<compile_context>
chip_gen: v5e
topology: v5e:2x2
jax: 0.10.0
libtpu: 0.0.40
codegen_flags: <defaults>
</compile_context>

<pallas_src>
import functools

import jax
import jax.numpy as jnp
from jax import lax
from jax.experimental import pallas as pl
from jax.experimental.pallas import tpu as pltpu


# ----------------------------------------------------------------------------
# Generation-aware configuration.
# ----------------------------------------------------------------------------
def _hw_config():
    kind = ""
    try:
        kind = jax.devices()[0].device_kind.lower()
    except Exception:
        pass
    is_v7 = "v7" in kind
    return {
        # v7x has 2 TensorCores per chip; v5e/v6e have 1.
        "num_tc": 2 if is_v7 else 1,
        # v7x: 64 MiB physical VMEM -> keep the 32 MiB scoped default.
        # v5e/v6e: 128 MiB physical -> raise the scoped limit, use bigger tiles.
        "vmem_limit": (32 << 20) if is_v7 else (64 << 20),
        "row_tile": 256 if is_v7 else 1024,
        "col_tile": 512 if is_v7 else 2048,
    }


def _round_up(x, m):
    return -(-x // m) * m


def _pick_tile(dim, preferred, align):
    """Largest tile <= preferred that divides `dim` and is `align`-aligned,
    otherwise the full dimension (always legal)."""
    if dim <= preferred:
        return dim
    t = (preferred // align) * align
    while t >= align:
        if dim % t == 0:
            return t
        t -= align
    return dim


# ----------------------------------------------------------------------------
# Generic tiled GEMM + bias kernel (input projection and FC / vocab GEMM).
# ----------------------------------------------------------------------------
def _matmul_bias_kernel(x_ref, w_ref, b_ref, o_ref):
    # x: (rt, K) bf16, w: (K, ct) bf16, b: (1, ct) f32, o: (rt, ct) f32
    x = x_ref[...]
    if x.dtype != w_ref.dtype:
        x = x.astype(w_ref.dtype)
    o_ref[...] = (jnp.dot(x, w_ref[...], preferred_element_type=jnp.float32)
                  + b_ref[...]).astype(o_ref.dtype)


def _matmul_bias(x, w, b, *, row_tile, col_tile, vmem_limit,
                 out_dtype=jnp.float32):
    """(R, K) @ (K, C) + (1, C) with a fully parallel 2-D grid."""
    r_dim, k_dim = x.shape
    c_dim = w.shape[1]
    rt = _pick_tile(r_dim, row_tile, 8)      # sublane-aligned row tile
    ct = _pick_tile(c_dim, col_tile, 128)    # lane-aligned column tile
    n_r, n_c = r_dim // rt, c_dim // ct

    # Stream the *smaller* operand repeatedly: put rows innermost when the
    # activation matrix is smaller than the weight matrix so each W column
    # tile is fetched exactly once (matters for the big vocab projection).
    rows_inner = (r_dim * k_dim * x.dtype.itemsize
                  < k_dim * c_dim * w.dtype.itemsize) and n_r > 1

    if rows_inner:
        grid = (n_c, n_r)
        x_map = lambda c, r: (r, 0)
        w_map = lambda c, r: (0, c)
        b_map = lambda c, r: (0, c)
        o_map = lambda c, r: (r, c)
    else:
        grid = (n_r, n_c)
        x_map = lambda r, c: (r, 0)
        w_map = lambda r, c: (0, c)
        b_map = lambda r, c: (0, c)
        o_map = lambda r, c: (r, c)

    return pl.pallas_call(
        _matmul_bias_kernel,
        out_shape=jax.ShapeDtypeStruct((r_dim, c_dim), out_dtype),
        grid_spec=pltpu.PrefetchScalarGridSpec(
            num_scalar_prefetch=0,
            grid=grid,
            in_specs=[
                pl.BlockSpec((rt, k_dim), x_map),
                pl.BlockSpec((k_dim, ct), w_map),
                pl.BlockSpec((1, ct), b_map),
            ],
            out_specs=pl.BlockSpec((rt, ct), o_map),
        ),
        compiler_params=pltpu.CompilerParams(
            dimension_semantics=("parallel", "parallel"),
            vmem_limit_bytes=vmem_limit),
    )(x, w, b)


# ----------------------------------------------------------------------------
# Recurrent LSTM core: gates_x precomputed, only h @ W_hh^T on the serial path.
# ----------------------------------------------------------------------------
def _lstm_recurrent_kernel(gx_ref, whh_ref, hseq_ref, h_ref, c_ref):
    """One (batch-tile, time-chunk) grid step of the recurrence.

    gx_ref   : (TC, BT, 4H) f32   precomputed x @ W_ih^T + (b_ih + b_hh), time-major
    whh_ref  : (H, 4H)      bf16  recurrent weight (kept VMEM-resident)
    hseq_ref : (BT, TC, H)  bf16  hidden states written directly in (B, T, H) order
    h_ref,c_ref : (BT, H)   f32   state scratch, carried across the time axis
    """
    @pl.when(pl.program_id(1) == 0)          # time axis is grid dim 1
    def _():
        h_ref[...] = jnp.zeros_like(h_ref)
        c_ref[...] = jnp.zeros_like(c_ref)

    n_h = h_ref.shape[-1]
    t_chunk = gx_ref.shape[0]

    # Fully unrolled static loop: every slice offset is a compile-time constant.
    for t in range(t_chunk):
        gates = gx_ref[t] + jnp.dot(
            h_ref[...].astype(jnp.bfloat16), whh_ref[...],
            preferred_element_type=jnp.float32)            # (BT, 4H) f32
        # PyTorch gate order: i, f, g, o.  i/f sigmoids fused into one EUP call.
        i_f = jax.nn.sigmoid(gates[:, :2 * n_h])
        i = i_f[:, :n_h]
        f = i_f[:, n_h:]
        g = jnp.tanh(gates[:, 2 * n_h:3 * n_h])
        o = jax.nn.sigmoid(gates[:, 3 * n_h:])
        c = f * c_ref[...] + i * g
        h = o * jnp.tanh(c)
        c_ref[...] = c
        h_ref[...] = h
        # Batch-major store: logits consumer reads (B, T, H) with no transpose.
        hseq_ref[:, t:t + 1, :] = h[:, None, :].astype(hseq_ref.dtype)


# ----------------------------------------------------------------------------
# Forward pass
# ----------------------------------------------------------------------------
@functools.partial(jax.jit, static_argnames=("vocab_size", "t_chunk"))
def caption_decoder_forward(features, captions, params, *, vocab_size=None,
                            t_chunk=16):
    """features: (B, T, F) f32; captions unused (parity with the PyTorch module)."""
    del captions
    B, T, F = features.shape
    H = params["w_hh_t"].shape[0]
    Vp = params["w_fc_t"].shape[1]
    V = Vp if vocab_size is None else vocab_size

    cfg = _hw_config()

    # Time chunk: amortize per-grid-step overhead, keep sublane alignment.
    tc = max(1, min(t_chunk, T))
    if tc < T and tc % 8 != 0:
        tc = max(8, (tc // 8) * 8)
    Tp = _round_up(T, tc)

    # Pre-cast input to bf16 before the HBM-bound projection GEMM.
    x_tm = jnp.transpose(features.astype(jnp.bfloat16), (1, 0, 2))   # (T, B, F)
    if Tp != T:
        x_tm = jnp.pad(x_tm, ((0, Tp - T), (0, 0), (0, 0)))

    # 1) Input projection, hoisted out of the recurrence (parallel GEMM).
    gx2d = _matmul_bias(x_tm.reshape(Tp * B, F), params["w_ih_t"], params["b"],
                        row_tile=cfg["row_tile"], col_tile=cfg["col_tile"],
                        vmem_limit=cfg["vmem_limit"])
    gx = gx2d.reshape(Tp, B, 4 * H)                                   # f32

    # 2) Sequential recurrence.  Batch split only on 2-TC chips (v7x) and only
    #    when the tile stays sublane-aligned; on v5e/v6e bt = B.
    bt = B // 2 if (cfg["num_tc"] >= 2 and B % 16 == 0) else B
    h_seq = pl.pallas_call(
        _lstm_recurrent_kernel,
        out_shape=jax.ShapeDtypeStruct((B, Tp, H), jnp.bfloat16),
        grid_spec=pltpu.PrefetchScalarGridSpec(
            num_scalar_prefetch=0,
            grid=(B // bt, Tp // tc),
            in_specs=[
                pl.BlockSpec((tc, bt, 4 * H), lambda b, t: (t, b, 0)),  # gates_x
                pl.BlockSpec((H, 4 * H), lambda b, t: (0, 0)),          # W_hh^T
            ],
            out_specs=pl.BlockSpec((bt, tc, H), lambda b, t: (b, t, 0)),
            scratch_shapes=[pltpu.VMEM((bt, H), jnp.float32),           # h
                            pltpu.VMEM((bt, H), jnp.float32)],          # c
        ),
        compiler_params=pltpu.CompilerParams(
            dimension_semantics=("parallel", "arbitrary"),
            vmem_limit_bytes=cfg["vmem_limit"]),
    )(gx, params["w_hh_t"])

    # 3) FC / vocab projection: bf16 activations straight from the recurrence
    #    (already in (B, T, H) order -> free reshape, no transpose round trip).
    h_bt = h_seq if Tp == T else h_seq[:, :T, :]
    logits2d = _matmul_bias(h_bt.reshape(B * T, H),
                            params["w_fc_t"], params["b_fc"],
                            row_tile=cfg["row_tile"], col_tile=cfg["col_tile"],
                            vmem_limit=cfg["vmem_limit"])
    logits = logits2d.reshape(B, T, Vp)
    if Vp != V:
        logits = logits[..., :V]          # drop lane padding of the vocab axis
    return logits


# ----------------------------------------------------------------------------
# Params / reference
# ----------------------------------------------------------------------------
def init_params(key, feature_dim, hidden_dim, vocab_size):
    """Same parameter shapes/init as the PyTorch module; weights stored bf16.
    The vocab axis is zero-padded to a lane-friendly multiple so the logits
    GEMM always gets lane-dense, VMEM-predictable tiles."""
    ks = jax.random.split(key, 6)
    s = 1.0 / jnp.sqrt(hidden_dim)
    w_ih = jax.random.uniform(ks[0], (4 * hidden_dim, feature_dim), jnp.float32, -s, s)
    w_hh = jax.random.uniform(ks[1], (4 * hidden_dim, hidden_dim), jnp.float32, -s, s)
    b_ih = jax.random.uniform(ks[2], (4 * hidden_dim,), jnp.float32, -s, s)
    b_hh = jax.random.uniform(ks[3], (4 * hidden_dim,), jnp.float32, -s, s)
    w_fc = jax.random.uniform(ks[4], (vocab_size, hidden_dim), jnp.float32, -s, s)
    b_fc = jax.random.uniform(ks[5], (vocab_size,), jnp.float32, -s, s)

    vp = _round_up(vocab_size, 512)
    w_fc_p = jnp.zeros((vp, hidden_dim), jnp.float32).at[:vocab_size].set(w_fc)
    b_fc_p = jnp.zeros((vp,), jnp.float32).at[:vocab_size].set(b_fc)

    return {
        "w_ih_t": w_ih.T.astype(jnp.bfloat16),    # (F, 4H)
        "w_hh_t": w_hh.T.astype(jnp.bfloat16),    # (H, 4H)
        "b": (b_ih + b_hh)[None, :],              # (1, 4H) f32
        "w_fc_t": w_fc_p.T.astype(jnp.bfloat16),  # (H, Vp)
        "b_fc": b_fc_p[None, :],                  # (1, Vp) f32
    }


def reference_forward(features, params, vocab_size):
    """Pure-JAX reference (lax.scan LSTM + linear), PyTorch gate order i,f,g,o."""
    w_ih_t = params["w_ih_t"].astype(jnp.float32)
    w_hh_t = params["w_hh_t"].astype(jnp.float32)
    w_fc_t = params["w_fc_t"].astype(jnp.float32)[:, :vocab_size]
    b, b_fc = params["b"][0], params["b_fc"][0, :vocab_size]
    B = features.shape[0]
    H = w_hh_t.shape[0]

    def step(carry, x_t):
        h, c = carry
        gates = x_t @ w_ih_t + h @ w_hh_t + b
        i, f, g, o = jnp.split(gates, 4, axis=-1)
        i, f, o = jax.nn.sigmoid(i), jax.nn.sigmoid(f), jax.nn.sigmoid(o)
        g = jnp.tanh(g)
        c = f * c + i * g
        h = o * jnp.tanh(c)
        return (h, c), h

    h0 = jnp.zeros((B, H), jnp.float32)
    _, hs = lax.scan(step, (h0, h0), jnp.transpose(features, (1, 0, 2)))
    hs = jnp.transpose(hs, (1, 0, 2))                       # (B, T, H)
    return hs @ w_fc_t + b_fc


if __name__ == "__main__":
    # Small TPU-friendly shapes consistent with the module's forward
    # (vocab 1000 deliberately exercises the lane-padding path).
    B, T = 8, 16
    feature_dim, hidden_dim, vocab_size = 64, 128, 1000

    key = jax.random.PRNGKey(0)
    k_feat, k_cap, k_par = jax.random.split(key, 3)

    features = jax.random.normal(k_feat, (B, T, feature_dim), jnp.float32)
    captions = jax.random.randint(k_cap, (B, T), 0, vocab_size)   # unused
    params = init_params(k_par, feature_dim, hidden_dim, vocab_size)

    logits = caption_decoder_forward(features, captions, params,
                                     vocab_size=vocab_size)
    logits = jax.block_until_ready(logits)

    assert logits.shape == (B, T, vocab_size), logits.shape

    ref = reference_forward(features, params, vocab_size)
    max_err = float(jnp.max(jnp.abs(logits - ref)))
    # Weights, activations and the stored hidden sequence are bf16
    # (f32 accumulation everywhere), so tolerance is loosened vs pure f32.
    assert max_err < 2e-2, max_err

    print("KERNEL_OK")
</pallas_src>

<mosaic_0001>
module attributes {stable_mosaic.version = 11 : i64} {
  func.func @_matmul_bias_kernel(%arg0: i32, %arg1: i32, %arg2: memref<128x64xbf16, #tpu.memory_space<vmem>>, %arg3: memref<64x512xbf16, #tpu.memory_space<vmem>>, %arg4: memref<1x512xf32, #tpu.memory_space<vmem>>, %arg5: memref<128x512xf32, #tpu.memory_space<vmem>>) attributes {dimension_semantics = [#tpu.dimension_semantics<parallel>, #tpu.dimension_semantics<parallel>], iteration_bounds = array<i64: 1, 1>, scalar_prefetch = 0 : i64, scratch_operands = 0 : i64, tpu.core_type = #tpu.core_type<tc>, window_params = [{transform_indices = @transform_0, window_bounds = array<i64: 128, 64>}, {transform_indices = @transform_1, window_bounds = array<i64: 64, 512>}, {transform_indices = @transform_2, window_bounds = array<i64: 1, 512>}, {transform_indices = @transform_3, window_bounds = array<i64: 128, 512>}]} {
    %c0 = arith.constant 0 : index
    %c0_0 = arith.constant 0 : index
    %0 = vector.load %arg2[%c0, %c0_0] : memref<128x64xbf16, #tpu.memory_space<vmem>>, vector<128x64xbf16>
    %c0_1 = arith.constant 0 : index
    %c0_2 = arith.constant 0 : index
    %1 = vector.load %arg3[%c0_1, %c0_2] : memref<64x512xbf16, #tpu.memory_space<vmem>>, vector<64x512xbf16>
    %cst = arith.constant dense<0.000000e+00> : vector<128x512xf32>
    %2 = tpu.matmul %0, %1, %cst {dimension_numbers = #tpu.dot_dimension_numbers<[1], [0], [0], [1], [0, 0, 1, 1], [], []>} : vector<128x64xbf16>, vector<64x512xbf16>, vector<128x512xf32> -> vector<128x512xf32>
    %c0_3 = arith.constant 0 : index
    %c0_4 = arith.constant 0 : index
    %3 = vector.load %arg4[%c0_3, %c0_4] : memref<1x512xf32, #tpu.memory_space<vmem>>, vector<1x512xf32>
    %4 = vector.broadcast %3 : vector<1x512xf32> to vector<128x512xf32>
    %5 = arith.addf %2, %4 : vector<128x512xf32>
    %c0_5 = arith.constant 0 : index
    %c0_6 = arith.constant 0 : index
    %6 = vector.load %arg5[%c0_5, %c0_6] : memref<128x512xf32, #tpu.memory_space<vmem>>, vector<128x512xf32>
    tpu.vector_store %arg5[%c0_5, %c0_6], %5 {strides = array<i32>} : memref<128x512xf32, #tpu.memory_space<vmem>>, vector<128x512xf32>,
    return
  }
  func.func @transform_0(%arg0: i32, %arg1: i32) -> (i32, i32) {
    %c0_i32 = arith.constant 0 : i32
    %c0_i32_0 = arith.constant 0 : i32
    return %arg0, %c0_i32 : i32, i32
  }
  func.func @transform_1(%arg0: i32, %arg1: i32) -> (i32, i32) {
    %c0_i32 = arith.constant 0 : i32
    %c0_i32_0 = arith.constant 0 : i32
    return %c0_i32, %arg1 : i32, i32
  }
  func.func @transform_2(%arg0: i32, %arg1: i32) -> (i32, i32) {
    %c0_i32 = arith.constant 0 : i32
    %c0_i32_0 = arith.constant 0 : i32
    return %c0_i32, %arg1 : i32, i32
  }
  func.func @transform_3(%arg0: i32, %arg1: i32) -> (i32, i32) {
    %c0_i32 = arith.constant 0 : i32
    return %arg0, %arg1 : i32, i32
  }
}

module attributes {stable_mosaic.version = 11 : i64} {
  func.func @_lstm_recurrent_kernel(%arg0: i32, %arg1: i32, %arg2: memref<16x8x512xf32, #tpu.memory_space<vmem>>, %arg3: memref<128x512xbf16, #tpu.memory_space<vmem>>, %arg4: memref<8x16x128xbf16, #tpu.memory_space<vmem>>, %arg5: memref<8x128xf32, #tpu.memory_space<vmem>>, %arg6: memref<8x128xf32, #tpu.memory_space<vmem>>) attributes {dimension_semantics = [#tpu.dimension_semantics<parallel>, #tpu.dimension_semantics<arbitrary>], iteration_bounds = array<i64: 1, 1>, scalar_prefetch = 0 : i64, scratch_operands = 2 : i64, tpu.core_type = #tpu.core_type<tc>, window_params = [{transform_indices = @transform_0, window_bounds = array<i64: 16, 8, 512>}, {pipeline_mode = #tpu.pipeline_mode<synchronous>, transform_indices = @transform_1, window_bounds = array<i64: 128, 512>}, {transform_indices = @transform_2, window_bounds = array<i64: 8, 16, 128>}]} {
    %c0_i32 = arith.constant 0 : i32
    %0 = arith.cmpi eq, %arg1, %c0_i32 : i32
    %1 = arith.extui %0 : i1 to i32
    %c0_i32_0 = arith.constant 0 : i32
    %2 = arith.cmpi ne, %1, %c0_i32_0 : i32
    scf.if %2 {
      %cst_288 = arith.constant 0.000000e+00 : f32
      %547 = vector.broadcast %cst_288 : f32 to vector<8x128xf32>
      %c0_289 = arith.constant 0 : index
      %c0_290 = arith.constant 0 : index
      %548 = vector.load %arg5[%c0_289, %c0_290] : memref<8x128xf32, #tpu.memory_space<vmem>>, vector<8x128xf32>
      tpu.vector_store %arg5[%c0_289, %c0_290], %547 {strides = array<i32>} : memref<8x128xf32, #tpu.memory_space<vmem>>, vector<8x128xf32>,
      %cst_291 = arith.constant 0.000000e+00 : f32
      %549 = vector.broadcast %cst_291 : f32 to vector<8x128xf32>
      %c0_292 = arith.constant 0 : index
      %c0_293 = arith.constant 0 : index
      %550 = vector.load %arg6[%c0_292, %c0_293] : memref<8x128xf32, #tpu.memory_space<vmem>>, vector<8x128xf32>
      tpu.vector_store %arg6[%c0_292, %c0_293], %549 {strides = array<i32>} : memref<8x128xf32, #tpu.memory_space<vmem>>, vector<8x128xf32>,
    } else {
    }
    %c0 = arith.constant 0 : index
    %c0_1 = arith.constant 0 : index
    %c0_2 = arith.constant 0 : index
    %3 = vector.load %arg2[%c0, %c0_1, %c0_2] : memref<16x8x512xf32, #tpu.memory_space<vmem>>, vector<1x8x512xf32>
    %4 = vector.shape_cast %3 : vector<1x8x512xf32> to vector<8x512xf32>
    %c0_3 = arith.constant 0 : index
    %c0_4 = arith.constant 0 : index
    %5 = vector.load %arg5[%c0_3, %c0_4] : memref<8x128xf32, #tpu.memory_space<vmem>>, vector<8x128xf32>
    %6 = arith.truncf %5 : vector<8x128xf32> to vector<8x128xbf16>
    %c0_5 = arith.constant 0 : index
    %c0_6 = arith.constant 0 : index
    %7 = vector.load %arg3[%c0_5, %c0_6] : memref<128x512xbf16, #tpu.memory_space<vmem>>, vector<128x512xbf16>
    %cst = arith.constant dense<0.000000e+00> : vector<8x512xf32>
    %8 = tpu.matmul %6, %7, %cst {dimension_numbers = #tpu.dot_dimension_numbers<[1], [0], [0], [1], [0, 0, 1, 1], [], []>} : vector<8x128xbf16>, vector<128x512xbf16>, vector<8x512xf32> -> vector<8x512xf32>
    %9 = arith.addf %4, %8 : vector<8x512xf32>
    %10 = vector.extract_strided_slice %9 {offsets = [0, 0], sizes = [8, 256], strides = [1, 1]} : vector<8x512xf32> to vector<8x256xf32>
    %11 = arith.negf %10 : vector<8x256xf32>
    %12 = math.exp %11 : vector<8x256xf32>
    %cst_7 = arith.constant 1.000000e+00 : f32
    %13 = vector.broadcast %cst_7 : f32 to vector<8x256xf32>
    %14 = arith.addf %13, %12 : vector<8x256xf32>
    %15 = arith.divf %13, %14 : vector<8x256xf32>
    %16 = vector.extract_strided_slice %15 {offsets = [0, 0], sizes = [8, 128], strides = [1, 1]} : vector<8x256xf32> to vector<8x128xf32>
    %17 = vector.extract_strided_slice %15 {offsets = [0, 128], sizes = [8, 128], strides = [1, 1]} : vector<8x256xf32> to vector<8x128xf32>
    %18 = vector.extract_strided_slice %9 {offsets = [0, 256], sizes = [8, 128], strides = [1, 1]} : vector<8x512xf32> to vector<8x128xf32>
    %19 = math.tanh %18 : vector<8x128xf32>
    %20 = vector.extract_strided_slice %9 {offsets = [0, 384], sizes = [8, 128], strides = [1, 1]} : vector<8x512xf32> to vector<8x128xf32>
    %21 = arith.negf %20 : vector<8x128xf32>
    %22 = math.exp %21 : vector<8x128xf32>
    %cst_8 = arith.constant 1.000000e+00 : f32
    %23 = vector.broadcast %cst_8 : f32 to vector<8x128xf32>
    %24 = arith.addf %23, %22 : vector<8x128xf32>
    %25 = arith.divf %23, %24 : vector<8x128xf32>
    %c0_9 = arith.constant 0 : index
    %c0_10 = arith.constant 0 : index
    %26 = vector.load %arg6[%c0_9, %c0_10] : memref<8x128xf32, #tpu.memory_space<vmem>>, vector<8x128xf32>
    %27 = arith.mulf %17, %26 : vector<8x128xf32>
    %28 = arith.mulf %16, %19 : vector<8x128xf32>
    %29 = arith.addf %27, %28 : vector<8x128xf32>
    %30 = math.tanh %29 : vector<8x128xf32>
    %31 = arith.mulf %25, %30 : vector<8x128xf32>
    %c0_11 = arith.constant 0 : index
    %c0_12 = arith.constant 0 : index
    %32 = vector.load %arg6[%c0_11, %c0_12] : memref<8x128xf32, #tpu.memory_space<vmem>>, vector<8x128xf32>
    tpu.vector_store %arg6[%c0_11, %c0_12], %29 {strides = array<i32>} : memref<8x128xf32, #tpu.memory_space<vmem>>, vector<8x128xf32>,
    %c0_13 = arith.constant 0 : index
    %c0_14 = arith.constant 0 : index
    %33 = vector.load %arg5[%c0_13, %c0_14] : memref<8x128xf32, #tpu.memory_space<vmem>>, vector<8x128xf32>
    tpu.vector_store %arg5[%c0_13, %c0_14], %31 {strides = array<i32>} : memref<8x128xf32, #tpu.memory_space<vmem>>, vector<8x128xf32>,
    %34 = vector.shape_cast %31 : vector<8x128xf32> to vector<8x1x128xf32>
    %35 = arith.truncf %34 : vector<8x1x128xf32> to vector<8x1x128xbf16>
    %c0_15 = arith.constant 0 : index
    %c0_16 = arith.constant 0 : index
    %c0_17 = arith.constant 0 : index
    %36 = vector.load %arg4[%c0_15, %c0_16, %c0_17] : memref<8x16x128xbf16, #tpu.memory_space<vmem>>, vector<8x1x128xbf16>
    tpu.vector_store %arg4[%c0_15, %c0_16, %c0_17], %35 {strides = array<i32>} : memref<8x16x128xbf16, #tpu.memory_space<vmem>>, vector<8x1x128xbf16>,
    %c1 = arith.constant 1 : index
    %c0_18 = arith.constant 0 : index
    %c0_19 = arith.constant 0 : index
    %37 = vector.load %arg2[%c1, %c0_18, %c0_19] : memref<16x8x512xf32, #tpu.memory_space<vmem>>, vector<1x8x512xf32>
    %38 = vector.shape_cast %37 : vector<1x8x512xf32> to vector<8x512xf32>
    %c0_20 = arith.constant 0 : index
    %c0_21 = arith.constant 0 : index
    %39 = vector.load %arg5[%c0_20, %c0_21] : memref<8x128xf32, #tpu.memory_space<vmem>>, vector<8x128xf32>
    %40 = arith.truncf %39 : vector<8x128xf32> to vector<8x128xbf16>
    %c0_22 = arith.constant 0 : index
    %c0_23 = arith.constant 0 : index
    %41 = vector.load %arg3[%c0_22, %c0_23] : memref<128x512xbf16, #tpu.memory_space<vmem>>, vector<128x512xbf16>
    %cst_24 = arith.constant dense<0.000000e+00> : vector<8x512xf32>
    %42 = tpu.matmul %40, %41, %cst_24 {dimension_numbers = #tpu.dot_dimension_numbers<[1], [0], [0], [1], [0, 0, 1, 1], [], []>} : vector<8x128xbf16>, vector<128x512xbf16>, vector<8x512xf32> -> vector<8x512xf32>
    %43 = arith.addf %38, %42 : vector<8x512xf32>
    %44 = vector.extract_strided_slice %43 {offsets = [0, 0], sizes = [8, 256], strides = [1, 1]} : vector<8x512xf32> to vector<8x256xf32>
    %45 = arith.negf %44 : vector<8x256xf32>
    %46 = math.exp %45 : vector<8x256xf32>
    %cst_25 = arith.constant 1.000000e+00 : f32
    %47 = vector.broadcast %cst_25 : f32 to vector<8x256xf32>
    %48 = arith.addf %47, %46 : vector<8x256xf32>
    %49 = arith.divf %47, %48 : vector<8x256xf32>
    %50 = vector.extract_strided_slice %49 {offsets = [0, 0], sizes = [8, 128], strides = [1, 1]} : vector<8x256xf32> to vector<8x128xf32>
    %51 = vector.extract_strided_slice %49 {offsets = [0, 128], sizes = [8, 128], strides = [1, 1]} : vector<8x256xf32> to vector<8x128xf32>
    %52 = vector.extract_strided_slice %43 {offsets = [0, 256], sizes = [8, 128], strides = [1, 1]} : vector<8x512xf32> to vector<8x128xf32>
    %53 = math.tanh %52 : vector<8x128xf32>
    %54 = vector.extract_strided_slice %43 {offsets = [0, 384], sizes = [8, 128], strides = [1, 1]} : vector<8x512xf32> to vector<8x128xf32>
    %55 = arith.negf %54 : vector<8x128xf32>
    %56 = math.exp %55 : vector<8x128xf32>
    %cst_26 = arith.constant 1.000000e+00 : f32
    %57 = vector.broadcast %cst_26 : f32 to vector<8x128xf32>
    %58 = arith.addf %57, %56 : vector<8x128xf32>
    %59 = arith.divf %57, %58 : vector<8x128xf32>
    %c0_27 = arith.constant 0 : index
    %c0_28 = arith.constant 0 : index
    %60 = vector.load %arg6[%c0_27, %c0_28] : memref<8x128xf32, #tpu.memory_space<vmem>>, vector<8x128xf32>
    %61 = arith.mulf %51, %60 : vector<8x128xf32>
    %62 = arith.mulf %50, %53 : vector<8x128xf32>
    %63 = arith.addf %61, %62 : vector<8x128xf32>
    %64 = math.tanh %63 : vector<8x128xf32>
    %65 = arith.mulf %59, %64 : vector<8x128xf32>
    %c0_29 = arith.constant 0 : index
    %c0_30 = arith.constant 0 : index
    %66 = vector.load %arg6[%c0_29, %c0_30] : memref<8x128xf32, #tpu.memory_space<vmem>>, vector<8x128xf32>
    tpu.vector_store %arg6[%c0_29, %c0_30], %63 {strides = array<i32>} : memref<8x128xf32, #tpu.memory_space<vmem>>, vector<8x128xf32>,
    %c0_31 = arith.constant 0 : index
    %c0_32 = arith.constant 0 : index
    %67 = vector.load %arg5[%c0_31, %c0_32] : memref<8x128xf32, #tpu.memory_space<vmem>>, vector<8x128xf32>
    tpu.vector_store %arg5[%c0_31, %c0_32], %65 {strides = array<i32>} : memref<8x128xf32, #tpu.memory_space<vmem>>, vector<8x128xf32>,
    %68 = vector.shape_cast %65 : vector<8x128xf32> to vector<8x1x128xf32>
    %69 = arith.truncf %68 : vector<8x1x128xf32> to vector<8x1x128xbf16>
    %c0_33 = arith.constant 0 : index
    %c1_34 = arith.constant 1 : index
    %c0_35 = arith.constant 0 : index
    %70 = vector.load %arg4[%c0_33, %c1_34, %c0_35] : memref<8x16x128xbf16, #tpu.memory_space<vmem>>, vector<8x1x128xbf16>
    tpu.vector_store %arg4[%c0_33, %c1_34, %c0_35], %69 {strides = array<i32>} : memref<8x16x128xbf16, #tpu.memory_space<vmem>>, vector<8x1x128xbf16>,
    %c2 = arith.constant 2 : index
    %c0_36 = arith.constant 0 : index
    %c0_37 = arith.constant 0 : index
    %71 = vector.load %arg2[%c2, %c0_36, %c0_37] : memref<16x8x512xf32, #tpu.memory_space<vmem>>, vector<1x8x512xf32>
    %72 = vector.shape_cast %71 : vector<1x8x512xf32> to vector<8x512xf32>
    %c0_38 = arith.constant 0 : index
    %c0_39 = arith.constant 0 : index
    %73 = vector.load %arg5[%c0_38, %c0_39] : memref<8x128xf32, #tpu.memory_space<vmem>>, vector<8x128xf32>
    %74 = arith.truncf %73 : vector<8x128xf32> to vector<8x128xbf16>
    %c0_40 = arith.constant 0 : index
    %c0_41 = arith.constant 0 : index
    %75 = vector.load %arg3[%c0_40, %c0_41] : memref<128x512xbf16, #tpu.memory_space<vmem>>, vector<128x512xbf16>
    %cst_42 = arith.constant dense<0.000000e+00> : vector<8x512xf32>
    %76 = tpu.matmul %74, %75, %cst_42 {dimension_numbers = #tpu.dot_dimension_numbers<[1], [0], [0], [1], [0, 0, 1, 1], [], []>} : vector<8x128xbf16>, vector<128x512xbf16>, vector<8x512xf32> -> vector<8x512xf32>
    %77 = arith.addf %72, %76 : vector<8x512xf32>
    %78 = vector.extract_strided_slice %77 {offsets = [0, 0], sizes = [8, 256], strides = [1, 1]} : vector<8x512xf32> to vector<8x256xf32>
    %79 = arith.negf %78 : vector<8x256xf32>
    %80 = math.exp %79 : vector<8x256xf32>
    %cst_43 = arith.constant 1.000000e+00 : f32
    %81 = vector.broadcast %cst_43 : f32 to vector<8x256xf32>
    %82 = arith.addf %81, %80 : vector<8x256xf32>
    %83 = arith.divf %81, %82 : vector<8x256xf32>
    %84 = vector.extract_strided_slice %83 {offsets = [0, 0], sizes = [8, 128], strides = [1, 1]} : vector<8x256xf32> to vector<8x128xf32>
    %85 = vector.extract_strided_slice %83 {offsets = [0, 128], sizes = [8, 128], strides = [1, 1]} : vector<8x256xf32> to vector<8x128xf32>
    %86 = vector.extract_strided_slice %77 {offsets = [0, 256], sizes = [8, 128], strides = [1, 1]} : vector<8x512xf32> to vector<8x128xf32>
    %87 = math.tanh %86 : vector<8x128xf32>
    %88 = vector.extract_strided_slice %77 {offsets = [0, 384], sizes = [8, 128], strides = [1, 1]} : vector<8x512xf32> to vector<8x128xf32>
    %89 = arith.negf %88 : vector<8x128xf32>
    %90 = math.exp %89 : vector<8x128xf32>
    %cst_44 = arith.constant 1.000000e+00 : f32
    %91 = vector.broadcast %cst_44 : f32 to vector<8x128xf32>
    %92 = arith.addf %91, %90 : vector<8x128xf32>
    %93 = arith.divf %91, %92 : vector<8x128xf32>
    %c0_45 = arith.constant 0 : index
    %c0_46 = arith.constant 0 : index
    %94 = vector.load %arg6[%c0_45, %c0_46] : memref<8x128xf32, #tpu.memory_space<vmem>>, vector<8x128xf32>
    %95 = arith.mulf %85, %94 : vector<8x128xf32>
    %96 = arith.mulf %84, %87 : vector<8x128xf32>
    %97 = arith.addf %95, %96 : vector<8x128xf32>
    %98 = math.tanh %97 : vector<8x128xf32>
    %99 = arith.mulf %93, %98 : vector<8x128xf32>
    %c0_47 = arith.constant 0 : index
    %c0_48 = arith.constant 0 : index
    %100 = vector.load %arg6[%c0_47, %c0_48] : memref<8x128xf32, #tpu.memory_space<vmem>>, vector<8x128xf32>
    tpu.vector_store %arg6[%c0_47, %c0_48], %97 {strides = array<i32>} : memref<8x128xf32, #tpu.memory_space<vmem>>, vector<8x128xf32>,
    %c0_49 = arith.constant 0 : index
    %c0_50 = arith.constant 0 : index
    %101 = vector.load %arg5[%c0_49, %c0_50] : memref<8x128xf32, #tpu.memory_space<vmem>>, vector<8x128xf32>
    tpu.vector_store %arg5[%c0_49, %c0_50], %99 {strides = array<i32>} : memref<8x128xf32, #tpu.memory_space<vmem>>, vector<8x128xf32>,
    %102 = vector.shape_cast %99 : vector<8x128xf32> to vector<8x1x128xf32>
    %103 = arith.truncf %102 : vector<8x1x128xf32> to vector<8x1x128xbf16>
    %c0_51 = arith.constant 0 : index
    %c2_52 = arith.constant 2 : index
    %c0_53 = arith.constant 0 : index
    %104 = vector.load %arg4[%c0_51, %c2_52, %c0_53] : memref<8x16x128xbf16, #tpu.memory_space<vmem>>, vector<8x1x128xbf16>
    tpu.vector_store %arg4[%c0_51, %c2_52, %c0_53], %103 {strides = array<i32>} : memref<8x16x128xbf16, #tpu.memory_space<vmem>>, vector<8x1x128xbf16>,
    %c3 = arith.constant 3 : index
    %c0_54 = arith.constant 0 : index
    %c0_55 = arith.constant 0 : index
    %105 = vector.load %arg2[%c3, %c0_54, %c0_55] : memref<16x8x512xf32, #tpu.memory_space<vmem>>, vector<1x8x512xf32>
    %106 = vector.shape_cast %105 : vector<1x8x512xf32> to vector<8x512xf32>
    %c0_56 = arith.constant 0 : index
    %c0_57 = arith.constant 0 : index
    %107 = vector.load %arg5[%c0_56, %c0_57] : memref<8x128xf32, #tpu.memory_space<vmem>>, vector<8x128xf32>
    %108 = arith.truncf %107 : vector<8x128xf32> to vector<8x128xbf16>
    %c0_58 = arith.constant 0 : index
    %c0_59 = arith.constant 0 : index
    %109 = vector.load %arg3[%c0_58, %c0_59] : memref<128x512xbf16, #tpu.memory_space<vmem>>, vector<128x512xbf16>
    %cst_60 = arith.constant dense<0.000000e+00> : vector<8x512xf32>
    %110 = tpu.matmul %108, %109, %cst_60 {dimension_numbers = #tpu.dot_dimension_numbers<[1], [0], [0], [1], [0, 0, 1, 1], [], []>} : vector<8x128xbf16>, vector<128x512xbf16>, vector<8x512xf32> -> vector<8x512xf32>
    %111 = arith.addf %106, %110 : vector<8x512xf32>
    %112 = vector.extract_strided_slice %111 {offsets = [0, 0], sizes = [8, 256], strides = [1, 1]} : vector<8x512xf32> to vector<8x256xf32>
    %113 = arith.negf %112 : vector<8x256xf32>
    %114 = math.exp %113 : vector<8x256xf32>
    %cst_61 = arith.constant 1.000000e+00 : f32
    %115 = vector.broadcast %cst_61 : f32 to vector<8x256xf32>
    %116 = arith.addf %115, %114 : vector<8x256xf32>
    %117 = arith.divf %115, %116 : vector<8x256xf32>
    %118 = vector.extract_strided_slice %117 {offsets = [0, 0], sizes = [8, 128], strides = [1, 1]} : vector<8x256xf32> to vector<8x128xf32>
    %119 = vector.extract_strided_slice %117 {offsets = [0, 128], sizes = [8, 128], strides = [1, 1]} : vector<8x256xf32> to vector<8x128xf32>
    %120 = vector.extract_strided_slice %111 {offsets = [0, 256], sizes = [8, 128], strides = [1, 1]} : vector<8x512xf32> to vector<8x128xf32>
    %121 = math.tanh %120 : vector<8x128xf32>
    %122 = vector.extract_strided_slice %111 {offsets = [0, 384], sizes = [8, 128], strides = [1, 1]} : vector<8x512xf32> to vector<8x128xf32>
    %123 = arith.negf %122 : vector<8x128xf32>
    %124 = math.exp %123 : vector<8x128xf32>
    %cst_62 = arith.constant 1.000000e+00 : f32
    %125 = vector.broadcast %cst_62 : f32 to vector<8x128xf32>
    %126 = arith.addf %125, %124 : vector<8x128xf32>
    %127 = arith.divf %125, %126 : vector<8x128xf32>
    %c0_63 = arith.constant 0 : index
    %c0_64 = arith.constant 0 : index
    %128 = vector.load %arg6[%c0_63, %c0_64] : memref<8x128xf32, #tpu.memory_space<vmem>>, vector<8x128xf32>
    %129 = arith.mulf %119, %128 : vector<8x128xf32>
    %130 = arith.mulf %118, %121 : vector<8x128xf32>
    %131 = arith.addf %129, %130 : vector<8x128xf32>
    %132 = math.tanh %131 : vector<8x128xf32>
    %133 = arith.mulf %127, %132 : vector<8x128xf32>
    %c0_65 = arith.constant 0 : index
    %c0_66 = arith.constant 0 : index
    %134 = vector.load %arg6[%c0_65, %c0_66] : memref<8x128xf32, #tpu.memory_space<vmem>>, vector<8x128xf32>
    tpu.vector_store %arg6[%c0_65, %c0_66], %131 {strides = array<i32>} : memref<8x128xf32, #tpu.memory_space<vmem>>, vector<8x128xf32>,
    %c0_67 = arith.constant 0 : index
    %c0_68 = arith.constant 0 : index
    %135 = vector.load %arg5[%c0_67, %c0_68] : memref<8x128xf32, #tpu.memory_space<vmem>>, vector<8x128xf32>
    tpu.vector_store %arg5[%c0_67, %c0_68], %133 {strides = array<i32>} : memref<8x128xf32, #tpu.memory_space<vmem>>, vector<8x128xf32>,
    %136 = vector.shape_cast %133 : vector<8x128xf32> to vector<8x1x128xf32>
    %137 = arith.truncf %136 : vector<8x1x128xf32> to vector<8x1x128xbf16>
    %c0_69 = arith.constant 0 : index
    %c3_70 = arith.constant 3 : index
    %c0_71 = arith.constant 0 : index
    %138 = vector.load %arg4[%c0_69, %c3_70, %c0_71] : memref<8x16x128xbf16, #tpu.memory_space<vmem>>, vector<8x1x128xbf16>
    tpu.vector_store %arg4[%c0_69, %c3_70, %c0_71], %137 {strides = array<i32>} : memref<8x16x128xbf16, #tpu.memory_space<vmem>>, vector<8x1x128xbf16>,
    %c4 = arith.constant 4 : index
    %c0_72 = arith.constant 0 : index
    %c0_73 = arith.constant 0 : index
    %139 = vector.load %arg2[%c4, %c0_72, %c0_73] : memref<16x8x512xf32, #tpu.memory_space<vmem>>, vector<1x8x512xf32>
    %140 = vector.shape_cast %139 : vector<1x8x512xf32> to vector<8x512xf32>
    %c0_74 = arith.constant 0 : index
    %c0_75 = arith.constant 0 : index
    %141 = vector.load %arg5[%c0_74, %c0_75] : memref<8x128xf32, #tpu.memory_space<vmem>>, vector<8x128xf32>
    %142 = arith.truncf %141 : vector<8x128xf32> to vector<8x128xbf16>
    %c0_76 = arith.constant 0 : index
    %c0_77 = arith.constant 0 : index
    %143 = vector.load %arg3[%c0_76, %c0_77] : memref<128x512xbf16, #tpu.memory_space<vmem>>, vector<128x512xbf16>
    %cst_78 = arith.constant dense<0.000000e+00> : vector<8x512xf32>
    %144 = tpu.matmul %142, %143, %cst_78 {dimension_numbers = #tpu.dot_dimension_numbers<[1], [0], [0], [1], [0, 0, 1, 1], [], []>} : vector<8x128xbf16>, vector<128x512xbf16>, vector<8x512xf32> -> vector<8x512xf32>
    %145 = arith.addf %140, %144 : vector<8x512xf32>
    %146 = vector.extract_strided_slice %145 {offsets = [0, 0], sizes = [8, 256], strides = [1, 1]} : vector<8x512xf32> to vector<8x256xf32>
    %147 = arith.negf %146 : vector<8x256xf32>
    %148 = math.exp %147 : vector<8x256xf32>
    %cst_79 = arith.constant 1.000000e+00 : f32
    %149 = vector.broadcast %cst_79 : f32 to vector<8x256xf32>
    %150 = arith.addf %149, %148 : vector<8x256xf32>
    %151 = arith.divf %149, %150 : vector<8x256xf32>
    %152 = vector.extract_strided_slice %151 {offsets = [0, 0], sizes = [8, 128], strides = [1, 1]} : vector<8x256xf32> to vector<8x128xf32>
    %153 = vector.extract_strided_slice %151 {offsets = [0, 128], sizes = [8, 128], strides = [1, 1]} : vector<8x256xf32> to vector<8x128xf32>
    %154 = vector.extract_strided_slice %145 {offsets = [0, 256], sizes = [8, 128], strides = [1, 1]} : vector<8x512xf32> to vector<8x128xf32>
    %155 = math.tanh %154 : vector<8x128xf32>
    %156 = vector.extract_strided_slice %145 {offsets = [0, 384], sizes = [8, 128], strides = [1, 1]} : vector<8x512xf32> to vector<8x128xf32>
    %157 = arith.negf %156 : vector<8x128xf32>
    %158 = math.exp %157 : vector<8x128xf32>
    %cst_80 = arith.constant 1.000000e+00 : f32
    %159 = vector.broadcast %cst_80 : f32 to vector<8x128xf32>
    %160 = arith.addf %159, %158 : vector<8x128xf32>
    %161 = arith.divf %159, %160 : vector<8x128xf32>
    %c0_81 = arith.constant 0 : index
    %c0_82 = arith.constant 0 : index
    %162 = vector.load %arg6[%c0_81, %c0_82] : memref<8x128xf32, #tpu.memory_space<vmem>>, vector<8x128xf32>
    %163 = arith.mulf %153, %162 : vector<8x128xf32>
    %164 = arith.mulf %152, %155 : vector<8x128xf32>
    %165 = arith.addf %163, %164 : vector<8x128xf32>
    %166 = math.tanh %165 : vector<8x128xf32>
    %167 = arith.mulf %161, %166 : vector<8x128xf32>
    %c0_83 = arith.constant 0 : index
    %c0_84 = arith.constant 0 : index
    %168 = vector.load %arg6[%c0_83, %c0_84] : memref<8x128xf32, #tpu.memory_space<vmem>>, vector<8x128xf32>
    tpu.vector_store %arg6[%c0_83, %c0_84], %165 {strides = array<i32>} : memref<8x128xf32, #tpu.memory_space<vmem>>, vector<8x128xf32>,
    %c0_85 = arith.constant 0 : index
    %c0_86 = arith.constant 0 : index
    %169 = vector.load %arg5[%c0_85, %c0_86] : memref<8x128xf32, #tpu.memory_space<vmem>>, vector<8x128xf32>
    tpu.vector_store %arg5[%c0_85, %c0_86], %167 {strides = array<i32>} : memref<8x128xf32, #tpu.memory_space<vmem>>, vector<8x128xf32>,
    %170 = vector.shape_cast %167 : vector<8x128xf32> to vector<8x1x128xf32>
    %171 = arith.truncf %170 : vector<8x1x128xf32> to vector<8x1x128xbf16>
    %c0_87 = arith.constant 0 : index
    %c4_88 = arith.constant 4 : index
    %c0_89 = arith.constant 0 : index
    %172 = vector.load %arg4[%c0_87, %c4_88, %c0_89] : memref<8x16x128xbf16, #tpu.memory_space<vmem>>, vector<8x1x128xbf16>
    tpu.vector_store %arg4[%c0_87, %c4_88, %c0_89], %171 {strides = array<i32>} : memref<8x16x128xbf16, #tpu.memory_space<vmem>>, vector<8x1x128xbf16>,
    %c5 = arith.constant 5 : index
    %c0_90 = arith.constant 0 : index
    %c0_91 = arith.constant 0 : index
    %173 = vector.load %arg2[%c5, %c0_90, %c0_91] : memref<16x8x512xf32, #tpu.memory_space<vmem>>, vector<1x8x512xf32>
    %174 = vector.shape_cast %173 : vector<1x8x512xf32> to vector<8x512xf32>
    %c0_92 = arith.constant 0 : index
    %c0_93 = arith.constant 0 : index
    %175 = vector.load %arg5[%c0_92, %c0_93] : memref<8x128xf32, #tpu.memory_space<vmem>>, vector<8x128xf32>
    %176 = arith.truncf %175 : vector<8x128xf32> to vector<8x128xbf16>
    %c0_94 = arith.constant 0 : index
    %c0_95 = arith.constant 0 : index
    %177 = vector.load %arg3[%c0_94, %c0_95] : memref<128x512xbf16, #tpu.memory_space<vmem>>, vector<128x512xbf16>
    %cst_96 = arith.constant dense<0.000000e+00> : vector<8x512xf32>
    %178 = tpu.matmul %176, %177, %cst_96 {dimension_numbers = #tpu.dot_dimension_numbers<[1], [0], [0], [1], [0, 0, 1, 1], [], []>} : vector<8x128xbf16>, vector<128x512xbf16>, vector<8x512xf32> -> vector<8x512xf32>
    %179 = arith.addf %174, %178 : vector<8x512xf32>
    %180 = vector.extract_strided_slice %179 {offsets = [0, 0], sizes = [8, 256], strides = [1, 1]} : vector<8x512xf32> to vector<8x256xf32>
    %181 = arith.negf %180 : vector<8x256xf32>
    %182 = math.exp %181 : vector<8x256xf32>
    %cst_97 = arith.constant 1.000000e+00 : f32
    %183 = vector.broadcast %cst_97 : f32 to vector<8x256xf32>
    %184 = arith.addf %183, %182 : vector<8x256xf32>
    %185 = arith.divf %183, %184 : vector<8x256xf32>
    %186 = vector.extract_strided_slice %185 {offsets = [0, 0], sizes = [8, 128], strides = [1, 1]} : vector<8x256xf32> to vector<8x128xf32>
    %187 = vector.extract_strided_slice %185 {offsets = [0, 128], sizes = [8, 128], strides = [1, 1]} : vector<8x256xf32> to vector<8x128xf32>
    %188 = vector.extract_strided_slice %179 {offsets = [0, 256], sizes = [8, 128], strides = [1, 1]} : vector<8x512xf32> to vector<8x128xf32>
    %189 = math.tanh %188 : vector<8x128xf32>
    %190 = vector.extract_strided_slice %179 {offsets = [0, 384], sizes = [8, 128], strides = [1, 1]} : vector<8x512xf32> to vector<8x128xf32>
    %191 = arith.negf %190 : vector<8x128xf32>
    %192 = math.exp %191 : vector<8x128xf32>
    %cst_98 = arith.constant 1.000000e+00 : f32
    %193 = vector.broadcast %cst_98 : f32 to vector<8x128xf32>
    %194 = arith.addf %193, %192 : vector<8x128xf32>
    %195 = arith.divf %193, %194 : vector<8x128xf32>
    %c0_99 = arith.constant 0 : index
    %c0_100 = arith.constant 0 : index
    %196 = vector.load %arg6[%c0_99, %c0_100] : memref<8x128xf32, #tpu.memory_space<vmem>>, vector<8x128xf32>
    %197 = arith.mulf %187, %196 : vector<8x128xf32>
    %198 = arith.mulf %186, %189 : vector<8x128xf32>
    %199 = arith.addf %197, %198 : vector<8x128xf32>
    %200 = math.tanh %199 : vector<8x128xf32>
    %201 = arith.mulf %195, %200 : vector<8x128xf32>
    %c0_101 = arith.constant 0 : index
    %c0_102 = arith.constant 0 : index
    %202 = vector.load %arg6[%c0_101, %c0_102] : memref<8x128xf32, #tpu.memory_space<vmem>>, vector<8x128xf32>
    tpu.vector_store %arg6[%c0_101, %c0_102], %199 {strides = array<i32>} : memref<8x128xf32, #tpu.memory_space<vmem>>, vector<8x128xf32>,
    %c0_103 = arith.constant 0 : index
    %c0_104 = arith.constant 0 : index
    %203 = vector.load %arg5[%c0_103, %c0_104] : memref<8x128xf32, #tpu.memory_space<vmem>>, vector<8x128xf32>
    tpu.vector_store %arg5[%c0_103, %c0_104], %201 {strides = array<i32>} : memref<8x128xf32, #tpu.memory_space<vmem>>, vector<8x128xf32>,
    %204 = vector.shape_cast %201 : vector<8x128xf32> to vector<8x1x128xf32>
    %205 = arith.truncf %204 : vector<8x1x128xf32> to vector<8x1x128xbf16>
    %c0_105 = arith.constant 0 : index
    %c5_106 = arith.constant 5 : index
    %c0_107 = arith.constant 0 : index
    %206 = vector.load %arg4[%c0_105, %c5_106, %c0_107] : memref<8x16x128xbf16, #tpu.memory_space<vmem>>, vector<8x1x128xbf16>
    tpu.vector_store %arg4[%c0_105, %c5_106, %c0_107], %205 {strides = array<i32>} : memref<8x16x128xbf16, #tpu.memory_space<vmem>>, vector<8x1x128xbf16>,
    %c6 = arith.constant 6 : index
    %c0_108 = arith.constant 0 : index
    %c0_109 = arith.constant 0 : index
    %207 = vector.load %arg2[%c6, %c0_108, %c0_109] : memref<16x8x512xf32, #tpu.memory_space<vmem>>, vector<1x8x512xf32>
    %208 = vector.shape_cast %207 : vector<1x8x512xf32> to vector<8x512xf32>
    %c0_110 = arith.constant 0 : index
    %c0_111 = arith.constant 0 : index
    %209 = vector.load %arg5[%c0_110, %c0_111] : memref<8x128xf32, #tpu.memory_space<vmem>>, vector<8x128xf32>
    %210 = arith.truncf %209 : vector<8x128xf32> to vector<8x128xbf16>
    %c0_112 = arith.constant 0 : index
    %c0_113 = arith.constant 0 : index
    %211 = vector.load %arg3[%c0_112, %c0_113] : memref<128x512xbf16, #tpu.memory_space<vmem>>, vector<128x512xbf16>
    %cst_114 = arith.constant dense<0.000000e+00> : vector<8x512xf32>
    %212 = tpu.matmul %210, %211, %cst_114 {dimension_numbers = #tpu.dot_dimension_numbers<[1], [0], [0], [1], [0, 0, 1, 1], [], []>} : vector<8x128xbf16>, vector<128x512xbf16>, vector<8x512xf32> -> vector<8x512xf32>
    %213 = arith.addf %208, %212 : vector<8x512xf32>
    %214 = vector.extract_strided_slice %213 {offsets = [0, 0], sizes = [8, 256], strides = [1, 1]} : vector<8x512xf32> to vector<8x256xf32>
    %215 = arith.negf %214 : vector<8x256xf32>
    %216 = math.exp %215 : vector<8x256xf32>
    %cst_115 = arith.constant 1.000000e+00 : f32
    %217 = vector.broadcast %cst_115 : f32 to vector<8x256xf32>
    %218 = arith.addf %217, %216 : vector<8x256xf32>
    %219 = arith.divf %217, %218 : vector<8x256xf32>
    %220 = vector.extract_strided_slice %219 {offsets = [0, 0], sizes = [8, 128], strides = [1, 1]} : vector<8x256xf32> to vector<8x128xf32>
    %221 = vector.extract_strided_slice %219 {offsets = [0, 128], sizes = [8, 128], strides = [1, 1]} : vector<8x256xf32> to vector<8x128xf32>
    %222 = vector.extract_strided_slice %213 {offsets = [0, 256], sizes = [8, 128], strides = [1, 1]} : vector<8x512xf32> to vector<8x128xf32>
    %223 = math.tanh %222 : vector<8x128xf32>
    %224 = vector.extract_strided_slice %213 {offsets = [0, 384], sizes = [8, 128], strides = [1, 1]} : vector<8x512xf32> to vector<8x128xf32>
    %225 = arith.negf %224 : vector<8x128xf32>
    %226 = math.exp %225 : vector<8x128xf32>
    %cst_116 = arith.constant 1.000000e+00 : f32
    %227 = vector.broadcast %cst_116 : f32 to vector<8x128xf32>
    %228 = arith.addf %227, %226 : vector<8x128xf32>
    %229 = arith.divf %227, %228 : vector<8x128xf32>
    %c0_117 = arith.constant 0 : index
    %c0_118 = arith.constant 0 : index
    %230 = vector.load %arg6[%c0_117, %c0_118] : memref<8x128xf32, #tpu.memory_space<vmem>>, vector<8x128xf32>
    %231 = arith.mulf %221, %230 : vector<8x128xf32>
    %232 = arith.mulf %220, %223 : vector<8x128xf32>
    %233 = arith.addf %231, %232 : vector<8x128xf32>
    %234 = math.tanh %233 : vector<8x128xf32>
    %235 = arith.mulf %229, %234 : vector<8x128xf32>
    %c0_119 = arith.constant 0 : index
    %c0_120 = arith.constant 0 : index
    %236 = vector.load %arg6[%c0_119, %c0_120] : memref<8x128xf32, #tpu.memory_space<vmem>>, vector<8x128xf32>
    tpu.vector_store %arg6[%c0_119, %c0_120], %233 {strides = array<i32>} : memref<8x128xf32, #tpu.memory_space<vmem>>, vector<8x128xf32>,
    %c0_121 = arith.constant 0 : index
    %c0_122 = arith.constant 0 : index
    %237 = vector.load %arg5[%c0_121, %c0_122] : memref<8x128xf32, #tpu.memory_space<vmem>>, vector<8x128xf32>
    tpu.vector_store %arg5[%c0_121, %c0_122], %235 {strides = array<i32>} : memref<8x128xf32, #tpu.memory_space<vmem>>, vector<8x128xf32>,
    %238 = vector.shape_cast %235 : vector<8x128xf32> to vector<8x1x128xf32>
    %239 = arith.truncf %238 : vector<8x1x128xf32> to vector<8x1x128xbf16>
    %c0_123 = arith.constant 0 : index
    %c6_124 = arith.constant 6 : index
    %c0_125 = arith.constant 0 : index
    %240 = vector.load %arg4[%c0_123, %c6_124, %c0_125] : memref<8x16x128xbf16, #tpu.memory_space<vmem>>, vector<8x1x128xbf16>
    tpu.vector_store %arg4[%c0_123, %c6_124, %c0_125], %239 {strides = array<i32>} : memref<8x16x128xbf16, #tpu.memory_space<vmem>>, vector<8x1x128xbf16>,
    %c7 = arith.constant 7 : index
    %c0_126 = arith.constant 0 : index
    %c0_127 = arith.constant 0 : index
    %241 = vector.load %arg2[%c7, %c0_126, %c0_127] : memref<16x8x512xf32, #tpu.memory_space<vmem>>, vector<1x8x512xf32>
    %242 = vector.shape_cast %241 : vector<1x8x512xf32> to vector<8x512xf32>
    %c0_128 = arith.constant 0 : index
    %c0_129 = arith.constant 0 : index
    %243 = vector.load %arg5[%c0_128, %c0_129] : memref<8x128xf32, #tpu.memory_space<vmem>>, vector<8x128xf32>
    %244 = arith.truncf %243 : vector<8x128xf32> to vector<8x128xbf16>
    %c0_130 = arith.constant 0 : index
    %c0_131 = arith.constant 0 : index
    %245 = vector.load %arg3[%c0_130, %c0_131] : memref<128x512xbf16, #tpu.memory_space<vmem>>, vector<128x512xbf16>
    %cst_132 = arith.constant dense<0.000000e+00> : vector<8x512xf32>
    %246 = tpu.matmul %244, %245, %cst_132 {dimension_numbers = #tpu.dot_dimension_numbers<[1], [0], [0], [1], [0, 0, 1, 1], [], []>} : vector<8x128xbf16>, vector<128x512xbf16>, vector<8x512xf32> -> vector<8x512xf32>
    %247 = arith.addf %242, %246 : vector<8x512xf32>
    %248 = vector.extract_strided_slice %247 {offsets = [0, 0], sizes = [8, 256], strides = [1, 1]} : vector<8x512xf32> to vector<8x256xf32>
    %249 = arith.negf %248 : vector<8x256xf32>
    %250 = math.exp %249 : vector<8x256xf32>
    %cst_133 = arith.constant 1.000000e+00 : f32
    %251 = vector.broadcast %cst_133 : f32 to vector<8x256xf32>
    %252 = arith.addf %251, %250 : vector<8x256xf32>
    %253 = arith.divf %251, %252 : vector<8x256xf32>
    %254 = vector.extract_strided_slice %253 {offsets = [0, 0], sizes = [8, 128], strides = [1, 1]} : vector<8x256xf32> to vector<8x128xf32>
    %255 = vector.extract_strided_slice %253 {offsets = [0, 128], sizes = [8, 128], strides = [1, 1]} : vector<8x256xf32> to vector<8x128xf32>
    %256 = vector.extract_strided_slice %247 {offsets = [0, 256], sizes = [8, 128], strides = [1, 1]} : vector<8x512xf32> to vector<8x128xf32>
    %257 = math.tanh %256 : vector<8x128xf32>
    %258 = vector.extract_strided_slice %247 {offsets = [0, 384], sizes = [8, 128], strides = [1, 1]} : vector<8x512xf32> to vector<8x128xf32>
    %259 = arith.negf %258 : vector<8x128xf32>
    %260 = math.exp %259 : vector<8x128xf32>
    %cst_134 = arith.constant 1.000000e+00 : f32
    %261 = vector.broadcast %cst_134 : f32 to vector<8x128xf32>
    %262 = arith.addf %261, %260 : vector<8x128xf32>
    %263 = arith.divf %261, %262 : vector<8x128xf32>
    %c0_135 = arith.constant 0 : index
    %c0_136 = arith.constant 0 : index
    %264 = vector.load %arg6[%c0_135, %c0_136] : memref<8x128xf32, #tpu.memory_space<vmem>>, vector<8x128xf32>
    %265 = arith.mulf %255, %264 : vector<8x128xf32>
    %266 = arith.mulf %254, %257 : vector<8x128xf32>
    %267 = arith.addf %265, %266 : vector<8x128xf32>
    %268 = math.tanh %267 : vector<8x128xf32>
    %269 = arith.mulf %263, %268 : vector<8x128xf32>
    %c0_137 = arith.constant 0 : index
    %c0_138 = arith.constant 0 : index
    %270 = vector.load %arg6[%c0_137, %c0_138] : memref<8x128xf32, #tpu.memory_space<vmem>>, vector<8x128xf32>
    tpu.vector_store %arg6[%c0_137, %c0_138], %267 {strides = array<i32>} : memref<8x128xf32, #tpu.memory_space<vmem>>, vector<8x128xf32>,
    %c0_139 = arith.constant 0 : index
    %c0_140 = arith.constant 0 : index
    %271 = vector.load %arg5[%c0_139, %c0_140] : memref<8x128xf32, #tpu.memory_space<vmem>>, vector<8x128xf32>
    tpu.vector_store %arg5[%c0_139, %c0_140], %269 {strides = array<i32>} : memref<8x128xf32, #tpu.memory_space<vmem>>, vector<8x128xf32>,
    %272 = vector.shape_cast %269 : vector<8x128xf32> to vector<8x1x128xf32>
    %273 = arith.truncf %272 : vector<8x1x128xf32> to vector<8x1x128xbf16>
    %c0_141 = arith.constant 0 : index
    %c7_142 = arith.constant 7 : index
    %c0_143 = arith.constant 0 : index
    %274 = vector.load %arg4[%c0_141, %c7_142, %c0_143] : memref<8x16x128xbf16, #tpu.memory_space<vmem>>, vector<8x1x128xbf16>
    tpu.vector_store %arg4[%c0_141, %c7_142, %c0_143], %273 {strides = array<i32>} : memref<8x16x128xbf16, #tpu.memory_space<vmem>>, vector<8x1x128xbf16>,
    %c8 = arith.constant 8 : index
    %c0_144 = arith.constant 0 : index
    %c0_145 = arith.constant 0 : index
    %275 = vector.load %arg2[%c8, %c0_144, %c0_145] : memref<16x8x512xf32, #tpu.memory_space<vmem>>, vector<1x8x512xf32>
    %276 = vector.shape_cast %275 : vector<1x8x512xf32> to vector<8x512xf32>
    %c0_146 = arith.constant 0 : index
    %c0_147 = arith.constant 0 : index
    %277 = vector.load %arg5[%c0_146, %c0_147] : memref<8x128xf32, #tpu.memory_space<vmem>>, vector<8x128xf32>
    %278 = arith.truncf %277 : vector<8x128xf32> to vector<8x128xbf16>
    %c0_148 = arith.constant 0 : index
    %c0_149 = arith.constant 0 : index
    %279 = vector.load %arg3[%c0_148, %c0_149] : memref<128x512xbf16, #tpu.memory_space<vmem>>, vector<128x512xbf16>
    %cst_150 = arith.constant dense<0.000000e+00> : vector<8x512xf32>
    %280 = tpu.matmul %278, %279, %cst_150 {dimension_numbers = #tpu.dot_dimension_numbers<[1], [0], [0], [1], [0, 0, 1, 1], [], []>} : vector<8x128xbf16>, vector<128x512xbf16>, vector<8x512xf32> -> vector<8x512xf32>
    %281 = arith.addf %276, %280 : vector<8x512xf32>
    %282 = vector.extract_strided_slice %281 {offsets = [0, 0], sizes = [8, 256], strides = [1, 1]} : vector<8x512xf32> to vector<8x256xf32>
    %283 = arith.negf %282 : vector<8x256xf32>
    %284 = math.exp %283 : vector<8x256xf32>
    %cst_151 = arith.constant 1.000000e+00 : f32
    %285 = vector.broadcast %cst_151 : f32 to vector<8x256xf32>
    %286 = arith.addf %285, %284 : vector<8x256xf32>
    %287 = arith.divf %285, %286 : vector<8x256xf32>
    %288 = vector.extract_strided_slice %287 {offsets = [0, 0], sizes = [8, 128], strides = [1, 1]} : vector<8x256xf32> to vector<8x128xf32>
    %289 = vector.extract_strided_slice %287 {offsets = [0, 128], sizes = [8, 128], strides = [1, 1]} : vector<8x256xf32> to vector<8x128xf32>
    %290 = vector.extract_strided_slice %281 {offsets = [0, 256], sizes = [8, 128], strides = [1, 1]} : vector<8x512xf32> to vector<8x128xf32>
    %291 = math.tanh %290 : vector<8x128xf32>
    %292 = vector.extract_strided_slice %281 {offsets = [0, 384], sizes = [8, 128], strides = [1, 1]} : vector<8x512xf32> to vector<8x128xf32>
    %293 = arith.negf %292 : vector<8x128xf32>
    %294 = math.exp %293 : vector<8x128xf32>
    %cst_152 = arith.constant 1.000000e+00 : f32
    %295 = vector.broadcast %cst_152 : f32 to vector<8x128xf32>
    %296 = arith.addf %295, %294 : vector<8x128xf32>
    %297 = arith.divf %295, %296 : vector<8x128xf32>
    %c0_153 = arith.constant 0 : index
    %c0_154 = arith.constant 0 : index
    %298 = vector.load %arg6[%c0_153, %c0_154] : memref<8x128xf32, #tpu.memory_space<vmem>>, vector<8x128xf32>
    %299 = arith.mulf %289, %298 : vector<8x128xf32>
    %300 = arith.mulf %288, %291 : vector<8x128xf32>
    %301 = arith.addf %299, %300 : vector<8x128xf32>
    %302 = math.tanh %301 : vector<8x128xf32>
    %303 = arith.mulf %297, %302 : vector<8x128xf32>
    %c0_155 = arith.constant 0 : index
    %c0_156 = arith.constant 0 : index
    %304 = vector.load %arg6[%c0_155, %c0_156] : memref<8x128xf32, #tpu.memory_space<vmem>>, vector<8x128xf32>
    tpu.vector_store %arg6[%c0_155, %c0_156], %301 {strides = array<i32>} : memref<8x128xf32, #tpu.memory_space<vmem>>, vector<8x128xf32>,
    %c0_157 = arith.constant 0 : index
    %c0_158 = arith.constant 0 : index
    %305 = vector.load %arg5[%c0_157, %c0_158] : memref<8x128xf32, #tpu.memory_space<vmem>>, vector<8x128xf32>
    tpu.vector_store %arg5[%c0_157, %c0_158], %303 {strides = array<i32>} : memref<8x128xf32, #tpu.memory_space<vmem>>, vector<8x128xf32>,
    %306 = vector.shape_cast %303 : vector<8x128xf32> to vector<8x1x128xf32>
    %307 = arith.truncf %306 : vector<8x1x128xf32> to vector<8x1x128xbf16>
    %c0_159 = arith.constant 0 : index
    %c8_160 = arith.constant 8 : index
    %c0_161 = arith.constant 0 : index
    %308 = vector.load %arg4[%c0_159, %c8_160, %c0_161] : memref<8x16x128xbf16, #tpu.memory_space<vmem>>, vector<8x1x128xbf16>
    tpu.vector_store %arg4[%c0_159, %c8_160, %c0_161], %307 {strides = array<i32>} : memref<8x16x128xbf16, #tpu.memory_space<vmem>>, vector<8x1x128xbf16>,
    %c9 = arith.constant 9 : index
    %c0_162 = arith.constant 0 : index
    %c0_163 = arith.constant 0 : index
    %309 = vector.load %arg2[%c9, %c0_162, %c0_163] : memref<16x8x512xf32, #tpu.memory_space<vmem>>, vector<1x8x512xf32>
    %310 = vector.shape_cast %309 : vector<1x8x512xf32> to vector<8x512xf32>
    %c0_164 = arith.constant 0 : index
    %c0_165 = arith.constant 0 : index
    %311 = vector.load %arg5[%c0_164, %c0_165] : memref<8x128xf32, #tpu.memory_space<vmem>>, vector<8x128xf32>
    %312 = arith.truncf %311 : vector<8x128xf32> to vector<8x128xbf16>
    %c0_166 = arith.constant 0 : index
    %c0_167 = arith.constant 0 : index
    %313 = vector.load %arg3[%c0_166, %c0_167] : memref<128x512xbf16, #tpu.memory_space<vmem>>, vector<128x512xbf16>
    %cst_168 = arith.constant dense<0.000000e+00> : vector<8x512xf32>
    %314 = tpu.matmul %312, %313, %cst_168 {dimension_numbers = #tpu.dot_dimension_numbers<[1], [0], [0], [1], [0, 0, 1, 1], [], []>} : vector<8x128xbf16>, vector<128x512xbf16>, vector<8x512xf32> -> vector<8x512xf32>
    %315 = arith.addf %310, %314 : vector<8x512xf32>
    %316 = vector.extract_strided_slice %315 {offsets = [0, 0], sizes = [8, 256], strides = [1, 1]} : vector<8x512xf32> to vector<8x256xf32>
    %317 = arith.negf %316 : vector<8x256xf32>
    %318 = math.exp %317 : vector<8x256xf32>
    %cst_169 = arith.constant 1.000000e+00 : f32
    %319 = vector.broadcast %cst_169 : f32 to vector<8x256xf32>
    %320 = arith.addf %319, %318 : vector<8x256xf32>
    %321 = arith.divf %319, %320 : vector<8x256xf32>
    %322 = vector.extract_strided_slice %321 {offsets = [0, 0], sizes = [8, 128], strides = [1, 1]} : vector<8x256xf32> to vector<8x128xf32>
    %323 = vector.extract_strided_slice %321 {offsets = [0, 128], sizes = [8, 128], strides = [1, 1]} : vector<8x256xf32> to vector<8x128xf32>
    %324 = vector.extract_strided_slice %315 {offsets = [0, 256], sizes = [8, 128], strides = [1, 1]} : vector<8x512xf32> to vector<8x128xf32>
    %325 = math.tanh %324 : vector<8x128xf32>
    %326 = vector.extract_strided_slice %315 {offsets = [0, 384], sizes = [8, 128], strides = [1, 1]} : vector<8x512xf32> to vector<8x128xf32>
    %327 = arith.negf %326 : vector<8x128xf32>
    %328 = math.exp %327 : vector<8x128xf32>
    %cst_170 = arith.constant 1.000000e+00 : f32
    %329 = vector.broadcast %cst_170 : f32 to vector<8x128xf32>
    %330 = arith.addf %329, %328 : vector<8x128xf32>
    %331 = arith.divf %329, %330 : vector<8x128xf32>
    %c0_171 = arith.constant 0 : index
    %c0_172 = arith.constant 0 : index
    %332 = vector.load %arg6[%c0_171, %c0_172] : memref<8x128xf32, #tpu.memory_space<vmem>>, vector<8x128xf32>
    %333 = arith.mulf %323, %332 : vector<8x128xf32>
    %334 = arith.mulf %322, %325 : vector<8x128xf32>
    %335 = arith.addf %333, %334 : vector<8x128xf32>
    %336 = math.tanh %335 : vector<8x128xf32>
    %337 = arith.mulf %331, %336 : vector<8x128xf32>
    %c0_173 = arith.constant 0 : index
    %c0_174 = arith.constant 0 : index
    %338 = vector.load %arg6[%c0_173, %c0_174] : memref<8x128xf32, #tpu.memory_space<vmem>>, vector<8x128xf32>
    tpu.vector_store %arg6[%c0_173, %c0_174], %335 {strides = array<i32>} : memref<8x128xf32, #tpu.memory_space<vmem>>, vector<8x128xf32>,
    %c0_175 = arith.constant 0 : index
    %c0_176 = arith.constant 0 : index
    %339 = vector.load %arg5[%c0_175, %c0_176] : memref<8x128xf32, #tpu.memory_space<vmem>>, vector<8x128xf32>
    tpu.vector_store %arg5[%c0_175, %c0_176], %337 {strides = array<i32>} : memref<8x128xf32, #tpu.memory_space<vmem>>, vector<8x128xf32>,
    %340 = vector.shape_cast %337 : vector<8x128xf32> to vector<8x1x128xf32>
    %341 = arith.truncf %340 : vector<8x1x128xf32> to vector<8x1x128xbf16>
    %c0_177 = arith.constant 0 : index
    %c9_178 = arith.constant 9 : index
    %c0_179 = arith.constant 0 : index
    %342 = vector.load %arg4[%c0_177, %c9_178, %c0_179] : memref<8x16x128xbf16, #tpu.memory_space<vmem>>, vector<8x1x128xbf16>
    tpu.vector_store %arg4[%c0_177, %c9_178, %c0_179], %341 {strides = array<i32>} : memref<8x16x128xbf16, #tpu.memory_space<vmem>>, vector<8x1x128xbf16>,
    %c10 = arith.constant 10 : index
    %c0_180 = arith.constant 0 : index
    %c0_181 = arith.constant 0 : index
    %343 = vector.load %arg2[%c10, %c0_180, %c0_181] : memref<16x8x512xf32, #tpu.memory_space<vmem>>, vector<1x8x512xf32>
    %344 = vector.shape_cast %343 : vector<1x8x512xf32> to vector<8x512xf32>
    %c0_182 = arith.constant 0 : index
    %c0_183 = arith.constant 0 : index
    %345 = vector.load %arg5[%c0_182, %c0_183] : memref<8x128xf32, #tpu.memory_space<vmem>>, vector<8x128xf32>
    %346 = arith.truncf %345 : vector<8x128xf32> to vector<8x128xbf16>
    %c0_184 = arith.constant 0 : index
    %c0_185 = arith.constant 0 : index
    %347 = vector.load %arg3[%c0_184, %c0_185] : memref<128x512xbf16, #tpu.memory_space<vmem>>, vector<128x512xbf16>
    %cst_186 = arith.constant dense<0.000000e+00> : vector<8x512xf32>
    %348 = tpu.matmul %346, %347, %cst_186 {dimension_numbers = #tpu.dot_dimension_numbers<[1], [0], [0], [1], [0, 0, 1, 1], [], []>} : vector<8x128xbf16>, vector<128x512xbf16>, vector<8x512xf32> -> vector<8x512xf32>
    %349 = arith.addf %344, %348 : vector<8x512xf32>
    %350 = vector.extract_strided_slice %349 {offsets = [0, 0], sizes = [8, 256], strides = [1, 1]} : vector<8x512xf32> to vector<8x256xf32>
    %351 = arith.negf %350 : vector<8x256xf32>
    %352 = math.exp %351 : vector<8x256xf32>
    %cst_187 = arith.constant 1.000000e+00 : f32
    %353 = vector.broadcast %cst_187 : f32 to vector<8x256xf32>
    %354 = arith.addf %353, %352 : vector<8x256xf32>
    %355 = arith.divf %353, %354 : vector<8x256xf32>
    %356 = vector.extract_strided_slice %355 {offsets = [0, 0], sizes = [8, 128], strides = [1, 1]} : vector<8x256xf32> to vector<8x128xf32>
    %357 = vector.extract_strided_slice %355 {offsets = [0, 128], sizes = [8, 128], strides = [1, 1]} : vector<8x256xf32> to vector<8x128xf32>
    %358 = vector.extract_strided_slice %349 {offsets = [0, 256], sizes = [8, 128], strides = [1, 1]} : vector<8x512xf32> to vector<8x128xf32>
    %359 = math.tanh %358 : vector<8x128xf32>
    %360 = vector.extract_strided_slice %349 {offsets = [0, 384], sizes = [8, 128], strides = [1, 1]} : vector<8x512xf32> to vector<8x128xf32>
    %361 = arith.negf %360 : vector<8x128xf32>
    %362 = math.exp %361 : vector<8x128xf32>
    %cst_188 = arith.constant 1.000000e+00 : f32
    %363 = vector.broadcast %cst_188 : f32 to vector<8x128xf32>
    %364 = arith.addf %363, %362 : vector<8x128xf32>
    %365 = arith.divf %363, %364 : vector<8x128xf32>
    %c0_189 = arith.constant 0 : index
    %c0_190 = arith.constant 0 : index
    %366 = vector.load %arg6[%c0_189, %c0_190] : memref<8x128xf32, #tpu.memory_space<vmem>>, vector<8x128xf32>
    %367 = arith.mulf %357, %366 : vector<8x128xf32>
    %368 = arith.mulf %356, %359 : vector<8x128xf32>
    %369 = arith.addf %367, %368 : vector<8x128xf32>
    %370 = math.tanh %369 : vector<8x128xf32>
    %371 = arith.mulf %365, %370 : vector<8x128xf32>
    %c0_191 = arith.constant 0 : index
    %c0_192 = arith.constant 0 : index
    %372 = vector.load %arg6[%c0_191, %c0_192] : memref<8x128xf32, #tpu.memory_space<vmem>>, vector<8x128xf32>
    tpu.vector_store %arg6[%c0_191, %c0_192], %369 {strides = array<i32>} : memref<8x128xf32, #tpu.memory_space<vmem>>, vector<8x128xf32>,
    %c0_193 = arith.constant 0 : index
    %c0_194 = arith.constant 0 : index
    %373 = vector.load %arg5[%c0_193, %c0_194] : memref<8x128xf32, #tpu.memory_space<vmem>>, vector<8x128xf32>
    tpu.vector_store %arg5[%c0_193, %c0_194], %371 {strides = array<i32>} : memref<8x128xf32, #tpu.memory_space<vmem>>, vector<8x128xf32>,
    %374 = vector.shape_cast %371 : vector<8x128xf32> to vector<8x1x128xf32>
    %375 = arith.truncf %374 : vector<8x1x128xf32> to vector<8x1x128xbf16>
    %c0_195 = arith.constant 0 : index
    %c10_196 = arith.constant 10 : index
    %c0_197 = arith.constant 0 : index
    %376 = vector.load %arg4[%c0_195, %c10_196, %c0_197] : memref<8x16x128xbf16, #tpu.memory_space<vmem>>, vector<8x1x128xbf16>
    tpu.vector_store %arg4[%c0_195, %c10_196, %c0_197], %375 {strides = array<i32>} : memref<8x16x128xbf16, #tpu.memory_space<vmem>>, vector<8x1x128xbf16>,
    %c11 = arith.constant 11 : index
    %c0_198 = arith.constant 0 : index
    %c0_199 = arith.constant 0 : index
    %377 = vector.load %arg2[%c11, %c0_198, %c0_199] : memref<16x8x512xf32, #tpu.memory_space<vmem>>, vector<1x8x512xf32>
    %378 = vector.shape_cast %377 : vector<1x8x512xf32> to vector<8x512xf32>
    %c0_200 = arith.constant 0 : index
    %c0_201 = arith.constant 0 : index
    %379 = vector.load %arg5[%c0_200, %c0_201] : memref<8x128xf32, #tpu.memory_space<vmem>>, vector<8x128xf32>
    %380 = arith.truncf %379 : vector<8x128xf32> to vector<8x128xbf16>
    %c0_202 = arith.constant 0 : index
    %c0_203 = arith.constant 0 : index
    %381 = vector.load %arg3[%c0_202, %c0_203] : memref<128x512xbf16, #tpu.memory_space<vmem>>, vector<128x512xbf16>
    %cst_204 = arith.constant dense<0.000000e+00> : vector<8x512xf32>
    %382 = tpu.matmul %380, %381, %cst_204 {dimension_numbers = #tpu.dot_dimension_numbers<[1], [0], [0], [1], [0, 0, 1, 1], [], []>} : vector<8x128xbf16>, vector<128x512xbf16>, vector<8x512xf32> -> vector<8x512xf32>
    %383 = arith.addf %378, %382 : vector<8x512xf32>
    %384 = vector.extract_strided_slice %383 {offsets = [0, 0], sizes = [8, 256], strides = [1, 1]} : vector<8x512xf32> to vector<8x256xf32>
    %385 = arith.negf %384 : vector<8x256xf32>
    %386 = math.exp %385 : vector<8x256xf32>
    %cst_205 = arith.constant 1.000000e+00 : f32
    %387 = vector.broadcast %cst_205 : f32 to vector<8x256xf32>
    %388 = arith.addf %387, %386 : vector<8x256xf32>
    %389 = arith.divf %387, %388 : vector<8x256xf32>
    %390 = vector.extract_strided_slice %389 {offsets = [0, 0], sizes = [8, 128], strides = [1, 1]} : vector<8x256xf32> to vector<8x128xf32>
    %391 = vector.extract_strided_slice %389 {offsets = [0, 128], sizes = [8, 128], strides = [1, 1]} : vector<8x256xf32> to vector<8x128xf32>
    %392 = vector.extract_strided_slice %383 {offsets = [0, 256], sizes = [8, 128], strides = [1, 1]} : vector<8x512xf32> to vector<8x128xf32>
    %393 = math.tanh %392 : vector<8x128xf32>
    %394 = vector.extract_strided_slice %383 {offsets = [0, 384], sizes = [8, 128], strides = [1, 1]} : vector<8x512xf32> to vector<8x128xf32>
    %395 = arith.negf %394 : vector<8x128xf32>
    %396 = math.exp %395 : vector<8x128xf32>
    %cst_206 = arith.constant 1.000000e+00 : f32
    %397 = vector.broadcast %cst_206 : f32 to vector<8x128xf32>
    %398 = arith.addf %397, %396 : vector<8x128xf32>
    %399 = arith.divf %397, %398 : vector<8x128xf32>
    %c0_207 = arith.constant 0 : index
    %c0_208 = arith.constant 0 : index
    %400 = vector.load %arg6[%c0_207, %c0_208] : memref<8x128xf32, #tpu.memory_space<vmem>>, vector<8x128xf32>
    %401 = arith.mulf %391, %400 : vector<8x128xf32>
    %402 = arith.mulf %390, %393 : vector<8x128xf32>
    %403 = arith.addf %401, %402 : vector<8x128xf32>
    %404 = math.tanh %403 : vector<8x128xf32>
    %405 = arith.mulf %399, %404 : vector<8x128xf32>
    %c0_209 = arith.constant 0 : index
    %c0_210 = arith.constant 0 : index
    %406 = vector.load %arg6[%c0_209, %c0_210] : memref<8x128xf32, #tpu.memory_space<vmem>>, vector<8x128xf32>
    tpu.vector_store %arg6[%c0_209, %c0_210], %403 {strides = array<i32>} : memref<8x128xf32, #tpu.memory_space<vmem>>, vector<8x128xf32>,
    %c0_211 = arith.constant 0 : index
    %c0_212 = arith.constant 0 : index
    %407 = vector.load %arg5[%c0_211, %c0_212] : memref<8x128xf32, #tpu.memory_space<vmem>>, vector<8x128xf32>
    tpu.vector_store %arg5[%c0_211, %c0_212], %405 {strides = array<i32>} : memref<8x128xf32, #tpu.memory_space<vmem>>, vector<8x128xf32>,
    %408 = vector.shape_cast %405 : vector<8x128xf32> to vector<8x1x128xf32>
    %409 = arith.truncf %408 : vector<8x1x128xf32> to vector<8x1x128xbf16>
    %c0_213 = arith.constant 0 : index
    %c11_214 = arith.constant 11 : index
    %c0_215 = arith.constant 0 : index
    %410 = vector.load %arg4[%c0_213, %c11_214, %c0_215] : memref<8x16x128xbf16, #tpu.memory_space<vmem>>, vector<8x1x128xbf16>
    tpu.vector_store %arg4[%c0_213, %c11_214, %c0_215], %409 {strides = array<i32>} : memref<8x16x128xbf16, #tpu.memory_space<vmem>>, vector<8x1x128xbf16>,
    %c12 = arith.constant 12 : index
    %c0_216 = arith.constant 0 : index
    %c0_217 = arith.constant 0 : index
    %411 = vector.load %arg2[%c12, %c0_216, %c0_217] : memref<16x8x512xf32, #tpu.memory_space<vmem>>, vector<1x8x512xf32>
    %412 = vector.shape_cast %411 : vector<1x8x512xf32> to vector<8x512xf32>
    %c0_218 = arith.constant 0 : index
    %c0_219 = arith.constant 0 : index
    %413 = vector.load %arg5[%c0_218, %c0_219] : memref<8x128xf32, #tpu.memory_space<vmem>>, vector<8x128xf32>
    %414 = arith.truncf %413 : vector<8x128xf32> to vector<8x128xbf16>
    %c0_220 = arith.constant 0 : index
    %c0_221 = arith.constant 0 : index
    %415 = vector.load %arg3[%c0_220, %c0_221] : memref<128x512xbf16, #tpu.memory_space<vmem>>, vector<128x512xbf16>
    %cst_222 = arith.constant dense<0.000000e+00> : vector<8x512xf32>
    %416 = tpu.matmul %414, %415, %cst_222 {dimension_numbers = #tpu.dot_dimension_numbers<[1], [0], [0], [1], [0, 0, 1, 1], [], []>} : vector<8x128xbf16>, vector<128x512xbf16>, vector<8x512xf32> -> vector<8x512xf32>
    %417 = arith.addf %412, %416 : vector<8x512xf32>
    %418 = vector.extract_strided_slice %417 {offsets = [0, 0], sizes = [8, 256], strides = [1, 1]} : vector<8x512xf32> to vector<8x256xf32>
    %419 = arith.negf %418 : vector<8x256xf32>
    %420 = math.exp %419 : vector<8x256xf32>
    %cst_223 = arith.constant 1.000000e+00 : f32
    %421 = vector.broadcast %cst_223 : f32 to vector<8x256xf32>
    %422 = arith.addf %421, %420 : vector<8x256xf32>
    %423 = arith.divf %421, %422 : vector<8x256xf32>
    %424 = vector.extract_strided_slice %423 {offsets = [0, 0], sizes = [8, 128], strides = [1, 1]} : vector<8x256xf32> to vector<8x128xf32>
    %425 = vector.extract_strided_slice %423 {offsets = [0, 128], sizes = [8, 128], strides = [1, 1]} : vector<8x256xf32> to vector<8x128xf32>
    %426 = vector.extract_strided_slice %417 {offsets = [0, 256], sizes = [8, 128], strides = [1, 1]} : vector<8x512xf32> to vector<8x128xf32>
    %427 = math.tanh %426 : vector<8x128xf32>
    %428 = vector.extract_strided_slice %417 {offsets = [0, 384], sizes = [8, 128], strides = [1, 1]} : vector<8x512xf32> to vector<8x128xf32>
    %429 = arith.negf %428 : vector<8x128xf32>
    %430 = math.exp %429 : vector<8x128xf32>
    %cst_224 = arith.constant 1.000000e+00 : f32
    %431 = vector.broadcast %cst_224 : f32 to vector<8x128xf32>
    %432 = arith.addf %431, %430 : vector<8x128xf32>
    %433 = arith.divf %431, %432 : vector<8x128xf32>
    %c0_225 = arith.constant 0 : index
    %c0_226 = arith.constant 0 : index
    %434 = vector.load %arg6[%c0_225, %c0_226] : memref<8x128xf32, #tpu.memory_space<vmem>>, vector<8x128xf32>
    %435 = arith.mulf %425, %434 : vector<8x128xf32>
    %436 = arith.mulf %424, %427 : vector<8x128xf32>
    %437 = arith.addf %435, %436 : vector<8x128xf32>
    %438 = math.tanh %437 : vector<8x128xf32>
    %439 = arith.mulf %433, %438 : vector<8x128xf32>
    %c0_227 = arith.constant 0 : index
    %c0_228 = arith.constant 0 : index
    %440 = vector.load %arg6[%c0_227, %c0_228] : memref<8x128xf32, #tpu.memory_space<vmem>>, vector<8x128xf32>
    tpu.vector_store %arg6[%c0_227, %c0_228], %437 {strides = array<i32>} : memref<8x128xf32, #tpu.memory_space<vmem>>, vector<8x128xf32>,
    %c0_229 = arith.constant 0 : index
    %c0_230 = arith.constant 0 : index
    %441 = vector.load %arg5[%c0_229, %c0_230] : memref<8x128xf32, #tpu.memory_space<vmem>>, vector<8x128xf32>
    tpu.vector_store %arg5[%c0_229, %c0_230], %439 {strides = array<i32>} : memref<8x128xf32, #tpu.memory_space<vmem>>, vector<8x128xf32>,
    %442 = vector.shape_cast %439 : vector<8x128xf32> to vector<8x1x128xf32>
    %443 = arith.truncf %442 : vector<8x1x128xf32> to vector<8x1x128xbf16>
    %c0_231 = arith.constant 0 : index
    %c12_232 = arith.constant 12 : index
    %c0_233 = arith.constant 0 : index
    %444 = vector.load %arg4[%c0_231, %c12_232, %c0_233] : memref<8x16x128xbf16, #tpu.memory_space<vmem>>, vector<8x1x128xbf16>
    tpu.vector_store %arg4[%c0_231, %c12_232, %c0_233], %443 {strides = array<i32>} : memref<8x16x128xbf16, #tpu.memory_space<vmem>>, vector<8x1x128xbf16>,
    %c13 = arith.constant 13 : index
    %c0_234 = arith.constant 0 : index
    %c0_235 = arith.constant 0 : index
    %445 = vector.load %arg2[%c13, %c0_234, %c0_235] : memref<16x8x512xf32, #tpu.memory_space<vmem>>, vector<1x8x512xf32>
    %446 = vector.shape_cast %445 : vector<1x8x512xf32> to vector<8x512xf32>
    %c0_236 = arith.constant 0 : index
    %c0_237 = arith.constant 0 : index
    %447 = vector.load %arg5[%c0_236, %c0_237] : memref<8x128xf32, #tpu.memory_space<vmem>>, vector<8x128xf32>
    %448 = arith.truncf %447 : vector<8x128xf32> to vector<8x128xbf16>
    %c0_238 = arith.constant 0 : index
    %c0_239 = arith.constant 0 : index
    %449 = vector.load %arg3[%c0_238, %c0_239] : memref<128x512xbf16, #tpu.memory_space<vmem>>, vector<128x512xbf16>
    %cst_240 = arith.constant dense<0.000000e+00> : vector<8x512xf32>
    %450 = tpu.matmul %448, %449, %cst_240 {dimension_numbers = #tpu.dot_dimension_numbers<[1], [0], [0], [1], [0, 0, 1, 1], [], []>} : vector<8x128xbf16>, vector<128x512xbf16>, vector<8x512xf32> -> vector<8x512xf32>
    %451 = arith.addf %446, %450 : vector<8x512xf32>
    %452 = vector.extract_strided_slice %451 {offsets = [0, 0], sizes = [8, 256], strides = [1, 1]} : vector<8x512xf32> to vector<8x256xf32>
    %453 = arith.negf %452 : vector<8x256xf32>
    %454 = math.exp %453 : vector<8x256xf32>
    %cst_241 = arith.constant 1.000000e+00 : f32
    %455 = vector.broadcast %cst_241 : f32 to vector<8x256xf32>
    %456 = arith.addf %455, %454 : vector<8x256xf32>
    %457 = arith.divf %455, %456 : vector<8x256xf32>
    %458 = vector.extract_strided_slice %457 {offsets = [0, 0], sizes = [8, 128], strides = [1, 1]} : vector<8x256xf32> to vector<8x128xf32>
    %459 = vector.extract_strided_slice %457 {offsets = [0, 128], sizes = [8, 128], strides = [1, 1]} : vector<8x256xf32> to vector<8x128xf32>
    %460 = vector.extract_strided_slice %451 {offsets = [0, 256], sizes = [8, 128], strides = [1, 1]} : vector<8x512xf32> to vector<8x128xf32>
    %461 = math.tanh %460 : vector<8x128xf32>
    %462 = vector.extract_strided_slice %451 {offsets = [0, 384], sizes = [8, 128], strides = [1, 1]} : vector<8x512xf32> to vector<8x128xf32>
    %463 = arith.negf %462 : vector<8x128xf32>
    %464 = math.exp %463 : vector<8x128xf32>
    %cst_242 = arith.constant 1.000000e+00 : f32
    %465 = vector.broadcast %cst_242 : f32 to vector<8x128xf32>
    %466 = arith.addf %465, %464 : vector<8x128xf32>
    %467 = arith.divf %465, %466 : vector<8x128xf32>
    %c0_243 = arith.constant 0 : index
    %c0_244 = arith.constant 0 : index
    %468 = vector.load %arg6[%c0_243, %c0_244] : memref<8x128xf32, #tpu.memory_space<vmem>>, vector<8x128xf32>
    %469 = arith.mulf %459, %468 : vector<8x128xf32>
    %470 = arith.mulf %458, %461 : vector<8x128xf32>
    %471 = arith.addf %469, %470 : vector<8x128xf32>
    %472 = math.tanh %471 : vector<8x128xf32>
    %473 = arith.mulf %467, %472 : vector<8x128xf32>
    %c0_245 = arith.constant 0 : index
    %c0_246 = arith.constant 0 : index
    %474 = vector.load %arg6[%c0_245, %c0_246] : memref<8x128xf32, #tpu.memory_space<vmem>>, vector<8x128xf32>
    tpu.vector_store %arg6[%c0_245, %c0_246], %471 {strides = array<i32>} : memref<8x128xf32, #tpu.memory_space<vmem>>, vector<8x128xf32>,
    %c0_247 = arith.constant 0 : index
    %c0_248 = arith.constant 0 : index
    %475 = vector.load %arg5[%c0_247, %c0_248] : memref<8x128xf32, #tpu.memory_space<vmem>>, vector<8x128xf32>
    tpu.vector_store %arg5[%c0_247, %c0_248], %473 {strides = array<i32>} : memref<8x128xf32, #tpu.memory_space<vmem>>, vector<8x128xf32>,
    %476 = vector.shape_cast %473 : vector<8x128xf32> to vector<8x1x128xf32>
    %477 = arith.truncf %476 : vector<8x1x128xf32> to vector<8x1x128xbf16>
    %c0_249 = arith.constant 0 : index
    %c13_250 = arith.constant 13 : index
    %c0_251 = arith.constant 0 : index
    %478 = vector.load %arg4[%c0_249, %c13_250, %c0_251] : memref<8x16x128xbf16, #tpu.memory_space<vmem>>, vector<8x1x128xbf16>
    tpu.vector_store %arg4[%c0_249, %c13_250, %c0_251], %477 {strides = array<i32>} : memref<8x16x128xbf16, #tpu.memory_space<vmem>>, vector<8x1x128xbf16>,
    %c14 = arith.constant 14 : index
    %c0_252 = arith.constant 0 : index
    %c0_253 = arith.constant 0 : index
    %479 = vector.load %arg2[%c14, %c0_252, %c0_253] : memref<16x8x512xf32, #tpu.memory_space<vmem>>, vector<1x8x512xf32>
    %480 = vector.shape_cast %479 : vector<1x8x512xf32> to vector<8x512xf32>
    %c0_254 = arith.constant 0 : index
    %c0_255 = arith.constant 0 : index
    %481 = vector.load %arg5[%c0_254, %c0_255] : memref<8x128xf32, #tpu.memory_space<vmem>>, vector<8x128xf32>
    %482 = arith.truncf %481 : vector<8x128xf32> to vector<8x128xbf16>
    %c0_256 = arith.constant 0 : index
    %c0_257 = arith.constant 0 : index
    %483 = vector.load %arg3[%c0_256, %c0_257] : memref<128x512xbf16, #tpu.memory_space<vmem>>, vector<128x512xbf16>
    %cst_258 = arith.constant dense<0.000000e+00> : vector<8x512xf32>
    %484 = tpu.matmul %482, %483, %cst_258 {dimension_numbers = #tpu.dot_dimension_numbers<[1], [0], [0], [1], [0, 0, 1, 1], [], []>} : vector<8x128xbf16>, vector<128x512xbf16>, vector<8x512xf32> -> vector<8x512xf32>
    %485 = arith.addf %480, %484 : vector<8x512xf32>
    %486 = vector.extract_strided_slice %485 {offsets = [0, 0], sizes = [8, 256], strides = [1, 1]} : vector<8x512xf32> to vector<8x256xf32>
    %487 = arith.negf %486 : vector<8x256xf32>
    %488 = math.exp %487 : vector<8x256xf32>
    %cst_259 = arith.constant 1.000000e+00 : f32
    %489 = vector.broadcast %cst_259 : f32 to vector<8x256xf32>
    %490 = arith.addf %489, %488 : vector<8x256xf32>
    %491 = arith.divf %489, %490 : vector<8x256xf32>
    %492 = vector.extract_strided_slice %491 {offsets = [0, 0], sizes = [8, 128], strides = [1, 1]} : vector<8x256xf32> to vector<8x128xf32>
    %493 = vector.extract_strided_slice %491 {offsets = [0, 128], sizes = [8, 128], strides = [1, 1]} : vector<8x256xf32> to vector<8x128xf32>
    %494 = vector.extract_strided_slice %485 {offsets = [0, 256], sizes = [8, 128], strides = [1, 1]} : vector<8x512xf32> to vector<8x128xf32>
    %495 = math.tanh %494 : vector<8x128xf32>
    %496 = vector.extract_strided_slice %485 {offsets = [0, 384], sizes = [8, 128], strides = [1, 1]} : vector<8x512xf32> to vector<8x128xf32>
    %497 = arith.negf %496 : vector<8x128xf32>
    %498 = math.exp %497 : vector<8x128xf32>
    %cst_260 = arith.constant 1.000000e+00 : f32
    %499 = vector.broadcast %cst_260 : f32 to vector<8x128xf32>
    %500 = arith.addf %499, %498 : vector<8x128xf32>
    %501 = arith.divf %499, %500 : vector<8x128xf32>
    %c0_261 = arith.constant 0 : index
    %c0_262 = arith.constant 0 : index
    %502 = vector.load %arg6[%c0_261, %c0_262] : memref<8x128xf32, #tpu.memory_space<vmem>>, vector<8x128xf32>
    %503 = arith.mulf %493, %502 : vector<8x128xf32>
    %504 = arith.mulf %492, %495 : vector<8x128xf32>
    %505 = arith.addf %503, %504 : vector<8x128xf32>
    %506 = math.tanh %505 : vector<8x128xf32>
    %507 = arith.mulf %501, %506 : vector<8x128xf32>
    %c0_263 = arith.constant 0 : index
    %c0_264 = arith.constant 0 : index
    %508 = vector.load %arg6[%c0_263, %c0_264] : memref<8x128xf32, #tpu.memory_space<vmem>>, vector<8x128xf32>
    tpu.vector_store %arg6[%c0_263, %c0_264], %505 {strides = array<i32>} : memref<8x128xf32, #tpu.memory_space<vmem>>, vector<8x128xf32>,
    %c0_265 = arith.constant 0 : index
    %c0_266 = arith.constant 0 : index
    %509 = vector.load %arg5[%c0_265, %c0_266] : memref<8x128xf32, #tpu.memory_space<vmem>>, vector<8x128xf32>
    tpu.vector_store %arg5[%c0_265, %c0_266], %507 {strides = array<i32>} : memref<8x128xf32, #tpu.memory_space<vmem>>, vector<8x128xf32>,
    %510 = vector.shape_cast %507 : vector<8x128xf32> to vector<8x1x128xf32>
    %511 = arith.truncf %510 : vector<8x1x128xf32> to vector<8x1x128xbf16>
    %c0_267 = arith.constant 0 : index
    %c14_268 = arith.constant 14 : index
    %c0_269 = arith.constant 0 : index
    %512 = vector.load %arg4[%c0_267, %c14_268, %c0_269] : memref<8x16x128xbf16, #tpu.memory_space<vmem>>, vector<8x1x128xbf16>
    tpu.vector_store %arg4[%c0_267, %c14_268, %c0_269], %511 {strides = array<i32>} : memref<8x16x128xbf16, #tpu.memory_space<vmem>>, vector<8x1x128xbf16>,
    %c15 = arith.constant 15 : index
    %c0_270 = arith.constant 0 : index
    %c0_271 = arith.constant 0 : index
    %513 = vector.load %arg2[%c15, %c0_270, %c0_271] : memref<16x8x512xf32, #tpu.memory_space<vmem>>, vector<1x8x512xf32>
    %514 = vector.shape_cast %513 : vector<1x8x512xf32> to vector<8x512xf32>
    %c0_272 = arith.constant 0 : index
    %c0_273 = arith.constant 0 : index
    %515 = vector.load %arg5[%c0_272, %c0_273] : memref<8x128xf32, #tpu.memory_space<vmem>>, vector<8x128xf32>
    %516 = arith.truncf %515 : vector<8x128xf32> to vector<8x128xbf16>
    %c0_274 = arith.constant 0 : index
    %c0_275 = arith.constant 0 : index
    %517 = vector.load %arg3[%c0_274, %c0_275] : memref<128x512xbf16, #tpu.memory_space<vmem>>, vector<128x512xbf16>
    %cst_276 = arith.constant dense<0.000000e+00> : vector<8x512xf32>
    %518 = tpu.matmul %516, %517, %cst_276 {dimension_numbers = #tpu.dot_dimension_numbers<[1], [0], [0], [1], [0, 0, 1, 1], [], []>} : vector<8x128xbf16>, vector<128x512xbf16>, vector<8x512xf32> -> vector<8x512xf32>
    %519 = arith.addf %514, %518 : vector<8x512xf32>
    %520 = vector.extract_strided_slice %519 {offsets = [0, 0], sizes = [8, 256], strides = [1, 1]} : vector<8x512xf32> to vector<8x256xf32>
    %521 = arith.negf %520 : vector<8x256xf32>
    %522 = math.exp %521 : vector<8x256xf32>
    %cst_277 = arith.constant 1.000000e+00 : f32
    %523 = vector.broadcast %cst_277 : f32 to vector<8x256xf32>
    %524 = arith.addf %523, %522 : vector<8x256xf32>
    %525 = arith.divf %523, %524 : vector<8x256xf32>
    %526 = vector.extract_strided_slice %525 {offsets = [0, 0], sizes = [8, 128], strides = [1, 1]} : vector<8x256xf32> to vector<8x128xf32>
    %527 = vector.extract_strided_slice %525 {offsets = [0, 128], sizes = [8, 128], strides = [1, 1]} : vector<8x256xf32> to vector<8x128xf32>
    %528 = vector.extract_strided_slice %519 {offsets = [0, 256], sizes = [8, 128], strides = [1, 1]} : vector<8x512xf32> to vector<8x128xf32>
    %529 = math.tanh %528 : vector<8x128xf32>
    %530 = vector.extract_strided_slice %519 {offsets = [0, 384], sizes = [8, 128], strides = [1, 1]} : vector<8x512xf32> to vector<8x128xf32>
    %531 = arith.negf %530 : vector<8x128xf32>
    %532 = math.exp %531 : vector<8x128xf32>
    %cst_278 = arith.constant 1.000000e+00 : f32
    %533 = vector.broadcast %cst_278 : f32 to vector<8x128xf32>
    %534 = arith.addf %533, %532 : vector<8x128xf32>
    %535 = arith.divf %533, %534 : vector<8x128xf32>
    %c0_279 = arith.constant 0 : index
    %c0_280 = arith.constant 0 : index
    %536 = vector.load %arg6[%c0_279, %c0_280] : memref<8x128xf32, #tpu.memory_space<vmem>>, vector<8x128xf32>
    %537 = arith.mulf %527, %536 : vector<8x128xf32>
    %538 = arith.mulf %526, %529 : vector<8x128xf32>
    %539 = arith.addf %537, %538 : vector<8x128xf32>
    %540 = math.tanh %539 : vector<8x128xf32>
    %541 = arith.mulf %535, %540 : vector<8x128xf32>
    %c0_281 = arith.constant 0 : index
    %c0_282 = arith.constant 0 : index
    %542 = vector.load %arg6[%c0_281, %c0_282] : memref<8x128xf32, #tpu.memory_space<vmem>>, vector<8x128xf32>
    tpu.vector_store %arg6[%c0_281, %c0_282], %539 {strides = array<i32>} : memref<8x128xf32, #tpu.memory_space<vmem>>, vector<8x128xf32>,
    %c0_283 = arith.constant 0 : index
    %c0_284 = arith.constant 0 : index
    %543 = vector.load %arg5[%c0_283, %c0_284] : memref<8x128xf32, #tpu.memory_space<vmem>>, vector<8x128xf32>
    tpu.vector_store %arg5[%c0_283, %c0_284], %541 {strides = array<i32>} : memref<8x128xf32, #tpu.memory_space<vmem>>, vector<8x128xf32>,
    %544 = vector.shape_cast %541 : vector<8x128xf32> to vector<8x1x128xf32>
    %545 = arith.truncf %544 : vector<8x1x128xf32> to vector<8x1x128xbf16>
    %c0_285 = arith.constant 0 : index
    %c15_286 = arith.constant 15 : index
    %c0_287 = arith.constant 0 : index
    %546 = vector.load %arg4[%c0_285, %c15_286, %c0_287] : memref<8x16x128xbf16, #tpu.memory_space<vmem>>, vector<8x1x128xbf16>
    tpu.vector_store %arg4[%c0_285, %c15_286, %c0_287], %545 {strides = array<i32>} : memref<8x16x128xbf16, #tpu.memory_space<vmem>>, vector<8x1x128xbf16>,
    return
  }
  func.func @transform_0(%arg0: i32, %arg1: i32) -> (i32, i32, i32) {
    %c0_i32 = arith.constant 0 : i32
    %c0_i32_0 = arith.constant 0 : i32
    return %arg1, %arg0, %c0_i32 : i32, i32, i32
  }
  func.func @transform_1(%arg0: i32, %arg1: i32) -> (i32, i32) {
    %c0_i32 = arith.constant 0 : i32
    %c0_i32_0 = arith.constant 0 : i32
    %c0_i32_1 = arith.constant 0 : i32
    return %c0_i32, %c0_i32_0 : i32, i32
  }
  func.func @transform_2(%arg0: i32, %arg1: i32) -> (i32, i32, i32) {
    %c0_i32 = arith.constant 0 : i32
    %c0_i32_0 = arith.constant 0 : i32
    return %arg0, %arg1, %c0_i32 : i32, i32, i32
  }
}

module attributes {stable_mosaic.version = 11 : i64} {
  func.func @_matmul_bias_kernel(%arg0: i32, %arg1: i32, %arg2: memref<128x128xbf16, #tpu.memory_space<vmem>>, %arg3: memref<128x1024xbf16, #tpu.memory_space<vmem>>, %arg4: memref<1x1024xf32, #tpu.memory_space<vmem>>, %arg5: memref<128x1024xf32, #tpu.memory_space<vmem>>) attributes {dimension_semantics = [#tpu.dimension_semantics<parallel>, #tpu.dimension_semantics<parallel>], iteration_bounds = array<i64: 1, 1>, scalar_prefetch = 0 : i64, scratch_operands = 0 : i64, tpu.core_type = #tpu.core_type<tc>, window_params = [{transform_indices = @transform_0, window_bounds = array<i64: 128, 128>}, {transform_indices = @transform_1, window_bounds = array<i64: 128, 1024>}, {transform_indices = @transform_2, window_bounds = array<i64: 1, 1024>}, {transform_indices = @transform_3, window_bounds = array<i64: 128, 1024>}]} {
    %c0 = arith.constant 0 : index
    %c0_0 = arith.constant 0 : index
    %0 = vector.load %arg2[%c0, %c0_0] : memref<128x128xbf16, #tpu.memory_space<vmem>>, vector<128x128xbf16>
    %c0_1 = arith.constant 0 : index
    %c0_2 = arith.constant 0 : index
    %1 = vector.load %arg3[%c0_1, %c0_2] : memref<128x1024xbf16, #tpu.memory_space<vmem>>, vector<128x1024xbf16>
    %cst = arith.constant dense<0.000000e+00> : vector<128x1024xf32>
    %2 = tpu.matmul %0, %1, %cst {dimension_numbers = #tpu.dot_dimension_numbers<[1], [0], [0], [1], [0, 0, 1, 1], [], []>} : vector<128x128xbf16>, vector<128x1024xbf16>, vector<128x1024xf32> -> vector<128x1024xf32>
    %c0_3 = arith.constant 0 : index
    %c0_4 = arith.constant 0 : index
    %3 = vector.load %arg4[%c0_3, %c0_4] : memref<1x1024xf32, #tpu.memory_space<vmem>>, vector<1x1024xf32>
    %4 = vector.broadcast %3 : vector<1x1024xf32> to vector<128x1024xf32>
    %5 = arith.addf %2, %4 : vector<128x1024xf32>
    %c0_5 = arith.constant 0 : index
    %c0_6 = arith.constant 0 : index
    %6 = vector.load %arg5[%c0_5, %c0_6] : memref<128x1024xf32, #tpu.memory_space<vmem>>, vector<128x1024xf32>
    tpu.vector_store %arg5[%c0_5, %c0_6], %5 {strides = array<i32>} : memref<128x1024xf32, #tpu.memory_space<vmem>>, vector<128x1024xf32>,
    return
  }
  func.func @transform_0(%arg0: i32, %arg1: i32) -> (i32, i32) {
    %c0_i32 = arith.constant 0 : i32
    %c0_i32_0 = arith.constant 0 : i32
    return %arg0, %c0_i32 : i32, i32
  }
  func.func @transform_1(%arg0: i32, %arg1: i32) -> (i32, i32) {
    %c0_i32 = arith.constant 0 : i32
    %c0_i32_0 = arith.constant 0 : i32
    return %c0_i32, %arg1 : i32, i32
  }
  func.func @transform_2(%arg0: i32, %arg1: i32) -> (i32, i32) {
    %c0_i32 = arith.constant 0 : i32
    %c0_i32_0 = arith.constant 0 : i32
    return %c0_i32, %arg1 : i32, i32
  }
  func.func @transform_3(%arg0: i32, %arg1: i32) -> (i32, i32) {
    %c0_i32 = arith.constant 0 : i32
    return %arg0, %arg1 : i32, i32
  }
}

</mosaic_0001>

<llo_original>
// kernel: caption_decoder_forward.3
$region0: #{caption_decoder_forward.3}
  #allocation0 [shape = 'u32[]', space=smem, size = 0x4, offset = 0x4, fixed_abs, tag = 'smem constant byte address 0x4 - core index']
  #allocation1 [shape = 'u32[72,128]{1,0:T(1,128)}', space=vmem, size = 0x9000, scoped, tag = 'internal scratch']
  %s0 = inlined_call_operand.vmem [shape: bf16[128,64], index: 0, kind: input, shape index: {}]
  %s1 = inlined_call_operand.hbm [shape: bf16[64,512], index: 1, kind: input, shape index: {}]
  %s2 = inlined_call_operand.vmem [shape: f32[1,512], index: 2, kind: input, shape index: {}]
  %s3 = inlined_call_operand.vmem [shape: f32[128,512], index: 3, kind: output, shape index: {}]
  %s4 = sld [smem:[#allocation0]]
  $region26: #{caption_decoder_forward.3} parent=0
    _
  %s6 = ssub.s32 1, %s4
  %s7 = scalar_select 0, %s6, %s4
  $region1: #{caption_decoder_forward.3} parent=0
    #allocation2 [shape = 'u8[65536]{0}', space=vmem, size = 0x10000, scoped, tag = 'input window, operand 1, single buffered']
    #allocation3 [shape = 's32[1]{0}', space=sflag, size = 0x4, scoped, tag = 'scoped memory for caption_decoder_forward.3']
    %8 = vsyncpa [#allocation3], 0
    // Predicated region
    $region2: #{caption_decoder_forward.3} parent=1 // pred_check
      _
    $region3: #{caption_decoder_forward.3} parent=1 // pred_check_branch
      %10 = sbr.rel (0) target = $region5
    $region4: #{caption_decoder_forward.3} parent=1 // pred_region
      _
    $region5: #{caption_decoder_forward.3} parent=1 // pred_fallthru
      _
    // Predicated region
    $region6: #{caption_decoder_forward.3} parent=1 // pred_check
      _
    $region7: #{caption_decoder_forward.3} parent=1 // pred_check_branch
      %12 = sbr.rel (0) target = $region9
    $region8: #{caption_decoder_forward.3} parent=1 // pred_region
      %14 = vsyncadd [#allocation3], 0
      %s15 = sshll.u32 %s1, 4
      %s16 = int_to_ptr.hbm [resolvable:$true] %s15
      %s17 = sshll.u32 [#allocation2], 4
      %s18 = int_to_ptr.vmem [resolvable:$true] %s17
      %23 = dma.hbm_to_vmem [thread:$0]  %s16, 2048, %s18, [#allocation3], 256, 256, 16
    $region9: #{caption_decoder_forward.3} parent=1 // pred_fallthru
      _
    // Predicated region
    $region10: #{caption_decoder_forward.3} parent=1 // pred_check
      _
    $region11: #{caption_decoder_forward.3} parent=1 // pred_check_branch
      %25 = sbr.rel (0) target = $region13
    $region12: #{caption_decoder_forward.3} parent=1 // pred_region
      _
    $region13: #{caption_decoder_forward.3} parent=1 // pred_fallthru
      _
    // Predicated region
    $region14: #{caption_decoder_forward.3} parent=1 // pred_check
      _
    $region15: #{caption_decoder_forward.3} parent=1 // pred_check_branch
      %27 = sbr.rel (0) target = $region17
    $region16: #{caption_decoder_forward.3} parent=1 // pred_region
      %29 = dma.done [#allocation3], 2048
    $region17: #{caption_decoder_forward.3} parent=1 // pred_fallthru
      _
    %v31 = vld [vmem:[%s0] sm:$0xf]
    %v32 = vld [vmem:[%s0 + $0x4] sm:$0xf]
    %v33 = vld [vmem:[%s0 + $0x8] sm:$0xf]
    %v34 = vld [vmem:[%s0 + $0xc] sm:$0xf]
    %v35 = vld [vmem:[%s0 + $0x10] sm:$0xf]
    %v36 = vld [vmem:[%s0 + $0x14] sm:$0xf]
    %v37 = vld [vmem:[%s0 + $0x18] sm:$0xf]
    %v38 = vld [vmem:[%s0 + $0x1c] sm:$0xf]
    %v39 = vld [vmem:[%s0 + $0x20] sm:$0xf]
    %v40 = vld [vmem:[%s0 + $0x24] sm:$0xf]
    %v41 = vld [vmem:[%s0 + $0x28] sm:$0xf]
    %v42 = vld [vmem:[%s0 + $0x2c] sm:$0xf]
    %v43 = vld [vmem:[%s0 + $0x30] sm:$0xf]
    %v44 = vld [vmem:[%s0 + $0x34] sm:$0xf]
    %v45 = vld [vmem:[%s0 + $0x38] sm:$0xf]
    %v46 = vld [vmem:[%s0 + $0x3c] sm:$0xf]
    %v47 = vld [vmem:[#allocation2] sm:$0xff]
    %v48 = vld [vmem:[#allocation2 + $0x8] sm:$0xff]
    %v49 = vld [vmem:[#allocation2 + $0x10] sm:$0xff]
    %v50 = vld [vmem:[#allocation2 + $0x18] sm:$0xff]
    %v51 = vld [vmem:[#allocation2 + $0x20] sm:$0xff]
    %v52 = vld [vmem:[#allocation2 + $0x28] sm:$0xff]
    %v53 = vld [vmem:[#allocation2 + $0x30] sm:$0xff]
    %v54 = vld [vmem:[#allocation2 + $0x38] sm:$0xff]
    %v55 = vld [vmem:[#allocation2 + $0x40] sm:$0xff]
    %v56 = vld [vmem:[#allocation2 + $0x48] sm:$0xff]
    %v57 = vld [vmem:[#allocation2 + $0x50] sm:$0xff]
    %v58 = vld [vmem:[#allocation2 + $0x58] sm:$0xff]
    %v59 = vld [vmem:[#allocation2 + $0x60] sm:$0xff]
    %v60 = vld [vmem:[#allocation2 + $0x68] sm:$0xff]
    %v61 = vld [vmem:[#allocation2 + $0x70] sm:$0xff]
    %v62 = vld [vmem:[#allocation2 + $0x78] sm:$0xff]
    %v63 = vld [vmem:[%s2] sm:$0xf]
    %v65 = vperm.slane %v63, 0
    %v66 = vperm.slane %v63, 1
    %v67 = vperm.slane %v63, 2
    %v68 = vperm.slane %v63, 3
    %v89 = vunpack.c.l.b16 %v31
    %v90 = vunpack.c.l.b16 %v32
    %v91 = vunpack.c.l.b16 %v33
    %v92 = vunpack.c.l.b16 %v34
    %v93 = vunpack.c.l.b16 %v35
    %v94 = vunpack.c.l.b16 %v36
    %v95 = vunpack.c.l.b16 %v37
    %v96 = vunpack.c.l.b16 %v38
    %v97 = vunpack.c.l.b16 %v39
    %v98 = vunpack.c.l.b16 %v40
    %v99 = vunpack.c.l.b16 %v41
    %v100 = vunpack.c.l.b16 %v42
    %v101 = vunpack.c.l.b16 %v43
    %v102 = vunpack.c.l.b16 %v44
    %v103 = vunpack.c.l.b16 %v45
    %v104 = vunpack.c.l.b16 %v46
    %v105 = vpack.c.b16 %v90, %v89
    %v106 = vpack.c.b16 %v92, %v91
    %v107 = vpack.c.b16 %v94, %v93
    %v108 = vpack.c.b16 %v96, %v95
    %v109 = vpack.c.b16 %v98, %v97
    %v110 = vpack.c.b16 %v100, %v99
    %v111 = vpack.c.b16 %v102, %v101
    %v112 = vpack.c.b16 %v104, %v103
    %v129 = vunpack.c.l.b16 %v47
    %v130 = vunpack.c.h.b16 %v47
    %v131 = vunpack.c.l.b16 %v48
    %v132 = vunpack.c.h.b16 %v48
    %v133 = vunpack.c.l.b16 %v49
    %v134 = vunpack.c.h.b16 %v49
    %v135 = vunpack.c.l.b16 %v50
    %v136 = vunpack.c.h.b16 %v50
    %v137 = vunpack.c.l.b16 %v51
    %v138 = vunpack.c.h.b16 %v51
    %v139 = vunpack.c.l.b16 %v52
    %v140 = vunpack.c.h.b16 %v52
    %v141 = vunpack.c.l.b16 %v53
    %v142 = vunpack.c.h.b16 %v53
    %v143 = vunpack.c.l.b16 %v54
    %v144 = vunpack.c.h.b16 %v54
    %v145 = vunpack.c.l.b16 %v55
    %v146 = vunpack.c.h.b16 %v55
    %v147 = vunpack.c.l.b16 %v56
    %v148 = vunpack.c.h.b16 %v56
    %v149 = vunpack.c.l.b16 %v57
    %v150 = vunpack.c.h.b16 %v57
    %v151 = vunpack.c.l.b16 %v58
    %v152 = vunpack.c.h.b16 %v58
    %v153 = vunpack.c.l.b16 %v59
    %v154 = vunpack.c.h.b16 %v59
    %v155 = vunpack.c.l.b16 %v60
    %v156 = vunpack.c.h.b16 %v60
    %v157 = vunpack.c.l.b16 %v61
    %v158 = vunpack.c.h.b16 %v61
    %v159 = vunpack.c.l.b16 %v62
    %v160 = vunpack.c.h.b16 %v62
    %v161 = vpack.c.b16 %v133, %v129
    %v162 = vpack.c.b16 %v134, %v130
    %v163 = vpack.c.b16 %v135, %v131
    %v164 = vpack.c.b16 %v136, %v132
    %v165 = vpack.c.b16 %v141, %v137
    %v166 = vpack.c.b16 %v142, %v138
    %v167 = vpack.c.b16 %v143, %v139
    %v168 = vpack.c.b16 %v144, %v140
    %v169 = vpack.c.b16 %v149, %v145
    %v170 = vpack.c.b16 %v150, %v146
    %v171 = vpack.c.b16 %v151, %v147
    %v172 = vpack.c.b16 %v152, %v148
    %v173 = vpack.c.b16 %v157, %v153
    %v174 = vpack.c.b16 %v158, %v154
    %v175 = vpack.c.b16 %v159, %v155
    %v176 = vpack.c.b16 %v160, %v156
    %vm193 = vcmask 523264
    %v195 = vsel %vm193, %v105, 0
    %v198 = vsel %vm193, %v106, 0
    %v201 = vsel %vm193, %v107, 0
    %v204 = vsel %vm193, %v108, 0
    %v207 = vsel %vm193, %v109, 0
    %v210 = vsel %vm193, %v110, 0
    %v213 = vsel %vm193, %v111, 0
    %v216 = vsel %vm193, %v112, 0
    %218 = vmatpush.bf16.msra.mxu0 0
    %219 = vmatpush.bf16.msra.mxu0 0
    %220 = vmatpush.bf16.msra.mxu0 0
    %221 = vmatpush.bf16.msra.mxu0 0
    %222 = vmatpush.bf16.msra.mxu0 %v173
    %223 = vmatpush.bf16.msra.mxu0 %v169
    %224 = vmatpush.bf16.msra.mxu0 %v165
    %225 = vmatpush.bf16.msra.mxu0 %v161
    %226 = vmatmul.bf16.gmra.mxu0 %v195
    %v227 = vpop.f32.mrf.mxu0
    %v228 = vadd.f32 %v65, %v227
    %v229 = vpop.f32.mrf.mxu0
    %v230 = vadd.f32 %v65, %v229
    %231 = vmatmul.bf16.gmra.mxu0 %v198
    %v232 = vpop.f32.mrf.mxu0
    %v233 = vadd.f32 %v65, %v232
    %v234 = vpop.f32.mrf.mxu0
    %v235 = vadd.f32 %v65, %v234
    %236 = vmatmul.bf16.gmra.mxu0 %v201
    %v237 = vpop.f32.mrf.mxu0
    %v238 = vadd.f32 %v65, %v237
    %v239 = vpop.f32.mrf.mxu0
    %v240 = vadd.f32 %v65, %v239
    %241 = vmatmul.bf16.gmra.mxu0 %v204
    %v242 = vpop.f32.mrf.mxu0
    %v243 = vadd.f32 %v65, %v242
    %v244 = vpop.f32.mrf.mxu0
    %v245 = vadd.f32 %v65, %v244
    %246 = vmatmul.bf16.gmra.mxu0 %v207
    %v247 = vpop.f32.mrf.mxu0
    %v248 = vadd.f32 %v65, %v247
    %v249 = vpop.f32.mrf.mxu0
    %v250 = vadd.f32 %v65, %v249
    %251 = vmatmul.bf16.gmra.mxu0 %v210
    %v252 = vpop.f32.mrf.mxu0
    %v253 = vadd.f32 %v65, %v252
    %v254 = vpop.f32.mrf.mxu0
    %v255 = vadd.f32 %v65, %v254
    %256 = vmatmul.bf16.gmra.mxu0 %v213
    %v257 = vpop.f32.mrf.mxu0
    %v258 = vadd.f32 %v65, %v257
    %v259 = vpop.f32.mrf.mxu0
    %v260 = vadd.f32 %v65, %v259
    %261 = vmatmul.bf16.gmra.mxu0 %v216
    %v262 = vpop.f32.mrf.mxu0
    %v263 = vadd.f32 %v65, %v262
    %v264 = vpop.f32.mrf.mxu0
    %v265 = vadd.f32 %v65, %v264
    %266 = vdwg.mxu0
    %267 = vmatpush.bf16.msra.mxu0 0
    %268 = vmatpush.bf16.msra.mxu0 0
    %269 = vmatpush.bf16.msra.mxu0 0
    %270 = vmatpush.bf16.msra.mxu0 0
    %271 = vmatpush.bf16.msra.mxu0 %v174
    %272 = vmatpush.bf16.msra.mxu0 %v170
    %273 = vmatpush.bf16.msra.mxu0 %v166
    %274 = vmatpush.bf16.msra.mxu0 %v162
    %275 = vmatmul.bf16.gmra.mxu0 %v195
    %v276 = vpop.f32.mrf.mxu0
    %v277 = vadd.f32 %v66, %v276
    %v278 = vpop.f32.mrf.mxu0
    %v279 = vadd.f32 %v66, %v278
    %280 = vmatmul.bf16.gmra.mxu0 %v198
    %v281 = vpop.f32.mrf.mxu0
    %v282 = vadd.f32 %v66, %v281
    %v283 = vpop.f32.mrf.mxu0
    %v284 = vadd.f32 %v66, %v283
    %285 = vmatmul.bf16.gmra.mxu0 %v201
    %v286 = vpop.f32.mrf.mxu0
    %v287 = vadd.f32 %v66, %v286
    %v288 = vpop.f32.mrf.mxu0
    %v289 = vadd.f32 %v66, %v288
    %290 = vmatmul.bf16.gmra.mxu0 %v204
    %v291 = vpop.f32.mrf.mxu0
    %v292 = vadd.f32 %v66, %v291
    %v293 = vpop.f32.mrf.mxu0
    %v294 = vadd.f32 %v66, %v293
    %295 = vmatmul.bf16.gmra.mxu0 %v207
    %v296 = vpop.f32.mrf.mxu0
    %v297 = vadd.f32 %v66, %v296
    %v298 = vpop.f32.mrf.mxu0
    %v299 = vadd.f32 %v66, %v298
    %300 = vmatmul.bf16.gmra.mxu0 %v210
    %v301 = vpop.f32.mrf.mxu0
    %v302 = vadd.f32 %v66, %v301
    %v303 = vpop.f32.mrf.mxu0
    %v304 = vadd.f32 %v66, %v303
    %305 = vmatmul.bf16.gmra.mxu0 %v213
    %v306 = vpop.f32.mrf.mxu0
    %v307 = vadd.f32 %v66, %v306
    %v308 = vpop.f32.mrf.mxu0
    %v309 = vadd.f32 %v66, %v308
    %310 = vmatmul.bf16.gmra.mxu0 %v216
    %v311 = vpop.f32.mrf.mxu0
    %v312 = vadd.f32 %v66, %v311
    %v313 = vpop.f32.mrf.mxu0
    %v314 = vadd.f32 %v66, %v313
    %315 = vdwg.mxu0
    %316 = vmatpush.bf16.msra.mxu0 0
    %317 = vmatpush.bf16.msra.mxu0 0
    %318 = vmatpush.bf16.msra.mxu0 0
    %319 = vmatpush.bf16.msra.mxu0 0
    %320 = vmatpush.bf16.msra.mxu0 %v175
    %321 = vmatpush.bf16.msra.mxu0 %v171
    %322 = vmatpush.bf16.msra.mxu0 %v167
    %323 = vmatpush.bf16.msra.mxu0 %v163
    %324 = vmatmul.bf16.gmra.mxu0 %v195
    %v325 = vpop.f32.mrf.mxu0
    %v326 = vadd.f32 %v67, %v325
    %v327 = vpop.f32.mrf.mxu0
    %v328 = vadd.f32 %v67, %v327
    %329 = vmatmul.bf16.gmra.mxu0 %v198
    %v330 = vpop.f32.mrf.mxu0
    %v331 = vadd.f32 %v67, %v330
    %v332 = vpop.f32.mrf.mxu0
    %v333 = vadd.f32 %v67, %v332
    %334 = vmatmul.bf16.gmra.mxu0 %v201
    %v335 = vpop.f32.mrf.mxu0
    %v336 = vadd.f32 %v67, %v335
    %v337 = vpop.f32.mrf.mxu0
    %v338 = vadd.f32 %v67, %v337
    %339 = vmatmul.bf16.gmra.mxu0 %v204
    %v340 = vpop.f32.mrf.mxu0
    %v341 = vadd.f32 %v67, %v340
    %v342 = vpop.f32.mrf.mxu0
    %v343 = vadd.f32 %v67, %v342
    %344 = vmatmul.bf16.gmra.mxu0 %v207
    %v345 = vpop.f32.mrf.mxu0
    %v346 = vadd.f32 %v67, %v345
    %v347 = vpop.f32.mrf.mxu0
    %v348 = vadd.f32 %v67, %v347
    %349 = vmatmul.bf16.gmra.mxu0 %v210
    %v350 = vpop.f32.mrf.mxu0
    %v351 = vadd.f32 %v67, %v350
    %v352 = vpop.f32.mrf.mxu0
    %v353 = vadd.f32 %v67, %v352
    %354 = vmatmul.bf16.gmra.mxu0 %v213
    %v355 = vpop.f32.mrf.mxu0
    %v356 = vadd.f32 %v67, %v355
    %v357 = vpop.f32.mrf.mxu0
    %v358 = vadd.f32 %v67, %v357
    %359 = vmatmul.bf16.gmra.mxu0 %v216
    %v360 = vpop.f32.mrf.mxu0
    %v361 = vadd.f32 %v67, %v360
    %v362 = vpop.f32.mrf.mxu0
    %v363 = vadd.f32 %v67, %v362
    %364 = vdwg.mxu0
    %365 = vmatpush.bf16.msra.mxu0 0
    %366 = vmatpush.bf16.msra.mxu0 0
    %367 = vmatpush.bf16.msra.mxu0 0
    %368 = vmatpush.bf16.msra.mxu0 0
    %369 = vmatpush.bf16.msra.mxu0 %v176
    %370 = vmatpush.bf16.msra.mxu0 %v172
    %371 = vmatpush.bf16.msra.mxu0 %v168
    %372 = vmatpush.bf16.msra.mxu0 %v164
    %373 = vmatmul.bf16.gmra.mxu0 %v195
    %v374 = vpop.f32.mrf.mxu0
    %v375 = vadd.f32 %v68, %v374
    %v376 = vpop.f32.mrf.mxu0
    %v377 = vadd.f32 %v68, %v376
    %378 = vmatmul.bf16.gmra.mxu0 %v198
    %v379 = vpop.f32.mrf.mxu0
    %v380 = vadd.f32 %v68, %v379
    %v381 = vpop.f32.mrf.mxu0
    %v382 = vadd.f32 %v68, %v381
    %383 = vmatmul.bf16.gmra.mxu0 %v201
    %v384 = vpop.f32.mrf.mxu0
    %v385 = vadd.f32 %v68, %v384
    %v386 = vpop.f32.mrf.mxu0
    %v387 = vadd.f32 %v68, %v386
    %388 = vmatmul.bf16.gmra.mxu0 %v204
    %v389 = vpop.f32.mrf.mxu0
    %v390 = vadd.f32 %v68, %v389
    %v391 = vpop.f32.mrf.mxu0
    %v392 = vadd.f32 %v68, %v391
    %393 = vmatmul.bf16.gmra.mxu0 %v207
    %v394 = vpop.f32.mrf.mxu0
    %v395 = vadd.f32 %v68, %v394
    %v396 = vpop.f32.mrf.mxu0
    %v397 = vadd.f32 %v68, %v396
    %398 = vmatmul.bf16.gmra.mxu0 %v210
    %v399 = vpop.f32.mrf.mxu0
    %v400 = vadd.f32 %v68, %v399
    %v401 = vpop.f32.mrf.mxu0
    %v402 = vadd.f32 %v68, %v401
    %403 = vmatmul.bf16.gmra.mxu0 %v213
    %v404 = vpop.f32.mrf.mxu0
    %v405 = vadd.f32 %v68, %v404
    %v406 = vpop.f32.mrf.mxu0
    %v407 = vadd.f32 %v68, %v406
    %408 = vmatmul.bf16.gmra.mxu0 %v216
    %v409 = vpop.f32.mrf.mxu0
    %v410 = vadd.f32 %v68, %v409
    %v411 = vpop.f32.mrf.mxu0
    %v412 = vadd.f32 %v68, %v411
    %413 = vdwg.mxu0
    %414 = vst [vmem:[%s3] sm:$0xff] %v228
    %415 = vst [vmem:[%s3 + $0x8] sm:$0xff] %v277
    %416 = vst [vmem:[%s3 + $0x10] sm:$0xff] %v326
    %417 = vst [vmem:[%s3 + $0x18] sm:$0xff] %v375
    %418 = vst [vmem:[%s3 + $0x20] sm:$0xff] %v230
    %419 = vst [vmem:[%s3 + $0x28] sm:$0xff] %v279
    %420 = vst [vmem:[%s3 + $0x30] sm:$0xff] %v328
    %421 = vst [vmem:[%s3 + $0x38] sm:$0xff] %v377
    %422 = vst [vmem:[%s3 + $0x40] sm:$0xff] %v233
    %423 = vst [vmem:[%s3 + $0x48] sm:$0xff] %v282
    %424 = vst [vmem:[%s3 + $0x50] sm:$0xff] %v331
    %425 = vst [vmem:[%s3 + $0x58] sm:$0xff] %v380
    %426 = vst [vmem:[%s3 + $0x60] sm:$0xff] %v235
    %427 = vst [vmem:[%s3 + $0x68] sm:$0xff] %v284
    %428 = vst [vmem:[%s3 + $0x70] sm:$0xff] %v333
    %429 = vst [vmem:[%s3 + $0x78] sm:$0xff] %v382
    %430 = vst [vmem:[%s3 + $0x80] sm:$0xff] %v238
    %431 = vst [vmem:[%s3 + $0x88] sm:$0xff] %v287
    %432 = vst [vmem:[%s3 + $0x90] sm:$0xff] %v336
    %433 = vst [vmem:[%s3 + $0x98] sm:$0xff] %v385
    %434 = vst [vmem:[%s3 + $0xa0] sm:$0xff] %v240
    %435 = vst [vmem:[%s3 + $0xa8] sm:$0xff] %v289
    %436 = vst [vmem:[%s3 + $0xb0] sm:$0xff] %v338
    %437 = vst [vmem:[%s3 + $0xb8] sm:$0xff] %v387
    %438 = vst [vmem:[%s3 + $0xc0] sm:$0xff] %v243
    %439 = vst [vmem:[%s3 + $0xc8] sm:$0xff] %v292
    %440 = vst [vmem:[%s3 + $0xd0] sm:$0xff] %v341
    %441 = vst [vmem:[%s3 + $0xd8] sm:$0xff] %v390
    %442 = vst [vmem:[%s3 + $0xe0] sm:$0xff] %v245
    %443 = vst [vmem:[%s3 + $0xe8] sm:$0xff] %v294
    %444 = vst [vmem:[%s3 + $0xf0] sm:$0xff] %v343
    %445 = vst [vmem:[%s3 + $0xf8] sm:$0xff] %v392
    %446 = vst [vmem:[%s3 + $0x100] sm:$0xff] %v248
    %447 = vst [vmem:[%s3 + $0x108] sm:$0xff] %v297
    %448 = vst [vmem:[%s3 + $0x110] sm:$0xff] %v346
    %449 = vst [vmem:[%s3 + $0x118] sm:$0xff] %v395
    %450 = vst [vmem:[%s3 + $0x120] sm:$0xff] %v250
    %451 = vst [vmem:[%s3 + $0x128] sm:$0xff] %v299
    %452 = vst [vmem:[%s3 + $0x130] sm:$0xff] %v348
    %453 = vst [vmem:[%s3 + $0x138] sm:$0xff] %v397
    %454 = vst [vmem:[%s3 + $0x140] sm:$0xff] %v253
    %455 = vst [vmem:[%s3 + $0x148] sm:$0xff] %v302
    %456 = vst [vmem:[%s3 + $0x150] sm:$0xff] %v351
    %457 = vst [vmem:[%s3 + $0x158] sm:$0xff] %v400
    %458 = vst [vmem:[%s3 + $0x160] sm:$0xff] %v255
    %459 = vst [vmem:[%s3 + $0x168] sm:$0xff] %v304
    %460 = vst [vmem:[%s3 + $0x170] sm:$0xff] %v353
    %461 = vst [vmem:[%s3 + $0x178] sm:$0xff] %v402
    %462 = vst [vmem:[%s3 + $0x180] sm:$0xff] %v258
    %463 = vst [vmem:[%s3 + $0x188] sm:$0xff] %v307
    %464 = vst [vmem:[%s3 + $0x190] sm:$0xff] %v356
    %465 = vst [vmem:[%s3 + $0x198] sm:$0xff] %v405
    %466 = vst [vmem:[%s3 + $0x1a0] sm:$0xff] %v260
    %467 = vst [vmem:[%s3 + $0x1a8] sm:$0xff] %v309
    %468 = vst [vmem:[%s3 + $0x1b0] sm:$0xff] %v358
    %469 = vst [vmem:[%s3 + $0x1b8] sm:$0xff] %v407
    %470 = vst [vmem:[%s3 + $0x1c0] sm:$0xff] %v263
    %471 = vst [vmem:[%s3 + $0x1c8] sm:$0xff] %v312
    %472 = vst [vmem:[%s3 + $0x1d0] sm:$0xff] %v361
    %473 = vst [vmem:[%s3 + $0x1d8] sm:$0xff] %v410
    %474 = vst [vmem:[%s3 + $0x1e0] sm:$0xff] %v265
    %475 = vst [vmem:[%s3 + $0x1e8] sm:$0xff] %v314
    %476 = vst [vmem:[%s3 + $0x1f0] sm:$0xff] %v363
    %477 = vst [vmem:[%s3 + $0x1f8] sm:$0xff] %v412
    // Predicated region
    $region18: #{caption_decoder_forward.3} parent=1 // pred_check
      _
    $region19: #{caption_decoder_forward.3} parent=1 // pred_check_branch
      %479 = sbr.rel (0) target = $region21
    $region20: #{caption_decoder_forward.3} parent=1 // pred_region
      _
    $region21: #{caption_decoder_forward.3} parent=1 // pred_fallthru
      _
    // Predicated region
    $region22: #{caption_decoder_forward.3} parent=1 // pred_check
      _
    $region23: #{caption_decoder_forward.3} parent=1 // pred_check_branch
      %481 = sbr.rel (0) target = $region25
    $region24: #{caption_decoder_forward.3} parent=1 // pred_region
      _
    $region25: #{caption_decoder_forward.3} parent=1 // pred_fallthru
      _
    %482 = vsyncpa [#allocation3], 1

// kernel: caption_decoder_forward.5
$region0: #{caption_decoder_forward.5}
  #allocation0 [shape = 'u32[]', space=smem, size = 0x4, offset = 0x4, fixed_abs, tag = 'smem constant byte address 0x4 - core index']
  #allocation1 [shape = 'u32[72,128]{1,0:T(1,128)}', space=vmem, size = 0x9000, scoped, tag = 'internal scratch']
  %s0 = inlined_call_operand.vmem [shape: bf16[128,128], index: 0, kind: input, shape index: {}]
  %s1 = inlined_call_operand.hbm [shape: bf16[128,1024], index: 1, kind: input, shape index: {}]
  %s2 = inlined_call_operand.vmem [shape: f32[1,1024], index: 2, kind: input, shape index: {}]
  %s3 = inlined_call_operand.hbm [shape: f32[128,1024], index: 3, kind: output, shape index: {}]
  %s4 = sld [smem:[#allocation0]]
  $region26: #{caption_decoder_forward.5} parent=0
    _
  %s6 = ssub.s32 1, %s4
  %s7 = scalar_select 0, %s6, %s4
  $region1: #{caption_decoder_forward.5} parent=0
    #allocation2 [shape = 'u8[262144]{0}', space=vmem, size = 0x40000, scoped, tag = 'input window, operand 1, single buffered']
    #allocation3 [shape = 's32[1]{0}', space=sflag, size = 0x4, scoped, tag = 'scoped memory for caption_decoder_forward.5']
    #allocation4 [shape = 's32[1]{0}', space=sflag, size = 0x4, scoped, tag = 'scoped memory for caption_decoder_forward.5']
    #allocation5 [shape = 'u8[524288]{0}', space=vmem, size = 0x80000, scoped, tag = 'output window, operand 0, single buffered']
    %8 = vsyncpa [#allocation3], 0
    %9 = vsyncpa [#allocation4], 0
    // Predicated region
    $region2: #{caption_decoder_forward.5} parent=1 // pred_check
      _
    $region3: #{caption_decoder_forward.5} parent=1 // pred_check_branch
      %11 = sbr.rel (0) target = $region5
    $region4: #{caption_decoder_forward.5} parent=1 // pred_region
      _
    $region5: #{caption_decoder_forward.5} parent=1 // pred_fallthru
      _
    // Predicated region
    $region6: #{caption_decoder_forward.5} parent=1 // pred_check
      _
    $region7: #{caption_decoder_forward.5} parent=1 // pred_check_branch
      %13 = sbr.rel (0) target = $region9
    $region8: #{caption_decoder_forward.5} parent=1 // pred_region
      %15 = vsyncadd [#allocation3], 0
      %s16 = sshll.u32 %s1, 4
      %s17 = int_to_ptr.hbm [resolvable:$true] %s16
      %s18 = sshll.u32 [#allocation2], 4
      %s19 = int_to_ptr.vmem [resolvable:$true] %s18
      %24 = dma.hbm_to_vmem [thread:$0]  %s17, 8192, %s19, [#allocation3], 512, 512, 32
    $region9: #{caption_decoder_forward.5} parent=1 // pred_fallthru
      _
    // Predicated region
    $region10: #{caption_decoder_forward.5} parent=1 // pred_check
      _
    $region11: #{caption_decoder_forward.5} parent=1 // pred_check_branch
      %26 = sbr.rel (0) target = $region13
    $region12: #{caption_decoder_forward.5} parent=1 // pred_region
      _
    $region13: #{caption_decoder_forward.5} parent=1 // pred_fallthru
      _
    // Predicated region
    $region14: #{caption_decoder_forward.5} parent=1 // pred_check
      _
    $region15: #{caption_decoder_forward.5} parent=1 // pred_check_branch
      %28 = sbr.rel (0) target = $region17
    $region16: #{caption_decoder_forward.5} parent=1 // pred_region
      %30 = dma.done [#allocation3], 8192
    $region17: #{caption_decoder_forward.5} parent=1 // pred_fallthru
      _
    %v31 = vld [vmem:[%s0] sm:$0xf]
    %v32 = vld [vmem:[%s0 + $0x4] sm:$0xf]
    %v33 = vld [vmem:[%s0 + $0x8] sm:$0xf]
    %v34 = vld [vmem:[%s0 + $0xc] sm:$0xf]
    %v35 = vld [vmem:[%s0 + $0x10] sm:$0xf]
    %v36 = vld [vmem:[%s0 + $0x14] sm:$0xf]
    %v37 = vld [vmem:[%s0 + $0x18] sm:$0xf]
    %v38 = vld [vmem:[%s0 + $0x1c] sm:$0xf]
    %v39 = vld [vmem:[%s0 + $0x20] sm:$0xf]
    %v40 = vld [vmem:[%s0 + $0x24] sm:$0xf]
    %v41 = vld [vmem:[%s0 + $0x28] sm:$0xf]
    %v42 = vld [vmem:[%s0 + $0x2c] sm:$0xf]
    %v43 = vld [vmem:[%s0 + $0x30] sm:$0xf]
    %v44 = vld [vmem:[%s0 + $0x34] sm:$0xf]
    %v45 = vld [vmem:[%s0 + $0x38] sm:$0xf]
    %v46 = vld [vmem:[%s0 + $0x3c] sm:$0xf]
    %v47 = vld [vmem:[#allocation2] sm:$0xff]
    %v48 = vld [vmem:[#allocation2 + $0x8] sm:$0xff]
    %v49 = vld [vmem:[#allocation2 + $0x10] sm:$0xff]
    %v50 = vld [vmem:[#allocation2 + $0x18] sm:$0xff]
    %v51 = vld [vmem:[#allocation2 + $0x20] sm:$0xff]
    %v52 = vld [vmem:[#allocation2 + $0x28] sm:$0xff]
    %v53 = vld [vmem:[#allocation2 + $0x30] sm:$0xff]
    %v54 = vld [vmem:[#allocation2 + $0x38] sm:$0xff]
    %v55 = vld [vmem:[#allocation2 + $0x40] sm:$0xff]
    %v56 = vld [vmem:[#allocation2 + $0x48] sm:$0xff]
    %v57 = vld [vmem:[#allocation2 + $0x50] sm:$0xff]
    %v58 = vld [vmem:[#allocation2 + $0x58] sm:$0xff]
    %v59 = vld [vmem:[#allocation2 + $0x60] sm:$0xff]
    %v60 = vld [vmem:[#allocation2 + $0x68] sm:$0xff]
    %v61 = vld [vmem:[#allocation2 + $0x70] sm:$0xff]
    %v62 = vld [vmem:[#allocation2 + $0x78] sm:$0xff]
    %v63 = vld [vmem:[#allocation2 + $0x80] sm:$0xff]
    %v64 = vld [vmem:[#allocation2 + $0x88] sm:$0xff]
    %v65 = vld [vmem:[#allocation2 + $0x90] sm:$0xff]
    %v66 = vld [vmem:[#allocation2 + $0x98] sm:$0xff]
    %v67 = vld [vmem:[#allocation2 + $0xa0] sm:$0xff]
    %v68 = vld [vmem:[#allocation2 + $0xa8] sm:$0xff]
    %v69 = vld [vmem:[#allocation2 + $0xb0] sm:$0xff]
    %v70 = vld [vmem:[#allocation2 + $0xb8] sm:$0xff]
    %v71 = vld [vmem:[#allocation2 + $0xc0] sm:$0xff]
    %v72 = vld [vmem:[#allocation2 + $0xc8] sm:$0xff]
    %v73 = vld [vmem:[#allocation2 + $0xd0] sm:$0xff]
    %v74 = vld [vmem:[#allocation2 + $0xd8] sm:$0xff]
    %v75 = vld [vmem:[#allocation2 + $0xe0] sm:$0xff]
    %v76 = vld [vmem:[#allocation2 + $0xe8] sm:$0xff]
    %v77 = vld [vmem:[#allocation2 + $0xf0] sm:$0xff]
    %v78 = vld [vmem:[#allocation2 + $0xf8] sm:$0xff]
    %v79 = vld [vmem:[#allocation2 + $0x100] sm:$0xff]
    %v80 = vld [vmem:[#allocation2 + $0x108] sm:$0xff]
    %v81 = vld [vmem:[#allocation2 + $0x110] sm:$0xff]
    %v82 = vld [vmem:[#allocation2 + $0x118] sm:$0xff]
    %v83 = vld [vmem:[#allocation2 + $0x120] sm:$0xff]
    %v84 = vld [vmem:[#allocation2 + $0x128] sm:$0xff]
    %v85 = vld [vmem:[#allocation2 + $0x130] sm:$0xff]
    %v86 = vld [vmem:[#allocation2 + $0x138] sm:$0xff]
    %v87 = vld [vmem:[#allocation2 + $0x140] sm:$0xff]
    %v88 = vld [vmem:[#allocation2 + $0x148] sm:$0xff]
    %v89 = vld [vmem:[#allocation2 + $0x150] sm:$0xff]
    %v90 = vld [vmem:[#allocation2 + $0x158] sm:$0xff]
    %v91 = vld [vmem:[#allocation2 + $0x160] sm:$0xff]
    %v92 = vld [vmem:[#allocation2 + $0x168] sm:$0xff]
    %v93 = vld [vmem:[#allocation2 + $0x170] sm:$0xff]
    %v94 = vld [vmem:[#allocation2 + $0x178] sm:$0xff]
    %v95 = vld [vmem:[#allocation2 + $0x180] sm:$0xff]
    %v96 = vld [vmem:[#allocation2 + $0x188] sm:$0xff]
    %v97 = vld [vmem:[#allocation2 + $0x190] sm:$0xff]
    %v98 = vld [vmem:[#allocation2 + $0x198] sm:$0xff]
    %v99 = vld [vmem:[#allocation2 + $0x1a0] sm:$0xff]
    %v100 = vld [vmem:[#allocation2 + $0x1a8] sm:$0xff]
    %v101 = vld [vmem:[#allocation2 + $0x1b0] sm:$0xff]
    %v102 = vld [vmem:[#allocation2 + $0x1b8] sm:$0xff]
    %v103 = vld [vmem:[#allocation2 + $0x1c0] sm:$0xff]
    %v104 = vld [vmem:[#allocation2 + $0x1c8] sm:$0xff]
    %v105 = vld [vmem:[#allocation2 + $0x1d0] sm:$0xff]
    %v106 = vld [vmem:[#allocation2 + $0x1d8] sm:$0xff]
    %v107 = vld [vmem:[#allocation2 + $0x1e0] sm:$0xff]
    %v108 = vld [vmem:[#allocation2 + $0x1e8] sm:$0xff]
    %v109 = vld [vmem:[#allocation2 + $0x1f0] sm:$0xff]
    %v110 = vld [vmem:[#allocation2 + $0x1f8] sm:$0xff]
    %v111 = vld [vmem:[%s2] sm:$0xff]
    %v113 = vperm.slane %v111, 0
    %v114 = vperm.slane %v111, 1
    %v115 = vperm.slane %v111, 2
    %v116 = vperm.slane %v111, 3
    %v117 = vperm.slane %v111, 4
    %v118 = vperm.slane %v111, 5
    %v119 = vperm.slane %v111, 6
    %v120 = vperm.slane %v111, 7
    %v145 = vunpack.c.l.b16 %v31
    %v146 = vunpack.c.l.b16 %v32
    %v147 = vunpack.c.l.b16 %v33
    %v148 = vunpack.c.l.b16 %v34
    %v149 = vunpack.c.l.b16 %v35
    %v150 = vunpack.c.l.b16 %v36
    %v151 = vunpack.c.l.b16 %v37
    %v152 = vunpack.c.l.b16 %v38
    %v153 = vunpack.c.l.b16 %v39
    %v154 = vunpack.c.l.b16 %v40
    %v155 = vunpack.c.l.b16 %v41
    %v156 = vunpack.c.l.b16 %v42
    %v157 = vunpack.c.l.b16 %v43
    %v158 = vunpack.c.l.b16 %v44
    %v159 = vunpack.c.l.b16 %v45
    %v160 = vunpack.c.l.b16 %v46
    %v161 = vpack.c.b16 %v146, %v145
    %v162 = vpack.c.b16 %v148, %v147
    %v163 = vpack.c.b16 %v150, %v149
    %v164 = vpack.c.b16 %v152, %v151
    %v165 = vpack.c.b16 %v154, %v153
    %v166 = vpack.c.b16 %v156, %v155
    %v167 = vpack.c.b16 %v158, %v157
    %v168 = vpack.c.b16 %v160, %v159
    %v241 = vunpack.c.l.b16 %v47
    %v242 = vunpack.c.h.b16 %v47
    %v243 = vunpack.c.l.b16 %v48
    %v244 = vunpack.c.h.b16 %v48
    %v245 = vunpack.c.l.b16 %v49
    %v246 = vunpack.c.h.b16 %v49
    %v247 = vunpack.c.l.b16 %v50
    %v248 = vunpack.c.h.b16 %v50
    %v249 = vunpack.c.l.b16 %v51
    %v250 = vunpack.c.h.b16 %v51
    %v251 = vunpack.c.l.b16 %v52
    %v252 = vunpack.c.h.b16 %v52
    %v253 = vunpack.c.l.b16 %v53
    %v254 = vunpack.c.h.b16 %v53
    %v255 = vunpack.c.l.b16 %v54
    %v256 = vunpack.c.h.b16 %v54
    %v257 = vunpack.c.l.b16 %v55
    %v258 = vunpack.c.h.b16 %v55
    %v259 = vunpack.c.l.b16 %v56
    %v260 = vunpack.c.h.b16 %v56
    %v261 = vunpack.c.l.b16 %v57
    %v262 = vunpack.c.h.b16 %v57
    %v263 = vunpack.c.l.b16 %v58
    %v264 = vunpack.c.h.b16 %v58
    %v265 = vunpack.c.l.b16 %v59
    %v266 = vunpack.c.h.b16 %v59
    %v267 = vunpack.c.l.b16 %v60
    %v268 = vunpack.c.h.b16 %v60
    %v269 = vunpack.c.l.b16 %v61
    %v270 = vunpack.c.h.b16 %v61
    %v271 = vunpack.c.l.b16 %v62
    %v272 = vunpack.c.h.b16 %v62
    %v273 = vunpack.c.l.b16 %v63
    %v274 = vunpack.c.h.b16 %v63
    %v275 = vunpack.c.l.b16 %v64
    %v276 = vunpack.c.h.b16 %v64
    %v277 = vunpack.c.l.b16 %v65
    %v278 = vunpack.c.h.b16 %v65
    %v279 = vunpack.c.l.b16 %v66
    %v280 = vunpack.c.h.b16 %v66
    %v281 = vunpack.c.l.b16 %v67
    %v282 = vunpack.c.h.b16 %v67
    %v283 = vunpack.c.l.b16 %v68
    %v284 = vunpack.c.h.b16 %v68
    %v285 = vunpack.c.l.b16 %v69
    %v286 = vunpack.c.h.b16 %v69
    %v287 = vunpack.c.l.b16 %v70
    %v288 = vunpack.c.h.b16 %v70
    %v289 = vunpack.c.l.b16 %v71
    %v290 = vunpack.c.h.b16 %v71
    %v291 = vunpack.c.l.b16 %v72
    %v292 = vunpack.c.h.b16 %v72
    %v293 = vunpack.c.l.b16 %v73
    %v294 = vunpack.c.h.b16 %v73
    %v295 = vunpack.c.l.b16 %v74
    %v296 = vunpack.c.h.b16 %v74
    %v297 = vunpack.c.l.b16 %v75
    %v298 = vunpack.c.h.b16 %v75
    %v299 = vunpack.c.l.b16 %v76
    %v300 = vunpack.c.h.b16 %v76
    %v301 = vunpack.c.l.b16 %v77
    %v302 = vunpack.c.h.b16 %v77
    %v303 = vunpack.c.l.b16 %v78
    %v304 = vunpack.c.h.b16 %v78
    %v305 = vunpack.c.l.b16 %v79
    %v306 = vunpack.c.h.b16 %v79
    %v307 = vunpack.c.l.b16 %v80
    %v308 = vunpack.c.h.b16 %v80
    %v309 = vunpack.c.l.b16 %v81
    %v310 = vunpack.c.h.b16 %v81
    %v311 = vunpack.c.l.b16 %v82
    %v312 = vunpack.c.h.b16 %v82
    %v313 = vunpack.c.l.b16 %v83
    %v314 = vunpack.c.h.b16 %v83
    %v315 = vunpack.c.l.b16 %v84
    %v316 = vunpack.c.h.b16 %v84
    %v317 = vunpack.c.l.b16 %v85
    %v318 = vunpack.c.h.b16 %v85
    %v319 = vunpack.c.l.b16 %v86
    %v320 = vunpack.c.h.b16 %v86
    %v321 = vunpack.c.l.b16 %v87
    %v322 = vunpack.c.h.b16 %v87
    %v323 = vunpack.c.l.b16 %v88
    %v324 = vunpack.c.h.b16 %v88
    %v325 = vunpack.c.l.b16 %v89
    %v326 = vunpack.c.h.b16 %v89
    %v327 = vunpack.c.l.b16 %v90
    %v328 = vunpack.c.h.b16 %v90
    %v329 = vunpack.c.l.b16 %v91
    %v330 = vunpack.c.h.b16 %v91
    %v331 = vunpack.c.l.b16 %v92
    %v332 = vunpack.c.h.b16 %v92
    %v333 = vunpack.c.l.b16 %v93
    %v334 = vunpack.c.h.b16 %v93
    %v335 = vunpack.c.l.b16 %v94
    %v336 = vunpack.c.h.b16 %v94
    %v337 = vunpack.c.l.b16 %v95
    %v338 = vunpack.c.h.b16 %v95
    %v339 = vunpack.c.l.b16 %v96
    %v340 = vunpack.c.h.b16 %v96
    %v341 = vunpack.c.l.b16 %v97
    %v342 = vunpack.c.h.b16 %v97
    %v343 = vunpack.c.l.b16 %v98
    %v344 = vunpack.c.h.b16 %v98
    %v345 = vunpack.c.l.b16 %v99
    %v346 = vunpack.c.h.b16 %v99
    %v347 = vunpack.c.l.b16 %v100
    %v348 = vunpack.c.h.b16 %v100
    %v349 = vunpack.c.l.b16 %v101
    %v350 = vunpack.c.h.b16 %v101
    %v351 = vunpack.c.l.b16 %v102
    %v352 = vunpack.c.h.b16 %v102
    %v353 = vunpack.c.l.b16 %v103
    %v354 = vunpack.c.h.b16 %v103
    %v355 = vunpack.c.l.b16 %v104
    %v356 = vunpack.c.h.b16 %v104
    %v357 = vunpack.c.l.b16 %v105
    %v358 = vunpack.c.h.b16 %v105
    %v359 = vunpack.c.l.b16 %v106
    %v360 = vunpack.c.h.b16 %v106
    %v361 = vunpack.c.l.b16 %v107
    %v362 = vunpack.c.h.b16 %v107
    %v363 = vunpack.c.l.b16 %v108
    %v364 = vunpack.c.h.b16 %v108
    %v365 = vunpack.c.l.b16 %v109
    %v366 = vunpack.c.h.b16 %v109
    %v367 = vunpack.c.l.b16 %v110
    %v368 = vunpack.c.h.b16 %v110
    %v369 = vpack.c.b16 %v249, %v241
    %v370 = vpack.c.b16 %v250, %v242
    %v371 = vpack.c.b16 %v251, %v243
    %v372 = vpack.c.b16 %v252, %v244
    %v373 = vpack.c.b16 %v253, %v245
    %v374 = vpack.c.b16 %v254, %v246
    %v375 = vpack.c.b16 %v255, %v247
    %v376 = vpack.c.b16 %v256, %v248
    %v377 = vpack.c.b16 %v265, %v257
    %v378 = vpack.c.b16 %v266, %v258
    %v379 = vpack.c.b16 %v267, %v259
    %v380 = vpack.c.b16 %v268, %v260
    %v381 = vpack.c.b16 %v269, %v261
    %v382 = vpack.c.b16 %v270, %v262
    %v383 = vpack.c.b16 %v271, %v263
    %v384 = vpack.c.b16 %v272, %v264
    %v385 = vpack.c.b16 %v281, %v273
    %v386 = vpack.c.b16 %v282, %v274
    %v387 = vpack.c.b16 %v283, %v275
    %v388 = vpack.c.b16 %v284, %v276
    %v389 = vpack.c.b16 %v285, %v277
    %v390 = vpack.c.b16 %v286, %v278
    %v391 = vpack.c.b16 %v287, %v279
    %v392 = vpack.c.b16 %v288, %v280
    %v393 = vpack.c.b16 %v297, %v289
    %v394 = vpack.c.b16 %v298, %v290
    %v395 = vpack.c.b16 %v299, %v291
    %v396 = vpack.c.b16 %v300, %v292
    %v397 = vpack.c.b16 %v301, %v293
    %v398 = vpack.c.b16 %v302, %v294
    %v399 = vpack.c.b16 %v303, %v295
    %v400 = vpack.c.b16 %v304, %v296
    %v401 = vpack.c.b16 %v313, %v305
    %v402 = vpack.c.b16 %v314, %v306
    %v403 = vpack.c.b16 %v315, %v307
    %v404 = vpack.c.b16 %v316, %v308
    %v405 = vpack.c.b16 %v317, %v309
    %v406 = vpack.c.b16 %v318, %v310
    %v407 = vpack.c.b16 %v319, %v311
    %v408 = vpack.c.b16 %v320, %v312
    %v409 = vpack.c.b16 %v329, %v321
    %v410 = vpack.c.b16 %v330, %v322
    %v411 = vpack.c.b16 %v331, %v323
    %v412 = vpack.c.b16 %v332, %v324
    %v413 = vpack.c.b16 %v333, %v325
    %v414 = vpack.c.b16 %v334, %v326
    %v415 = vpack.c.b16 %v335, %v327
    %v416 = vpack.c.b16 %v336, %v328
    %v417 = vpack.c.b16 %v345, %v337
    %v418 = vpack.c.b16 %v346, %v338
    %v419 = vpack.c.b16 %v347, %v339
    %v420 = vpack.c.b16 %v348, %v340
    %v421 = vpack.c.b16 %v349, %v341
    %v422 = vpack.c.b16 %v350, %v342
    %v423 = vpack.c.b16 %v351, %v343
    %v424 = vpack.c.b16 %v352, %v344
    %v425 = vpack.c.b16 %v361, %v353
    %v426 = vpack.c.b16 %v362, %v354
    %v427 = vpack.c.b16 %v363, %v355
    %v428 = vpack.c.b16 %v364, %v356
    %v429 = vpack.c.b16 %v365, %v357
    %v430 = vpack.c.b16 %v366, %v358
    %v431 = vpack.c.b16 %v367, %v359
    %v432 = vpack.c.b16 %v368, %v360
    %497 = vmatpush.bf16.msra.mxu0 %v425
    %498 = vmatpush.bf16.msra.mxu0 %v417
    %499 = vmatpush.bf16.msra.mxu0 %v409
    %500 = vmatpush.bf16.msra.mxu0 %v401
    %501 = vmatpush.bf16.msra.mxu0 %v393
    %502 = vmatpush.bf16.msra.mxu0 %v385
    %503 = vmatpush.bf16.msra.mxu0 %v377
    %504 = vmatpush.bf16.msra.mxu0 %v369
    %505 = vmatmul.bf16.gmra.mxu0 %v161
    %v506 = vpop.f32.mrf.mxu0
    %v507 = vadd.f32 %v113, %v506
    %v508 = vpop.f32.mrf.mxu0
    %v509 = vadd.f32 %v113, %v508
    %510 = vmatmul.bf16.gmra.mxu0 %v162
    %v511 = vpop.f32.mrf.mxu0
    %v512 = vadd.f32 %v113, %v511
    %v513 = vpop.f32.mrf.mxu0
    %v514 = vadd.f32 %v113, %v513
    %515 = vmatmul.bf16.gmra.mxu0 %v163
    %v516 = vpop.f32.mrf.mxu0
    %v517 = vadd.f32 %v113, %v516
    %v518 = vpop.f32.mrf.mxu0
    %v519 = vadd.f32 %v113, %v518
    %520 = vmatmul.bf16.gmra.mxu0 %v164
    %v521 = vpop.f32.mrf.mxu0
    %v522 = vadd.f32 %v113, %v521
    %v523 = vpop.f32.mrf.mxu0
    %v524 = vadd.f32 %v113, %v523
    %525 = vmatmul.bf16.gmra.mxu0 %v165
    %v526 = vpop.f32.mrf.mxu0
    %v527 = vadd.f32 %v113, %v526
    %v528 = vpop.f32.mrf.mxu0
    %v529 = vadd.f32 %v113, %v528
    %530 = vmatmul.bf16.gmra.mxu0 %v166
    %v531 = vpop.f32.mrf.mxu0
    %v532 = vadd.f32 %v113, %v531
    %v533 = vpop.f32.mrf.mxu0
    %v534 = vadd.f32 %v113, %v533
    %535 = vmatmul.bf16.gmra.mxu0 %v167
    %v536 = vpop.f32.mrf.mxu0
    %v537 = vadd.f32 %v113, %v536
    %v538 = vpop.f32.mrf.mxu0
    %v539 = vadd.f32 %v113, %v538
    %540 = vmatmul.bf16.gmra.mxu0 %v168
    %v541 = vpop.f32.mrf.mxu0
    %v542 = vadd.f32 %v113, %v541
    %v543 = vpop.f32.mrf.mxu0
    %v544 = vadd.f32 %v113, %v543
    %545 = vdwg.mxu0
    %546 = vmatpush.bf16.msra.mxu0 %v426
    %547 = vmatpush.bf16.msra.mxu0 %v418
    %548 = vmatpush.bf16.msra.mxu0 %v410
    %549 = vmatpush.bf16.msra.mxu0 %v402
    %550 = vmatpush.bf16.msra.mxu0 %v394
    %551 = vmatpush.bf16.msra.mxu0 %v386
    %552 = vmatpush.bf16.msra.mxu0 %v378
    %553 = vmatpush.bf16.msra.mxu0 %v370
    %554 = vmatmul.bf16.gmra.mxu0 %v161
    %v555 = vpop.f32.mrf.mxu0
    %v556 = vadd.f32 %v114, %v555
    %v557 = vpop.f32.mrf.mxu0
    %v558 = vadd.f32 %v114, %v557
    %559 = vmatmul.bf16.gmra.mxu0 %v162
    %v560 = vpop.f32.mrf.mxu0
    %v561 = vadd.f32 %v114, %v560
    %v562 = vpop.f32.mrf.mxu0
    %v563 = vadd.f32 %v114, %v562
    %564 = vmatmul.bf16.gmra.mxu0 %v163
    %v565 = vpop.f32.mrf.mxu0
    %v566 = vadd.f32 %v114, %v565
    %v567 = vpop.f32.mrf.mxu0
    %v568 = vadd.f32 %v114, %v567
    %569 = vmatmul.bf16.gmra.mxu0 %v164
    %v570 = vpop.f32.mrf.mxu0
    %v571 = vadd.f32 %v114, %v570
    %v572 = vpop.f32.mrf.mxu0
    %v573 = vadd.f32 %v114, %v572
    %574 = vmatmul.bf16.gmra.mxu0 %v165
    %v575 = vpop.f32.mrf.mxu0
    %v576 = vadd.f32 %v114, %v575
    %v577 = vpop.f32.mrf.mxu0
    %v578 = vadd.f32 %v114, %v577
    %579 = vmatmul.bf16.gmra.mxu0 %v166
    %v580 = vpop.f32.mrf.mxu0
    %v581 = vadd.f32 %v114, %v580
    %v582 = vpop.f32.mrf.mxu0
    %v583 = vadd.f32 %v114, %v582
    %584 = vmatmul.bf16.gmra.mxu0 %v167
    %v585 = vpop.f32.mrf.mxu0
    %v586 = vadd.f32 %v114, %v585
    %v587 = vpop.f32.mrf.mxu0
    %v588 = vadd.f32 %v114, %v587
    %589 = vmatmul.bf16.gmra.mxu0 %v168
    %v590 = vpop.f32.mrf.mxu0
    %v591 = vadd.f32 %v114, %v590
    %v592 = vpop.f32.mrf.mxu0
    %v593 = vadd.f32 %v114, %v592
    %594 = vdwg.mxu0
    %595 = vmatpush.bf16.msra.mxu0 %v427
    %596 = vmatpush.bf16.msra.mxu0 %v419
    %597 = vmatpush.bf16.msra.mxu0 %v411
    %598 = vmatpush.bf16.msra.mxu0 %v403
    %599 = vmatpush.bf16.msra.mxu0 %v395
    %600 = vmatpush.bf16.msra.mxu0 %v387
    %601 = vmatpush.bf16.msra.mxu0 %v379
    %602 = vmatpush.bf16.msra.mxu0 %v371
    %603 = vmatmul.bf16.gmra.mxu0 %v161
    %v604 = vpop.f32.mrf.mxu0
    %v605 = vadd.f32 %v115, %v604
    %v606 = vpop.f32.mrf.mxu0
    %v607 = vadd.f32 %v115, %v606
    %608 = vmatmul.bf16.gmra.mxu0 %v162
    %v609 = vpop.f32.mrf.mxu0
    %v610 = vadd.f32 %v115, %v609
    %v611 = vpop.f32.mrf.mxu0
    %v612 = vadd.f32 %v115, %v611
    %613 = vmatmul.bf16.gmra.mxu0 %v163
    %v614 = vpop.f32.mrf.mxu0
    %v615 = vadd.f32 %v115, %v614
    %v616 = vpop.f32.mrf.mxu0
    %v617 = vadd.f32 %v115, %v616
    %618 = vmatmul.bf16.gmra.mxu0 %v164
    %v619 = vpop.f32.mrf.mxu0
    %v620 = vadd.f32 %v115, %v619
    %v621 = vpop.f32.mrf.mxu0
    %v622 = vadd.f32 %v115, %v621
    %623 = vmatmul.bf16.gmra.mxu0 %v165
    %v624 = vpop.f32.mrf.mxu0
    %v625 = vadd.f32 %v115, %v624
    %v626 = vpop.f32.mrf.mxu0
    %v627 = vadd.f32 %v115, %v626
    %628 = vmatmul.bf16.gmra.mxu0 %v166
    %v629 = vpop.f32.mrf.mxu0
    %v630 = vadd.f32 %v115, %v629
    %v631 = vpop.f32.mrf.mxu0
    %v632 = vadd.f32 %v115, %v631
    %633 = vmatmul.bf16.gmra.mxu0 %v167
    %v634 = vpop.f32.mrf.mxu0
    %v635 = vadd.f32 %v115, %v634
    %v636 = vpop.f32.mrf.mxu0
    %v637 = vadd.f32 %v115, %v636
    %638 = vmatmul.bf16.gmra.mxu0 %v168
    %v639 = vpop.f32.mrf.mxu0
    %v640 = vadd.f32 %v115, %v639
    %v641 = vpop.f32.mrf.mxu0
    %v642 = vadd.f32 %v115, %v641
    %643 = vdwg.mxu0
    %644 = vmatpush.bf16.msra.mxu0 %v428
    %645 = vmatpush.bf16.msra.mxu0 %v420
    %646 = vmatpush.bf16.msra.mxu0 %v412
    %647 = vmatpush.bf16.msra.mxu0 %v404
    %648 = vmatpush.bf16.msra.mxu0 %v396
    %649 = vmatpush.bf16.msra.mxu0 %v388
    %650 = vmatpush.bf16.msra.mxu0 %v380
    %651 = vmatpush.bf16.msra.mxu0 %v372
    %652 = vmatmul.bf16.gmra.mxu0 %v161
    %v653 = vpop.f32.mrf.mxu0
    %v654 = vadd.f32 %v116, %v653
    %v655 = vpop.f32.mrf.mxu0
    %v656 = vadd.f32 %v116, %v655
    %657 = vmatmul.bf16.gmra.mxu0 %v162
    %v658 = vpop.f32.mrf.mxu0
    %v659 = vadd.f32 %v116, %v658
    %v660 = vpop.f32.mrf.mxu0
    %v661 = vadd.f32 %v116, %v660
    %662 = vmatmul.bf16.gmra.mxu0 %v163
    %v663 = vpop.f32.mrf.mxu0
    %v664 = vadd.f32 %v116, %v663
    %v665 = vpop.f32.mrf.mxu0
    %v666 = vadd.f32 %v116, %v665
    %667 = vmatmul.bf16.gmra.mxu0 %v164
    %v668 = vpop.f32.mrf.mxu0
    %v669 = vadd.f32 %v116, %v668
    %v670 = vpop.f32.mrf.mxu0
    %v671 = vadd.f32 %v116, %v670
    %672 = vmatmul.bf16.gmra.mxu0 %v165
    %v673 = vpop.f32.mrf.mxu0
    %v674 = vadd.f32 %v116, %v673
    %v675 = vpop.f32.mrf.mxu0
    %v676 = vadd.f32 %v116, %v675
    %677 = vmatmul.bf16.gmra.mxu0 %v166
    %v678 = vpop.f32.mrf.mxu0
    %v679 = vadd.f32 %v116, %v678
    %v680 = vpop.f32.mrf.mxu0
    %v681 = vadd.f32 %v116, %v680
    %682 = vmatmul.bf16.gmra.mxu0 %v167
    %v683 = vpop.f32.mrf.mxu0
    %v684 = vadd.f32 %v116, %v683
    %v685 = vpop.f32.mrf.mxu0
    %v686 = vadd.f32 %v116, %v685
    %687 = vmatmul.bf16.gmra.mxu0 %v168
    %v688 = vpop.f32.mrf.mxu0
    %v689 = vadd.f32 %v116, %v688
    %v690 = vpop.f32.mrf.mxu0
    %v691 = vadd.f32 %v116, %v690
    %692 = vdwg.mxu0
    %693 = vmatpush.bf16.msra.mxu0 %v429
    %694 = vmatpush.bf16.msra.mxu0 %v421
    %695 = vmatpush.bf16.msra.mxu0 %v413
    %696 = vmatpush.bf16.msra.mxu0 %v405
    %697 = vmatpush.bf16.msra.mxu0 %v397
    %698 = vmatpush.bf16.msra.mxu0 %v389
    %699 = vmatpush.bf16.msra.mxu0 %v381
    %700 = vmatpush.bf16.msra.mxu0 %v373
    %701 = vmatmul.bf16.gmra.mxu0 %v161
    %v702 = vpop.f32.mrf.mxu0
    %v703 = vadd.f32 %v117, %v702
    %v704 = vpop.f32.mrf.mxu0
    %v705 = vadd.f32 %v117, %v704
    %706 = vmatmul.bf16.gmra.mxu0 %v162
    %v707 = vpop.f32.mrf.mxu0
    %v708 = vadd.f32 %v117, %v707
    %v709 = vpop.f32.mrf.mxu0
    %v710 = vadd.f32 %v117, %v709
    %711 = vmatmul.bf16.gmra.mxu0 %v163
    %v712 = vpop.f32.mrf.mxu0
    %v713 = vadd.f32 %v117, %v712
    %v714 = vpop.f32.mrf.mxu0
    %v715 = vadd.f32 %v117, %v714
    %716 = vmatmul.bf16.gmra.mxu0 %v164
    %v717 = vpop.f32.mrf.mxu0
    %v718 = vadd.f32 %v117, %v717
    %v719 = vpop.f32.mrf.mxu0
    %v720 = vadd.f32 %v117, %v719
    %721 = vmatmul.bf16.gmra.mxu0 %v165
    %v722 = vpop.f32.mrf.mxu0
    %v723 = vadd.f32 %v117, %v722
    %v724 = vpop.f32.mrf.mxu0
    %v725 = vadd.f32 %v117, %v724
    %726 = vmatmul.bf16.gmra.mxu0 %v166
    %v727 = vpop.f32.mrf.mxu0
    %v728 = vadd.f32 %v117, %v727
    %v729 = vpop.f32.mrf.mxu0
    %v730 = vadd.f32 %v117, %v729
    %731 = vmatmul.bf16.gmra.mxu0 %v167
    %v732 = vpop.f32.mrf.mxu0
    %v733 = vadd.f32 %v117, %v732
    %v734 = vpop.f32.mrf.mxu0
    %v735 = vadd.f32 %v117, %v734
    %736 = vmatmul.bf16.gmra.mxu0 %v168
    %v737 = vpop.f32.mrf.mxu0
    %v738 = vadd.f32 %v117, %v737
    %v739 = vpop.f32.mrf.mxu0
    %v740 = vadd.f32 %v117, %v739
    %741 = vdwg.mxu0
    %742 = vmatpush.bf16.msra.mxu0 %v430
    %743 = vmatpush.bf16.msra.mxu0 %v422
    %744 = vmatpush.bf16.msra.mxu0 %v414
    %745 = vmatpush.bf16.msra.mxu0 %v406
    %746 = vmatpush.bf16.msra.mxu0 %v398
    %747 = vmatpush.bf16.msra.mxu0 %v390
    %748 = vmatpush.bf16.msra.mxu0 %v382
    %749 = vmatpush.bf16.msra.mxu0 %v374
    %750 = vmatmul.bf16.gmra.mxu0 %v161
    %v751 = vpop.f32.mrf.mxu0
    %v752 = vadd.f32 %v118, %v751
    %v753 = vpop.f32.mrf.mxu0
    %v754 = vadd.f32 %v118, %v753
    %755 = vmatmul.bf16.gmra.mxu0 %v162
    %v756 = vpop.f32.mrf.mxu0
    %v757 = vadd.f32 %v118, %v756
    %v758 = vpop.f32.mrf.mxu0
    %v759 = vadd.f32 %v118, %v758
    %760 = vmatmul.bf16.gmra.mxu0 %v163
    %v761 = vpop.f32.mrf.mxu0
    %v762 = vadd.f32 %v118, %v761
    %v763 = vpop.f32.mrf.mxu0
    %v764 = vadd.f32 %v118, %v763
    %765 = vmatmul.bf16.gmra.mxu0 %v164
    %v766 = vpop.f32.mrf.mxu0
    %v767 = vadd.f32 %v118, %v766
    %v768 = vpop.f32.mrf.mxu0
    %v769 = vadd.f32 %v118, %v768
    %770 = vmatmul.bf16.gmra.mxu0 %v165
    %v771 = vpop.f32.mrf.mxu0
    %v772 = vadd.f32 %v118, %v771
    %v773 = vpop.f32.mrf.mxu0
    %v774 = vadd.f32 %v118, %v773
    %775 = vmatmul.bf16.gmra.mxu0 %v166
    %v776 = vpop.f32.mrf.mxu0
    %v777 = vadd.f32 %v118, %v776
    %v778 = vpop.f32.mrf.mxu0
    %v779 = vadd.f32 %v118, %v778
    %780 = vmatmul.bf16.gmra.mxu0 %v167
    %v781 = vpop.f32.mrf.mxu0
    %v782 = vadd.f32 %v118, %v781
    %v783 = vpop.f32.mrf.mxu0
    %v784 = vadd.f32 %v118, %v783
    %785 = vmatmul.bf16.gmra.mxu0 %v168
    %v786 = vpop.f32.mrf.mxu0
    %v787 = vadd.f32 %v118, %v786
    %v788 = vpop.f32.mrf.mxu0
    %v789 = vadd.f32 %v118, %v788
    %790 = vdwg.mxu0
    %791 = vmatpush.bf16.msra.mxu0 %v431
    %792 = vmatpush.bf16.msra.mxu0 %v423
    %793 = vmatpush.bf16.msra.mxu0 %v415
    %794 = vmatpush.bf16.msra.mxu0 %v407
    %795 = vmatpush.bf16.msra.mxu0 %v399
    %796 = vmatpush.bf16.msra.mxu0 %v391
    %797 = vmatpush.bf16.msra.mxu0 %v383
    %798 = vmatpush.bf16.msra.mxu0 %v375
    %799 = vmatmul.bf16.gmra.mxu0 %v161
    %v800 = vpop.f32.mrf.mxu0
    %v801 = vadd.f32 %v119, %v800
    %v802 = vpop.f32.mrf.mxu0
    %v803 = vadd.f32 %v119, %v802
    %804 = vmatmul.bf16.gmra.mxu0 %v162
    %v805 = vpop.f32.mrf.mxu0
    %v806 = vadd.f32 %v119, %v805
    %v807 = vpop.f32.mrf.mxu0
    %v808 = vadd.f32 %v119, %v807
    %809 = vmatmul.bf16.gmra.mxu0 %v163
    %v810 = vpop.f32.mrf.mxu0
    %v811 = vadd.f32 %v119, %v810
    %v812 = vpop.f32.mrf.mxu0
    %v813 = vadd.f32 %v119, %v812
    %814 = vmatmul.bf16.gmra.mxu0 %v164
    %v815 = vpop.f32.mrf.mxu0
    %v816 = vadd.f32 %v119, %v815
    %v817 = vpop.f32.mrf.mxu0
    %v818 = vadd.f32 %v119, %v817
    %819 = vmatmul.bf16.gmra.mxu0 %v165
    %v820 = vpop.f32.mrf.mxu0
    %v821 = vadd.f32 %v119, %v820
    %v822 = vpop.f32.mrf.mxu0
    %v823 = vadd.f32 %v119, %v822
    %824 = vmatmul.bf16.gmra.mxu0 %v166
    %v825 = vpop.f32.mrf.mxu0
    %v826 = vadd.f32 %v119, %v825
    %v827 = vpop.f32.mrf.mxu0
    %v828 = vadd.f32 %v119, %v827
    %829 = vmatmul.bf16.gmra.mxu0 %v167
    %v830 = vpop.f32.mrf.mxu0
    %v831 = vadd.f32 %v119, %v830
    %v832 = vpop.f32.mrf.mxu0
    %v833 = vadd.f32 %v119, %v832
    %834 = vmatmul.bf16.gmra.mxu0 %v168
    %v835 = vpop.f32.mrf.mxu0
    %v836 = vadd.f32 %v119, %v835
    %v837 = vpop.f32.mrf.mxu0
    %v838 = vadd.f32 %v119, %v837
    %839 = vdwg.mxu0
    %840 = vmatpush.bf16.msra.mxu0 %v432
    %841 = vmatpush.bf16.msra.mxu0 %v424
    %842 = vmatpush.bf16.msra.mxu0 %v416
    %843 = vmatpush.bf16.msra.mxu0 %v408
    %844 = vmatpush.bf16.msra.mxu0 %v400
    %845 = vmatpush.bf16.msra.mxu0 %v392
    %846 = vmatpush.bf16.msra.mxu0 %v384
    %847 = vmatpush.bf16.msra.mxu0 %v376
    %848 = vmatmul.bf16.gmra.mxu0 %v161
    %v849 = vpop.f32.mrf.mxu0
    %v850 = vadd.f32 %v120, %v849
    %v851 = vpop.f32.mrf.mxu0
    %v852 = vadd.f32 %v120, %v851
    %853 = vmatmul.bf16.gmra.mxu0 %v162
    %v854 = vpop.f32.mrf.mxu0
    %v855 = vadd.f32 %v120, %v854
    %v856 = vpop.f32.mrf.mxu0
    %v857 = vadd.f32 %v120, %v856
    %858 = vmatmul.bf16.gmra.mxu0 %v163
    %v859 = vpop.f32.mrf.mxu0
    %v860 = vadd.f32 %v120, %v859
    %v861 = vpop.f32.mrf.mxu0
    %v862 = vadd.f32 %v120, %v861
    %863 = vmatmul.bf16.gmra.mxu0 %v164
    %v864 = vpop.f32.mrf.mxu0
    %v865 = vadd.f32 %v120, %v864
    %v866 = vpop.f32.mrf.mxu0
    %v867 = vadd.f32 %v120, %v866
    %868 = vmatmul.bf16.gmra.mxu0 %v165
    %v869 = vpop.f32.mrf.mxu0
    %v870 = vadd.f32 %v120, %v869
    %v871 = vpop.f32.mrf.mxu0
    %v872 = vadd.f32 %v120, %v871
    %873 = vmatmul.bf16.gmra.mxu0 %v166
    %v874 = vpop.f32.mrf.mxu0
    %v875 = vadd.f32 %v120, %v874
    %v876 = vpop.f32.mrf.mxu0
    %v877 = vadd.f32 %v120, %v876
    %878 = vmatmul.bf16.gmra.mxu0 %v167
    %v879 = vpop.f32.mrf.mxu0
    %v880 = vadd.f32 %v120, %v879
    %v881 = vpop.f32.mrf.mxu0
    %v882 = vadd.f32 %v120, %v881
    %883 = vmatmul.bf16.gmra.mxu0 %v168
    %v884 = vpop.f32.mrf.mxu0
    %v885 = vadd.f32 %v120, %v884
    %v886 = vpop.f32.mrf.mxu0
    %v887 = vadd.f32 %v120, %v886
    %888 = vdwg.mxu0
    %889 = vst [vmem:[#allocation5] sm:$0xff] %v507
    %890 = vst [vmem:[#allocation5 + $0x8] sm:$0xff] %v556
    %891 = vst [vmem:[#allocation5 + $0x10] sm:$0xff] %v605
    %892 = vst [vmem:[#allocation5 + $0x18] sm:$0xff] %v654
    %893 = vst [vmem:[#allocation5 + $0x20] sm:$0xff] %v703
    %894 = vst [vmem:[#allocation5 + $0x28] sm:$0xff] %v752
    %895 = vst [vmem:[#allocation5 + $0x30] sm:$0xff] %v801
    %896 = vst [vmem:[#allocation5 + $0x38] sm:$0xff] %v850
    %897 = vst [vmem:[#allocation5 + $0x40] sm:$0xff] %v509
    %898 = vst [vmem:[#allocation5 + $0x48] sm:$0xff] %v558
    %899 = vst [vmem:[#allocation5 + $0x50] sm:$0xff] %v607
    %900 = vst [vmem:[#allocation5 + $0x58] sm:$0xff] %v656
    %901 = vst [vmem:[#allocation5 + $0x60] sm:$0xff] %v705
    %902 = vst [vmem:[#allocation5 + $0x68] sm:$0xff] %v754
    %903 = vst [vmem:[#allocation5 + $0x70] sm:$0xff] %v803
    %904 = vst [vmem:[#allocation5 + $0x78] sm:$0xff] %v852
    %905 = vst [vmem:[#allocation5 + $0x80] sm:$0xff] %v512
    %906 = vst [vmem:[#allocation5 + $0x88] sm:$0xff] %v561
    %907 = vst [vmem:[#allocation5 + $0x90] sm:$0xff] %v610
    %908 = vst [vmem:[#allocation5 + $0x98] sm:$0xff] %v659
    %909 = vst [vmem:[#allocation5 + $0xa0] sm:$0xff] %v708
    %910 = vst [vmem:[#allocation5 + $0xa8] sm:$0xff] %v757
    %911 = vst [vmem:[#allocation5 + $0xb0] sm:$0xff] %v806
    %912 = vst [vmem:[#allocation5 + $0xb8] sm:$0xff] %v855
    %913 = vst [vmem:[#allocation5 + $0xc0] sm:$0xff] %v514
    %914 = vst [vmem:[#allocation5 + $0xc8] sm:$0xff] %v563
    %915 = vst [vmem:[#allocation5 + $0xd0] sm:$0xff] %v612
    %916 = vst [vmem:[#allocation5 + $0xd8] sm:$0xff] %v661
    %917 = vst [vmem:[#allocation5 + $0xe0] sm:$0xff] %v710
    %918 = vst [vmem:[#allocation5 + $0xe8] sm:$0xff] %v759
    %919 = vst [vmem:[#allocation5 + $0xf0] sm:$0xff] %v808
    %920 = vst [vmem:[#allocation5 + $0xf8] sm:$0xff] %v857
    %921 = vst [vmem:[#allocation5 + $0x100] sm:$0xff] %v517
    %922 = vst [vmem:[#allocation5 + $0x108] sm:$0xff] %v566
    %923 = vst [vmem:[#allocation5 + $0x110] sm:$0xff] %v615
    %924 = vst [vmem:[#allocation5 + $0x118] sm:$0xff] %v664
    %925 = vst [vmem:[#allocation5 + $0x120] sm:$0xff] %v713
    %926 = vst [vmem:[#allocation5 + $0x128] sm:$0xff] %v762
    %927 = vst [vmem:[#allocation5 + $0x130] sm:$0xff] %v811
    %928 = vst [vmem:[#allocation5 + $0x138] sm:$0xff] %v860
    %929 = vst [vmem:[#allocation5 + $0x140] sm:$0xff] %v519
    %930 = vst [vmem:[#allocation5 + $0x148] sm:$0xff] %v568
    %931 = vst [vmem:[#allocation5 + $0x150] sm:$0xff] %v617
    %932 = vst [vmem:[#allocation5 + $0x158] sm:$0xff] %v666
    %933 = vst [vmem:[#allocation5 + $0x160] sm:$0xff] %v715
    %934 = vst [vmem:[#allocation5 + $0x168] sm:$0xff] %v764
    %935 = vst [vmem:[#allocation5 + $0x170] sm:$0xff] %v813
    %936 = vst [vmem:[#allocation5 + $0x178] sm:$0xff] %v862
    %937 = vst [vmem:[#allocation5 + $0x180] sm:$0xff] %v522
    %938 = vst [vmem:[#allocation5 + $0x188] sm:$0xff] %v571
    %939 = vst [vmem:[#allocation5 + $0x190] sm:$0xff] %v620
    %940 = vst [vmem:[#allocation5 + $0x198] sm:$0xff] %v669
    %941 = vst [vmem:[#allocation5 + $0x1a0] sm:$0xff] %v718
    %942 = vst [vmem:[#allocation5 + $0x1a8] sm:$0xff] %v767
    %943 = vst [vmem:[#allocation5 + $0x1b0] sm:$0xff] %v816
    %944 = vst [vmem:[#allocation5 + $0x1b8] sm:$0xff] %v865
    %945 = vst [vmem:[#allocation5 + $0x1c0] sm:$0xff] %v524
    %946 = vst [vmem:[#allocation5 + $0x1c8] sm:$0xff] %v573
    %947 = vst [vmem:[#allocation5 + $0x1d0] sm:$0xff] %v622
    %948 = vst [vmem:[#allocation5 + $0x1d8] sm:$0xff] %v671
    %949 = vst [vmem:[#allocation5 + $0x1e0] sm:$0xff] %v720
    %950 = vst [vmem:[#allocation5 + $0x1e8] sm:$0xff] %v769
    %951 = vst [vmem:[#allocation5 + $0x1f0] sm:$0xff] %v818
    %952 = vst [vmem:[#allocation5 + $0x1f8] sm:$0xff] %v867
    %953 = vst [vmem:[#allocation5 + $0x200] sm:$0xff] %v527
    %954 = vst [vmem:[#allocation5 + $0x208] sm:$0xff] %v576
    %955 = vst [vmem:[#allocation5 + $0x210] sm:$0xff] %v625
    %956 = vst [vmem:[#allocation5 + $0x218] sm:$0xff] %v674
    %957 = vst [vmem:[#allocation5 + $0x220] sm:$0xff] %v723
    %958 = vst [vmem:[#allocation5 + $0x228] sm:$0xff] %v772
    %959 = vst [vmem:[#allocation5 + $0x230] sm:$0xff] %v821
    %960 = vst [vmem:[#allocation5 + $0x238] sm:$0xff] %v870
    %961 = vst [vmem:[#allocation5 + $0x240] sm:$0xff] %v529
    %962 = vst [vmem:[#allocation5 + $0x248] sm:$0xff] %v578
    %963 = vst [vmem:[#allocation5 + $0x250] sm:$0xff] %v627
    %964 = vst [vmem:[#allocation5 + $0x258] sm:$0xff] %v676
    %965 = vst [vmem:[#allocation5 + $0x260] sm:$0xff] %v725
    %966 = vst [vmem:[#allocation5 + $0x268] sm:$0xff] %v774
    %967 = vst [vmem:[#allocation5 + $0x270] sm:$0xff] %v823
    %968 = vst [vmem:[#allocation5 + $0x278] sm:$0xff] %v872
    %969 = vst [vmem:[#allocation5 + $0x280] sm:$0xff] %v532
    %970 = vst [vmem:[#allocation5 + $0x288] sm:$0xff] %v581
    %971 = vst [vmem:[#allocation5 + $0x290] sm:$0xff] %v630
    %972 = vst [vmem:[#allocation5 + $0x298] sm:$0xff] %v679
    %973 = vst [vmem:[#allocation5 + $0x2a0] sm:$0xff] %v728
    %974 = vst [vmem:[#allocation5 + $0x2a8] sm:$0xff] %v777
    %975 = vst [vmem:[#allocation5 + $0x2b0] sm:$0xff] %v826
    %976 = vst [vmem:[#allocation5 + $0x2b8] sm:$0xff] %v875
    %977 = vst [vmem:[#allocation5 + $0x2c0] sm:$0xff] %v534
    %978 = vst [vmem:[#allocation5 + $0x2c8] sm:$0xff] %v583
    %979 = vst [vmem:[#allocation5 + $0x2d0] sm:$0xff] %v632
    %980 = vst [vmem:[#allocation5 + $0x2d8] sm:$0xff] %v681
    %981 = vst [vmem:[#allocation5 + $0x2e0] sm:$0xff] %v730
    %982 = vst [vmem:[#allocation5 + $0x2e8] sm:$0xff] %v779
    %983 = vst [vmem:[#allocation5 + $0x2f0] sm:$0xff] %v828
    %984 = vst [vmem:[#allocation5 + $0x2f8] sm:$0xff] %v877
    %985 = vst [vmem:[#allocation5 + $0x300] sm:$0xff] %v537
    %986 = vst [vmem:[#allocation5 + $0x308] sm:$0xff] %v586
    %987 = vst [vmem:[#allocation5 + $0x310] sm:$0xff] %v635
    %988 = vst [vmem:[#allocation5 + $0x318] sm:$0xff] %v684
    %989 = vst [vmem:[#allocation5 + $0x320] sm:$0xff] %v733
    %990 = vst [vmem:[#allocation5 + $0x328] sm:$0xff] %v782
    %991 = vst [vmem:[#allocation5 + $0x330] sm:$0xff] %v831
    %992 = vst [vmem:[#allocation5 + $0x338] sm:$0xff] %v880
    %993 = vst [vmem:[#allocation5 + $0x340] sm:$0xff] %v539
    %994 = vst [vmem:[#allocation5 + $0x348] sm:$0xff] %v588
    %995 = vst [vmem:[#allocation5 + $0x350] sm:$0xff] %v637
    %996 = vst [vmem:[#allocation5 + $0x358] sm:$0xff] %v686
    %997 = vst [vmem:[#allocation5 + $0x360] sm:$0xff] %v735
    %998 = vst [vmem:[#allocation5 + $0x368] sm:$0xff] %v784
    %999 = vst [vmem:[#allocation5 + $0x370] sm:$0xff] %v833
    %1000 = vst [vmem:[#allocation5 + $0x378] sm:$0xff] %v882
    %1001 = vst [vmem:[#allocation5 + $0x380] sm:$0xff] %v542
    %1002 = vst [vmem:[#allocation5 + $0x388] sm:$0xff] %v591
    %1003 = vst [vmem:[#allocation5 + $0x390] sm:$0xff] %v640
    %1004 = vst [vmem:[#allocation5 + $0x398] sm:$0xff] %v689
    %1005 = vst [vmem:[#allocation5 + $0x3a0] sm:$0xff] %v738
    %1006 = vst [vmem:[#allocation5 + $0x3a8] sm:$0xff] %v787
    %1007 = vst [vmem:[#allocation5 + $0x3b0] sm:$0xff] %v836
    %1008 = vst [vmem:[#allocation5 + $0x3b8] sm:$0xff] %v885
    %1009 = vst [vmem:[#allocation5 + $0x3c0] sm:$0xff] %v544
    %1010 = vst [vmem:[#allocation5 + $0x3c8] sm:$0xff] %v593
    %1011 = vst [vmem:[#allocation5 + $0x3d0] sm:$0xff] %v642
    %1012 = vst [vmem:[#allocation5 + $0x3d8] sm:$0xff] %v691
    %1013 = vst [vmem:[#allocation5 + $0x3e0] sm:$0xff] %v740
    %1014 = vst [vmem:[#allocation5 + $0x3e8] sm:$0xff] %v789
    %1015 = vst [vmem:[#allocation5 + $0x3f0] sm:$0xff] %v838
    %1016 = vst [vmem:[#allocation5 + $0x3f8] sm:$0xff] %v887
    // Predicated region
    $region18: #{caption_decoder_forward.5} parent=1 // pred_check
      _
    $region19: #{caption_decoder_forward.5} parent=1 // pred_check_branch
      %1018 = sbr.rel (0) target = $region21
    $region20: #{caption_decoder_forward.5} parent=1 // pred_region
      %1020 = vsyncadd [#allocation4], 0
      %s1021 = sshll.u32 [#allocation5], 4
      %s1022 = int_to_ptr.vmem [resolvable:$true] %s1021
      %s1023 = sshll.u32 %s3, 4
      %s1024 = int_to_ptr.hbm [resolvable:$true] %s1023
      %1029 = dma.vmem_to_hbm [thread:$0]  %s1022, 16384, %s1024, [#allocation4], 1024, 1024, 64
    $region21: #{caption_decoder_forward.5} parent=1 // pred_fallthru
      _
    // Predicated region
    $region22: #{caption_decoder_forward.5} parent=1 // pred_check
      _
    $region23: #{caption_decoder_forward.5} parent=1 // pred_check_branch
      %1031 = sbr.rel (0) target = $region25
    $region24: #{caption_decoder_forward.5} parent=1 // pred_region
      %1033 = dma.done [#allocation4], 16384
    $region25: #{caption_decoder_forward.5} parent=1 // pred_fallthru
      _
    %1034 = vsyncpa [#allocation3], 1
    %1035 = vsyncpa [#allocation4], 1

// kernel: caption_decoder_forward.4
$region0: #{caption_decoder_forward.4}
  #allocation0 [shape = 'u32[]', space=smem, size = 0x4, offset = 0x4, fixed_abs, tag = 'smem constant byte address 0x4 - core index']
  #allocation1 [shape = 'u32[72,128]{1,0:T(1,128)}', space=vmem, size = 0x9000, scoped, tag = 'internal scratch']
  #allocation2 [shape = 'f32[8,128]{1,0:T(8,128)}', space=vmem, size = 0x1000, scoped, tag = 'scratch operand']
  #allocation3 [shape = 'f32[8,128]{1,0:T(8,128)}', space=vmem, size = 0x1000, scoped, tag = 'scratch operand']
  %s0 = inlined_call_operand.vmem [shape: f32[16,8,512], index: 0, kind: input, shape index: {}]
  %s1 = inlined_call_operand.vmem [shape: bf16[128,512], index: 1, kind: input, shape index: {}]
  %s2 = inlined_call_operand.vmem [shape: bf16[8,16,128], index: 2, kind: output, shape index: {}]
  %s3 = sld [smem:[#allocation0]]
  $region22: #{caption_decoder_forward.4} parent=0
    _
  %s5 = ssub.s32 1, %s3
  %s6 = scalar_select 0, %s5, %s3
  // Predicated region
  $region2: #{caption_decoder_forward.4} parent=0 // pred_check
    _
  $region3: #{caption_decoder_forward.4} parent=0 // pred_check_branch
    %8 = sbr.rel (0) target = $region5
  $region4: #{caption_decoder_forward.4} parent=0 // pred_region
    _
  $region5: #{caption_decoder_forward.4} parent=0 // pred_fallthru
    _
  // Predicated region
  $region6: #{caption_decoder_forward.4} parent=0 // pred_check
    _
  $region7: #{caption_decoder_forward.4} parent=0 // pred_check_branch
    %10 = sbr.rel (0) target = $region9
  $region8: #{caption_decoder_forward.4} parent=0 // pred_region
    _
  $region9: #{caption_decoder_forward.4} parent=0 // pred_fallthru
    _
  %p11 = scmp.eq.s32.totalorder 0, 0
  // Predicated region
  $region10: #{caption_decoder_forward.4} parent=0 // pred_check
    %p12 = pneg %p11
  $region11: #{caption_decoder_forward.4} parent=0 // pred_check_branch
    %14 = sbr.rel (%p12) target = $region13
  $region12: #{caption_decoder_forward.4} parent=0 // pred_region
    %15 = vst [vmem:[#allocation2] sm:$0xff] 0.0
    %16 = vst [vmem:[#allocation3] sm:$0xff] 0.0
  $region13: #{caption_decoder_forward.4} parent=0 // pred_fallthru
    _
  %v17 = vld [vmem:[%s0] sm:$0xff]
  %v18 = vld [vmem:[%s0 + $0x8] sm:$0xff]
  %v19 = vld [vmem:[%s0 + $0x10] sm:$0xff]
  %v20 = vld [vmem:[%s0 + $0x18] sm:$0xff]
  %v21 = vld [vmem:[#allocation2] sm:$0xff]
  %v22 = vpack.c.bf16 %v21, %v21
  %v23 = vld [vmem:[%s1] sm:$0xff]
  %v24 = vld [vmem:[%s1 + $0x8] sm:$0xff]
  %v25 = vld [vmem:[%s1 + $0x10] sm:$0xff]
  %v26 = vld [vmem:[%s1 + $0x18] sm:$0xff]
  %v27 = vld [vmem:[%s1 + $0x20] sm:$0xff]
  %v28 = vld [vmem:[%s1 + $0x28] sm:$0xff]
  %v29 = vld [vmem:[%s1 + $0x30] sm:$0xff]
  %v30 = vld [vmem:[%s1 + $0x38] sm:$0xff]
  %v31 = vld [vmem:[%s1 + $0x40] sm:$0xff]
  %v32 = vld [vmem:[%s1 + $0x48] sm:$0xff]
  %v33 = vld [vmem:[%s1 + $0x50] sm:$0xff]
  %v34 = vld [vmem:[%s1 + $0x58] sm:$0xff]
  %v35 = vld [vmem:[%s1 + $0x60] sm:$0xff]
  %v36 = vld [vmem:[%s1 + $0x68] sm:$0xff]
  %v37 = vld [vmem:[%s1 + $0x70] sm:$0xff]
  %v38 = vld [vmem:[%s1 + $0x78] sm:$0xff]
  %v39 = vld [vmem:[%s1 + $0x80] sm:$0xff]
  %v40 = vld [vmem:[%s1 + $0x88] sm:$0xff]
  %v41 = vld [vmem:[%s1 + $0x90] sm:$0xff]
  %v42 = vld [vmem:[%s1 + $0x98] sm:$0xff]
  %v43 = vld [vmem:[%s1 + $0xa0] sm:$0xff]
  %v44 = vld [vmem:[%s1 + $0xa8] sm:$0xff]
  %v45 = vld [vmem:[%s1 + $0xb0] sm:$0xff]
  %v46 = vld [vmem:[%s1 + $0xb8] sm:$0xff]
  %v47 = vld [vmem:[%s1 + $0xc0] sm:$0xff]
  %v48 = vld [vmem:[%s1 + $0xc8] sm:$0xff]
  %v49 = vld [vmem:[%s1 + $0xd0] sm:$0xff]
  %v50 = vld [vmem:[%s1 + $0xd8] sm:$0xff]
  %v51 = vld [vmem:[%s1 + $0xe0] sm:$0xff]
  %v52 = vld [vmem:[%s1 + $0xe8] sm:$0xff]
  %v53 = vld [vmem:[%s1 + $0xf0] sm:$0xff]
  %v54 = vld [vmem:[%s1 + $0xf8] sm:$0xff]
  %v87 = vunpack.c.l.b16 %v23
  %v88 = vunpack.c.h.b16 %v23
  %v89 = vunpack.c.l.b16 %v24
  %v90 = vunpack.c.h.b16 %v24
  %v91 = vunpack.c.l.b16 %v25
  %v92 = vunpack.c.h.b16 %v25
  %v93 = vunpack.c.l.b16 %v26
  %v94 = vunpack.c.h.b16 %v26
  %v95 = vunpack.c.l.b16 %v27
  %v96 = vunpack.c.h.b16 %v27
  %v97 = vunpack.c.l.b16 %v28
  %v98 = vunpack.c.h.b16 %v28
  %v99 = vunpack.c.l.b16 %v29
  %v100 = vunpack.c.h.b16 %v29
  %v101 = vunpack.c.l.b16 %v30
  %v102 = vunpack.c.h.b16 %v30
  %v103 = vunpack.c.l.b16 %v31
  %v104 = vunpack.c.h.b16 %v31
  %v105 = vunpack.c.l.b16 %v32
  %v106 = vunpack.c.h.b16 %v32
  %v107 = vunpack.c.l.b16 %v33
  %v108 = vunpack.c.h.b16 %v33
  %v109 = vunpack.c.l.b16 %v34
  %v110 = vunpack.c.h.b16 %v34
  %v111 = vunpack.c.l.b16 %v35
  %v112 = vunpack.c.h.b16 %v35
  %v113 = vunpack.c.l.b16 %v36
  %v114 = vunpack.c.h.b16 %v36
  %v115 = vunpack.c.l.b16 %v37
  %v116 = vunpack.c.h.b16 %v37
  %v117 = vunpack.c.l.b16 %v38
  %v118 = vunpack.c.h.b16 %v38
  %v119 = vunpack.c.l.b16 %v39
  %v120 = vunpack.c.h.b16 %v39
  %v121 = vunpack.c.l.b16 %v40
  %v122 = vunpack.c.h.b16 %v40
  %v123 = vunpack.c.l.b16 %v41
  %v124 = vunpack.c.h.b16 %v41
  %v125 = vunpack.c.l.b16 %v42
  %v126 = vunpack.c.h.b16 %v42
  %v127 = vunpack.c.l.b16 %v43
  %v128 = vunpack.c.h.b16 %v43
  %v129 = vunpack.c.l.b16 %v44
  %v130 = vunpack.c.h.b16 %v44
  %v131 = vunpack.c.l.b16 %v45
  %v132 = vunpack.c.h.b16 %v45
  %v133 = vunpack.c.l.b16 %v46
  %v134 = vunpack.c.h.b16 %v46
  %v135 = vunpack.c.l.b16 %v47
  %v136 = vunpack.c.h.b16 %v47
  %v137 = vunpack.c.l.b16 %v48
  %v138 = vunpack.c.h.b16 %v48
  %v139 = vunpack.c.l.b16 %v49
  %v140 = vunpack.c.h.b16 %v49
  %v141 = vunpack.c.l.b16 %v50
  %v142 = vunpack.c.h.b16 %v50
  %v143 = vunpack.c.l.b16 %v51
  %v144 = vunpack.c.h.b16 %v51
  %v145 = vunpack.c.l.b16 %v52
  %v146 = vunpack.c.h.b16 %v52
  %v147 = vunpack.c.l.b16 %v53
  %v148 = vunpack.c.h.b16 %v53
  %v149 = vunpack.c.l.b16 %v54
  %v150 = vunpack.c.h.b16 %v54
  %v151 = vpack.c.b16 %v91, %v87
  %v152 = vpack.c.b16 %v92, %v88
  %v153 = vpack.c.b16 %v93, %v89
  %v154 = vpack.c.b16 %v94, %v90
  %v155 = vpack.c.b16 %v99, %v95
  %v156 = vpack.c.b16 %v100, %v96
  %v157 = vpack.c.b16 %v101, %v97
  %v158 = vpack.c.b16 %v102, %v98
  %v159 = vpack.c.b16 %v107, %v103
  %v160 = vpack.c.b16 %v108, %v104
  %v161 = vpack.c.b16 %v109, %v105
  %v162 = vpack.c.b16 %v110, %v106
  %v163 = vpack.c.b16 %v115, %v111
  %v164 = vpack.c.b16 %v116, %v112
  %v165 = vpack.c.b16 %v117, %v113
  %v166 = vpack.c.b16 %v118, %v114
  %v167 = vpack.c.b16 %v123, %v119
  %v168 = vpack.c.b16 %v124, %v120
  %v169 = vpack.c.b16 %v125, %v121
  %v170 = vpack.c.b16 %v126, %v122
  %v171 = vpack.c.b16 %v131, %v127
  %v172 = vpack.c.b16 %v132, %v128
  %v173 = vpack.c.b16 %v133, %v129
  %v174 = vpack.c.b16 %v134, %v130
  %v175 = vpack.c.b16 %v139, %v135
  %v176 = vpack.c.b16 %v140, %v136
  %v177 = vpack.c.b16 %v141, %v137
  %v178 = vpack.c.b16 %v142, %v138
  %v179 = vpack.c.b16 %v147, %v143
  %v180 = vpack.c.b16 %v148, %v144
  %v181 = vpack.c.b16 %v149, %v145
  %v182 = vpack.c.b16 %v150, %v146
  %215 = vmatpush.bf16.msra.mxu0 %v179
  %216 = vmatpush.bf16.msra.mxu0 %v175
  %217 = vmatpush.bf16.msra.mxu0 %v171
  %218 = vmatpush.bf16.msra.mxu0 %v167
  %219 = vmatpush.bf16.msra.mxu0 %v163
  %220 = vmatpush.bf16.msra.mxu0 %v159
  %221 = vmatpush.bf16.msra.mxu0 %v155
  %222 = vmatpush.bf16.msra.mxu0 %v151
  %223 = vmatmul.bf16.gmra.mxu0 %v22
  %v224 = vpop.f32.mrf.mxu0
  %v225 = vadd.f32 0.0, %v224
  %v226 = vpop.f32.mrf.mxu0
  %227 = vdwg.mxu0
  %228 = vmatpush.bf16.msra.mxu0 %v180
  %229 = vmatpush.bf16.msra.mxu0 %v176
  %230 = vmatpush.bf16.msra.mxu0 %v172
  %231 = vmatpush.bf16.msra.mxu0 %v168
  %232 = vmatpush.bf16.msra.mxu0 %v164
  %233 = vmatpush.bf16.msra.mxu0 %v160
  %234 = vmatpush.bf16.msra.mxu0 %v156
  %235 = vmatpush.bf16.msra.mxu0 %v152
  %236 = vmatmul.bf16.gmra.mxu0 %v22
  %v237 = vpop.f32.mrf.mxu0
  %v238 = vadd.f32 0.0, %v237
  %v239 = vpop.f32.mrf.mxu0
  %240 = vdwg.mxu0
  %241 = vmatpush.bf16.msra.mxu0 %v181
  %242 = vmatpush.bf16.msra.mxu0 %v177
  %243 = vmatpush.bf16.msra.mxu0 %v173
  %244 = vmatpush.bf16.msra.mxu0 %v169
  %245 = vmatpush.bf16.msra.mxu0 %v165
  %246 = vmatpush.bf16.msra.mxu0 %v161
  %247 = vmatpush.bf16.msra.mxu0 %v157
  %248 = vmatpush.bf16.msra.mxu0 %v153
  %249 = vmatmul.bf16.gmra.mxu0 %v22
  %v250 = vpop.f32.mrf.mxu0
  %v251 = vadd.f32 0.0, %v250
  %v252 = vpop.f32.mrf.mxu0
  %253 = vdwg.mxu0
  %254 = vmatpush.bf16.msra.mxu0 %v182
  %255 = vmatpush.bf16.msra.mxu0 %v178
  %256 = vmatpush.bf16.msra.mxu0 %v174
  %257 = vmatpush.bf16.msra.mxu0 %v170
  %258 = vmatpush.bf16.msra.mxu0 %v166
  %259 = vmatpush.bf16.msra.mxu0 %v162
  %260 = vmatpush.bf16.msra.mxu0 %v158
  %261 = vmatpush.bf16.msra.mxu0 %v154
  %262 = vmatmul.bf16.gmra.mxu0 %v22
  %v263 = vpop.f32.mrf.mxu0
  %v264 = vadd.f32 0.0, %v263
  %v265 = vpop.f32.mrf.mxu0
  %266 = vdwg.mxu0
  %v267 = vadd.f32 %v17, %v225
  %v268 = vadd.f32 %v18, %v238
  %v269 = vadd.f32 %v19, %v251
  %v270 = vadd.f32 %v20, %v264
  %v271 = vxor.u32 %v267, 2147483648
  %v272 = vxor.u32 %v268, 2147483648
  %v273 = vmul.f32 %v271, 1.442695
  %v274 = vpow.pop %v273
  %v275 = vmul.f32 %v272, 1.442695
  %v276 = vpow.pop %v275
  %v277 = vadd.f32 %v274, 1.0
  %v278 = vadd.f32 %v276, 1.0
  %v279 = vrcp.pop %v277
  %v280 = vmul.f32 %v277, %v279
  %v281 = vsub.f32 1.0, %v280
  %v282 = vmul.f32 %v279, %v281
  %v283 = vadd.f32 %v279, %v282
  %vm284 = vweird.f32 %v277
  %vm285 = vweird.f32 %v279
  %vm286 = vmor %vm284, %vm285
  %v287 = vsel %vm286, %v279, %v283
  %v288 = vand.u32 2147483647, %v277
  %vm289 = vcmp.eq.f32.partialorder %v288, 8.507059e+37
  %v290 = vand.u32 %v277, 2147483648
  %v291 = vor.u32 1.1754944e-38, %v290
  %v292 = vsel %vm289, %v291, %v287
  %v293 = vmul.f32 1.0, %v292
  %v294 = vrcp.pop %v278
  %v295 = vmul.f32 %v278, %v294
  %v296 = vsub.f32 1.0, %v295
  %v297 = vmul.f32 %v294, %v296
  %v298 = vadd.f32 %v294, %v297
  %vm299 = vweird.f32 %v278
  %vm300 = vweird.f32 %v294
  %vm301 = vmor %vm299, %vm300
  %v302 = vsel %vm301, %v294, %v298
  %v303 = vand.u32 2147483647, %v278
  %vm304 = vcmp.eq.f32.partialorder %v303, 8.507059e+37
  %v305 = vand.u32 %v278, 2147483648
  %v306 = vor.u32 1.1754944e-38, %v305
  %v307 = vsel %vm304, %v306, %v302
  %v308 = vmul.f32 1.0, %v307
  %v309 = vtanh.pop %v269
  %v310 = vxor.u32 %v270, 2147483648
  %v311 = vmul.f32 %v310, 1.442695
  %v312 = vpow.pop %v311
  %v313 = vadd.f32 %v312, 1.0
  %v314 = vrcp.pop %v313
  %v315 = vmul.f32 %v313, %v314
  %v316 = vsub.f32 1.0, %v315
  %v317 = vmul.f32 %v314, %v316
  %v318 = vadd.f32 %v314, %v317
  %vm319 = vweird.f32 %v313
  %vm320 = vweird.f32 %v314
  %vm321 = vmor %vm319, %vm320
  %v322 = vsel %vm321, %v314, %v318
  %v323 = vand.u32 2147483647, %v313
  %vm324 = vcmp.eq.f32.partialorder %v323, 8.507059e+37
  %v325 = vand.u32 %v313, 2147483648
  %v326 = vor.u32 1.1754944e-38, %v325
  %v327 = vsel %vm324, %v326, %v322
  %v328 = vmul.f32 1.0, %v327
  %v329 = vld [vmem:[#allocation3] sm:$0xff]
  %v330 = vmul.f32 %v308, %v329
  %v331 = vmul.f32 %v293, %v309
  %v332 = vadd.f32 %v330, %v331
  %v333 = vtanh.pop %v332
  %v334 = vmul.f32 %v328, %v333
  %335 = vst [vmem:[#allocation3] sm:$0xff] %v332
  %336 = vst [vmem:[#allocation2] sm:$0xff] %v334
  %v338 = vrot.slane %v334, 1
  %v339 = vrot.slane %v334, 2
  %v340 = vrot.slane %v334, 3
  %v341 = vrot.slane %v334, 4
  %v342 = vrot.slane %v334, 5
  %v343 = vrot.slane %v334, 6
  %v344 = vrot.slane %v334, 7
  %v352 = vpack.c.bf16 %v334, %v334
  %v353 = vpack.c.bf16 %v338, %v338
  %v354 = vpack.c.bf16 %v339, %v339
  %v355 = vpack.c.bf16 %v340, %v340
  %v356 = vpack.c.bf16 %v341, %v341
  %v357 = vpack.c.bf16 %v342, %v342
  %v358 = vpack.c.bf16 %v343, %v343
  %v359 = vpack.c.bf16 %v344, %v344
  %vm360 = vcmask 1040384
  %vm361 = vsmask.f32 256
  %vm362 = vmand %vm360, %vm361
  %v363 = vld [vmem:[%s2] sm:$0x1]
  %v364 = vsel %vm362, %v352, %v363
  %365 = vst [vmem:[%s2] sm:$0x1] %v364
  %v366 = vld [vmem:[%s2 + $0x8] sm:$0x1]
  %v367 = vsel %vm362, %v353, %v366
  %368 = vst [vmem:[%s2 + $0x8] sm:$0x1] %v367
  %v369 = vld [vmem:[%s2 + $0x10] sm:$0x1]
  %v370 = vsel %vm362, %v354, %v369
  %371 = vst [vmem:[%s2 + $0x10] sm:$0x1] %v370
  %v372 = vld [vmem:[%s2 + $0x18] sm:$0x1]
  %v373 = vsel %vm362, %v355, %v372
  %374 = vst [vmem:[%s2 + $0x18] sm:$0x1] %v373
  %v375 = vld [vmem:[%s2 + $0x20] sm:$0x1]
  %v376 = vsel %vm362, %v356, %v375
  %377 = vst [vmem:[%s2 + $0x20] sm:$0x1] %v376
  %v378 = vld [vmem:[%s2 + $0x28] sm:$0x1]
  %v379 = vsel %vm362, %v357, %v378
  %380 = vst [vmem:[%s2 + $0x28] sm:$0x1] %v379
  %v381 = vld [vmem:[%s2 + $0x30] sm:$0x1]
  %v382 = vsel %vm362, %v358, %v381
  %383 = vst [vmem:[%s2 + $0x30] sm:$0x1] %v382
  %v384 = vld [vmem:[%s2 + $0x38] sm:$0x1]
  %v385 = vsel %vm362, %v359, %v384
  %386 = vst [vmem:[%s2 + $0x38] sm:$0x1] %v385
  %s387 = scalar_lea.vmem %s0, 32
  %v388 = vld [vmem:[%s387] sm:$0xff]
  %v389 = vld [vmem:[%s387 + $0x8] sm:$0xff]
  %v390 = vld [vmem:[%s387 + $0x10] sm:$0xff]
  %v391 = vld [vmem:[%s387 + $0x18] sm:$0xff]
  %v392 = vld [vmem:[#allocation2] sm:$0xff]
  %v393 = vpack.c.bf16 %v392, %v392
  %v394 = vld [vmem:[%s1] sm:$0xff]
  %v395 = vld [vmem:[%s1 + $0x8] sm:$0xff]
  %v396 = vld [vmem:[%s1 + $0x10] sm:$0xff]
  %v397 = vld [vmem:[%s1 + $0x18] sm:$0xff]
  %v398 = vld [vmem:[%s1 + $0x20] sm:$0xff]
  %v399 = vld [vmem:[%s1 + $0x28] sm:$0xff]
  %v400 = vld [vmem:[%s1 + $0x30] sm:$0xff]
  %v401 = vld [vmem:[%s1 + $0x38] sm:$0xff]
  %v402 = vld [vmem:[%s1 + $0x40] sm:$0xff]
  %v403 = vld [vmem:[%s1 + $0x48] sm:$0xff]
  %v404 = vld [vmem:[%s1 + $0x50] sm:$0xff]
  %v405 = vld [vmem:[%s1 + $0x58] sm:$0xff]
  %v406 = vld [vmem:[%s1 + $0x60] sm:$0xff]
  %v407 = vld [vmem:[%s1 + $0x68] sm:$0xff]
  %v408 = vld [vmem:[%s1 + $0x70] sm:$0xff]
  %v409 = vld [vmem:[%s1 + $0x78] sm:$0xff]
  %v410 = vld [vmem:[%s1 + $0x80] sm:$0xff]
  %v411 = vld [vmem:[%s1 + $0x88] sm:$0xff]
  %v412 = vld [vmem:[%s1 + $0x90] sm:$0xff]
  %v413 = vld [vmem:[%s1 + $0x98] sm:$0xff]
  %v414 = vld [vmem:[%s1 + $0xa0] sm:$0xff]
  %v415 = vld [vmem:[%s1 + $0xa8] sm:$0xff]
  %v416 = vld [vmem:[%s1 + $0xb0] sm:$0xff]
  %v417 = vld [vmem:[%s1 + $0xb8] sm:$0xff]
  %v418 = vld [vmem:[%s1 + $0xc0] sm:$0xff]
  %v419 = vld [vmem:[%s1 + $0xc8] sm:$0xff]
  %v420 = vld [vmem:[%s1 + $0xd0] sm:$0xff]
  %v421 = vld [vmem:[%s1 + $0xd8] sm:$0xff]
  %v422 = vld [vmem:[%s1 + $0xe0] sm:$0xff]
  %v423 = vld [vmem:[%s1 + $0xe8] sm:$0xff]
  %v424 = vld [vmem:[%s1 + $0xf0] sm:$0xff]
  %v425 = vld [vmem:[%s1 + $0xf8] sm:$0xff]
  %v458 = vunpack.c.l.b16 %v394
  %v459 = vunpack.c.h.b16 %v394
  %v460 = vunpack.c.l.b16 %v395
  %v461 = vunpack.c.h.b16 %v395
  %v462 = vunpack.c.l.b16 %v396
  %v463 = vunpack.c.h.b16 %v396
  %v464 = vunpack.c.l.b16 %v397
  %v465 = vunpack.c.h.b16 %v397
  %v466 = vunpack.c.l.b16 %v398
  %v467 = vunpack.c.h.b16 %v398
  %v468 = vunpack.c.l.b16 %v399
  %v469 = vunpack.c.h.b16 %v399
  %v470 = vunpack.c.l.b16 %v400
  %v471 = vunpack.c.h.b16 %v400
  %v472 = vunpack.c.l.b16 %v401
  %v473 = vunpack.c.h.b16 %v401
  %v474 = vunpack.c.l.b16 %v402
  %v475 = vunpack.c.h.b16 %v402
  %v476 = vunpack.c.l.b16 %v403
  %v477 = vunpack.c.h.b16 %v403
  %v478 = vunpack.c.l.b16 %v404
  %v479 = vunpack.c.h.b16 %v404
  %v480 = vunpack.c.l.b16 %v405
  %v481 = vunpack.c.h.b16 %v405
  %v482 = vunpack.c.l.b16 %v406
  %v483 = vunpack.c.h.b16 %v406
  %v484 = vunpack.c.l.b16 %v407
  %v485 = vunpack.c.h.b16 %v407
  %v486 = vunpack.c.l.b16 %v408
  %v487 = vunpack.c.h.b16 %v408
  %v488 = vunpack.c.l.b16 %v409
  %v489 = vunpack.c.h.b16 %v409
  %v490 = vunpack.c.l.b16 %v410
  %v491 = vunpack.c.h.b16 %v410
  %v492 = vunpack.c.l.b16 %v411
  %v493 = vunpack.c.h.b16 %v411
  %v494 = vunpack.c.l.b16 %v412
  %v495 = vunpack.c.h.b16 %v412
  %v496 = vunpack.c.l.b16 %v413
  %v497 = vunpack.c.h.b16 %v413
  %v498 = vunpack.c.l.b16 %v414
  %v499 = vunpack.c.h.b16 %v414
  %v500 = vunpack.c.l.b16 %v415
  %v501 = vunpack.c.h.b16 %v415
  %v502 = vunpack.c.l.b16 %v416
  %v503 = vunpack.c.h.b16 %v416
  %v504 = vunpack.c.l.b16 %v417
  %v505 = vunpack.c.h.b16 %v417
  %v506 = vunpack.c.l.b16 %v418
  %v507 = vunpack.c.h.b16 %v418
  %v508 = vunpack.c.l.b16 %v419
  %v509 = vunpack.c.h.b16 %v419
  %v510 = vunpack.c.l.b16 %v420
  %v511 = vunpack.c.h.b16 %v420
  %v512 = vunpack.c.l.b16 %v421
  %v513 = vunpack.c.h.b16 %v421
  %v514 = vunpack.c.l.b16 %v422
  %v515 = vunpack.c.h.b16 %v422
  %v516 = vunpack.c.l.b16 %v423
  %v517 = vunpack.c.h.b16 %v423
  %v518 = vunpack.c.l.b16 %v424
  %v519 = vunpack.c.h.b16 %v424
  %v520 = vunpack.c.l.b16 %v425
  %v521 = vunpack.c.h.b16 %v425
  %v522 = vpack.c.b16 %v462, %v458
  %v523 = vpack.c.b16 %v463, %v459
  %v524 = vpack.c.b16 %v464, %v460
  %v525 = vpack.c.b16 %v465, %v461
  %v526 = vpack.c.b16 %v470, %v466
  %v527 = vpack.c.b16 %v471, %v467
  %v528 = vpack.c.b16 %v472, %v468
  %v529 = vpack.c.b16 %v473, %v469
  %v530 = vpack.c.b16 %v478, %v474
  %v531 = vpack.c.b16 %v479, %v475
  %v532 = vpack.c.b16 %v480, %v476
  %v533 = vpack.c.b16 %v481, %v477
  %v534 = vpack.c.b16 %v486, %v482
  %v535 = vpack.c.b16 %v487, %v483
  %v536 = vpack.c.b16 %v488, %v484
  %v537 = vpack.c.b16 %v489, %v485
  %v538 = vpack.c.b16 %v494, %v490
  %v539 = vpack.c.b16 %v495, %v491
  %v540 = vpack.c.b16 %v496, %v492
  %v541 = vpack.c.b16 %v497, %v493
  %v542 = vpack.c.b16 %v502, %v498
  %v543 = vpack.c.b16 %v503, %v499
  %v544 = vpack.c.b16 %v504, %v500
  %v545 = vpack.c.b16 %v505, %v501
  %v546 = vpack.c.b16 %v510, %v506
  %v547 = vpack.c.b16 %v511, %v507
  %v548 = vpack.c.b16 %v512, %v508
  %v549 = vpack.c.b16 %v513, %v509
  %v550 = vpack.c.b16 %v518, %v514
  %v551 = vpack.c.b16 %v519, %v515
  %v552 = vpack.c.b16 %v520, %v516
  %v553 = vpack.c.b16 %v521, %v517
  %586 = vmatpush.bf16.msra.mxu0 %v550
  %587 = vmatpush.bf16.msra.mxu0 %v546
  %588 = vmatpush.bf16.msra.mxu0 %v542
  %589 = vmatpush.bf16.msra.mxu0 %v538
  %590 = vmatpush.bf16.msra.mxu0 %v534
  %591 = vmatpush.bf16.msra.mxu0 %v530
  %592 = vmatpush.bf16.msra.mxu0 %v526
  %593 = vmatpush.bf16.msra.mxu0 %v522
  %594 = vmatmul.bf16.gmra.mxu0 %v393
  %v595 = vpop.f32.mrf.mxu0
  %v596 = vadd.f32 0.0, %v595
  %v597 = vpop.f32.mrf.mxu0
  %598 = vdwg.mxu0
  %599 = vmatpush.bf16.msra.mxu0 %v551
  %600 = vmatpush.bf16.msra.mxu0 %v547
  %601 = vmatpush.bf16.msra.mxu0 %v543
  %602 = vmatpush.bf16.msra.mxu0 %v539
  %603 = vmatpush.bf16.msra.mxu0 %v535
  %604 = vmatpush.bf16.msra.mxu0 %v531
  %605 = vmatpush.bf16.msra.mxu0 %v527
  %606 = vmatpush.bf16.msra.mxu0 %v523
  %607 = vmatmul.bf16.gmra.mxu0 %v393
  %v608 = vpop.f32.mrf.mxu0
  %v609 = vadd.f32 0.0, %v608
  %v610 = vpop.f32.mrf.mxu0
  %611 = vdwg.mxu0
  %612 = vmatpush.bf16.msra.mxu0 %v552
  %613 = vmatpush.bf16.msra.mxu0 %v548
  %614 = vmatpush.bf16.msra.mxu0 %v544
  %615 = vmatpush.bf16.msra.mxu0 %v540
  %616 = vmatpush.bf16.msra.mxu0 %v536
  %617 = vmatpush.bf16.msra.mxu0 %v532
  %618 = vmatpush.bf16.msra.mxu0 %v528
  %619 = vmatpush.bf16.msra.mxu0 %v524
  %620 = vmatmul.bf16.gmra.mxu0 %v393
  %v621 = vpop.f32.mrf.mxu0
  %v622 = vadd.f32 0.0, %v621
  %v623 = vpop.f32.mrf.mxu0
  %624 = vdwg.mxu0
  %625 = vmatpush.bf16.msra.mxu0 %v553
  %626 = vmatpush.bf16.msra.mxu0 %v549
  %627 = vmatpush.bf16.msra.mxu0 %v545
  %628 = vmatpush.bf16.msra.mxu0 %v541
  %629 = vmatpush.bf16.msra.mxu0 %v537
  %630 = vmatpush.bf16.msra.mxu0 %v533
  %631 = vmatpush.bf16.msra.mxu0 %v529
  %632 = vmatpush.bf16.msra.mxu0 %v525
  %633 = vmatmul.bf16.gmra.mxu0 %v393
  %v634 = vpop.f32.mrf.mxu0
  %v635 = vadd.f32 0.0, %v634
  %v636 = vpop.f32.mrf.mxu0
  %637 = vdwg.mxu0
  %v638 = vadd.f32 %v388, %v596
  %v639 = vadd.f32 %v389, %v609
  %v640 = vadd.f32 %v390, %v622
  %v641 = vadd.f32 %v391, %v635
  %v642 = vxor.u32 %v638, 2147483648
  %v643 = vxor.u32 %v639, 2147483648
  %v644 = vmul.f32 %v642, 1.442695
  %v645 = vpow.pop %v644
  %v646 = vmul.f32 %v643, 1.442695
  %v647 = vpow.pop %v646
  %v648 = vadd.f32 %v645, 1.0
  %v649 = vadd.f32 %v647, 1.0
  %v650 = vrcp.pop %v648
  %v651 = vmul.f32 %v648, %v650
  %v652 = vsub.f32 1.0, %v651
  %v653 = vmul.f32 %v650, %v652
  %v654 = vadd.f32 %v650, %v653
  %vm655 = vweird.f32 %v648
  %vm656 = vweird.f32 %v650
  %vm657 = vmor %vm655, %vm656
  %v658 = vsel %vm657, %v650, %v654
  %v659 = vand.u32 2147483647, %v648
  %vm660 = vcmp.eq.f32.partialorder %v659, 8.507059e+37
  %v661 = vand.u32 %v648, 2147483648
  %v662 = vor.u32 1.1754944e-38, %v661
  %v663 = vsel %vm660, %v662, %v658
  %v664 = vmul.f32 1.0, %v663
  %v665 = vrcp.pop %v649
  %v666 = vmul.f32 %v649, %v665
  %v667 = vsub.f32 1.0, %v666
  %v668 = vmul.f32 %v665, %v667
  %v669 = vadd.f32 %v665, %v668
  %vm670 = vweird.f32 %v649
  %vm671 = vweird.f32 %v665
  %vm672 = vmor %vm670, %vm671
  %v673 = vsel %vm672, %v665, %v669
  %v674 = vand.u32 2147483647, %v649
  %vm675 = vcmp.eq.f32.partialorder %v674, 8.507059e+37
  %v676 = vand.u32 %v649, 2147483648
  %v677 = vor.u32 1.1754944e-38, %v676
  %v678 = vsel %vm675, %v677, %v673
  %v679 = vmul.f32 1.0, %v678
  %v680 = vtanh.pop %v640
  %v681 = vxor.u32 %v641, 2147483648
  %v682 = vmul.f32 %v681, 1.442695
  %v683 = vpow.pop %v682
  %v684 = vadd.f32 %v683, 1.0
  %v685 = vrcp.pop %v684
  %v686 = vmul.f32 %v684, %v685
  %v687 = vsub.f32 1.0, %v686
  %v688 = vmul.f32 %v685, %v687
  %v689 = vadd.f32 %v685, %v688
  %vm690 = vweird.f32 %v684
  %vm691 = vweird.f32 %v685
  %vm692 = vmor %vm690, %vm691
  %v693 = vsel %vm692, %v685, %v689
  %v694 = vand.u32 2147483647, %v684
  %vm695 = vcmp.eq.f32.partialorder %v694, 8.507059e+37
  %v696 = vand.u32 %v684, 2147483648
  %v697 = vor.u32 1.1754944e-38, %v696
  %v698 = vsel %vm695, %v697, %v693
  %v699 = vmul.f32 1.0, %v698
  %v700 = vld [vmem:[#allocation3] sm:$0xff]
  %v701 = vmul.f32 %v679, %v700
  %v702 = vmul.f32 %v664, %v680
  %v703 = vadd.f32 %v701, %v702
  %v704 = vtanh.pop %v703
  %v705 = vmul.f32 %v699, %v704
  %706 = vst [vmem:[#allocation3] sm:$0xff] %v703
  %707 = vst [vmem:[#allocation2] sm:$0xff] %v705
  %v709 = vrot.slane %v705, 1
  %v710 = vrot.slane %v705, 2
  %v711 = vrot.slane %v705, 3
  %v712 = vrot.slane %v705, 4
  %v713 = vrot.slane %v705, 5
  %v714 = vrot.slane %v705, 6
  %v715 = vrot.slane %v705, 7
  %v723 = vpack.c.bf16 %v705, %v705
  %v724 = vpack.c.bf16 %v709, %v709
  %v725 = vpack.c.bf16 %v710, %v710
  %v726 = vpack.c.bf16 %v711, %v711
  %v727 = vpack.c.bf16 %v712, %v712
  %v728 = vpack.c.bf16 %v713, %v713
  %v729 = vpack.c.bf16 %v714, %v714
  %v730 = vpack.c.bf16 %v715, %v715
  %v732 = vshll.u32 %v723, 16
  %v735 = vshll.u32 %v724, 16
  %v738 = vshll.u32 %v725, 16
  %v741 = vshll.u32 %v726, 16
  %v744 = vshll.u32 %v727, 16
  %v747 = vshll.u32 %v728, 16
  %v750 = vshll.u32 %v729, 16
  %v753 = vshll.u32 %v730, 16
  %vm763 = vsmask.f32 7938
  %vm764 = vmand %vm360, %vm763
  %v765 = vld [vmem:[%s2] sm:$0x1]
  %v766 = vsel %vm764, %v732, %v765
  %767 = vst [vmem:[%s2] sm:$0x1] %v766
  %v768 = vld [vmem:[%s2 + $0x8] sm:$0x1]
  %v769 = vsel %vm764, %v735, %v768
  %770 = vst [vmem:[%s2 + $0x8] sm:$0x1] %v769
  %v771 = vld [vmem:[%s2 + $0x10] sm:$0x1]
  %v772 = vsel %vm764, %v738, %v771
  %773 = vst [vmem:[%s2 + $0x10] sm:$0x1] %v772
  %v774 = vld [vmem:[%s2 + $0x18] sm:$0x1]
  %v775 = vsel %vm764, %v741, %v774
  %776 = vst [vmem:[%s2 + $0x18] sm:$0x1] %v775
  %v777 = vld [vmem:[%s2 + $0x20] sm:$0x1]
  %v778 = vsel %vm764, %v744, %v777
  %779 = vst [vmem:[%s2 + $0x20] sm:$0x1] %v778
  %v780 = vld [vmem:[%s2 + $0x28] sm:$0x1]
  %v781 = vsel %vm764, %v747, %v780
  %782 = vst [vmem:[%s2 + $0x28] sm:$0x1] %v781
  %v783 = vld [vmem:[%s2 + $0x30] sm:$0x1]
  %v784 = vsel %vm764, %v750, %v783
  %785 = vst [vmem:[%s2 + $0x30] sm:$0x1] %v784
  %v786 = vld [vmem:[%s2 + $0x38] sm:$0x1]
  %v787 = vsel %vm764, %v753, %v786
  %788 = vst [vmem:[%s2 + $0x38] sm:$0x1] %v787
  %s789 = scalar_lea.vmem %s0, 64
  %v790 = vld [vmem:[%s789] sm:$0xff]
  %v791 = vld [vmem:[%s789 + $0x8] sm:$0xff]
  %v792 = vld [vmem:[%s789 + $0x10] sm:$0xff]
  %v793 = vld [vmem:[%s789 + $0x18] sm:$0xff]
  %v794 = vld [vmem:[#allocation2] sm:$0xff]
  %v795 = vpack.c.bf16 %v794, %v794
  %v796 = vld [vmem:[%s1] sm:$0xff]
  %v797 = vld [vmem:[%s1 + $0x8] sm:$0xff]
  %v798 = vld [vmem:[%s1 + $0x10] sm:$0xff]
  %v799 = vld [vmem:[%s1 + $0x18] sm:$0xff]
  %v800 = vld [vmem:[%s1 + $0x20] sm:$0xff]
  %v801 = vld [vmem:[%s1 + $0x28] sm:$0xff]
  %v802 = vld [vmem:[%s1 + $0x30] sm:$0xff]
  %v803 = vld [vmem:[%s1 + $0x38] sm:$0xff]
  %v804 = vld [vmem:[%s1 + $0x40] sm:$0xff]
  %v805 = vld [vmem:[%s1 + $0x48] sm:$0xff]
  %v806 = vld [vmem:[%s1 + $0x50] sm:$0xff]
  %v807 = vld [vmem:[%s1 + $0x58] sm:$0xff]
  %v808 = vld [vmem:[%s1 + $0x60] sm:$0xff]
  %v809 = vld [vmem:[%s1 + $0x68] sm:$0xff]
  %v810 = vld [vmem:[%s1 + $0x70] sm:$0xff]
  %v811 = vld [vmem:[%s1 + $0x78] sm:$0xff]
  %v812 = vld [vmem:[%s1 + $0x80] sm:$0xff]
  %v813 = vld [vmem:[%s1 + $0x88] sm:$0xff]
  %v814 = vld [vmem:[%s1 + $0x90] sm:$0xff]
  %v815 = vld [vmem:[%s1 + $0x98] sm:$0xff]
  %v816 = vld [vmem:[%s1 + $0xa0] sm:$0xff]
  %v817 = vld [vmem:[%s1 + $0xa8] sm:$0xff]
  %v818 = vld [vmem:[%s1 + $0xb0] sm:$0xff]
  %v819 = vld [vmem:[%s1 + $0xb8] sm:$0xff]
  %v820 = vld [vmem:[%s1 + $0xc0] sm:$0xff]
  %v821 = vld [vmem:[%s1 + $0xc8] sm:$0xff]
  %v822 = vld [vmem:[%s1 + $0xd0] sm:$0xff]
  %v823 = vld [vmem:[%s1 + $0xd8] sm:$0xff]
  %v824 = vld [vmem:[%s1 + $0xe0] sm:$0xff]
  %v825 = vld [vmem:[%s1 + $0xe8] sm:$0xff]
  %v826 = vld [vmem:[%s1 + $0xf0] sm:$0xff]
  %v827 = vld [vmem:[%s1 + $0xf8] sm:$0xff]
  %v860 = vunpack.c.l.b16 %v796
  %v861 = vunpack.c.h.b16 %v796
  %v862 = vunpack.c.l.b16 %v797
  %v863 = vunpack.c.h.b16 %v797
  %v864 = vunpack.c.l.b16 %v798
  %v865 = vunpack.c.h.b16 %v798
  %v866 = vunpack.c.l.b16 %v799
  %v867 = vunpack.c.h.b16 %v799
  %v868 = vunpack.c.l.b16 %v800
  %v869 = vunpack.c.h.b16 %v800
  %v870 = vunpack.c.l.b16 %v801
  %v871 = vunpack.c.h.b16 %v801
  %v872 = vunpack.c.l.b16 %v802
  %v873 = vunpack.c.h.b16 %v802
  %v874 = vunpack.c.l.b16 %v803
  %v875 = vunpack.c.h.b16 %v803
  %v876 = vunpack.c.l.b16 %v804
  %v877 = vunpack.c.h.b16 %v804
  %v878 = vunpack.c.l.b16 %v805
  %v879 = vunpack.c.h.b16 %v805
  %v880 = vunpack.c.l.b16 %v806
  %v881 = vunpack.c.h.b16 %v806
  %v882 = vunpack.c.l.b16 %v807
  %v883 = vunpack.c.h.b16 %v807
  %v884 = vunpack.c.l.b16 %v808
  %v885 = vunpack.c.h.b16 %v808
  %v886 = vunpack.c.l.b16 %v809
  %v887 = vunpack.c.h.b16 %v809
  %v888 = vunpack.c.l.b16 %v810
  %v889 = vunpack.c.h.b16 %v810
  %v890 = vunpack.c.l.b16 %v811
  %v891 = vunpack.c.h.b16 %v811
  %v892 = vunpack.c.l.b16 %v812
  %v893 = vunpack.c.h.b16 %v812
  %v894 = vunpack.c.l.b16 %v813
  %v895 = vunpack.c.h.b16 %v813
  %v896 = vunpack.c.l.b16 %v814
  %v897 = vunpack.c.h.b16 %v814
  %v898 = vunpack.c.l.b16 %v815
  %v899 = vunpack.c.h.b16 %v815
  %v900 = vunpack.c.l.b16 %v816
  %v901 = vunpack.c.h.b16 %v816
  %v902 = vunpack.c.l.b16 %v817
  %v903 = vunpack.c.h.b16 %v817
  %v904 = vunpack.c.l.b16 %v818
  %v905 = vunpack.c.h.b16 %v818
  %v906 = vunpack.c.l.b16 %v819
  %v907 = vunpack.c.h.b16 %v819
  %v908 = vunpack.c.l.b16 %v820
  %v909 = vunpack.c.h.b16 %v820
  %v910 = vunpack.c.l.b16 %v821
  %v911 = vunpack.c.h.b16 %v821
  %v912 = vunpack.c.l.b16 %v822
  %v913 = vunpack.c.h.b16 %v822
  %v914 = vunpack.c.l.b16 %v823
  %v915 = vunpack.c.h.b16 %v823
  %v916 = vunpack.c.l.b16 %v824
  %v917 = vunpack.c.h.b16 %v824
  %v918 = vunpack.c.l.b16 %v825
  %v919 = vunpack.c.h.b16 %v825
  %v920 = vunpack.c.l.b16 %v826
  %v921 = vunpack.c.h.b16 %v826
  %v922 = vunpack.c.l.b16 %v827
  %v923 = vunpack.c.h.b16 %v827
  %v924 = vpack.c.b16 %v864, %v860
  %v925 = vpack.c.b16 %v865, %v861
  %v926 = vpack.c.b16 %v866, %v862
  %v927 = vpack.c.b16 %v867, %v863
  %v928 = vpack.c.b16 %v872, %v868
  %v929 = vpack.c.b16 %v873, %v869
  %v930 = vpack.c.b16 %v874, %v870
  %v931 = vpack.c.b16 %v875, %v871
  %v932 = vpack.c.b16 %v880, %v876
  %v933 = vpack.c.b16 %v881, %v877
  %v934 = vpack.c.b16 %v882, %v878
  %v935 = vpack.c.b16 %v883, %v879
  %v936 = vpack.c.b16 %v888, %v884
  %v937 = vpack.c.b16 %v889, %v885
  %v938 = vpack.c.b16 %v890, %v886
  %v939 = vpack.c.b16 %v891, %v887
  %v940 = vpack.c.b16 %v896, %v892
  %v941 = vpack.c.b16 %v897, %v893
  %v942 = vpack.c.b16 %v898, %v894
  %v943 = vpack.c.b16 %v899, %v895
  %v944 = vpack.c.b16 %v904, %v900
  %v945 = vpack.c.b16 %v905, %v901
  %v946 = vpack.c.b16 %v906, %v902
  %v947 = vpack.c.b16 %v907, %v903
  %v948 = vpack.c.b16 %v912, %v908
  %v949 = vpack.c.b16 %v913, %v909
  %v950 = vpack.c.b16 %v914, %v910
  %v951 = vpack.c.b16 %v915, %v911
  %v952 = vpack.c.b16 %v920, %v916
  %v953 = vpack.c.b16 %v921, %v917
  %v954 = vpack.c.b16 %v922, %v918
  %v955 = vpack.c.b16 %v923, %v919
  %988 = vmatpush.bf16.msra.mxu0 %v952
  %989 = vmatpush.bf16.msra.mxu0 %v948
  %990 = vmatpush.bf16.msra.mxu0 %v944
  %991 = vmatpush.bf16.msra.mxu0 %v940
  %992 = vmatpush.bf16.msra.mxu0 %v936
  %993 = vmatpush.bf16.msra.mxu0 %v932
  %994 = vmatpush.bf16.msra.mxu0 %v928
  %995 = vmatpush.bf16.msra.mxu0 %v924
  %996 = vmatmul.bf16.gmra.mxu0 %v795
  %v997 = vpop.f32.mrf.mxu0
  %v998 = vadd.f32 0.0, %v997
  %v999 = vpop.f32.mrf.mxu0
  %1000 = vdwg.mxu0
  %1001 = vmatpush.bf16.msra.mxu0 %v953
  %1002 = vmatpush.bf16.msra.mxu0 %v949
  %1003 = vmatpush.bf16.msra.mxu0 %v945
  %1004 = vmatpush.bf16.msra.mxu0 %v941
  %1005 = vmatpush.bf16.msra.mxu0 %v937
  %1006 = vmatpush.bf16.msra.mxu0 %v933
  %1007 = vmatpush.bf16.msra.mxu0 %v929
  %1008 = vmatpush.bf16.msra.mxu0 %v925
  %1009 = vmatmul.bf16.gmra.mxu0 %v795
  %v1010 = vpop.f32.mrf.mxu0
  %v1011 = vadd.f32 0.0, %v1010
  %v1012 = vpop.f32.mrf.mxu0
  %1013 = vdwg.mxu0
  %1014 = vmatpush.bf16.msra.mxu0 %v954
  %1015 = vmatpush.bf16.msra.mxu0 %v950
  %1016 = vmatpush.bf16.msra.mxu0 %v946
  %1017 = vmatpush.bf16.msra.mxu0 %v942
  %1018 = vmatpush.bf16.msra.mxu0 %v938
  %1019 = vmatpush.bf16.msra.mxu0 %v934
  %1020 = vmatpush.bf16.msra.mxu0 %v930
  %1021 = vmatpush.bf16.msra.mxu0 %v926
  %1022 = vmatmul.bf16.gmra.mxu0 %v795
  %v1023 = vpop.f32.mrf.mxu0
  %v1024 = vadd.f32 0.0, %v1023
  %v1025 = vpop.f32.mrf.mxu0
  %1026 = vdwg.mxu0
  %1027 = vmatpush.bf16.msra.mxu0 %v955
  %1028 = vmatpush.bf16.msra.mxu0 %v951
  %1029 = vmatpush.bf16.msra.mxu0 %v947
  %1030 = vmatpush.bf16.msra.mxu0 %v943
  %1031 = vmatpush.bf16.msra.mxu0 %v939
  %1032 = vmatpush.bf16.msra.mxu0 %v935
  %1033 = vmatpush.bf16.msra.mxu0 %v931
  %1034 = vmatpush.bf16.msra.mxu0 %v927
  %1035 = vmatmul.bf16.gmra.mxu0 %v795
  %v1036 = vpop.f32.mrf.mxu0
  %v1037 = vadd.f32 0.0, %v1036
  %v1038 = vpop.f32.mrf.mxu0
  %1039 = vdwg.mxu0
  %v1040 = vadd.f32 %v790, %v998
  %v1041 = vadd.f32 %v791, %v1011
  %v1042 = vadd.f32 %v792, %v1024
  %v1043 = vadd.f32 %v793, %v1037
  %v1044 = vxor.u32 %v1040, 2147483648
  %v1045 = vxor.u32 %v1041, 2147483648
  %v1046 = vmul.f32 %v1044, 1.442695
  %v1047 = vpow.pop %v1046
  %v1048 = vmul.f32 %v1045, 1.442695
  %v1049 = vpow.pop %v1048
  %v1050 = vadd.f32 %v1047, 1.0
  %v1051 = vadd.f32 %v1049, 1.0
  %v1052 = vrcp.pop %v1050
  %v1053 = vmul.f32 %v1050, %v1052
  %v1054 = vsub.f32 1.0, %v1053
  %v1055 = vmul.f32 %v1052, %v1054
  %v1056 = vadd.f32 %v1052, %v1055
  %vm1057 = vweird.f32 %v1050
  %vm1058 = vweird.f32 %v1052
  %vm1059 = vmor %vm1057, %vm1058
  %v1060 = vsel %vm1059, %v1052, %v1056
  %v1061 = vand.u32 2147483647, %v1050
  %vm1062 = vcmp.eq.f32.partialorder %v1061, 8.507059e+37
  %v1063 = vand.u32 %v1050, 2147483648
  %v1064 = vor.u32 1.1754944e-38, %v1063
  %v1065 = vsel %vm1062, %v1064, %v1060
  %v1066 = vmul.f32 1.0, %v1065
  %v1067 = vrcp.pop %v1051
  %v1068 = vmul.f32 %v1051, %v1067
  %v1069 = vsub.f32 1.0, %v1068
  %v1070 = vmul.f32 %v1067, %v1069
  %v1071 = vadd.f32 %v1067, %v1070
  %vm1072 = vweird.f32 %v1051
  %vm1073 = vweird.f32 %v1067
  %vm1074 = vmor %vm1072, %vm1073
  %v1075 = vsel %vm1074, %v1067, %v1071
  %v1076 = vand.u32 2147483647, %v1051
  %vm1077 = vcmp.eq.f32.partialorder %v1076, 8.507059e+37
  %v1078 = vand.u32 %v1051, 2147483648
  %v1079 = vor.u32 1.1754944e-38, %v1078
  %v1080 = vsel %vm1077, %v1079, %v1075
  %v1081 = vmul.f32 1.0, %v1080
  %v1082 = vtanh.pop %v1042
  %v1083 = vxor.u32 %v1043, 2147483648
  %v1084 = vmul.f32 %v1083, 1.442695
  %v1085 = vpow.pop %v1084
  %v1086 = vadd.f32 %v1085, 1.0
  %v1087 = vrcp.pop %v1086
  %v1088 = vmul.f32 %v1086, %v1087
  %v1089 = vsub.f32 1.0, %v1088
  %v1090 = vmul.f32 %v1087, %v1089
  %v1091 = vadd.f32 %v1087, %v1090
  %vm1092 = vweird.f32 %v1086
  %vm1093 = vweird.f32 %v1087
  %vm1094 = vmor %vm1092, %vm1093
  %v1095 = vsel %vm1094, %v1087, %v1091
  %v1096 = vand.u32 2147483647, %v1086
  %vm1097 = vcmp.eq.f32.partialorder %v1096, 8.507059e+37
  %v1098 = vand.u32 %v1086, 2147483648
  %v1099 = vor.u32 1.1754944e-38, %v1098
  %v1100 = vsel %vm1097, %v1099, %v1095
  %v1101 = vmul.f32 1.0, %v1100
  %v1102 = vld [vmem:[#allocation3] sm:$0xff]
  %v1103 = vmul.f32 %v1081, %v1102
  %v1104 = vmul.f32 %v1066, %v1082
  %v1105 = vadd.f32 %v1103, %v1104
  %v1106 = vtanh.pop %v1105
  %v1107 = vmul.f32 %v1101, %v1106
  %1108 = vst [vmem:[#allocation3] sm:$0xff] %v1105
  %1109 = vst [vmem:[#allocation2] sm:$0xff] %v1107
  %v1111 = vrot.slane %v1107, 1
  %v1112 = vrot.slane %v1107, 2
  %v1113 = vrot.slane %v1107, 3
  %v1114 = vrot.slane %v1107, 4
  %v1115 = vrot.slane %v1107, 5
  %v1116 = vrot.slane %v1107, 6
  %v1117 = vrot.slane %v1107, 7
  %v1125 = vpack.c.bf16 %v1107, %v1107
  %v1126 = vpack.c.bf16 %v1111, %v1111
  %v1127 = vpack.c.bf16 %v1112, %v1112
  %v1128 = vpack.c.bf16 %v1113, %v1113
  %v1129 = vpack.c.bf16 %v1114, %v1114
  %v1130 = vpack.c.bf16 %v1115, %v1115
  %v1131 = vpack.c.bf16 %v1116, %v1116
  %v1132 = vpack.c.bf16 %v1117, %v1117
  %v1141 = vrot.slane %v1125, 7
  %v1142 = vrot.slane %v1126, 7
  %v1143 = vrot.slane %v1127, 7
  %v1144 = vrot.slane %v1128, 7
  %v1145 = vrot.slane %v1129, 7
  %v1146 = vrot.slane %v1130, 7
  %v1147 = vrot.slane %v1131, 7
  %v1148 = vrot.slane %v1132, 7
  %vm1157 = vcmask 1041409
  %vm1158 = vsmask.f32 1280
  %vm1159 = vmand %vm1157, %vm1158
  %v1160 = vld [vmem:[%s2] sm:$0x2]
  %v1161 = vsel %vm1159, %v1141, %v1160
  %1162 = vst [vmem:[%s2] sm:$0x2] %v1161
  %v1163 = vld [vmem:[%s2 + $0x8] sm:$0x2]
  %v1164 = vsel %vm1159, %v1142, %v1163
  %1165 = vst [vmem:[%s2 + $0x8] sm:$0x2] %v1164
  %v1166 = vld [vmem:[%s2 + $0x10] sm:$0x2]
  %v1167 = vsel %vm1159, %v1143, %v1166
  %1168 = vst [vmem:[%s2 + $0x10] sm:$0x2] %v1167
  %v1169 = vld [vmem:[%s2 + $0x18] sm:$0x2]
  %v1170 = vsel %vm1159, %v1144, %v1169
  %1171 = vst [vmem:[%s2 + $0x18] sm:$0x2] %v1170
  %v1172 = vld [vmem:[%s2 + $0x20] sm:$0x2]
  %v1173 = vsel %vm1159, %v1145, %v1172
  %1174 = vst [vmem:[%s2 + $0x20] sm:$0x2] %v1173
  %v1175 = vld [vmem:[%s2 + $0x28] sm:$0x2]
  %v1176 = vsel %vm1159, %v1146, %v1175
  %1177 = vst [vmem:[%s2 + $0x28] sm:$0x2] %v1176
  %v1178 = vld [vmem:[%s2 + $0x30] sm:$0x2]
  %v1179 = vsel %vm1159, %v1147, %v1178
  %1180 = vst [vmem:[%s2 + $0x30] sm:$0x2] %v1179
  %v1181 = vld [vmem:[%s2 + $0x38] sm:$0x2]
  %v1182 = vsel %vm1159, %v1148, %v1181
  %1183 = vst [vmem:[%s2 + $0x38] sm:$0x2] %v1182
  %s1184 = scalar_lea.vmem %s0, 96
  %v1185 = vld [vmem:[%s1184] sm:$0xff]
  %v1186 = vld [vmem:[%s1184 + $0x8] sm:$0xff]
  %v1187 = vld [vmem:[%s1184 + $0x10] sm:$0xff]
  %v1188 = vld [vmem:[%s1184 + $0x18] sm:$0xff]
  %v1189 = vld [vmem:[#allocation2] sm:$0xff]
  %v1190 = vpack.c.bf16 %v1189, %v1189
  %v1191 = vld [vmem:[%s1] sm:$0xff]
  %v1192 = vld [vmem:[%s1 + $0x8] sm:$0xff]
  %v1193 = vld [vmem:[%s1 + $0x10] sm:$0xff]
  %v1194 = vld [vmem:[%s1 + $0x18] sm:$0xff]
  %v1195 = vld [vmem:[%s1 + $0x20] sm:$0xff]
  %v1196 = vld [vmem:[%s1 + $0x28] sm:$0xff]
  %v1197 = vld [vmem:[%s1 + $0x30] sm:$0xff]
  %v1198 = vld [vmem:[%s1 + $0x38] sm:$0xff]
  %v1199 = vld [vmem:[%s1 + $0x40] sm:$0xff]
  %v1200 = vld [vmem:[%s1 + $0x48] sm:$0xff]
  %v1201 = vld [vmem:[%s1 + $0x50] sm:$0xff]
  %v1202 = vld [vmem:[%s1 + $0x58] sm:$0xff]
  %v1203 = vld [vmem:[%s1 + $0x60] sm:$0xff]
  %v1204 = vld [vmem:[%s1 + $0x68] sm:$0xff]
  %v1205 = vld [vmem:[%s1 + $0x70] sm:$0xff]
  %v1206 = vld [vmem:[%s1 + $0x78] sm:$0xff]
  %v1207 = vld [vmem:[%s1 + $0x80] sm:$0xff]
  %v1208 = vld [vmem:[%s1 + $0x88] sm:$0xff]
  %v1209 = vld [vmem:[%s1 + $0x90] sm:$0xff]
  %v1210 = vld [vmem:[%s1 + $0x98] sm:$0xff]
  %v1211 = vld [vmem:[%s1 + $0xa0] sm:$0xff]
  %v1212 = vld [vmem:[%s1 + $0xa8] sm:$0xff]
  %v1213 = vld [vmem:[%s1 + $0xb0] sm:$0xff]
  %v1214 = vld [vmem:[%s1 + $0xb8] sm:$0xff]
  %v1215 = vld [vmem:[%s1 + $0xc0] sm:$0xff]
  %v1216 = vld [vmem:[%s1 + $0xc8] sm:$0xff]
  %v1217 = vld [vmem:[%s1 + $0xd0] sm:$0xff]
  %v1218 = vld [vmem:[%s1 + $0xd8] sm:$0xff]
  %v1219 = vld [vmem:[%s1 + $0xe0] sm:$0xff]
  %v1220 = vld [vmem:[%s1 + $0xe8] sm:$0xff]
  %v1221 = vld [vmem:[%s1 + $0xf0] sm:$0xff]
  %v1222 = vld [vmem:[%s1 + $0xf8] sm:$0xff]
  %v1255 = vunpack.c.l.b16 %v1191
  %v1256 = vunpack.c.h.b16 %v1191
  %v1257 = vunpack.c.l.b16 %v1192
  %v1258 = vunpack.c.h.b16 %v1192
  %v1259 = vunpack.c.l.b16 %v1193
  %v1260 = vunpack.c.h.b16 %v1193
  %v1261 = vunpack.c.l.b16 %v1194
  %v1262 = vunpack.c.h.b16 %v1194
  %v1263 = vunpack.c.l.b16 %v1195
  %v1264 = vunpack.c.h.b16 %v1195
  %v1265 = vunpack.c.l.b16 %v1196
  %v1266 = vunpack.c.h.b16 %v1196
  %v1267 = vunpack.c.l.b16 %v1197
  %v1268 = vunpack.c.h.b16 %v1197
  %v1269 = vunpack.c.l.b16 %v1198
  %v1270 = vunpack.c.h.b16 %v1198
  %v1271 = vunpack.c.l.b16 %v1199
  %v1272 = vunpack.c.h.b16 %v1199
  %v1273 = vunpack.c.l.b16 %v1200
  %v1274 = vunpack.c.h.b16 %v1200
  %v1275 = vunpack.c.l.b16 %v1201
  %v1276 = vunpack.c.h.b16 %v1201
  %v1277 = vunpack.c.l.b16 %v1202
  %v1278 = vunpack.c.h.b16 %v1202
  %v1279 = vunpack.c.l.b16 %v1203
  %v1280 = vunpack.c.h.b16 %v1203
  %v1281 = vunpack.c.l.b16 %v1204
  %v1282 = vunpack.c.h.b16 %v1204
  %v1283 = vunpack.c.l.b16 %v1205
  %v1284 = vunpack.c.h.b16 %v1205
  %v1285 = vunpack.c.l.b16 %v1206
  %v1286 = vunpack.c.h.b16 %v1206
  %v1287 = vunpack.c.l.b16 %v1207
  %v1288 = vunpack.c.h.b16 %v1207
  %v1289 = vunpack.c.l.b16 %v1208
  %v1290 = vunpack.c.h.b16 %v1208
  %v1291 = vunpack.c.l.b16 %v1209
  %v1292 = vunpack.c.h.b16 %v1209
  %v1293 = vunpack.c.l.b16 %v1210
  %v1294 = vunpack.c.h.b16 %v1210
  %v1295 = vunpack.c.l.b16 %v1211
  %v1296 = vunpack.c.h.b16 %v1211
  %v1297 = vunpack.c.l.b16 %v1212
  %v1298 = vunpack.c.h.b16 %v1212
  %v1299 = vunpack.c.l.b16 %v1213
  %v1300 = vunpack.c.h.b16 %v1213
  %v1301 = vunpack.c.l.b16 %v1214
  %v1302 = vunpack.c.h.b16 %v1214
  %v1303 = vunpack.c.l.b16 %v1215
  %v1304 = vunpack.c.h.b16 %v1215
  %v1305 = vunpack.c.l.b16 %v1216
  %v1306 = vunpack.c.h.b16 %v1216
  %v1307 = vunpack.c.l.b16 %v1217
  %v1308 = vunpack.c.h.b16 %v1217
  %v1309 = vunpack.c.l.b16 %v1218
  %v1310 = vunpack.c.h.b16 %v1218
  %v1311 = vunpack.c.l.b16 %v1219
  %v1312 = vunpack.c.h.b16 %v1219
  %v1313 = vunpack.c.l.b16 %v1220
  %v1314 = vunpack.c.h.b16 %v1220
  %v1315 = vunpack.c.l.b16 %v1221
  %v1316 = vunpack.c.h.b16 %v1221
  %v1317 = vunpack.c.l.b16 %v1222
  %v1318 = vunpack.c.h.b16 %v1222
  %v1319 = vpack.c.b16 %v1259, %v1255
  %v1320 = vpack.c.b16 %v1260, %v1256
  %v1321 = vpack.c.b16 %v1261, %v1257
  %v1322 = vpack.c.b16 %v1262, %v1258
  %v1323 = vpack.c.b16 %v1267, %v1263
  %v1324 = vpack.c.b16 %v1268, %v1264
  %v1325 = vpack.c.b16 %v1269, %v1265
  %v1326 = vpack.c.b16 %v1270, %v1266
  %v1327 = vpack.c.b16 %v1275, %v1271
  %v1328 = vpack.c.b16 %v1276, %v1272
  %v1329 = vpack.c.b16 %v1277, %v1273
  %v1330 = vpack.c.b16 %v1278, %v1274
  %v1331 = vpack.c.b16 %v1283, %v1279
  %v1332 = vpack.c.b16 %v1284, %v1280
  %v1333 = vpack.c.b16 %v1285, %v1281
  %v1334 = vpack.c.b16 %v1286, %v1282
  %v1335 = vpack.c.b16 %v1291, %v1287
  %v1336 = vpack.c.b16 %v1292, %v1288
  %v1337 = vpack.c.b16 %v1293, %v1289
  %v1338 = vpack.c.b16 %v1294, %v1290
  %v1339 = vpack.c.b16 %v1299, %v1295
  %v1340 = vpack.c.b16 %v1300, %v1296
  %v1341 = vpack.c.b16 %v1301, %v1297
  %v1342 = vpack.c.b16 %v1302, %v1298
  %v1343 = vpack.c.b16 %v1307, %v1303
  %v1344 = vpack.c.b16 %v1308, %v1304
  %v1345 = vpack.c.b16 %v1309, %v1305
  %v1346 = vpack.c.b16 %v1310, %v1306
  %v1347 = vpack.c.b16 %v1315, %v1311
  %v1348 = vpack.c.b16 %v1316, %v1312
  %v1349 = vpack.c.b16 %v1317, %v1313
  %v1350 = vpack.c.b16 %v1318, %v1314
  %1383 = vmatpush.bf16.msra.mxu0 %v1347
  %1384 = vmatpush.bf16.msra.mxu0 %v1343
  %1385 = vmatpush.bf16.msra.mxu0 %v1339
  %1386 = vmatpush.bf16.msra.mxu0 %v1335
  %1387 = vmatpush.bf16.msra.mxu0 %v1331
  %1388 = vmatpush.bf16.msra.mxu0 %v1327
  %1389 = vmatpush.bf16.msra.mxu0 %v1323
  %1390 = vmatpush.bf16.msra.mxu0 %v1319
  %1391 = vmatmul.bf16.gmra.mxu0 %v1190
  %v1392 = vpop.f32.mrf.mxu0
  %v1393 = vadd.f32 0.0, %v1392
  %v1394 = vpop.f32.mrf.mxu0
  %1395 = vdwg.mxu0
  %1396 = vmatpush.bf16.msra.mxu0 %v1348
  %1397 = vmatpush.bf16.msra.mxu0 %v1344
  %1398 = vmatpush.bf16.msra.mxu0 %v1340
  %1399 = vmatpush.bf16.msra.mxu0 %v1336
  %1400 = vmatpush.bf16.msra.mxu0 %v1332
  %1401 = vmatpush.bf16.msra.mxu0 %v1328
  %1402 = vmatpush.bf16.msra.mxu0 %v1324
  %1403 = vmatpush.bf16.msra.mxu0 %v1320
  %1404 = vmatmul.bf16.gmra.mxu0 %v1190
  %v1405 = vpop.f32.mrf.mxu0
  %v1406 = vadd.f32 0.0, %v1405
  %v1407 = vpop.f32.mrf.mxu0
  %1408 = vdwg.mxu0
  %1409 = vmatpush.bf16.msra.mxu0 %v1349
  %1410 = vmatpush.bf16.msra.mxu0 %v1345
  %1411 = vmatpush.bf16.msra.mxu0 %v1341
  %1412 = vmatpush.bf16.msra.mxu0 %v1337
  %1413 = vmatpush.bf16.msra.mxu0 %v1333
  %1414 = vmatpush.bf16.msra.mxu0 %v1329
  %1415 = vmatpush.bf16.msra.mxu0 %v1325
  %1416 = vmatpush.bf16.msra.mxu0 %v1321
  %1417 = vmatmul.bf16.gmra.mxu0 %v1190
  %v1418 = vpop.f32.mrf.mxu0
  %v1419 = vadd.f32 0.0, %v1418
  %v1420 = vpop.f32.mrf.mxu0
  %1421 = vdwg.mxu0
  %1422 = vmatpush.bf16.msra.mxu0 %v1350
  %1423 = vmatpush.bf16.msra.mxu0 %v1346
  %1424 = vmatpush.bf16.msra.mxu0 %v1342
  %1425 = vmatpush.bf16.msra.mxu0 %v1338
  %1426 = vmatpush.bf16.msra.mxu0 %v1334
  %1427 = vmatpush.bf16.msra.mxu0 %v1330
  %1428 = vmatpush.bf16.msra.mxu0 %v1326
  %1429 = vmatpush.bf16.msra.mxu0 %v1322
  %1430 = vmatmul.bf16.gmra.mxu0 %v1190
  %v1431 = vpop.f32.mrf.mxu0
  %v1432 = vadd.f32 0.0, %v1431
  %v1433 = vpop.f32.mrf.mxu0
  %1434 = vdwg.mxu0
  %v1435 = vadd.f32 %v1185, %v1393
  %v1436 = vadd.f32 %v1186, %v1406
  %v1437 = vadd.f32 %v1187, %v1419
  %v1438 = vadd.f32 %v1188, %v1432
  %v1439 = vxor.u32 %v1435, 2147483648
  %v1440 = vxor.u32 %v1436, 2147483648
  %v1441 = vmul.f32 %v1439, 1.442695
  %v1442 = vpow.pop %v1441
  %v1443 = vmul.f32 %v1440, 1.442695
  %v1444 = vpow.pop %v1443
  %v1445 = vadd.f32 %v1442, 1.0
  %v1446 = vadd.f32 %v1444, 1.0
  %v1447 = vrcp.pop %v1445
  %v1448 = vmul.f32 %v1445, %v1447
  %v1449 = vsub.f32 1.0, %v1448
  %v1450 = vmul.f32 %v1447, %v1449
  %v1451 = vadd.f32 %v1447, %v1450
  %vm1452 = vweird.f32 %v1445
  %vm1453 = vweird.f32 %v1447
  %vm1454 = vmor %vm1452, %vm1453
  %v1455 = vsel %vm1454, %v1447, %v1451
  %v1456 = vand.u32 2147483647, %v1445
  %vm1457 = vcmp.eq.f32.partialorder %v1456, 8.507059e+37
  %v1458 = vand.u32 %v1445, 2147483648
  %v1459 = vor.u32 1.1754944e-38, %v1458
  %v1460 = vsel %vm1457, %v1459, %v1455
  %v1461 = vmul.f32 1.0, %v1460
  %v1462 = vrcp.pop %v1446
  %v1463 = vmul.f32 %v1446, %v1462
  %v1464 = vsub.f32 1.0, %v1463
  %v1465 = vmul.f32 %v1462, %v1464
  %v1466 = vadd.f32 %v1462, %v1465
  %vm1467 = vweird.f32 %v1446
  %vm1468 = vweird.f32 %v1462
  %vm1469 = vmor %vm1467, %vm1468
  %v1470 = vsel %vm1469, %v1462, %v1466
  %v1471 = vand.u32 2147483647, %v1446
  %vm1472 = vcmp.eq.f32.partialorder %v1471, 8.507059e+37
  %v1473 = vand.u32 %v1446, 2147483648
  %v1474 = vor.u32 1.1754944e-38, %v1473
  %v1475 = vsel %vm1472, %v1474, %v1470
  %v1476 = vmul.f32 1.0, %v1475
  %v1477 = vtanh.pop %v1437
  %v1478 = vxor.u32 %v1438, 2147483648
  %v1479 = vmul.f32 %v1478, 1.442695
  %v1480 = vpow.pop %v1479
  %v1481 = vadd.f32 %v1480, 1.0
  %v1482 = vrcp.pop %v1481
  %v1483 = vmul.f32 %v1481, %v1482
  %v1484 = vsub.f32 1.0, %v1483
  %v1485 = vmul.f32 %v1482, %v1484
  %v1486 = vadd.f32 %v1482, %v1485
  %vm1487 = vweird.f32 %v1481
  %vm1488 = vweird.f32 %v1482
  %vm1489 = vmor %vm1487, %vm1488
  %v1490 = vsel %vm1489, %v1482, %v1486
  %v1491 = vand.u32 2147483647, %v1481
  %vm1492 = vcmp.eq.f32.partialorder %v1491, 8.507059e+37
  %v1493 = vand.u32 %v1481, 2147483648
  %v1494 = vor.u32 1.1754944e-38, %v1493
  %v1495 = vsel %vm1492, %v1494, %v1490
  %v1496 = vmul.f32 1.0, %v1495
  %v1497 = vld [vmem:[#allocation3] sm:$0xff]
  %v1498 = vmul.f32 %v1476, %v1497
  %v1499 = vmul.f32 %v1461, %v1477
  %v1500 = vadd.f32 %v1498, %v1499
  %v1501 = vtanh.pop %v1500
  %v1502 = vmul.f32 %v1496, %v1501
  %1503 = vst [vmem:[#allocation3] sm:$0xff] %v1500
  %1504 = vst [vmem:[#allocation2] sm:$0xff] %v1502
  %v1506 = vrot.slane %v1502, 1
  %v1507 = vrot.slane %v1502, 2
  %v1508 = vrot.slane %v1502, 3
  %v1509 = vrot.slane %v1502, 4
  %v1510 = vrot.slane %v1502, 5
  %v1511 = vrot.slane %v1502, 6
  %v1512 = vrot.slane %v1502, 7
  %v1520 = vpack.c.bf16 %v1502, %v1502
  %v1521 = vpack.c.bf16 %v1506, %v1506
  %v1522 = vpack.c.bf16 %v1507, %v1507
  %v1523 = vpack.c.bf16 %v1508, %v1508
  %v1524 = vpack.c.bf16 %v1509, %v1509
  %v1525 = vpack.c.bf16 %v1510, %v1510
  %v1526 = vpack.c.bf16 %v1511, %v1511
  %v1527 = vpack.c.bf16 %v1512, %v1512
  %v1529 = vshll.u32 %v1520, 16
  %v1531 = vrot.slane %v1529, 7
  %v1533 = vshll.u32 %v1521, 16
  %v1535 = vrot.slane %v1533, 7
  %v1537 = vshll.u32 %v1522, 16
  %v1539 = vrot.slane %v1537, 7
  %v1541 = vshll.u32 %v1523, 16
  %v1543 = vrot.slane %v1541, 7
  %v1545 = vshll.u32 %v1524, 16
  %v1547 = vrot.slane %v1545, 7
  %v1549 = vshll.u32 %v1525, 16
  %v1551 = vrot.slane %v1549, 7
  %v1553 = vshll.u32 %v1526, 16
  %v1555 = vrot.slane %v1553, 7
  %v1557 = vshll.u32 %v1527, 16
  %v1559 = vrot.slane %v1557, 7
  %vm1568 = vsmask.f32 7942
  %vm1569 = vmand %vm1157, %vm1568
  %v1570 = vld [vmem:[%s2] sm:$0x2]
  %v1571 = vsel %vm1569, %v1531, %v1570
  %1572 = vst [vmem:[%s2] sm:$0x2] %v1571
  %v1573 = vld [vmem:[%s2 + $0x8] sm:$0x2]
  %v1574 = vsel %vm1569, %v1535, %v1573
  %1575 = vst [vmem:[%s2 + $0x8] sm:$0x2] %v1574
  %v1576 = vld [vmem:[%s2 + $0x10] sm:$0x2]
  %v1577 = vsel %vm1569, %v1539, %v1576
  %1578 = vst [vmem:[%s2 + $0x10] sm:$0x2] %v1577
  %v1579 = vld [vmem:[%s2 + $0x18] sm:$0x2]
  %v1580 = vsel %vm1569, %v1543, %v1579
  %1581 = vst [vmem:[%s2 + $0x18] sm:$0x2] %v1580
  %v1582 = vld [vmem:[%s2 + $0x20] sm:$0x2]
  %v1583 = vsel %vm1569, %v1547, %v1582
  %1584 = vst [vmem:[%s2 + $0x20] sm:$0x2] %v1583
  %v1585 = vld [vmem:[%s2 + $0x28] sm:$0x2]
  %v1586 = vsel %vm1569, %v1551, %v1585
  %1587 = vst [vmem:[%s2 + $0x28] sm:$0x2] %v1586
  %v1588 = vld [vmem:[%s2 + $0x30] sm:$0x2]
  %v1589 = vsel %vm1569, %v1555, %v1588
  %1590 = vst [vmem:[%s2 + $0x30] sm:$0x2] %v1589
  %v1591 = vld [vmem:[%s2 + $0x38] sm:$0x2]
  %v1592 = vsel %vm1569, %v1559, %v1591
  %1593 = vst [vmem:[%s2 + $0x38] sm:$0x2] %v1592
  %s1594 = scalar_lea.vmem %s0, 128
  %v1595 = vld [vmem:[%s1594] sm:$0xff]
  %v1596 = vld [vmem:[%s1594 + $0x8] sm:$0xff]
  %v1597 = vld [vmem:[%s1594 + $0x10] sm:$0xff]
  %v1598 = vld [vmem:[%s1594 + $0x18] sm:$0xff]
  %v1599 = vld [vmem:[#allocation2] sm:$0xff]
  %v1600 = vpack.c.bf16 %v1599, %v1599
  %v1601 = vld [vmem:[%s1] sm:$0xff]
  %v1602 = vld [vmem:[%s1 + $0x8] sm:$0xff]
  %v1603 = vld [vmem:[%s1 + $0x10] sm:$0xff]
  %v1604 = vld [vmem:[%s1 + $0x18] sm:$0xff]
  %v1605 = vld [vmem:[%s1 + $0x20] sm:$0xff]
  %v1606 = vld [vmem:[%s1 + $0x28] sm:$0xff]
  %v1607 = vld [vmem:[%s1 + $0x30] sm:$0xff]
  %v1608 = vld [vmem:[%s1 + $0x38] sm:$0xff]
  %v1609 = vld [vmem:[%s1 + $0x40] sm:$0xff]
  %v1610 = vld [vmem:[%s1 + $0x48] sm:$0xff]
  %v1611 = vld [vmem:[%s1 + $0x50] sm:$0xff]
  %v1612 = vld [vmem:[%s1 + $0x58] sm:$0xff]
  %v1613 = vld [vmem:[%s1 + $0x60] sm:$0xff]
  %v1614 = vld [vmem:[%s1 + $0x68] sm:$0xff]
  %v1615 = vld [vmem:[%s1 + $0x70] sm:$0xff]
  %v1616 = vld [vmem:[%s1 + $0x78] sm:$0xff]
  %v1617 = vld [vmem:[%s1 + $0x80] sm:$0xff]
  %v1618 = vld [vmem:[%s1 + $0x88] sm:$0xff]
  %v1619 = vld [vmem:[%s1 + $0x90] sm:$0xff]
  %v1620 = vld [vmem:[%s1 + $0x98] sm:$0xff]
  %v1621 = vld [vmem:[%s1 + $0xa0] sm:$0xff]
  %v1622 = vld [vmem:[%s1 + $0xa8] sm:$0xff]
  %v1623 = vld [vmem:[%s1 + $0xb0] sm:$0xff]
  %v1624 = vld [vmem:[%s1 + $0xb8] sm:$0xff]
  %v1625 = vld [vmem:[%s1 + $0xc0] sm:$0xff]
  %v1626 = vld [vmem:[%s1 + $0xc8] sm:$0xff]
  %v1627 = vld [vmem:[%s1 + $0xd0] sm:$0xff]
  %v1628 = vld [vmem:[%s1 + $0xd8] sm:$0xff]
  %v1629 = vld [vmem:[%s1 + $0xe0] sm:$0xff]
  %v1630 = vld [vmem:[%s1 + $0xe8] sm:$0xff]
  %v1631 = vld [vmem:[%s1 + $0xf0] sm:$0xff]
  %v1632 = vld [vmem:[%s1 + $0xf8] sm:$0xff]
  %v1665 = vunpack.c.l.b16 %v1601
  %v1666 = vunpack.c.h.b16 %v1601
  %v1667 = vunpack.c.l.b16 %v1602
  %v1668 = vunpack.c.h.b16 %v1602
  %v1669 = vunpack.c.l.b16 %v1603
  %v1670 = vunpack.c.h.b16 %v1603
  %v1671 = vunpack.c.l.b16 %v1604
  %v1672 = vunpack.c.h.b16 %v1604
  %v1673 = vunpack.c.l.b16 %v1605
  %v1674 = vunpack.c.h.b16 %v1605
  %v1675 = vunpack.c.l.b16 %v1606
  %v1676 = vunpack.c.h.b16 %v1606
  %v1677 = vunpack.c.l.b16 %v1607
  %v1678 = vunpack.c.h.b16 %v1607
  %v1679 = vunpack.c.l.b16 %v1608
  %v1680 = vunpack.c.h.b16 %v1608
  %v1681 = vunpack.c.l.b16 %v1609
  %v1682 = vunpack.c.h.b16 %v1609
  %v1683 = vunpack.c.l.b16 %v1610
  %v1684 = vunpack.c.h.b16 %v1610
  %v1685 = vunpack.c.l.b16 %v1611
  %v1686 = vunpack.c.h.b16 %v1611
  %v1687 = vunpack.c.l.b16 %v1612
  %v1688 = vunpack.c.h.b16 %v1612
  %v1689 = vunpack.c.l.b16 %v1613
  %v1690 = vunpack.c.h.b16 %v1613
  %v1691 = vunpack.c.l.b16 %v1614
  %v1692 = vunpack.c.h.b16 %v1614
  %v1693 = vunpack.c.l.b16 %v1615
  %v1694 = vunpack.c.h.b16 %v1615
  %v1695 = vunpack.c.l.b16 %v1616
  %v1696 = vunpack.c.h.b16 %v1616
  %v1697 = vunpack.c.l.b16 %v1617
  %v1698 = vunpack.c.h.b16 %v1617
  %v1699 = vunpack.c.l.b16 %v1618
  %v1700 = vunpack.c.h.b16 %v1618
  %v1701 = vunpack.c.l.b16 %v1619
  %v1702 = vunpack.c.h.b16 %v1619
  %v1703 = vunpack.c.l.b16 %v1620
  %v1704 = vunpack.c.h.b16 %v1620
  %v1705 = vunpack.c.l.b16 %v1621
  %v1706 = vunpack.c.h.b16 %v1621
  %v1707 = vunpack.c.l.b16 %v1622
  %v1708 = vunpack.c.h.b16 %v1622
  %v1709 = vunpack.c.l.b16 %v1623
  %v1710 = vunpack.c.h.b16 %v1623
  %v1711 = vunpack.c.l.b16 %v1624
  %v1712 = vunpack.c.h.b16 %v1624
  %v1713 = vunpack.c.l.b16 %v1625
  %v1714 = vunpack.c.h.b16 %v1625
  %v1715 = vunpack.c.l.b16 %v1626
  %v1716 = vunpack.c.h.b16 %v1626
  %v1717 = vunpack.c.l.b16 %v1627
  %v1718 = vunpack.c.h.b16 %v1627
  %v1719 = vunpack.c.l.b16 %v1628
  %v1720 = vunpack.c.h.b16 %v1628
  %v1721 = vunpack.c.l.b16 %v1629
  %v1722 = vunpack.c.h.b16 %v1629
  %v1723 = vunpack.c.l.b16 %v1630
  %v1724 = vunpack.c.h.b16 %v1630
  %v1725 = vunpack.c.l.b16 %v1631
  %v1726 = vunpack.c.h.b16 %v1631
  %v1727 = vunpack.c.l.b16 %v1632
  %v1728 = vunpack.c.h.b16 %v1632
  %v1729 = vpack.c.b16 %v1669, %v1665
  %v1730 = vpack.c.b16 %v1670, %v1666
  %v1731 = vpack.c.b16 %v1671, %v1667
  %v1732 = vpack.c.b16 %v1672, %v1668
  %v1733 = vpack.c.b16 %v1677, %v1673
  %v1734 = vpack.c.b16 %v1678, %v1674
  %v1735 = vpack.c.b16 %v1679, %v1675
  %v1736 = vpack.c.b16 %v1680, %v1676
  %v1737 = vpack.c.b16 %v1685, %v1681
  %v1738 = vpack.c.b16 %v1686, %v1682
  %v1739 = vpack.c.b16 %v1687, %v1683
  %v1740 = vpack.c.b16 %v1688, %v1684
  %v1741 = vpack.c.b16 %v1693, %v1689
  %v1742 = vpack.c.b16 %v1694, %v1690
  %v1743 = vpack.c.b16 %v1695, %v1691
  %v1744 = vpack.c.b16 %v1696, %v1692
  %v1745 = vpack.c.b16 %v1701, %v1697
  %v1746 = vpack.c.b16 %v1702, %v1698
  %v1747 = vpack.c.b16 %v1703, %v1699
  %v1748 = vpack.c.b16 %v1704, %v1700
  %v1749 = vpack.c.b16 %v1709, %v1705
  %v1750 = vpack.c.b16 %v1710, %v1706
  %v1751 = vpack.c.b16 %v1711, %v1707
  %v1752 = vpack.c.b16 %v1712, %v1708
  %v1753 = vpack.c.b16 %v1717, %v1713
  %v1754 = vpack.c.b16 %v1718, %v1714
  %v1755 = vpack.c.b16 %v1719, %v1715
  %v1756 = vpack.c.b16 %v1720, %v1716
  %v1757 = vpack.c.b16 %v1725, %v1721
  %v1758 = vpack.c.b16 %v1726, %v1722
  %v1759 = vpack.c.b16 %v1727, %v1723
  %v1760 = vpack.c.b16 %v1728, %v1724
  %1793 = vmatpush.bf16.msra.mxu0 %v1757
  %1794 = vmatpush.bf16.msra.mxu0 %v1753
  %1795 = vmatpush.bf16.msra.mxu0 %v1749
  %1796 = vmatpush.bf16.msra.mxu0 %v1745
  %1797 = vmatpush.bf16.msra.mxu0 %v1741
  %1798 = vmatpush.bf16.msra.mxu0 %v1737
  %1799 = vmatpush.bf16.msra.mxu0 %v1733
  %1800 = vmatpush.bf16.msra.mxu0 %v1729
  %1801 = vmatmul.bf16.gmra.mxu0 %v1600
  %v1802 = vpop.f32.mrf.mxu0
  %v1803 = vadd.f32 0.0, %v1802
  %v1804 = vpop.f32.mrf.mxu0
  %1805 = vdwg.mxu0
  %1806 = vmatpush.bf16.msra.mxu0 %v1758
  %1807 = vmatpush.bf16.msra.mxu0 %v1754
  %1808 = vmatpush.bf16.msra.mxu0 %v1750
  %1809 = vmatpush.bf16.msra.mxu0 %v1746
  %1810 = vmatpush.bf16.msra.mxu0 %v1742
  %1811 = vmatpush.bf16.msra.mxu0 %v1738
  %1812 = vmatpush.bf16.msra.mxu0 %v1734
  %1813 = vmatpush.bf16.msra.mxu0 %v1730
  %1814 = vmatmul.bf16.gmra.mxu0 %v1600
  %v1815 = vpop.f32.mrf.mxu0
  %v1816 = vadd.f32 0.0, %v1815
  %v1817 = vpop.f32.mrf.mxu0
  %1818 = vdwg.mxu0
  %1819 = vmatpush.bf16.msra.mxu0 %v1759
  %1820 = vmatpush.bf16.msra.mxu0 %v1755
  %1821 = vmatpush.bf16.msra.mxu0 %v1751
  %1822 = vmatpush.bf16.msra.mxu0 %v1747
  %1823 = vmatpush.bf16.msra.mxu0 %v1743
  %1824 = vmatpush.bf16.msra.mxu0 %v1739
  %1825 = vmatpush.bf16.msra.mxu0 %v1735
  %1826 = vmatpush.bf16.msra.mxu0 %v1731
  %1827 = vmatmul.bf16.gmra.mxu0 %v1600
  %v1828 = vpop.f32.mrf.mxu0
  %v1829 = vadd.f32 0.0, %v1828
  %v1830 = vpop.f32.mrf.mxu0
  %1831 = vdwg.mxu0
  %1832 = vmatpush.bf16.msra.mxu0 %v1760
  %1833 = vmatpush.bf16.msra.mxu0 %v1756
  %1834 = vmatpush.bf16.msra.mxu0 %v1752
  %1835 = vmatpush.bf16.msra.mxu0 %v1748
  %1836 = vmatpush.bf16.msra.mxu0 %v1744
  %1837 = vmatpush.bf16.msra.mxu0 %v1740
  %1838 = vmatpush.bf16.msra.mxu0 %v1736
  %1839 = vmatpush.bf16.msra.mxu0 %v1732
  %1840 = vmatmul.bf16.gmra.mxu0 %v1600
  %v1841 = vpop.f32.mrf.mxu0
  %v1842 = vadd.f32 0.0, %v1841
  %v1843 = vpop.f32.mrf.mxu0
  %1844 = vdwg.mxu0
  %v1845 = vadd.f32 %v1595, %v1803
  %v1846 = vadd.f32 %v1596, %v1816
  %v1847 = vadd.f32 %v1597, %v1829
  %v1848 = vadd.f32 %v1598, %v1842
  %v1849 = vxor.u32 %v1845, 2147483648
  %v1850 = vxor.u32 %v1846, 2147483648
  %v1851 = vmul.f32 %v1849, 1.442695
  %v1852 = vpow.pop %v1851
  %v1853 = vmul.f32 %v1850, 1.442695
  %v1854 = vpow.pop %v1853
  %v1855 = vadd.f32 %v1852, 1.0
  %v1856 = vadd.f32 %v1854, 1.0
  %v1857 = vrcp.pop %v1855
  %v1858 = vmul.f32 %v1855, %v1857
  %v1859 = vsub.f32 1.0, %v1858
  %v1860 = vmul.f32 %v1857, %v1859
  %v1861 = vadd.f32 %v1857, %v1860
  %vm1862 = vweird.f32 %v1855
  %vm1863 = vweird.f32 %v1857
  %vm1864 = vmor %vm1862, %vm1863
  %v1865 = vsel %vm1864, %v1857, %v1861
  %v1866 = vand.u32 2147483647, %v1855
  %vm1867 = vcmp.eq.f32.partialorder %v1866, 8.507059e+37
  %v1868 = vand.u32 %v1855, 2147483648
  %v1869 = vor.u32 1.1754944e-38, %v1868
  %v1870 = vsel %vm1867, %v1869, %v1865
  %v1871 = vmul.f32 1.0, %v1870
  %v1872 = vrcp.pop %v1856
  %v1873 = vmul.f32 %v1856, %v1872
  %v1874 = vsub.f32 1.0, %v1873
  %v1875 = vmul.f32 %v1872, %v1874
  %v1876 = vadd.f32 %v1872, %v1875
  %vm1877 = vweird.f32 %v1856
  %vm1878 = vweird.f32 %v1872
  %vm1879 = vmor %vm1877, %vm1878
  %v1880 = vsel %vm1879, %v1872, %v1876
  %v1881 = vand.u32 2147483647, %v1856
  %vm1882 = vcmp.eq.f32.partialorder %v1881, 8.507059e+37
  %v1883 = vand.u32 %v1856, 2147483648
  %v1884 = vor.u32 1.1754944e-38, %v1883
  %v1885 = vsel %vm1882, %v1884, %v1880
  %v1886 = vmul.f32 1.0, %v1885
  %v1887 = vtanh.pop %v1847
  %v1888 = vxor.u32 %v1848, 2147483648
  %v1889 = vmul.f32 %v1888, 1.442695
  %v1890 = vpow.pop %v1889
  %v1891 = vadd.f32 %v1890, 1.0
  %v1892 = vrcp.pop %v1891
  %v1893 = vmul.f32 %v1891, %v1892
  %v1894 = vsub.f32 1.0, %v1893
  %v1895 = vmul.f32 %v1892, %v1894
  %v1896 = vadd.f32 %v1892, %v1895
  %vm1897 = vweird.f32 %v1891
  %vm1898 = vweird.f32 %v1892
  %vm1899 = vmor %vm1897, %vm1898
  %v1900 = vsel %vm1899, %v1892, %v1896
  %v1901 = vand.u32 2147483647, %v1891
  %vm1902 = vcmp.eq.f32.partialorder %v1901, 8.507059e+37
  %v1903 = vand.u32 %v1891, 2147483648
  %v1904 = vor.u32 1.1754944e-38, %v1903
  %v1905 = vsel %vm1902, %v1904, %v1900
  %v1906 = vmul.f32 1.0, %v1905
  %v1907 = vld [vmem:[#allocation3] sm:$0xff]
  %v1908 = vmul.f32 %v1886, %v1907
  %v1909 = vmul.f32 %v1871, %v1887
  %v1910 = vadd.f32 %v1908, %v1909
  %v1911 = vtanh.pop %v1910
  %v1912 = vmul.f32 %v1906, %v1911
  %1913 = vst [vmem:[#allocation3] sm:$0xff] %v1910
  %1914 = vst [vmem:[#allocation2] sm:$0xff] %v1912
  %v1916 = vrot.slane %v1912, 1
  %v1917 = vrot.slane %v1912, 2
  %v1918 = vrot.slane %v1912, 3
  %v1919 = vrot.slane %v1912, 4
  %v1920 = vrot.slane %v1912, 5
  %v1921 = vrot.slane %v1912, 6
  %v1922 = vrot.slane %v1912, 7
  %v1930 = vpack.c.bf16 %v1912, %v1912
  %v1931 = vpack.c.bf16 %v1916, %v1916
  %v1932 = vpack.c.bf16 %v1917, %v1917
  %v1933 = vpack.c.bf16 %v1918, %v1918
  %v1934 = vpack.c.bf16 %v1919, %v1919
  %v1935 = vpack.c.bf16 %v1920, %v1920
  %v1936 = vpack.c.bf16 %v1921, %v1921
  %v1937 = vpack.c.bf16 %v1922, %v1922
  %v1946 = vrot.slane %v1930, 6
  %v1947 = vrot.slane %v1931, 6
  %v1948 = vrot.slane %v1932, 6
  %v1949 = vrot.slane %v1933, 6
  %v1950 = vrot.slane %v1934, 6
  %v1951 = vrot.slane %v1935, 6
  %v1952 = vrot.slane %v1936, 6
  %v1953 = vrot.slane %v1937, 6
  %vm1962 = vcmask 1042434
  %vm1963 = vsmask.f32 2304
  %vm1964 = vmand %vm1962, %vm1963
  %v1965 = vld [vmem:[%s2] sm:$0x4]
  %v1966 = vsel %vm1964, %v1946, %v1965
  %1967 = vst [vmem:[%s2] sm:$0x4] %v1966
  %v1968 = vld [vmem:[%s2 + $0x8] sm:$0x4]
  %v1969 = vsel %vm1964, %v1947, %v1968
  %1970 = vst [vmem:[%s2 + $0x8] sm:$0x4] %v1969
  %v1971 = vld [vmem:[%s2 + $0x10] sm:$0x4]
  %v1972 = vsel %vm1964, %v1948, %v1971
  %1973 = vst [vmem:[%s2 + $0x10] sm:$0x4] %v1972
  %v1974 = vld [vmem:[%s2 + $0x18] sm:$0x4]
  %v1975 = vsel %vm1964, %v1949, %v1974
  %1976 = vst [vmem:[%s2 + $0x18] sm:$0x4] %v1975
  %v1977 = vld [vmem:[%s2 + $0x20] sm:$0x4]
  %v1978 = vsel %vm1964, %v1950, %v1977
  %1979 = vst [vmem:[%s2 + $0x20] sm:$0x4] %v1978
  %v1980 = vld [vmem:[%s2 + $0x28] sm:$0x4]
  %v1981 = vsel %vm1964, %v1951, %v1980
  %1982 = vst [vmem:[%s2 + $0x28] sm:$0x4] %v1981
  %v1983 = vld [vmem:[%s2 + $0x30] sm:$0x4]
  %v1984 = vsel %vm1964, %v1952, %v1983
  %1985 = vst [vmem:[%s2 + $0x30] sm:$0x4] %v1984
  %v1986 = vld [vmem:[%s2 + $0x38] sm:$0x4]
  %v1987 = vsel %vm1964, %v1953, %v1986
  %1988 = vst [vmem:[%s2 + $0x38] sm:$0x4] %v1987
  %s1989 = scalar_lea.vmem %s0, 160
  %v1990 = vld [vmem:[%s1989] sm:$0xff]
  %v1991 = vld [vmem:[%s1989 + $0x8] sm:$0xff]
  %v1992 = vld [vmem:[%s1989 + $0x10] sm:$0xff]
  %v1993 = vld [vmem:[%s1989 + $0x18] sm:$0xff]
  %v1994 = vld [vmem:[#allocation2] sm:$0xff]
  %v1995 = vpack.c.bf16 %v1994, %v1994
  %v1996 = vld [vmem:[%s1] sm:$0xff]
  %v1997 = vld [vmem:[%s1 + $0x8] sm:$0xff]
  %v1998 = vld [vmem:[%s1 + $0x10] sm:$0xff]
  %v1999 = vld [vmem:[%s1 + $0x18] sm:$0xff]
  %v2000 = vld [vmem:[%s1 + $0x20] sm:$0xff]
  %v2001 = vld [vmem:[%s1 + $0x28] sm:$0xff]
  %v2002 = vld [vmem:[%s1 + $0x30] sm:$0xff]
  %v2003 = vld [vmem:[%s1 + $0x38] sm:$0xff]
  %v2004 = vld [vmem:[%s1 + $0x40] sm:$0xff]
  %v2005 = vld [vmem:[%s1 + $0x48] sm:$0xff]
  %v2006 = vld [vmem:[%s1 + $0x50] sm:$0xff]
  %v2007 = vld [vmem:[%s1 + $0x58] sm:$0xff]
  %v2008 = vld [vmem:[%s1 + $0x60] sm:$0xff]
  %v2009 = vld [vmem:[%s1 + $0x68] sm:$0xff]
  %v2010 = vld [vmem:[%s1 + $0x70] sm:$0xff]
  %v2011 = vld [vmem:[%s1 + $0x78] sm:$0xff]
  %v2012 = vld [vmem:[%s1 + $0x80] sm:$0xff]
  %v2013 = vld [vmem:[%s1 + $0x88] sm:$0xff]
  %v2014 = vld [vmem:[%s1 + $0x90] sm:$0xff]
  %v2015 = vld [vmem:[%s1 + $0x98] sm:$0xff]
  %v2016 = vld [vmem:[%s1 + $0xa0] sm:$0xff]
  %v2017 = vld [vmem:[%s1 + $0xa8] sm:$0xff]
  %v2018 = vld [vmem:[%s1 + $0xb0] sm:$0xff]
  %v2019 = vld [vmem:[%s1 + $0xb8] sm:$0xff]
  %v2020 = vld [vmem:[%s1 + $0xc0] sm:$0xff]
  %v2021 = vld [vmem:[%s1 + $0xc8] sm:$0xff]
  %v2022 = vld [vmem:[%s1 + $0xd0] sm:$0xff]
  %v2023 = vld [vmem:[%s1 + $0xd8] sm:$0xff]
  %v2024 = vld [vmem:[%s1 + $0xe0] sm:$0xff]
  %v2025 = vld [vmem:[%s1 + $0xe8] sm:$0xff]
  %v2026 = vld [vmem:[%s1 + $0xf0] sm:$0xff]
  %v2027 = vld [vmem:[%s1 + $0xf8] sm:$0xff]
  %v2060 = vunpack.c.l.b16 %v1996
  %v2061 = vunpack.c.h.b16 %v1996
  %v2062 = vunpack.c.l.b16 %v1997
  %v2063 = vunpack.c.h.b16 %v1997
  %v2064 = vunpack.c.l.b16 %v1998
  %v2065 = vunpack.c.h.b16 %v1998
  %v2066 = vunpack.c.l.b16 %v1999
  %v2067 = vunpack.c.h.b16 %v1999
  %v2068 = vunpack.c.l.b16 %v2000
  %v2069 = vunpack.c.h.b16 %v2000
  %v2070 = vunpack.c.l.b16 %v2001
  %v2071 = vunpack.c.h.b16 %v2001
  %v2072 = vunpack.c.l.b16 %v2002
  %v2073 = vunpack.c.h.b16 %v2002
  %v2074 = vunpack.c.l.b16 %v2003
  %v2075 = vunpack.c.h.b16 %v2003
  %v2076 = vunpack.c.l.b16 %v2004
  %v2077 = vunpack.c.h.b16 %v2004
  %v2078 = vunpack.c.l.b16 %v2005
  %v2079 = vunpack.c.h.b16 %v2005
  %v2080 = vunpack.c.l.b16 %v2006
  %v2081 = vunpack.c.h.b16 %v2006
  %v2082 = vunpack.c.l.b16 %v2007
  %v2083 = vunpack.c.h.b16 %v2007
  %v2084 = vunpack.c.l.b16 %v2008
  %v2085 = vunpack.c.h.b16 %v2008
  %v2086 = vunpack.c.l.b16 %v2009
  %v2087 = vunpack.c.h.b16 %v2009
  %v2088 = vunpack.c.l.b16 %v2010
  %v2089 = vunpack.c.h.b16 %v2010
  %v2090 = vunpack.c.l.b16 %v2011
  %v2091 = vunpack.c.h.b16 %v2011
  %v2092 = vunpack.c.l.b16 %v2012
  %v2093 = vunpack.c.h.b16 %v2012
  %v2094 = vunpack.c.l.b16 %v2013
  %v2095 = vunpack.c.h.b16 %v2013
  %v2096 = vunpack.c.l.b16 %v2014
  %v2097 = vunpack.c.h.b16 %v2014
  %v2098 = vunpack.c.l.b16 %v2015
  %v2099 = vunpack.c.h.b16 %v2015
  %v2100 = vunpack.c.l.b16 %v2016
  %v2101 = vunpack.c.h.b16 %v2016
  %v2102 = vunpack.c.l.b16 %v2017
  %v2103 = vunpack.c.h.b16 %v2017
  %v2104 = vunpack.c.l.b16 %v2018
  %v2105 = vunpack.c.h.b16 %v2018
  %v2106 = vunpack.c.l.b16 %v2019
  %v2107 = vunpack.c.h.b16 %v2019
  %v2108 = vunpack.c.l.b16 %v2020
  %v2109 = vunpack.c.h.b16 %v2020
  %v2110 = vunpack.c.l.b16 %v2021
  %v2111 = vunpack.c.h.b16 %v2021
  %v2112 = vunpack.c.l.b16 %v2022
  %v2113 = vunpack.c.h.b16 %v2022
  %v2114 = vunpack.c.l.b16 %v2023
  %v2115 = vunpack.c.h.b16 %v2023
  %v2116 = vunpack.c.l.b16 %v2024
  %v2117 = vunpack.c.h.b16 %v2024
  %v2118 = vunpack.c.l.b16 %v2025
  %v2119 = vunpack.c.h.b16 %v2025
  %v2120 = vunpack.c.l.b16 %v2026
  %v2121 = vunpack.c.h.b16 %v2026
  %v2122 = vunpack.c.l.b16 %v2027
  %v2123 = vunpack.c.h.b16 %v2027
  %v2124 = vpack.c.b16 %v2064, %v2060
  %v2125 = vpack.c.b16 %v2065, %v2061
  %v2126 = vpack.c.b16 %v2066, %v2062
  %v2127 = vpack.c.b16 %v2067, %v2063
  %v2128 = vpack.c.b16 %v2072, %v2068
  %v2129 = vpack.c.b16 %v2073, %v2069
  %v2130 = vpack.c.b16 %v2074, %v2070
  %v2131 = vpack.c.b16 %v2075, %v2071
  %v2132 = vpack.c.b16 %v2080, %v2076
  %v2133 = vpack.c.b16 %v2081, %v2077
  %v2134 = vpack.c.b16 %v2082, %v2078
  %v2135 = vpack.c.b16 %v2083, %v2079
  %v2136 = vpack.c.b16 %v2088, %v2084
  %v2137 = vpack.c.b16 %v2089, %v2085
  %v2138 = vpack.c.b16 %v2090, %v2086
  %v2139 = vpack.c.b16 %v2091, %v2087
  %v2140 = vpack.c.b16 %v2096, %v2092
  %v2141 = vpack.c.b16 %v2097, %v2093
  %v2142 = vpack.c.b16 %v2098, %v2094
  %v2143 = vpack.c.b16 %v2099, %v2095
  %v2144 = vpack.c.b16 %v2104, %v2100
  %v2145 = vpack.c.b16 %v2105, %v2101
  %v2146 = vpack.c.b16 %v2106, %v2102
  %v2147 = vpack.c.b16 %v2107, %v2103
  %v2148 = vpack.c.b16 %v2112, %v2108
  %v2149 = vpack.c.b16 %v2113, %v2109
  %v2150 = vpack.c.b16 %v2114, %v2110
  %v2151 = vpack.c.b16 %v2115, %v2111
  %v2152 = vpack.c.b16 %v2120, %v2116
  %v2153 = vpack.c.b16 %v2121, %v2117
  %v2154 = vpack.c.b16 %v2122, %v2118
  %v2155 = vpack.c.b16 %v2123, %v2119
  %2188 = vmatpush.bf16.msra.mxu0 %v2152
  %2189 = vmatpush.bf16.msra.mxu0 %v2148
  %2190 = vmatpush.bf16.msra.mxu0 %v2144
  %2191 = vmatpush.bf16.msra.mxu0 %v2140
  %2192 = vmatpush.bf16.msra.mxu0 %v2136
  %2193 = vmatpush.bf16.msra.mxu0 %v2132
  %2194 = vmatpush.bf16.msra.mxu0 %v2128
  %2195 = vmatpush.bf16.msra.mxu0 %v2124
  %2196 = vmatmul.bf16.gmra.mxu0 %v1995
  %v2197 = vpop.f32.mrf.mxu0
  %v2198 = vadd.f32 0.0, %v2197
  %v2199 = vpop.f32.mrf.mxu0
  %2200 = vdwg.mxu0
  %2201 = vmatpush.bf16.msra.mxu0 %v2153
  %2202 = vmatpush.bf16.msra.mxu0 %v2149
  %2203 = vmatpush.bf16.msra.mxu0 %v2145
  %2204 = vmatpush.bf16.msra.mxu0 %v2141
  %2205 = vmatpush.bf16.msra.mxu0 %v2137
  %2206 = vmatpush.bf16.msra.mxu0 %v2133
  %2207 = vmatpush.bf16.msra.mxu0 %v2129
  %2208 = vmatpush.bf16.msra.mxu0 %v2125
  %2209 = vmatmul.bf16.gmra.mxu0 %v1995
  %v2210 = vpop.f32.mrf.mxu0
  %v2211 = vadd.f32 0.0, %v2210
  %v2212 = vpop.f32.mrf.mxu0
  %2213 = vdwg.mxu0
  %2214 = vmatpush.bf16.msra.mxu0 %v2154
  %2215 = vmatpush.bf16.msra.mxu0 %v2150
  %2216 = vmatpush.bf16.msra.mxu0 %v2146
  %2217 = vmatpush.bf16.msra.mxu0 %v2142
  %2218 = vmatpush.bf16.msra.mxu0 %v2138
  %2219 = vmatpush.bf16.msra.mxu0 %v2134
  %2220 = vmatpush.bf16.msra.mxu0 %v2130
  %2221 = vmatpush.bf16.msra.mxu0 %v2126
  %2222 = vmatmul.bf16.gmra.mxu0 %v1995
  %v2223 = vpop.f32.mrf.mxu0
  %v2224 = vadd.f32 0.0, %v2223
  %v2225 = vpop.f32.mrf.mxu0
  %2226 = vdwg.mxu0
  %2227 = vmatpush.bf16.msra.mxu0 %v2155
  %2228 = vmatpush.bf16.msra.mxu0 %v2151
  %2229 = vmatpush.bf16.msra.mxu0 %v2147
  %2230 = vmatpush.bf16.msra.mxu0 %v2143
  %2231 = vmatpush.bf16.msra.mxu0 %v2139
  %2232 = vmatpush.bf16.msra.mxu0 %v2135
  %2233 = vmatpush.bf16.msra.mxu0 %v2131
  %2234 = vmatpush.bf16.msra.mxu0 %v2127
  %2235 = vmatmul.bf16.gmra.mxu0 %v1995
  %v2236 = vpop.f32.mrf.mxu0
  %v2237 = vadd.f32 0.0, %v2236
  %v2238 = vpop.f32.mrf.mxu0
  %2239 = vdwg.mxu0
  %v2240 = vadd.f32 %v1990, %v2198
  %v2241 = vadd.f32 %v1991, %v2211
  %v2242 = vadd.f32 %v1992, %v2224
  %v2243 = vadd.f32 %v1993, %v2237
  %v2244 = vxor.u32 %v2240, 2147483648
  %v2245 = vxor.u32 %v2241, 2147483648
  %v2246 = vmul.f32 %v2244, 1.442695
  %v2247 = vpow.pop %v2246
  %v2248 = vmul.f32 %v2245, 1.442695
  %v2249 = vpow.pop %v2248
  %v2250 = vadd.f32 %v2247, 1.0
  %v2251 = vadd.f32 %v2249, 1.0
  %v2252 = vrcp.pop %v2250
  %v2253 = vmul.f32 %v2250, %v2252
  %v2254 = vsub.f32 1.0, %v2253
  %v2255 = vmul.f32 %v2252, %v2254
  %v2256 = vadd.f32 %v2252, %v2255
  %vm2257 = vweird.f32 %v2250
  %vm2258 = vweird.f32 %v2252
  %vm2259 = vmor %vm2257, %vm2258
  %v2260 = vsel %vm2259, %v2252, %v2256
  %v2261 = vand.u32 2147483647, %v2250
  %vm2262 = vcmp.eq.f32.partialorder %v2261, 8.507059e+37
  %v2263 = vand.u32 %v2250, 2147483648
  %v2264 = vor.u32 1.1754944e-38, %v2263
  %v2265 = vsel %vm2262, %v2264, %v2260
  %v2266 = vmul.f32 1.0, %v2265
  %v2267 = vrcp.pop %v2251
  %v2268 = vmul.f32 %v2251, %v2267
  %v2269 = vsub.f32 1.0, %v2268
  %v2270 = vmul.f32 %v2267, %v2269
  %v2271 = vadd.f32 %v2267, %v2270
  %vm2272 = vweird.f32 %v2251
  %vm2273 = vweird.f32 %v2267
  %vm2274 = vmor %vm2272, %vm2273
  %v2275 = vsel %vm2274, %v2267, %v2271
  %v2276 = vand.u32 2147483647, %v2251
  %vm2277 = vcmp.eq.f32.partialorder %v2276, 8.507059e+37
  %v2278 = vand.u32 %v2251, 2147483648
  %v2279 = vor.u32 1.1754944e-38, %v2278
  %v2280 = vsel %vm2277, %v2279, %v2275
  %v2281 = vmul.f32 1.0, %v2280
  %v2282 = vtanh.pop %v2242
  %v2283 = vxor.u32 %v2243, 2147483648
  %v2284 = vmul.f32 %v2283, 1.442695
  %v2285 = vpow.pop %v2284
  %v2286 = vadd.f32 %v2285, 1.0
  %v2287 = vrcp.pop %v2286
  %v2288 = vmul.f32 %v2286, %v2287
  %v2289 = vsub.f32 1.0, %v2288
  %v2290 = vmul.f32 %v2287, %v2289
  %v2291 = vadd.f32 %v2287, %v2290
  %vm2292 = vweird.f32 %v2286
  %vm2293 = vweird.f32 %v2287
  %vm2294 = vmor %vm2292, %vm2293
  %v2295 = vsel %vm2294, %v2287, %v2291
  %v2296 = vand.u32 2147483647, %v2286
  %vm2297 = vcmp.eq.f32.partialorder %v2296, 8.507059e+37
  %v2298 = vand.u32 %v2286, 2147483648
  %v2299 = vor.u32 1.1754944e-38, %v2298
  %v2300 = vsel %vm2297, %v2299, %v2295
  %v2301 = vmul.f32 1.0, %v2300
  %v2302 = vld [vmem:[#allocation3] sm:$0xff]
  %v2303 = vmul.f32 %v2281, %v2302
  %v2304 = vmul.f32 %v2266, %v2282
  %v2305 = vadd.f32 %v2303, %v2304
  %v2306 = vtanh.pop %v2305
  %v2307 = vmul.f32 %v2301, %v2306
  %2308 = vst [vmem:[#allocation3] sm:$0xff] %v2305
  %2309 = vst [vmem:[#allocation2] sm:$0xff] %v2307
  %v2311 = vrot.slane %v2307, 1
  %v2312 = vrot.slane %v2307, 2
  %v2313 = vrot.slane %v2307, 3
  %v2314 = vrot.slane %v2307, 4
  %v2315 = vrot.slane %v2307, 5
  %v2316 = vrot.slane %v2307, 6
  %v2317 = vrot.slane %v2307, 7
  %v2325 = vpack.c.bf16 %v2307, %v2307
  %v2326 = vpack.c.bf16 %v2311, %v2311
  %v2327 = vpack.c.bf16 %v2312, %v2312
  %v2328 = vpack.c.bf16 %v2313, %v2313
  %v2329 = vpack.c.bf16 %v2314, %v2314
  %v2330 = vpack.c.bf16 %v2315, %v2315
  %v2331 = vpack.c.bf16 %v2316, %v2316
  %v2332 = vpack.c.bf16 %v2317, %v2317
  %v2334 = vshll.u32 %v2325, 16
  %v2336 = vrot.slane %v2334, 6
  %v2338 = vshll.u32 %v2326, 16
  %v2340 = vrot.slane %v2338, 6
  %v2342 = vshll.u32 %v2327, 16
  %v2344 = vrot.slane %v2342, 6
  %v2346 = vshll.u32 %v2328, 16
  %v2348 = vrot.slane %v2346, 6
  %v2350 = vshll.u32 %v2329, 16
  %v2352 = vrot.slane %v2350, 6
  %v2354 = vshll.u32 %v2330, 16
  %v2356 = vrot.slane %v2354, 6
  %v2358 = vshll.u32 %v2331, 16
  %v2360 = vrot.slane %v2358, 6
  %v2362 = vshll.u32 %v2332, 16
  %v2364 = vrot.slane %v2362, 6
  %vm2373 = vsmask.f32 7946
  %vm2374 = vmand %vm1962, %vm2373
  %v2375 = vld [vmem:[%s2] sm:$0x4]
  %v2376 = vsel %vm2374, %v2336, %v2375
  %2377 = vst [vmem:[%s2] sm:$0x4] %v2376
  %v2378 = vld [vmem:[%s2 + $0x8] sm:$0x4]
  %v2379 = vsel %vm2374, %v2340, %v2378
  %2380 = vst [vmem:[%s2 + $0x8] sm:$0x4] %v2379
  %v2381 = vld [vmem:[%s2 + $0x10] sm:$0x4]
  %v2382 = vsel %vm2374, %v2344, %v2381
  %2383 = vst [vmem:[%s2 + $0x10] sm:$0x4] %v2382
  %v2384 = vld [vmem:[%s2 + $0x18] sm:$0x4]
  %v2385 = vsel %vm2374, %v2348, %v2384
  %2386 = vst [vmem:[%s2 + $0x18] sm:$0x4] %v2385
  %v2387 = vld [vmem:[%s2 + $0x20] sm:$0x4]
  %v2388 = vsel %vm2374, %v2352, %v2387
  %2389 = vst [vmem:[%s2 + $0x20] sm:$0x4] %v2388
  %v2390 = vld [vmem:[%s2 + $0x28] sm:$0x4]
  %v2391 = vsel %vm2374, %v2356, %v2390
  %2392 = vst [vmem:[%s2 + $0x28] sm:$0x4] %v2391
  %v2393 = vld [vmem:[%s2 + $0x30] sm:$0x4]
  %v2394 = vsel %vm2374, %v2360, %v2393
  %2395 = vst [vmem:[%s2 + $0x30] sm:$0x4] %v2394
  %v2396 = vld [vmem:[%s2 + $0x38] sm:$0x4]
  %v2397 = vsel %vm2374, %v2364, %v2396
  %2398 = vst [vmem:[%s2 + $0x38] sm:$0x4] %v2397
  %s2399 = scalar_lea.vmem %s0, 192
  %v2400 = vld [vmem:[%s2399] sm:$0xff]
  %v2401 = vld [vmem:[%s2399 + $0x8] sm:$0xff]
  %v2402 = vld [vmem:[%s2399 + $0x10] sm:$0xff]
  %v2403 = vld [vmem:[%s2399 + $0x18] sm:$0xff]
  %v2404 = vld [vmem:[#allocation2] sm:$0xff]
  %v2405 = vpack.c.bf16 %v2404, %v2404
  %v2406 = vld [vmem:[%s1] sm:$0xff]
  %v2407 = vld [vmem:[%s1 + $0x8] sm:$0xff]
  %v2408 = vld [vmem:[%s1 + $0x10] sm:$0xff]
  %v2409 = vld [vmem:[%s1 + $0x18] sm:$0xff]
  %v2410 = vld [vmem:[%s1 + $0x20] sm:$0xff]
  %v2411 = vld [vmem:[%s1 + $0x28] sm:$0xff]
  %v2412 = vld [vmem:[%s1 + $0x30] sm:$0xff]
  %v2413 = vld [vmem:[%s1 + $0x38] sm:$0xff]
  %v2414 = vld [vmem:[%s1 + $0x40] sm:$0xff]
  %v2415 = vld [vmem:[%s1 + $0x48] sm:$0xff]
  %v2416 = vld [vmem:[%s1 + $0x50] sm:$0xff]
  %v2417 = vld [vmem:[%s1 + $0x58] sm:$0xff]
  %v2418 = vld [vmem:[%s1 + $0x60] sm:$0xff]
  %v2419 = vld [vmem:[%s1 + $0x68] sm:$0xff]
  %v2420 = vld [vmem:[%s1 + $0x70] sm:$0xff]
  %v2421 = vld [vmem:[%s1 + $0x78] sm:$0xff]
  %v2422 = vld [vmem:[%s1 + $0x80] sm:$0xff]
  %v2423 = vld [vmem:[%s1 + $0x88] sm:$0xff]
  %v2424 = vld [vmem:[%s1 + $0x90] sm:$0xff]
  %v2425 = vld [vmem:[%s1 + $0x98] sm:$0xff]
  %v2426 = vld [vmem:[%s1 + $0xa0] sm:$0xff]
  %v2427 = vld [vmem:[%s1 + $0xa8] sm:$0xff]
  %v2428 = vld [vmem:[%s1 + $0xb0] sm:$0xff]
  %v2429 = vld [vmem:[%s1 + $0xb8] sm:$0xff]
  %v2430 = vld [vmem:[%s1 + $0xc0] sm:$0xff]
  %v2431 = vld [vmem:[%s1 + $0xc8] sm:$0xff]
  %v2432 = vld [vmem:[%s1 + $0xd0] sm:$0xff]
  %v2433 = vld [vmem:[%s1 + $0xd8] sm:$0xff]
  %v2434 = vld [vmem:[%s1 + $0xe0] sm:$0xff]
  %v2435 = vld [vmem:[%s1 + $0xe8] sm:$0xff]
  %v2436 = vld [vmem:[%s1 + $0xf0] sm:$0xff]
  %v2437 = vld [vmem:[%s1 + $0xf8] sm:$0xff]
  %v2470 = vunpack.c.l.b16 %v2406
  %v2471 = vunpack.c.h.b16 %v2406
  %v2472 = vunpack.c.l.b16 %v2407
  %v2473 = vunpack.c.h.b16 %v2407
  %v2474 = vunpack.c.l.b16 %v2408
  %v2475 = vunpack.c.h.b16 %v2408
  %v2476 = vunpack.c.l.b16 %v2409
  %v2477 = vunpack.c.h.b16 %v2409
  %v2478 = vunpack.c.l.b16 %v2410
  %v2479 = vunpack.c.h.b16 %v2410
  %v2480 = vunpack.c.l.b16 %v2411
  %v2481 = vunpack.c.h.b16 %v2411
  %v2482 = vunpack.c.l.b16 %v2412
  %v2483 = vunpack.c.h.b16 %v2412
  %v2484 = vunpack.c.l.b16 %v2413
  %v2485 = vunpack.c.h.b16 %v2413
  %v2486 = vunpack.c.l.b16 %v2414
  %v2487 = vunpack.c.h.b16 %v2414
  %v2488 = vunpack.c.l.b16 %v2415
  %v2489 = vunpack.c.h.b16 %v2415
  %v2490 = vunpack.c.l.b16 %v2416
  %v2491 = vunpack.c.h.b16 %v2416
  %v2492 = vunpack.c.l.b16 %v2417
  %v2493 = vunpack.c.h.b16 %v2417
  %v2494 = vunpack.c.l.b16 %v2418
  %v2495 = vunpack.c.h.b16 %v2418
  %v2496 = vunpack.c.l.b16 %v2419
  %v2497 = vunpack.c.h.b16 %v2419
  %v2498 = vunpack.c.l.b16 %v2420
  %v2499 = vunpack.c.h.b16 %v2420
  %v2500 = vunpack.c.l.b16 %v2421
  %v2501 = vunpack.c.h.b16 %v2421
  %v2502 = vunpack.c.l.b16 %v2422
  %v2503 = vunpack.c.h.b16 %v2422
  %v2504 = vunpack.c.l.b16 %v2423
  %v2505 = vunpack.c.h.b16 %v2423
  %v2506 = vunpack.c.l.b16 %v2424
  %v2507 = vunpack.c.h.b16 %v2424
  %v2508 = vunpack.c.l.b16 %v2425
  %v2509 = vunpack.c.h.b16 %v2425
  %v2510 = vunpack.c.l.b16 %v2426
  %v2511 = vunpack.c.h.b16 %v2426
  %v2512 = vunpack.c.l.b16 %v2427
  %v2513 = vunpack.c.h.b16 %v2427
  %v2514 = vunpack.c.l.b16 %v2428
  %v2515 = vunpack.c.h.b16 %v2428
  %v2516 = vunpack.c.l.b16 %v2429
  %v2517 = vunpack.c.h.b16 %v2429
  %v2518 = vunpack.c.l.b16 %v2430
  %v2519 = vunpack.c.h.b16 %v2430
  %v2520 = vunpack.c.l.b16 %v2431
  %v2521 = vunpack.c.h.b16 %v2431
  %v2522 = vunpack.c.l.b16 %v2432
  %v2523 = vunpack.c.h.b16 %v2432
  %v2524 = vunpack.c.l.b16 %v2433
  %v2525 = vunpack.c.h.b16 %v2433
  %v2526 = vunpack.c.l.b16 %v2434
  %v2527 = vunpack.c.h.b16 %v2434
  %v2528 = vunpack.c.l.b16 %v2435
  %v2529 = vunpack.c.h.b16 %v2435
  %v2530 = vunpack.c.l.b16 %v2436
  %v2531 = vunpack.c.h.b16 %v2436
  %v2532 = vunpack.c.l.b16 %v2437
  %v2533 = vunpack.c.h.b16 %v2437
  %v2534 = vpack.c.b16 %v2474, %v2470
  %v2535 = vpack.c.b16 %v2475, %v2471
  %v2536 = vpack.c.b16 %v2476, %v2472
  %v2537 = vpack.c.b16 %v2477, %v2473
  %v2538 = vpack.c.b16 %v2482, %v2478
  %v2539 = vpack.c.b16 %v2483, %v2479
  %v2540 = vpack.c.b16 %v2484, %v2480
  %v2541 = vpack.c.b16 %v2485, %v2481
  %v2542 = vpack.c.b16 %v2490, %v2486
  %v2543 = vpack.c.b16 %v2491, %v2487
  %v2544 = vpack.c.b16 %v2492, %v2488
  %v2545 = vpack.c.b16 %v2493, %v2489
  %v2546 = vpack.c.b16 %v2498, %v2494
  %v2547 = vpack.c.b16 %v2499, %v2495
  %v2548 = vpack.c.b16 %v2500, %v2496
  %v2549 = vpack.c.b16 %v2501, %v2497
  %v2550 = vpack.c.b16 %v2506, %v2502
  %v2551 = vpack.c.b16 %v2507, %v2503
  %v2552 = vpack.c.b16 %v2508, %v2504
  %v2553 = vpack.c.b16 %v2509, %v2505
  %v2554 = vpack.c.b16 %v2514, %v2510
  %v2555 = vpack.c.b16 %v2515, %v2511
  %v2556 = vpack.c.b16 %v2516, %v2512
  %v2557 = vpack.c.b16 %v2517, %v2513
  %v2558 = vpack.c.b16 %v2522, %v2518
  %v2559 = vpack.c.b16 %v2523, %v2519
  %v2560 = vpack.c.b16 %v2524, %v2520
  %v2561 = vpack.c.b16 %v2525, %v2521
  %v2562 = vpack.c.b16 %v2530, %v2526
  %v2563 = vpack.c.b16 %v2531, %v2527
  %v2564 = vpack.c.b16 %v2532, %v2528
  %v2565 = vpack.c.b16 %v2533, %v2529
  %2598 = vmatpush.bf16.msra.mxu0 %v2562
  %2599 = vmatpush.bf16.msra.mxu0 %v2558
  %2600 = vmatpush.bf16.msra.mxu0 %v2554
  %2601 = vmatpush.bf16.msra.mxu0 %v2550
  %2602 = vmatpush.bf16.msra.mxu0 %v2546
  %2603 = vmatpush.bf16.msra.mxu0 %v2542
  %2604 = vmatpush.bf16.msra.mxu0 %v2538
  %2605 = vmatpush.bf16.msra.mxu0 %v2534
  %2606 = vmatmul.bf16.gmra.mxu0 %v2405
  %v2607 = vpop.f32.mrf.mxu0
  %v2608 = vadd.f32 0.0, %v2607
  %v2609 = vpop.f32.mrf.mxu0
  %2610 = vdwg.mxu0
  %2611 = vmatpush.bf16.msra.mxu0 %v2563
  %2612 = vmatpush.bf16.msra.mxu0 %v2559
  %2613 = vmatpush.bf16.msra.mxu0 %v2555
  %2614 = vmatpush.bf16.msra.mxu0 %v2551
  %2615 = vmatpush.bf16.msra.mxu0 %v2547
  %2616 = vmatpush.bf16.msra.mxu0 %v2543
  %2617 = vmatpush.bf16.msra.mxu0 %v2539
  %2618 = vmatpush.bf16.msra.mxu0 %v2535
  %2619 = vmatmul.bf16.gmra.mxu0 %v2405
  %v2620 = vpop.f32.mrf.mxu0
  %v2621 = vadd.f32 0.0, %v2620
  %v2622 = vpop.f32.mrf.mxu0
  %2623 = vdwg.mxu0
  %2624 = vmatpush.bf16.msra.mxu0 %v2564
  %2625 = vmatpush.bf16.msra.mxu0 %v2560
  %2626 = vmatpush.bf16.msra.mxu0 %v2556
  %2627 = vmatpush.bf16.msra.mxu0 %v2552
  %2628 = vmatpush.bf16.msra.mxu0 %v2548
  %2629 = vmatpush.bf16.msra.mxu0 %v2544
  %2630 = vmatpush.bf16.msra.mxu0 %v2540
  %2631 = vmatpush.bf16.msra.mxu0 %v2536
  %2632 = vmatmul.bf16.gmra.mxu0 %v2405
  %v2633 = vpop.f32.mrf.mxu0
  %v2634 = vadd.f32 0.0, %v2633
  %v2635 = vpop.f32.mrf.mxu0
  %2636 = vdwg.mxu0
  %2637 = vmatpush.bf16.msra.mxu0 %v2565
  %2638 = vmatpush.bf16.msra.mxu0 %v2561
  %2639 = vmatpush.bf16.msra.mxu0 %v2557
  %2640 = vmatpush.bf16.msra.mxu0 %v2553
  %2641 = vmatpush.bf16.msra.mxu0 %v2549
  %2642 = vmatpush.bf16.msra.mxu0 %v2545
  %2643 = vmatpush.bf16.msra.mxu0 %v2541
  %2644 = vmatpush.bf16.msra.mxu0 %v2537
  %2645 = vmatmul.bf16.gmra.mxu0 %v2405
  %v2646 = vpop.f32.mrf.mxu0
  %v2647 = vadd.f32 0.0, %v2646
  %v2648 = vpop.f32.mrf.mxu0
  %2649 = vdwg.mxu0
  %v2650 = vadd.f32 %v2400, %v2608
  %v2651 = vadd.f32 %v2401, %v2621
  %v2652 = vadd.f32 %v2402, %v2634
  %v2653 = vadd.f32 %v2403, %v2647
  %v2654 = vxor.u32 %v2650, 2147483648
  %v2655 = vxor.u32 %v2651, 2147483648
  %v2656 = vmul.f32 %v2654, 1.442695
  %v2657 = vpow.pop %v2656
  %v2658 = vmul.f32 %v2655, 1.442695
  %v2659 = vpow.pop %v2658
  %v2660 = vadd.f32 %v2657, 1.0
  %v2661 = vadd.f32 %v2659, 1.0
  %v2662 = vrcp.pop %v2660
  %v2663 = vmul.f32 %v2660, %v2662
  %v2664 = vsub.f32 1.0, %v2663
  %v2665 = vmul.f32 %v2662, %v2664
  %v2666 = vadd.f32 %v2662, %v2665
  %vm2667 = vweird.f32 %v2660
  %vm2668 = vweird.f32 %v2662
  %vm2669 = vmor %vm2667, %vm2668
  %v2670 = vsel %vm2669, %v2662, %v2666
  %v2671 = vand.u32 2147483647, %v2660
  %vm2672 = vcmp.eq.f32.partialorder %v2671, 8.507059e+37
  %v2673 = vand.u32 %v2660, 2147483648
  %v2674 = vor.u32 1.1754944e-38, %v2673
  %v2675 = vsel %vm2672, %v2674, %v2670
  %v2676 = vmul.f32 1.0, %v2675
  %v2677 = vrcp.pop %v2661
  %v2678 = vmul.f32 %v2661, %v2677
  %v2679 = vsub.f32 1.0, %v2678
  %v2680 = vmul.f32 %v2677, %v2679
  %v2681 = vadd.f32 %v2677, %v2680
  %vm2682 = vweird.f32 %v2661
  %vm2683 = vweird.f32 %v2677
  %vm2684 = vmor %vm2682, %vm2683
  %v2685 = vsel %vm2684, %v2677, %v2681
  %v2686 = vand.u32 2147483647, %v2661
  %vm2687 = vcmp.eq.f32.partialorder %v2686, 8.507059e+37
  %v2688 = vand.u32 %v2661, 2147483648
  %v2689 = vor.u32 1.1754944e-38, %v2688
  %v2690 = vsel %vm2687, %v2689, %v2685
  %v2691 = vmul.f32 1.0, %v2690
  %v2692 = vtanh.pop %v2652
  %v2693 = vxor.u32 %v2653, 2147483648
  %v2694 = vmul.f32 %v2693, 1.442695
  %v2695 = vpow.pop %v2694
  %v2696 = vadd.f32 %v2695, 1.0
  %v2697 = vrcp.pop %v2696
  %v2698 = vmul.f32 %v2696, %v2697
  %v2699 = vsub.f32 1.0, %v2698
  %v2700 = vmul.f32 %v2697, %v2699
  %v2701 = vadd.f32 %v2697, %v2700
  %vm2702 = vweird.f32 %v2696
  %vm2703 = vweird.f32 %v2697
  %vm2704 = vmor %vm2702, %vm2703
  %v2705 = vsel %vm2704, %v2697, %v2701
  %v2706 = vand.u32 2147483647, %v2696
  %vm2707 = vcmp.eq.f32.partialorder %v2706, 8.507059e+37
  %v2708 = vand.u32 %v2696, 2147483648
  %v2709 = vor.u32 1.1754944e-38, %v2708
  %v2710 = vsel %vm2707, %v2709, %v2705
  %v2711 = vmul.f32 1.0, %v2710
  %v2712 = vld [vmem:[#allocation3] sm:$0xff]
  %v2713 = vmul.f32 %v2691, %v2712
  %v2714 = vmul.f32 %v2676, %v2692
  %v2715 = vadd.f32 %v2713, %v2714
  %v2716 = vtanh.pop %v2715
  %v2717 = vmul.f32 %v2711, %v2716
  %2718 = vst [vmem:[#allocation3] sm:$0xff] %v2715
  %2719 = vst [vmem:[#allocation2] sm:$0xff] %v2717
  %v2721 = vrot.slane %v2717, 1
  %v2722 = vrot.slane %v2717, 2
  %v2723 = vrot.slane %v2717, 3
  %v2724 = vrot.slane %v2717, 4
  %v2725 = vrot.slane %v2717, 5
  %v2726 = vrot.slane %v2717, 6
  %v2727 = vrot.slane %v2717, 7
  %v2735 = vpack.c.bf16 %v2717, %v2717
  %v2736 = vpack.c.bf16 %v2721, %v2721
  %v2737 = vpack.c.bf16 %v2722, %v2722
  %v2738 = vpack.c.bf16 %v2723, %v2723
  %v2739 = vpack.c.bf16 %v2724, %v2724
  %v2740 = vpack.c.bf16 %v2725, %v2725
  %v2741 = vpack.c.bf16 %v2726, %v2726
  %v2742 = vpack.c.bf16 %v2727, %v2727
  %v2751 = vrot.slane %v2735, 5
  %v2752 = vrot.slane %v2736, 5
  %v2753 = vrot.slane %v2737, 5
  %v2754 = vrot.slane %v2738, 5
  %v2755 = vrot.slane %v2739, 5
  %v2756 = vrot.slane %v2740, 5
  %v2757 = vrot.slane %v2741, 5
  %v2758 = vrot.slane %v2742, 5
  %vm2767 = vcmask 1043459
  %vm2768 = vsmask.f32 3328
  %vm2769 = vmand %vm2767, %vm2768
  %v2770 = vld [vmem:[%s2] sm:$0x8]
  %v2771 = vsel %vm2769, %v2751, %v2770
  %2772 = vst [vmem:[%s2] sm:$0x8] %v2771
  %v2773 = vld [vmem:[%s2 + $0x8] sm:$0x8]
  %v2774 = vsel %vm2769, %v2752, %v2773
  %2775 = vst [vmem:[%s2 + $0x8] sm:$0x8] %v2774
  %v2776 = vld [vmem:[%s2 + $0x10] sm:$0x8]
  %v2777 = vsel %vm2769, %v2753, %v2776
  %2778 = vst [vmem:[%s2 + $0x10] sm:$0x8] %v2777
  %v2779 = vld [vmem:[%s2 + $0x18] sm:$0x8]
  %v2780 = vsel %vm2769, %v2754, %v2779
  %2781 = vst [vmem:[%s2 + $0x18] sm:$0x8] %v2780
  %v2782 = vld [vmem:[%s2 + $0x20] sm:$0x8]
  %v2783 = vsel %vm2769, %v2755, %v2782
  %2784 = vst [vmem:[%s2 + $0x20] sm:$0x8] %v2783
  %v2785 = vld [vmem:[%s2 + $0x28] sm:$0x8]
  %v2786 = vsel %vm2769, %v2756, %v2785
  %2787 = vst [vmem:[%s2 + $0x28] sm:$0x8] %v2786
  %v2788 = vld [vmem:[%s2 + $0x30] sm:$0x8]
  %v2789 = vsel %vm2769, %v2757, %v2788
  %2790 = vst [vmem:[%s2 + $0x30] sm:$0x8] %v2789
  %v2791 = vld [vmem:[%s2 + $0x38] sm:$0x8]
  %v2792 = vsel %vm2769, %v2758, %v2791
  %2793 = vst [vmem:[%s2 + $0x38] sm:$0x8] %v2792
  %s2794 = scalar_lea.vmem %s0, 224
  %v2795 = vld [vmem:[%s2794] sm:$0xff]
  %v2796 = vld [vmem:[%s2794 + $0x8] sm:$0xff]
  %v2797 = vld [vmem:[%s2794 + $0x10] sm:$0xff]
  %v2798 = vld [vmem:[%s2794 + $0x18] sm:$0xff]
  %v2799 = vld [vmem:[#allocation2] sm:$0xff]
  %v2800 = vpack.c.bf16 %v2799, %v2799
  %v2801 = vld [vmem:[%s1] sm:$0xff]
  %v2802 = vld [vmem:[%s1 + $0x8] sm:$0xff]
  %v2803 = vld [vmem:[%s1 + $0x10] sm:$0xff]
  %v2804 = vld [vmem:[%s1 + $0x18] sm:$0xff]
  %v2805 = vld [vmem:[%s1 + $0x20] sm:$0xff]
  %v2806 = vld [vmem:[%s1 + $0x28] sm:$0xff]
  %v2807 = vld [vmem:[%s1 + $0x30] sm:$0xff]
  %v2808 = vld [vmem:[%s1 + $0x38] sm:$0xff]
  %v2809 = vld [vmem:[%s1 + $0x40] sm:$0xff]
  %v2810 = vld [vmem:[%s1 + $0x48] sm:$0xff]
  %v2811 = vld [vmem:[%s1 + $0x50] sm:$0xff]
  %v2812 = vld [vmem:[%s1 + $0x58] sm:$0xff]
  %v2813 = vld [vmem:[%s1 + $0x60] sm:$0xff]
  %v2814 = vld [vmem:[%s1 + $0x68] sm:$0xff]
  %v2815 = vld [vmem:[%s1 + $0x70] sm:$0xff]
  %v2816 = vld [vmem:[%s1 + $0x78] sm:$0xff]
  %v2817 = vld [vmem:[%s1 + $0x80] sm:$0xff]
  %v2818 = vld [vmem:[%s1 + $0x88] sm:$0xff]
  %v2819 = vld [vmem:[%s1 + $0x90] sm:$0xff]
  %v2820 = vld [vmem:[%s1 + $0x98] sm:$0xff]
  %v2821 = vld [vmem:[%s1 + $0xa0] sm:$0xff]
  %v2822 = vld [vmem:[%s1 + $0xa8] sm:$0xff]
  %v2823 = vld [vmem:[%s1 + $0xb0] sm:$0xff]
  %v2824 = vld [vmem:[%s1 + $0xb8] sm:$0xff]
  %v2825 = vld [vmem:[%s1 + $0xc0] sm:$0xff]
  %v2826 = vld [vmem:[%s1 + $0xc8] sm:$0xff]
  %v2827 = vld [vmem:[%s1 + $0xd0] sm:$0xff]
  %v2828 = vld [vmem:[%s1 + $0xd8] sm:$0xff]
  %v2829 = vld [vmem:[%s1 + $0xe0] sm:$0xff]
  %v2830 = vld [vmem:[%s1 + $0xe8] sm:$0xff]
  %v2831 = vld [vmem:[%s1 + $0xf0] sm:$0xff]
  %v2832 = vld [vmem:[%s1 + $0xf8] sm:$0xff]
  %v2865 = vunpack.c.l.b16 %v2801
  %v2866 = vunpack.c.h.b16 %v2801
  %v2867 = vunpack.c.l.b16 %v2802
  %v2868 = vunpack.c.h.b16 %v2802
  %v2869 = vunpack.c.l.b16 %v2803
  %v2870 = vunpack.c.h.b16 %v2803
  %v2871 = vunpack.c.l.b16 %v2804
  %v2872 = vunpack.c.h.b16 %v2804
  %v2873 = vunpack.c.l.b16 %v2805
  %v2874 = vunpack.c.h.b16 %v2805
  %v2875 = vunpack.c.l.b16 %v2806
  %v2876 = vunpack.c.h.b16 %v2806
  %v2877 = vunpack.c.l.b16 %v2807
  %v2878 = vunpack.c.h.b16 %v2807
  %v2879 = vunpack.c.l.b16 %v2808
  %v2880 = vunpack.c.h.b16 %v2808
  %v2881 = vunpack.c.l.b16 %v2809
  %v2882 = vunpack.c.h.b16 %v2809
  %v2883 = vunpack.c.l.b16 %v2810
  %v2884 = vunpack.c.h.b16 %v2810
  %v2885 = vunpack.c.l.b16 %v2811
  %v2886 = vunpack.c.h.b16 %v2811
  %v2887 = vunpack.c.l.b16 %v2812
  %v2888 = vunpack.c.h.b16 %v2812
  %v2889 = vunpack.c.l.b16 %v2813
  %v2890 = vunpack.c.h.b16 %v2813
  %v2891 = vunpack.c.l.b16 %v2814
  %v2892 = vunpack.c.h.b16 %v2814
  %v2893 = vunpack.c.l.b16 %v2815
  %v2894 = vunpack.c.h.b16 %v2815
  %v2895 = vunpack.c.l.b16 %v2816
  %v2896 = vunpack.c.h.b16 %v2816
  %v2897 = vunpack.c.l.b16 %v2817
  %v2898 = vunpack.c.h.b16 %v2817
  %v2899 = vunpack.c.l.b16 %v2818
  %v2900 = vunpack.c.h.b16 %v2818
  %v2901 = vunpack.c.l.b16 %v2819
  %v2902 = vunpack.c.h.b16 %v2819
  %v2903 = vunpack.c.l.b16 %v2820
  %v2904 = vunpack.c.h.b16 %v2820
  %v2905 = vunpack.c.l.b16 %v2821
  %v2906 = vunpack.c.h.b16 %v2821
  %v2907 = vunpack.c.l.b16 %v2822
  %v2908 = vunpack.c.h.b16 %v2822
  %v2909 = vunpack.c.l.b16 %v2823
  %v2910 = vunpack.c.h.b16 %v2823
  %v2911 = vunpack.c.l.b16 %v2824
  %v2912 = vunpack.c.h.b16 %v2824
  %v2913 = vunpack.c.l.b16 %v2825
  %v2914 = vunpack.c.h.b16 %v2825
  %v2915 = vunpack.c.l.b16 %v2826
  %v2916 = vunpack.c.h.b16 %v2826
  %v2917 = vunpack.c.l.b16 %v2827
  %v2918 = vunpack.c.h.b16 %v2827
  %v2919 = vunpack.c.l.b16 %v2828
  %v2920 = vunpack.c.h.b16 %v2828
  %v2921 = vunpack.c.l.b16 %v2829
  %v2922 = vunpack.c.h.b16 %v2829
  %v2923 = vunpack.c.l.b16 %v2830
  %v2924 = vunpack.c.h.b16 %v2830
  %v2925 = vunpack.c.l.b16 %v2831
  %v2926 = vunpack.c.h.b16 %v2831
  %v2927 = vunpack.c.l.b16 %v2832
  %v2928 = vunpack.c.h.b16 %v2832
  %v2929 = vpack.c.b16 %v2869, %v2865
  %v2930 = vpack.c.b16 %v2870, %v2866
  %v2931 = vpack.c.b16 %v2871, %v2867
  %v2932 = vpack.c.b16 %v2872, %v2868
  %v2933 = vpack.c.b16 %v2877, %v2873
  %v2934 = vpack.c.b16 %v2878, %v2874
  %v2935 = vpack.c.b16 %v2879, %v2875
  %v2936 = vpack.c.b16 %v2880, %v2876
  %v2937 = vpack.c.b16 %v2885, %v2881
  %v2938 = vpack.c.b16 %v2886, %v2882
  %v2939 = vpack.c.b16 %v2887, %v2883
  %v2940 = vpack.c.b16 %v2888, %v2884
  %v2941 = vpack.c.b16 %v2893, %v2889
  %v2942 = vpack.c.b16 %v2894, %v2890
  %v2943 = vpack.c.b16 %v2895, %v2891
  %v2944 = vpack.c.b16 %v2896, %v2892
  %v2945 = vpack.c.b16 %v2901, %v2897
  %v2946 = vpack.c.b16 %v2902, %v2898
  %v2947 = vpack.c.b16 %v2903, %v2899
  %v2948 = vpack.c.b16 %v2904, %v2900
  %v2949 = vpack.c.b16 %v2909, %v2905
  %v2950 = vpack.c.b16 %v2910, %v2906
  %v2951 = vpack.c.b16 %v2911, %v2907
  %v2952 = vpack.c.b16 %v2912, %v2908
  %v2953 = vpack.c.b16 %v2917, %v2913
  %v2954 = vpack.c.b16 %v2918, %v2914
  %v2955 = vpack.c.b16 %v2919, %v2915
  %v2956 = vpack.c.b16 %v2920, %v2916
  %v2957 = vpack.c.b16 %v2925, %v2921
  %v2958 = vpack.c.b16 %v2926, %v2922
  %v2959 = vpack.c.b16 %v2927, %v2923
  %v2960 = vpack.c.b16 %v2928, %v2924
  %2993 = vmatpush.bf16.msra.mxu0 %v2957
  %2994 = vmatpush.bf16.msra.mxu0 %v2953
  %2995 = vmatpush.bf16.msra.mxu0 %v2949
  %2996 = vmatpush.bf16.msra.mxu0 %v2945
  %2997 = vmatpush.bf16.msra.mxu0 %v2941
  %2998 = vmatpush.bf16.msra.mxu0 %v2937
  %2999 = vmatpush.bf16.msra.mxu0 %v2933
  %3000 = vmatpush.bf16.msra.mxu0 %v2929
  %3001 = vmatmul.bf16.gmra.mxu0 %v2800
  %v3002 = vpop.f32.mrf.mxu0
  %v3003 = vadd.f32 0.0, %v3002
  %v3004 = vpop.f32.mrf.mxu0
  %3005 = vdwg.mxu0
  %3006 = vmatpush.bf16.msra.mxu0 %v2958
  %3007 = vmatpush.bf16.msra.mxu0 %v2954
  %3008 = vmatpush.bf16.msra.mxu0 %v2950
  %3009 = vmatpush.bf16.msra.mxu0 %v2946
  %3010 = vmatpush.bf16.msra.mxu0 %v2942
  %3011 = vmatpush.bf16.msra.mxu0 %v2938
  %3012 = vmatpush.bf16.msra.mxu0 %v2934
  %3013 = vmatpush.bf16.msra.mxu0 %v2930
  %3014 = vmatmul.bf16.gmra.mxu0 %v2800
  %v3015 = vpop.f32.mrf.mxu0
  %v3016 = vadd.f32 0.0, %v3015
  %v3017 = vpop.f32.mrf.mxu0
  %3018 = vdwg.mxu0
  %3019 = vmatpush.bf16.msra.mxu0 %v2959
  %3020 = vmatpush.bf16.msra.mxu0 %v2955
  %3021 = vmatpush.bf16.msra.mxu0 %v2951
  %3022 = vmatpush.bf16.msra.mxu0 %v2947
  %3023 = vmatpush.bf16.msra.mxu0 %v2943
  %3024 = vmatpush.bf16.msra.mxu0 %v2939
  %3025 = vmatpush.bf16.msra.mxu0 %v2935
  %3026 = vmatpush.bf16.msra.mxu0 %v2931
  %3027 = vmatmul.bf16.gmra.mxu0 %v2800
  %v3028 = vpop.f32.mrf.mxu0
  %v3029 = vadd.f32 0.0, %v3028
  %v3030 = vpop.f32.mrf.mxu0
  %3031 = vdwg.mxu0
  %3032 = vmatpush.bf16.msra.mxu0 %v2960
  %3033 = vmatpush.bf16.msra.mxu0 %v2956
  %3034 = vmatpush.bf16.msra.mxu0 %v2952
  %3035 = vmatpush.bf16.msra.mxu0 %v2948
  %3036 = vmatpush.bf16.msra.mxu0 %v2944
  %3037 = vmatpush.bf16.msra.mxu0 %v2940
  %3038 = vmatpush.bf16.msra.mxu0 %v2936
  %3039 = vmatpush.bf16.msra.mxu0 %v2932
  %3040 = vmatmul.bf16.gmra.mxu0 %v2800
  %v3041 = vpop.f32.mrf.mxu0
  %v3042 = vadd.f32 0.0, %v3041
  %v3043 = vpop.f32.mrf.mxu0
  %3044 = vdwg.mxu0
  %v3045 = vadd.f32 %v2795, %v3003
  %v3046 = vadd.f32 %v2796, %v3016
  %v3047 = vadd.f32 %v2797, %v3029
  %v3048 = vadd.f32 %v2798, %v3042
  %v3049 = vxor.u32 %v3045, 2147483648
  %v3050 = vxor.u32 %v3046, 2147483648
  %v3051 = vmul.f32 %v3049, 1.442695
  %v3052 = vpow.pop %v3051
  %v3053 = vmul.f32 %v3050, 1.442695
  %v3054 = vpow.pop %v3053
  %v3055 = vadd.f32 %v3052, 1.0
  %v3056 = vadd.f32 %v3054, 1.0
  %v3057 = vrcp.pop %v3055
  %v3058 = vmul.f32 %v3055, %v3057
  %v3059 = vsub.f32 1.0, %v3058
  %v3060 = vmul.f32 %v3057, %v3059
  %v3061 = vadd.f32 %v3057, %v3060
  %vm3062 = vweird.f32 %v3055
  %vm3063 = vweird.f32 %v3057
  %vm3064 = vmor %vm3062, %vm3063
  %v3065 = vsel %vm3064, %v3057, %v3061
  %v3066 = vand.u32 2147483647, %v3055
  %vm3067 = vcmp.eq.f32.partialorder %v3066, 8.507059e+37
  %v3068 = vand.u32 %v3055, 2147483648
  %v3069 = vor.u32 1.1754944e-38, %v3068
  %v3070 = vsel %vm3067, %v3069, %v3065
  %v3071 = vmul.f32 1.0, %v3070
  %v3072 = vrcp.pop %v3056
  %v3073 = vmul.f32 %v3056, %v3072
  %v3074 = vsub.f32 1.0, %v3073
  %v3075 = vmul.f32 %v3072, %v3074
  %v3076 = vadd.f32 %v3072, %v3075
  %vm3077 = vweird.f32 %v3056
  %vm3078 = vweird.f32 %v3072
  %vm3079 = vmor %vm3077, %vm3078
  %v3080 = vsel %vm3079, %v3072, %v3076
  %v3081 = vand.u32 2147483647, %v3056
  %vm3082 = vcmp.eq.f32.partialorder %v3081, 8.507059e+37
  %v3083 = vand.u32 %v3056, 2147483648
  %v3084 = vor.u32 1.1754944e-38, %v3083
  %v3085 = vsel %vm3082, %v3084, %v3080
  %v3086 = vmul.f32 1.0, %v3085
  %v3087 = vtanh.pop %v3047
  %v3088 = vxor.u32 %v3048, 2147483648
  %v3089 = vmul.f32 %v3088, 1.442695
  %v3090 = vpow.pop %v3089
  %v3091 = vadd.f32 %v3090, 1.0
  %v3092 = vrcp.pop %v3091
  %v3093 = vmul.f32 %v3091, %v3092
  %v3094 = vsub.f32 1.0, %v3093
  %v3095 = vmul.f32 %v3092, %v3094
  %v3096 = vadd.f32 %v3092, %v3095
  %vm3097 = vweird.f32 %v3091
  %vm3098 = vweird.f32 %v3092
  %vm3099 = vmor %vm3097, %vm3098
  %v3100 = vsel %vm3099, %v3092, %v3096
  %v3101 = vand.u32 2147483647, %v3091
  %vm3102 = vcmp.eq.f32.partialorder %v3101, 8.507059e+37
  %v3103 = vand.u32 %v3091, 2147483648
  %v3104 = vor.u32 1.1754944e-38, %v3103
  %v3105 = vsel %vm3102, %v3104, %v3100
  %v3106 = vmul.f32 1.0, %v3105
  %v3107 = vld [vmem:[#allocation3] sm:$0xff]
  %v3108 = vmul.f32 %v3086, %v3107
  %v3109 = vmul.f32 %v3071, %v3087
  %v3110 = vadd.f32 %v3108, %v3109
  %v3111 = vtanh.pop %v3110
  %v3112 = vmul.f32 %v3106, %v3111
  %3113 = vst [vmem:[#allocation3] sm:$0xff] %v3110
  %3114 = vst [vmem:[#allocation2] sm:$0xff] %v3112
  %v3116 = vrot.slane %v3112, 1
  %v3117 = vrot.slane %v3112, 2
  %v3118 = vrot.slane %v3112, 3
  %v3119 = vrot.slane %v3112, 4
  %v3120 = vrot.slane %v3112, 5
  %v3121 = vrot.slane %v3112, 6
  %v3122 = vrot.slane %v3112, 7
  %v3130 = vpack.c.bf16 %v3112, %v3112
  %v3131 = vpack.c.bf16 %v3116, %v3116
  %v3132 = vpack.c.bf16 %v3117, %v3117
  %v3133 = vpack.c.bf16 %v3118, %v3118
  %v3134 = vpack.c.bf16 %v3119, %v3119
  %v3135 = vpack.c.bf16 %v3120, %v3120
  %v3136 = vpack.c.bf16 %v3121, %v3121
  %v3137 = vpack.c.bf16 %v3122, %v3122
  %v3139 = vshll.u32 %v3130, 16
  %v3141 = vrot.slane %v3139, 5
  %v3143 = vshll.u32 %v3131, 16
  %v3145 = vrot.slane %v3143, 5
  %v3147 = vshll.u32 %v3132, 16
  %v3149 = vrot.slane %v3147, 5
  %v3151 = vshll.u32 %v3133, 16
  %v3153 = vrot.slane %v3151, 5
  %v3155 = vshll.u32 %v3134, 16
  %v3157 = vrot.slane %v3155, 5
  %v3159 = vshll.u32 %v3135, 16
  %v3161 = vrot.slane %v3159, 5
  %v3163 = vshll.u32 %v3136, 16
  %v3165 = vrot.slane %v3163, 5
  %v3167 = vshll.u32 %v3137, 16
  %v3169 = vrot.slane %v3167, 5
  %vm3178 = vsmask.f32 7950
  %vm3179 = vmand %vm2767, %vm3178
  %v3180 = vld [vmem:[%s2] sm:$0x8]
  %v3181 = vsel %vm3179, %v3141, %v3180
  %3182 = vst [vmem:[%s2] sm:$0x8] %v3181
  %v3183 = vld [vmem:[%s2 + $0x8] sm:$0x8]
  %v3184 = vsel %vm3179, %v3145, %v3183
  %3185 = vst [vmem:[%s2 + $0x8] sm:$0x8] %v3184
  %v3186 = vld [vmem:[%s2 + $0x10] sm:$0x8]
  %v3187 = vsel %vm3179, %v3149, %v3186
  %3188 = vst [vmem:[%s2 + $0x10] sm:$0x8] %v3187
  %v3189 = vld [vmem:[%s2 + $0x18] sm:$0x8]
  %v3190 = vsel %vm3179, %v3153, %v3189
  %3191 = vst [vmem:[%s2 + $0x18] sm:$0x8] %v3190
  %v3192 = vld [vmem:[%s2 + $0x20] sm:$0x8]
  %v3193 = vsel %vm3179, %v3157, %v3192
  %3194 = vst [vmem:[%s2 + $0x20] sm:$0x8] %v3193
  %v3195 = vld [vmem:[%s2 + $0x28] sm:$0x8]
  %v3196 = vsel %vm3179, %v3161, %v3195
  %3197 = vst [vmem:[%s2 + $0x28] sm:$0x8] %v3196
  %v3198 = vld [vmem:[%s2 + $0x30] sm:$0x8]
  %v3199 = vsel %vm3179, %v3165, %v3198
  %3200 = vst [vmem:[%s2 + $0x30] sm:$0x8] %v3199
  %v3201 = vld [vmem:[%s2 + $0x38] sm:$0x8]
  %v3202 = vsel %vm3179, %v3169, %v3201
  %3203 = vst [vmem:[%s2 + $0x38] sm:$0x8] %v3202
  %s3204 = scalar_lea.vmem %s0, 256
  %v3205 = vld [vmem:[%s3204] sm:$0xff]
  %v3206 = vld [vmem:[%s3204 + $0x8] sm:$0xff]
  %v3207 = vld [vmem:[%s3204 + $0x10] sm:$0xff]
  %v3208 = vld [vmem:[%s3204 + $0x18] sm:$0xff]
  %v3209 = vld [vmem:[#allocation2] sm:$0xff]
  %v3210 = vpack.c.bf16 %v3209, %v3209
  %v3211 = vld [vmem:[%s1] sm:$0xff]
  %v3212 = vld [vmem:[%s1 + $0x8] sm:$0xff]
  %v3213 = vld [vmem:[%s1 + $0x10] sm:$0xff]
  %v3214 = vld [vmem:[%s1 + $0x18] sm:$0xff]
  %v3215 = vld [vmem:[%s1 + $0x20] sm:$0xff]
  %v3216 = vld [vmem:[%s1 + $0x28] sm:$0xff]
  %v3217 = vld [vmem:[%s1 + $0x30] sm:$0xff]
  %v3218 = vld [vmem:[%s1 + $0x38] sm:$0xff]
  %v3219 = vld [vmem:[%s1 + $0x40] sm:$0xff]
  %v3220 = vld [vmem:[%s1 + $0x48] sm:$0xff]
  %v3221 = vld [vmem:[%s1 + $0x50] sm:$0xff]
  %v3222 = vld [vmem:[%s1 + $0x58] sm:$0xff]
  %v3223 = vld [vmem:[%s1 + $0x60] sm:$0xff]
  %v3224 = vld [vmem:[%s1 + $0x68] sm:$0xff]
  %v3225 = vld [vmem:[%s1 + $0x70] sm:$0xff]
  %v3226 = vld [vmem:[%s1 + $0x78] sm:$0xff]
  %v3227 = vld [vmem:[%s1 + $0x80] sm:$0xff]
  %v3228 = vld [vmem:[%s1 + $0x88] sm:$0xff]
  %v3229 = vld [vmem:[%s1 + $0x90] sm:$0xff]
  %v3230 = vld [vmem:[%s1 + $0x98] sm:$0xff]
  %v3231 = vld [vmem:[%s1 + $0xa0] sm:$0xff]
  %v3232 = vld [vmem:[%s1 + $0xa8] sm:$0xff]
  %v3233 = vld [vmem:[%s1 + $0xb0] sm:$0xff]
  %v3234 = vld [vmem:[%s1 + $0xb8] sm:$0xff]
  %v3235 = vld [vmem:[%s1 + $0xc0] sm:$0xff]
  %v3236 = vld [vmem:[%s1 + $0xc8] sm:$0xff]
  %v3237 = vld [vmem:[%s1 + $0xd0] sm:$0xff]
  %v3238 = vld [vmem:[%s1 + $0xd8] sm:$0xff]
  %v3239 = vld [vmem:[%s1 + $0xe0] sm:$0xff]
  %v3240 = vld [vmem:[%s1 + $0xe8] sm:$0xff]
  %v3241 = vld [vmem:[%s1 + $0xf0] sm:$0xff]
  %v3242 = vld [vmem:[%s1 + $0xf8] sm:$0xff]
  %v3275 = vunpack.c.l.b16 %v3211
  %v3276 = vunpack.c.h.b16 %v3211
  %v3277 = vunpack.c.l.b16 %v3212
  %v3278 = vunpack.c.h.b16 %v3212
  %v3279 = vunpack.c.l.b16 %v3213
  %v3280 = vunpack.c.h.b16 %v3213
  %v3281 = vunpack.c.l.b16 %v3214
  %v3282 = vunpack.c.h.b16 %v3214
  %v3283 = vunpack.c.l.b16 %v3215
  %v3284 = vunpack.c.h.b16 %v3215
  %v3285 = vunpack.c.l.b16 %v3216
  %v3286 = vunpack.c.h.b16 %v3216
  %v3287 = vunpack.c.l.b16 %v3217
  %v3288 = vunpack.c.h.b16 %v3217
  %v3289 = vunpack.c.l.b16 %v3218
  %v3290 = vunpack.c.h.b16 %v3218
  %v3291 = vunpack.c.l.b16 %v3219
  %v3292 = vunpack.c.h.b16 %v3219
  %v3293 = vunpack.c.l.b16 %v3220
  %v3294 = vunpack.c.h.b16 %v3220
  %v3295 = vunpack.c.l.b16 %v3221
  %v3296 = vunpack.c.h.b16 %v3221
  %v3297 = vunpack.c.l.b16 %v3222
  %v3298 = vunpack.c.h.b16 %v3222
  %v3299 = vunpack.c.l.b16 %v3223
  %v3300 = vunpack.c.h.b16 %v3223
  %v3301 = vunpack.c.l.b16 %v3224
  %v3302 = vunpack.c.h.b16 %v3224
  %v3303 = vunpack.c.l.b16 %v3225
  %v3304 = vunpack.c.h.b16 %v3225
  %v3305 = vunpack.c.l.b16 %v3226
  %v3306 = vunpack.c.h.b16 %v3226
  %v3307 = vunpack.c.l.b16 %v3227
  %v3308 = vunpack.c.h.b16 %v3227
  %v3309 = vunpack.c.l.b16 %v3228
  %v3310 = vunpack.c.h.b16 %v3228
  %v3311 = vunpack.c.l.b16 %v3229
  %v3312 = vunpack.c.h.b16 %v3229
  %v3313 = vunpack.c.l.b16 %v3230
  %v3314 = vunpack.c.h.b16 %v3230
  %v3315 = vunpack.c.l.b16 %v3231
  %v3316 = vunpack.c.h.b16 %v3231
  %v3317 = vunpack.c.l.b16 %v3232
  %v3318 = vunpack.c.h.b16 %v3232
  %v3319 = vunpack.c.l.b16 %v3233
  %v3320 = vunpack.c.h.b16 %v3233
  %v3321 = vunpack.c.l.b16 %v3234
  %v3322 = vunpack.c.h.b16 %v3234
  %v3323 = vunpack.c.l.b16 %v3235
  %v3324 = vunpack.c.h.b16 %v3235
  %v3325 = vunpack.c.l.b16 %v3236
  %v3326 = vunpack.c.h.b16 %v3236
  %v3327 = vunpack.c.l.b16 %v3237
  %v3328 = vunpack.c.h.b16 %v3237
  %v3329 = vunpack.c.l.b16 %v3238
  %v3330 = vunpack.c.h.b16 %v3238
  %v3331 = vunpack.c.l.b16 %v3239
  %v3332 = vunpack.c.h.b16 %v3239
  %v3333 = vunpack.c.l.b16 %v3240
  %v3334 = vunpack.c.h.b16 %v3240
  %v3335 = vunpack.c.l.b16 %v3241
  %v3336 = vunpack.c.h.b16 %v3241
  %v3337 = vunpack.c.l.b16 %v3242
  %v3338 = vunpack.c.h.b16 %v3242
  %v3339 = vpack.c.b16 %v3279, %v3275
  %v3340 = vpack.c.b16 %v3280, %v3276
  %v3341 = vpack.c.b16 %v3281, %v3277
  %v3342 = vpack.c.b16 %v3282, %v3278
  %v3343 = vpack.c.b16 %v3287, %v3283
  %v3344 = vpack.c.b16 %v3288, %v3284
  %v3345 = vpack.c.b16 %v3289, %v3285
  %v3346 = vpack.c.b16 %v3290, %v3286
  %v3347 = vpack.c.b16 %v3295, %v3291
  %v3348 = vpack.c.b16 %v3296, %v3292
  %v3349 = vpack.c.b16 %v3297, %v3293
  %v3350 = vpack.c.b16 %v3298, %v3294
  %v3351 = vpack.c.b16 %v3303, %v3299
  %v3352 = vpack.c.b16 %v3304, %v3300
  %v3353 = vpack.c.b16 %v3305, %v3301
  %v3354 = vpack.c.b16 %v3306, %v3302
  %v3355 = vpack.c.b16 %v3311, %v3307
  %v3356 = vpack.c.b16 %v3312, %v3308
  %v3357 = vpack.c.b16 %v3313, %v3309
  %v3358 = vpack.c.b16 %v3314, %v3310
  %v3359 = vpack.c.b16 %v3319, %v3315
  %v3360 = vpack.c.b16 %v3320, %v3316
  %v3361 = vpack.c.b16 %v3321, %v3317
  %v3362 = vpack.c.b16 %v3322, %v3318
  %v3363 = vpack.c.b16 %v3327, %v3323
  %v3364 = vpack.c.b16 %v3328, %v3324
  %v3365 = vpack.c.b16 %v3329, %v3325
  %v3366 = vpack.c.b16 %v3330, %v3326
  %v3367 = vpack.c.b16 %v3335, %v3331
  %v3368 = vpack.c.b16 %v3336, %v3332
  %v3369 = vpack.c.b16 %v3337, %v3333
  %v3370 = vpack.c.b16 %v3338, %v3334
  %3403 = vmatpush.bf16.msra.mxu0 %v3367
  %3404 = vmatpush.bf16.msra.mxu0 %v3363
  %3405 = vmatpush.bf16.msra.mxu0 %v3359
  %3406 = vmatpush.bf16.msra.mxu0 %v3355
  %3407 = vmatpush.bf16.msra.mxu0 %v3351
  %3408 = vmatpush.bf16.msra.mxu0 %v3347
  %3409 = vmatpush.bf16.msra.mxu0 %v3343
  %3410 = vmatpush.bf16.msra.mxu0 %v3339
  %3411 = vmatmul.bf16.gmra.mxu0 %v3210
  %v3412 = vpop.f32.mrf.mxu0
  %v3413 = vadd.f32 0.0, %v3412
  %v3414 = vpop.f32.mrf.mxu0
  %3415 = vdwg.mxu0
  %3416 = vmatpush.bf16.msra.mxu0 %v3368
  %3417 = vmatpush.bf16.msra.mxu0 %v3364
  %3418 = vmatpush.bf16.msra.mxu0 %v3360
  %3419 = vmatpush.bf16.msra.mxu0 %v3356
  %3420 = vmatpush.bf16.msra.mxu0 %v3352
  %3421 = vmatpush.bf16.msra.mxu0 %v3348
  %3422 = vmatpush.bf16.msra.mxu0 %v3344
  %3423 = vmatpush.bf16.msra.mxu0 %v3340
  %3424 = vmatmul.bf16.gmra.mxu0 %v3210
  %v3425 = vpop.f32.mrf.mxu0
  %v3426 = vadd.f32 0.0, %v3425
  %v3427 = vpop.f32.mrf.mxu0
  %3428 = vdwg.mxu0
  %3429 = vmatpush.bf16.msra.mxu0 %v3369
  %3430 = vmatpush.bf16.msra.mxu0 %v3365
  %3431 = vmatpush.bf16.msra.mxu0 %v3361
  %3432 = vmatpush.bf16.msra.mxu0 %v3357
  %3433 = vmatpush.bf16.msra.mxu0 %v3353
  %3434 = vmatpush.bf16.msra.mxu0 %v3349
  %3435 = vmatpush.bf16.msra.mxu0 %v3345
  %3436 = vmatpush.bf16.msra.mxu0 %v3341
  %3437 = vmatmul.bf16.gmra.mxu0 %v3210
  %v3438 = vpop.f32.mrf.mxu0
  %v3439 = vadd.f32 0.0, %v3438
  %v3440 = vpop.f32.mrf.mxu0
  %3441 = vdwg.mxu0
  %3442 = vmatpush.bf16.msra.mxu0 %v3370
  %3443 = vmatpush.bf16.msra.mxu0 %v3366
  %3444 = vmatpush.bf16.msra.mxu0 %v3362
  %3445 = vmatpush.bf16.msra.mxu0 %v3358
  %3446 = vmatpush.bf16.msra.mxu0 %v3354
  %3447 = vmatpush.bf16.msra.mxu0 %v3350
  %3448 = vmatpush.bf16.msra.mxu0 %v3346
  %3449 = vmatpush.bf16.msra.mxu0 %v3342
  %3450 = vmatmul.bf16.gmra.mxu0 %v3210
  %v3451 = vpop.f32.mrf.mxu0
  %v3452 = vadd.f32 0.0, %v3451
  %v3453 = vpop.f32.mrf.mxu0
  %3454 = vdwg.mxu0
  %v3455 = vadd.f32 %v3205, %v3413
  %v3456 = vadd.f32 %v3206, %v3426
  %v3457 = vadd.f32 %v3207, %v3439
  %v3458 = vadd.f32 %v3208, %v3452
  %v3459 = vxor.u32 %v3455, 2147483648
  %v3460 = vxor.u32 %v3456, 2147483648
  %v3461 = vmul.f32 %v3459, 1.442695
  %v3462 = vpow.pop %v3461
  %v3463 = vmul.f32 %v3460, 1.442695
  %v3464 = vpow.pop %v3463
  %v3465 = vadd.f32 %v3462, 1.0
  %v3466 = vadd.f32 %v3464, 1.0
  %v3467 = vrcp.pop %v3465
  %v3468 = vmul.f32 %v3465, %v3467
  %v3469 = vsub.f32 1.0, %v3468
  %v3470 = vmul.f32 %v3467, %v3469
  %v3471 = vadd.f32 %v3467, %v3470
  %vm3472 = vweird.f32 %v3465
  %vm3473 = vweird.f32 %v3467
  %vm3474 = vmor %vm3472, %vm3473
  %v3475 = vsel %vm3474, %v3467, %v3471
  %v3476 = vand.u32 2147483647, %v3465
  %vm3477 = vcmp.eq.f32.partialorder %v3476, 8.507059e+37
  %v3478 = vand.u32 %v3465, 2147483648
  %v3479 = vor.u32 1.1754944e-38, %v3478
  %v3480 = vsel %vm3477, %v3479, %v3475
  %v3481 = vmul.f32 1.0, %v3480
  %v3482 = vrcp.pop %v3466
  %v3483 = vmul.f32 %v3466, %v3482
  %v3484 = vsub.f32 1.0, %v3483
  %v3485 = vmul.f32 %v3482, %v3484
  %v3486 = vadd.f32 %v3482, %v3485
  %vm3487 = vweird.f32 %v3466
  %vm3488 = vweird.f32 %v3482
  %vm3489 = vmor %vm3487, %vm3488
  %v3490 = vsel %vm3489, %v3482, %v3486
  %v3491 = vand.u32 2147483647, %v3466
  %vm3492 = vcmp.eq.f32.partialorder %v3491, 8.507059e+37
  %v3493 = vand.u32 %v3466, 2147483648
  %v3494 = vor.u32 1.1754944e-38, %v3493
  %v3495 = vsel %vm3492, %v3494, %v3490
  %v3496 = vmul.f32 1.0, %v3495
  %v3497 = vtanh.pop %v3457
  %v3498 = vxor.u32 %v3458, 2147483648
  %v3499 = vmul.f32 %v3498, 1.442695
  %v3500 = vpow.pop %v3499
  %v3501 = vadd.f32 %v3500, 1.0
  %v3502 = vrcp.pop %v3501
  %v3503 = vmul.f32 %v3501, %v3502
  %v3504 = vsub.f32 1.0, %v3503
  %v3505 = vmul.f32 %v3502, %v3504
  %v3506 = vadd.f32 %v3502, %v3505
  %vm3507 = vweird.f32 %v3501
  %vm3508 = vweird.f32 %v3502
  %vm3509 = vmor %vm3507, %vm3508
  %v3510 = vsel %vm3509, %v3502, %v3506
  %v3511 = vand.u32 2147483647, %v3501
  %vm3512 = vcmp.eq.f32.partialorder %v3511, 8.507059e+37
  %v3513 = vand.u32 %v3501, 2147483648
  %v3514 = vor.u32 1.1754944e-38, %v3513
  %v3515 = vsel %vm3512, %v3514, %v3510
  %v3516 = vmul.f32 1.0, %v3515
  %v3517 = vld [vmem:[#allocation3] sm:$0xff]
  %v3518 = vmul.f32 %v3496, %v3517
  %v3519 = vmul.f32 %v3481, %v3497
  %v3520 = vadd.f32 %v3518, %v3519
  %v3521 = vtanh.pop %v3520
  %v3522 = vmul.f32 %v3516, %v3521
  %3523 = vst [vmem:[#allocation3] sm:$0xff] %v3520
  %3524 = vst [vmem:[#allocation2] sm:$0xff] %v3522
  %v3526 = vrot.slane %v3522, 1
  %v3527 = vrot.slane %v3522, 2
  %v3528 = vrot.slane %v3522, 3
  %v3529 = vrot.slane %v3522, 4
  %v3530 = vrot.slane %v3522, 5
  %v3531 = vrot.slane %v3522, 6
  %v3532 = vrot.slane %v3522, 7
  %v3540 = vpack.c.bf16 %v3522, %v3522
  %v3541 = vpack.c.bf16 %v3526, %v3526
  %v3542 = vpack.c.bf16 %v3527, %v3527
  %v3543 = vpack.c.bf16 %v3528, %v3528
  %v3544 = vpack.c.bf16 %v3529, %v3529
  %v3545 = vpack.c.bf16 %v3530, %v3530
  %v3546 = vpack.c.bf16 %v3531, %v3531
  %v3547 = vpack.c.bf16 %v3532, %v3532
  %v3548 = vld [vmem:[%s2 + $0x4] sm:$0x1]
  %v3549 = vsel %vm362, %v3540, %v3548
  %3550 = vst [vmem:[%s2 + $0x4] sm:$0x1] %v3549
  %v3551 = vld [vmem:[%s2 + $0xc] sm:$0x1]
  %v3552 = vsel %vm362, %v3541, %v3551
  %3553 = vst [vmem:[%s2 + $0xc] sm:$0x1] %v3552
  %v3554 = vld [vmem:[%s2 + $0x14] sm:$0x1]
  %v3555 = vsel %vm362, %v3542, %v3554
  %3556 = vst [vmem:[%s2 + $0x14] sm:$0x1] %v3555
  %v3557 = vld [vmem:[%s2 + $0x1c] sm:$0x1]
  %v3558 = vsel %vm362, %v3543, %v3557
  %3559 = vst [vmem:[%s2 + $0x1c] sm:$0x1] %v3558
  %v3560 = vld [vmem:[%s2 + $0x24] sm:$0x1]
  %v3561 = vsel %vm362, %v3544, %v3560
  %3562 = vst [vmem:[%s2 + $0x24] sm:$0x1] %v3561
  %v3563 = vld [vmem:[%s2 + $0x2c] sm:$0x1]
  %v3564 = vsel %vm362, %v3545, %v3563
  %3565 = vst [vmem:[%s2 + $0x2c] sm:$0x1] %v3564
  %v3566 = vld [vmem:[%s2 + $0x34] sm:$0x1]
  %v3567 = vsel %vm362, %v3546, %v3566
  %3568 = vst [vmem:[%s2 + $0x34] sm:$0x1] %v3567
  %v3569 = vld [vmem:[%s2 + $0x3c] sm:$0x1]
  %v3570 = vsel %vm362, %v3547, %v3569
  %3571 = vst [vmem:[%s2 + $0x3c] sm:$0x1] %v3570
  %s3572 = scalar_lea.vmem %s0, 288
  %v3573 = vld [vmem:[%s3572] sm:$0xff]
  %v3574 = vld [vmem:[%s3572 + $0x8] sm:$0xff]
  %v3575 = vld [vmem:[%s3572 + $0x10] sm:$0xff]
  %v3576 = vld [vmem:[%s3572 + $0x18] sm:$0xff]
  %v3577 = vld [vmem:[#allocation2] sm:$0xff]
  %v3578 = vpack.c.bf16 %v3577, %v3577
  %v3579 = vld [vmem:[%s1] sm:$0xff]
  %v3580 = vld [vmem:[%s1 + $0x8] sm:$0xff]
  %v3581 = vld [vmem:[%s1 + $0x10] sm:$0xff]
  %v3582 = vld [vmem:[%s1 + $0x18] sm:$0xff]
  %v3583 = vld [vmem:[%s1 + $0x20] sm:$0xff]
  %v3584 = vld [vmem:[%s1 + $0x28] sm:$0xff]
  %v3585 = vld [vmem:[%s1 + $0x30] sm:$0xff]
  %v3586 = vld [vmem:[%s1 + $0x38] sm:$0xff]
  %v3587 = vld [vmem:[%s1 + $0x40] sm:$0xff]
  %v3588 = vld [vmem:[%s1 + $0x48] sm:$0xff]
  %v3589 = vld [vmem:[%s1 + $0x50] sm:$0xff]
  %v3590 = vld [vmem:[%s1 + $0x58] sm:$0xff]
  %v3591 = vld [vmem:[%s1 + $0x60] sm:$0xff]
  %v3592 = vld [vmem:[%s1 + $0x68] sm:$0xff]
  %v3593 = vld [vmem:[%s1 + $0x70] sm:$0xff]
  %v3594 = vld [vmem:[%s1 + $0x78] sm:$0xff]
  %v3595 = vld [vmem:[%s1 + $0x80] sm:$0xff]
  %v3596 = vld [vmem:[%s1 + $0x88] sm:$0xff]
  %v3597 = vld [vmem:[%s1 + $0x90] sm:$0xff]
  %v3598 = vld [vmem:[%s1 + $0x98] sm:$0xff]
  %v3599 = vld [vmem:[%s1 + $0xa0] sm:$0xff]
  %v3600 = vld [vmem:[%s1 + $0xa8] sm:$0xff]
  %v3601 = vld [vmem:[%s1 + $0xb0] sm:$0xff]
  %v3602 = vld [vmem:[%s1 + $0xb8] sm:$0xff]
  %v3603 = vld [vmem:[%s1 + $0xc0] sm:$0xff]
  %v3604 = vld [vmem:[%s1 + $0xc8] sm:$0xff]
  %v3605 = vld [vmem:[%s1 + $0xd0] sm:$0xff]
  %v3606 = vld [vmem:[%s1 + $0xd8] sm:$0xff]
  %v3607 = vld [vmem:[%s1 + $0xe0] sm:$0xff]
  %v3608 = vld [vmem:[%s1 + $0xe8] sm:$0xff]
  %v3609 = vld [vmem:[%s1 + $0xf0] sm:$0xff]
  %v3610 = vld [vmem:[%s1 + $0xf8] sm:$0xff]
  %v3643 = vunpack.c.l.b16 %v3579
  %v3644 = vunpack.c.h.b16 %v3579
  %v3645 = vunpack.c.l.b16 %v3580
  %v3646 = vunpack.c.h.b16 %v3580
  %v3647 = vunpack.c.l.b16 %v3581
  %v3648 = vunpack.c.h.b16 %v3581
  %v3649 = vunpack.c.l.b16 %v3582
  %v3650 = vunpack.c.h.b16 %v3582
  %v3651 = vunpack.c.l.b16 %v3583
  %v3652 = vunpack.c.h.b16 %v3583
  %v3653 = vunpack.c.l.b16 %v3584
  %v3654 = vunpack.c.h.b16 %v3584
  %v3655 = vunpack.c.l.b16 %v3585
  %v3656 = vunpack.c.h.b16 %v3585
  %v3657 = vunpack.c.l.b16 %v3586
  %v3658 = vunpack.c.h.b16 %v3586
  %v3659 = vunpack.c.l.b16 %v3587
  %v3660 = vunpack.c.h.b16 %v3587
  %v3661 = vunpack.c.l.b16 %v3588
  %v3662 = vunpack.c.h.b16 %v3588
  %v3663 = vunpack.c.l.b16 %v3589
  %v3664 = vunpack.c.h.b16 %v3589
  %v3665 = vunpack.c.l.b16 %v3590
  %v3666 = vunpack.c.h.b16 %v3590
  %v3667 = vunpack.c.l.b16 %v3591
  %v3668 = vunpack.c.h.b16 %v3591
  %v3669 = vunpack.c.l.b16 %v3592
  %v3670 = vunpack.c.h.b16 %v3592
  %v3671 = vunpack.c.l.b16 %v3593
  %v3672 = vunpack.c.h.b16 %v3593
  %v3673 = vunpack.c.l.b16 %v3594
  %v3674 = vunpack.c.h.b16 %v3594
  %v3675 = vunpack.c.l.b16 %v3595
  %v3676 = vunpack.c.h.b16 %v3595
  %v3677 = vunpack.c.l.b16 %v3596
  %v3678 = vunpack.c.h.b16 %v3596
  %v3679 = vunpack.c.l.b16 %v3597
  %v3680 = vunpack.c.h.b16 %v3597
  %v3681 = vunpack.c.l.b16 %v3598
  %v3682 = vunpack.c.h.b16 %v3598
  %v3683 = vunpack.c.l.b16 %v3599
  %v3684 = vunpack.c.h.b16 %v3599
  %v3685 = vunpack.c.l.b16 %v3600
  %v3686 = vunpack.c.h.b16 %v3600
  %v3687 = vunpack.c.l.b16 %v3601
  %v3688 = vunpack.c.h.b16 %v3601
  %v3689 = vunpack.c.l.b16 %v3602
  %v3690 = vunpack.c.h.b16 %v3602
  %v3691 = vunpack.c.l.b16 %v3603
  %v3692 = vunpack.c.h.b16 %v3603
  %v3693 = vunpack.c.l.b16 %v3604
  %v3694 = vunpack.c.h.b16 %v3604
  %v3695 = vunpack.c.l.b16 %v3605
  %v3696 = vunpack.c.h.b16 %v3605
  %v3697 = vunpack.c.l.b16 %v3606
  %v3698 = vunpack.c.h.b16 %v3606
  %v3699 = vunpack.c.l.b16 %v3607
  %v3700 = vunpack.c.h.b16 %v3607
  %v3701 = vunpack.c.l.b16 %v3608
  %v3702 = vunpack.c.h.b16 %v3608
  %v3703 = vunpack.c.l.b16 %v3609
  %v3704 = vunpack.c.h.b16 %v3609
  %v3705 = vunpack.c.l.b16 %v3610
  %v3706 = vunpack.c.h.b16 %v3610
  %v3707 = vpack.c.b16 %v3647, %v3643
  %v3708 = vpack.c.b16 %v3648, %v3644
  %v3709 = vpack.c.b16 %v3649, %v3645
  %v3710 = vpack.c.b16 %v3650, %v3646
  %v3711 = vpack.c.b16 %v3655, %v3651
  %v3712 = vpack.c.b16 %v3656, %v3652
  %v3713 = vpack.c.b16 %v3657, %v3653
  %v3714 = vpack.c.b16 %v3658, %v3654
  %v3715 = vpack.c.b16 %v3663, %v3659
  %v3716 = vpack.c.b16 %v3664, %v3660
  %v3717 = vpack.c.b16 %v3665, %v3661
  %v3718 = vpack.c.b16 %v3666, %v3662
  %v3719 = vpack.c.b16 %v3671, %v3667
  %v3720 = vpack.c.b16 %v3672, %v3668
  %v3721 = vpack.c.b16 %v3673, %v3669
  %v3722 = vpack.c.b16 %v3674, %v3670
  %v3723 = vpack.c.b16 %v3679, %v3675
  %v3724 = vpack.c.b16 %v3680, %v3676
  %v3725 = vpack.c.b16 %v3681, %v3677
  %v3726 = vpack.c.b16 %v3682, %v3678
  %v3727 = vpack.c.b16 %v3687, %v3683
  %v3728 = vpack.c.b16 %v3688, %v3684
  %v3729 = vpack.c.b16 %v3689, %v3685
  %v3730 = vpack.c.b16 %v3690, %v3686
  %v3731 = vpack.c.b16 %v3695, %v3691
  %v3732 = vpack.c.b16 %v3696, %v3692
  %v3733 = vpack.c.b16 %v3697, %v3693
  %v3734 = vpack.c.b16 %v3698, %v3694
  %v3735 = vpack.c.b16 %v3703, %v3699
  %v3736 = vpack.c.b16 %v3704, %v3700
  %v3737 = vpack.c.b16 %v3705, %v3701
  %v3738 = vpack.c.b16 %v3706, %v3702
  %3771 = vmatpush.bf16.msra.mxu0 %v3735
  %3772 = vmatpush.bf16.msra.mxu0 %v3731
  %3773 = vmatpush.bf16.msra.mxu0 %v3727
  %3774 = vmatpush.bf16.msra.mxu0 %v3723
  %3775 = vmatpush.bf16.msra.mxu0 %v3719
  %3776 = vmatpush.bf16.msra.mxu0 %v3715
  %3777 = vmatpush.bf16.msra.mxu0 %v3711
  %3778 = vmatpush.bf16.msra.mxu0 %v3707
  %3779 = vmatmul.bf16.gmra.mxu0 %v3578
  %v3780 = vpop.f32.mrf.mxu0
  %v3781 = vadd.f32 0.0, %v3780
  %v3782 = vpop.f32.mrf.mxu0
  %3783 = vdwg.mxu0
  %3784 = vmatpush.bf16.msra.mxu0 %v3736
  %3785 = vmatpush.bf16.msra.mxu0 %v3732
  %3786 = vmatpush.bf16.msra.mxu0 %v3728
  %3787 = vmatpush.bf16.msra.mxu0 %v3724
  %3788 = vmatpush.bf16.msra.mxu0 %v3720
  %3789 = vmatpush.bf16.msra.mxu0 %v3716
  %3790 = vmatpush.bf16.msra.mxu0 %v3712
  %3791 = vmatpush.bf16.msra.mxu0 %v3708
  %3792 = vmatmul.bf16.gmra.mxu0 %v3578
  %v3793 = vpop.f32.mrf.mxu0
  %v3794 = vadd.f32 0.0, %v3793
  %v3795 = vpop.f32.mrf.mxu0
  %3796 = vdwg.mxu0
  %3797 = vmatpush.bf16.msra.mxu0 %v3737
  %3798 = vmatpush.bf16.msra.mxu0 %v3733
  %3799 = vmatpush.bf16.msra.mxu0 %v3729
  %3800 = vmatpush.bf16.msra.mxu0 %v3725
  %3801 = vmatpush.bf16.msra.mxu0 %v3721
  %3802 = vmatpush.bf16.msra.mxu0 %v3717
  %3803 = vmatpush.bf16.msra.mxu0 %v3713
  %3804 = vmatpush.bf16.msra.mxu0 %v3709
  %3805 = vmatmul.bf16.gmra.mxu0 %v3578
  %v3806 = vpop.f32.mrf.mxu0
  %v3807 = vadd.f32 0.0, %v3806
  %v3808 = vpop.f32.mrf.mxu0
  %3809 = vdwg.mxu0
  %3810 = vmatpush.bf16.msra.mxu0 %v3738
  %3811 = vmatpush.bf16.msra.mxu0 %v3734
  %3812 = vmatpush.bf16.msra.mxu0 %v3730
  %3813 = vmatpush.bf16.msra.mxu0 %v3726
  %3814 = vmatpush.bf16.msra.mxu0 %v3722
  %3815 = vmatpush.bf16.msra.mxu0 %v3718
  %3816 = vmatpush.bf16.msra.mxu0 %v3714
  %3817 = vmatpush.bf16.msra.mxu0 %v3710
  %3818 = vmatmul.bf16.gmra.mxu0 %v3578
  %v3819 = vpop.f32.mrf.mxu0
  %v3820 = vadd.f32 0.0, %v3819
  %v3821 = vpop.f32.mrf.mxu0
  %3822 = vdwg.mxu0
  %v3823 = vadd.f32 %v3573, %v3781
  %v3824 = vadd.f32 %v3574, %v3794
  %v3825 = vadd.f32 %v3575, %v3807
  %v3826 = vadd.f32 %v3576, %v3820
  %v3827 = vxor.u32 %v3823, 2147483648
  %v3828 = vxor.u32 %v3824, 2147483648
  %v3829 = vmul.f32 %v3827, 1.442695
  %v3830 = vpow.pop %v3829
  %v3831 = vmul.f32 %v3828, 1.442695
  %v3832 = vpow.pop %v3831
  %v3833 = vadd.f32 %v3830, 1.0
  %v3834 = vadd.f32 %v3832, 1.0
  %v3835 = vrcp.pop %v3833
  %v3836 = vmul.f32 %v3833, %v3835
  %v3837 = vsub.f32 1.0, %v3836
  %v3838 = vmul.f32 %v3835, %v3837
  %v3839 = vadd.f32 %v3835, %v3838
  %vm3840 = vweird.f32 %v3833
  %vm3841 = vweird.f32 %v3835
  %vm3842 = vmor %vm3840, %vm3841
  %v3843 = vsel %vm3842, %v3835, %v3839
  %v3844 = vand.u32 2147483647, %v3833
  %vm3845 = vcmp.eq.f32.partialorder %v3844, 8.507059e+37
  %v3846 = vand.u32 %v3833, 2147483648
  %v3847 = vor.u32 1.1754944e-38, %v3846
  %v3848 = vsel %vm3845, %v3847, %v3843
  %v3849 = vmul.f32 1.0, %v3848
  %v3850 = vrcp.pop %v3834
  %v3851 = vmul.f32 %v3834, %v3850
  %v3852 = vsub.f32 1.0, %v3851
  %v3853 = vmul.f32 %v3850, %v3852
  %v3854 = vadd.f32 %v3850, %v3853
  %vm3855 = vweird.f32 %v3834
  %vm3856 = vweird.f32 %v3850
  %vm3857 = vmor %vm3855, %vm3856
  %v3858 = vsel %vm3857, %v3850, %v3854
  %v3859 = vand.u32 2147483647, %v3834
  %vm3860 = vcmp.eq.f32.partialorder %v3859, 8.507059e+37
  %v3861 = vand.u32 %v3834, 2147483648
  %v3862 = vor.u32 1.1754944e-38, %v3861
  %v3863 = vsel %vm3860, %v3862, %v3858
  %v3864 = vmul.f32 1.0, %v3863
  %v3865 = vtanh.pop %v3825
  %v3866 = vxor.u32 %v3826, 2147483648
  %v3867 = vmul.f32 %v3866, 1.442695
  %v3868 = vpow.pop %v3867
  %v3869 = vadd.f32 %v3868, 1.0
  %v3870 = vrcp.pop %v3869
  %v3871 = vmul.f32 %v3869, %v3870
  %v3872 = vsub.f32 1.0, %v3871
  %v3873 = vmul.f32 %v3870, %v3872
  %v3874 = vadd.f32 %v3870, %v3873
  %vm3875 = vweird.f32 %v3869
  %vm3876 = vweird.f32 %v3870
  %vm3877 = vmor %vm3875, %vm3876
  %v3878 = vsel %vm3877, %v3870, %v3874
  %v3879 = vand.u32 2147483647, %v3869
  %vm3880 = vcmp.eq.f32.partialorder %v3879, 8.507059e+37
  %v3881 = vand.u32 %v3869, 2147483648
  %v3882 = vor.u32 1.1754944e-38, %v3881
  %v3883 = vsel %vm3880, %v3882, %v3878
  %v3884 = vmul.f32 1.0, %v3883
  %v3885 = vld [vmem:[#allocation3] sm:$0xff]
  %v3886 = vmul.f32 %v3864, %v3885
  %v3887 = vmul.f32 %v3849, %v3865
  %v3888 = vadd.f32 %v3886, %v3887
  %v3889 = vtanh.pop %v3888
  %v3890 = vmul.f32 %v3884, %v3889
  %3891 = vst [vmem:[#allocation3] sm:$0xff] %v3888
  %3892 = vst [vmem:[#allocation2] sm:$0xff] %v3890
  %v3894 = vrot.slane %v3890, 1
  %v3895 = vrot.slane %v3890, 2
  %v3896 = vrot.slane %v3890, 3
  %v3897 = vrot.slane %v3890, 4
  %v3898 = vrot.slane %v3890, 5
  %v3899 = vrot.slane %v3890, 6
  %v3900 = vrot.slane %v3890, 7
  %v3908 = vpack.c.bf16 %v3890, %v3890
  %v3909 = vpack.c.bf16 %v3894, %v3894
  %v3910 = vpack.c.bf16 %v3895, %v3895
  %v3911 = vpack.c.bf16 %v3896, %v3896
  %v3912 = vpack.c.bf16 %v3897, %v3897
  %v3913 = vpack.c.bf16 %v3898, %v3898
  %v3914 = vpack.c.bf16 %v3899, %v3899
  %v3915 = vpack.c.bf16 %v3900, %v3900
  %v3917 = vshll.u32 %v3908, 16
  %v3920 = vshll.u32 %v3909, 16
  %v3923 = vshll.u32 %v3910, 16
  %v3926 = vshll.u32 %v3911, 16
  %v3929 = vshll.u32 %v3912, 16
  %v3932 = vshll.u32 %v3913, 16
  %v3935 = vshll.u32 %v3914, 16
  %v3938 = vshll.u32 %v3915, 16
  %v3948 = vld [vmem:[%s2 + $0x4] sm:$0x1]
  %v3949 = vsel %vm764, %v3917, %v3948
  %3950 = vst [vmem:[%s2 + $0x4] sm:$0x1] %v3949
  %v3951 = vld [vmem:[%s2 + $0xc] sm:$0x1]
  %v3952 = vsel %vm764, %v3920, %v3951
  %3953 = vst [vmem:[%s2 + $0xc] sm:$0x1] %v3952
  %v3954 = vld [vmem:[%s2 + $0x14] sm:$0x1]
  %v3955 = vsel %vm764, %v3923, %v3954
  %3956 = vst [vmem:[%s2 + $0x14] sm:$0x1] %v3955
  %v3957 = vld [vmem:[%s2 + $0x1c] sm:$0x1]
  %v3958 = vsel %vm764, %v3926, %v3957
  %3959 = vst [vmem:[%s2 + $0x1c] sm:$0x1] %v3958
  %v3960 = vld [vmem:[%s2 + $0x24] sm:$0x1]
  %v3961 = vsel %vm764, %v3929, %v3960
  %3962 = vst [vmem:[%s2 + $0x24] sm:$0x1] %v3961
  %v3963 = vld [vmem:[%s2 + $0x2c] sm:$0x1]
  %v3964 = vsel %vm764, %v3932, %v3963
  %3965 = vst [vmem:[%s2 + $0x2c] sm:$0x1] %v3964
  %v3966 = vld [vmem:[%s2 + $0x34] sm:$0x1]
  %v3967 = vsel %vm764, %v3935, %v3966
  %3968 = vst [vmem:[%s2 + $0x34] sm:$0x1] %v3967
  %v3969 = vld [vmem:[%s2 + $0x3c] sm:$0x1]
  %v3970 = vsel %vm764, %v3938, %v3969
  %3971 = vst [vmem:[%s2 + $0x3c] sm:$0x1] %v3970
  %s3972 = scalar_lea.vmem %s0, 320
  %v3973 = vld [vmem:[%s3972] sm:$0xff]
  %v3974 = vld [vmem:[%s3972 + $0x8] sm:$0xff]
  %v3975 = vld [vmem:[%s3972 + $0x10] sm:$0xff]
  %v3976 = vld [vmem:[%s3972 + $0x18] sm:$0xff]
  %v3977 = vld [vmem:[#allocation2] sm:$0xff]
  %v3978 = vpack.c.bf16 %v3977, %v3977
  %v3979 = vld [vmem:[%s1] sm:$0xff]
  %v3980 = vld [vmem:[%s1 + $0x8] sm:$0xff]
  %v3981 = vld [vmem:[%s1 + $0x10] sm:$0xff]
  %v3982 = vld [vmem:[%s1 + $0x18] sm:$0xff]
  %v3983 = vld [vmem:[%s1 + $0x20] sm:$0xff]
  %v3984 = vld [vmem:[%s1 + $0x28] sm:$0xff]
  %v3985 = vld [vmem:[%s1 + $0x30] sm:$0xff]
  %v3986 = vld [vmem:[%s1 + $0x38] sm:$0xff]
  %v3987 = vld [vmem:[%s1 + $0x40] sm:$0xff]
  %v3988 = vld [vmem:[%s1 + $0x48] sm:$0xff]
  %v3989 = vld [vmem:[%s1 + $0x50] sm:$0xff]
  %v3990 = vld [vmem:[%s1 + $0x58] sm:$0xff]
  %v3991 = vld [vmem:[%s1 + $0x60] sm:$0xff]
  %v3992 = vld [vmem:[%s1 + $0x68] sm:$0xff]
  %v3993 = vld [vmem:[%s1 + $0x70] sm:$0xff]
  %v3994 = vld [vmem:[%s1 + $0x78] sm:$0xff]
  %v3995 = vld [vmem:[%s1 + $0x80] sm:$0xff]
  %v3996 = vld [vmem:[%s1 + $0x88] sm:$0xff]
  %v3997 = vld [vmem:[%s1 + $0x90] sm:$0xff]
  %v3998 = vld [vmem:[%s1 + $0x98] sm:$0xff]
  %v3999 = vld [vmem:[%s1 + $0xa0] sm:$0xff]
  %v4000 = vld [vmem:[%s1 + $0xa8] sm:$0xff]
  %v4001 = vld [vmem:[%s1 + $0xb0] sm:$0xff]
  %v4002 = vld [vmem:[%s1 + $0xb8] sm:$0xff]
  %v4003 = vld [vmem:[%s1 + $0xc0] sm:$0xff]
  %v4004 = vld [vmem:[%s1 + $0xc8] sm:$0xff]
  %v4005 = vld [vmem:[%s1 + $0xd0] sm:$0xff]
  %v4006 = vld [vmem:[%s1 + $0xd8] sm:$0xff]
  %v4007 = vld [vmem:[%s1 + $0xe0] sm:$0xff]
  %v4008 = vld [vmem:[%s1 + $0xe8] sm:$0xff]
  %v4009 = vld [vmem:[%s1 + $0xf0] sm:$0xff]
  %v4010 = vld [vmem:[%s1 + $0xf8] sm:$0xff]
  %v4043 = vunpack.c.l.b16 %v3979
  %v4044 = vunpack.c.h.b16 %v3979
  %v4045 = vunpack.c.l.b16 %v3980
  %v4046 = vunpack.c.h.b16 %v3980
  %v4047 = vunpack.c.l.b16 %v3981
  %v4048 = vunpack.c.h.b16 %v3981
  %v4049 = vunpack.c.l.b16 %v3982
  %v4050 = vunpack.c.h.b16 %v3982
  %v4051 = vunpack.c.l.b16 %v3983
  %v4052 = vunpack.c.h.b16 %v3983
  %v4053 = vunpack.c.l.b16 %v3984
  %v4054 = vunpack.c.h.b16 %v3984
  %v4055 = vunpack.c.l.b16 %v3985
  %v4056 = vunpack.c.h.b16 %v3985
  %v4057 = vunpack.c.l.b16 %v3986
  %v4058 = vunpack.c.h.b16 %v3986
  %v4059 = vunpack.c.l.b16 %v3987
  %v4060 = vunpack.c.h.b16 %v3987
  %v4061 = vunpack.c.l.b16 %v3988
  %v4062 = vunpack.c.h.b16 %v3988
  %v4063 = vunpack.c.l.b16 %v3989
  %v4064 = vunpack.c.h.b16 %v3989
  %v4065 = vunpack.c.l.b16 %v3990
  %v4066 = vunpack.c.h.b16 %v3990
  %v4067 = vunpack.c.l.b16 %v3991
  %v4068 = vunpack.c.h.b16 %v3991
  %v4069 = vunpack.c.l.b16 %v3992
  %v4070 = vunpack.c.h.b16 %v3992
  %v4071 = vunpack.c.l.b16 %v3993
  %v4072 = vunpack.c.h.b16 %v3993
  %v4073 = vunpack.c.l.b16 %v3994
  %v4074 = vunpack.c.h.b16 %v3994
  %v4075 = vunpack.c.l.b16 %v3995
  %v4076 = vunpack.c.h.b16 %v3995
  %v4077 = vunpack.c.l.b16 %v3996
  %v4078 = vunpack.c.h.b16 %v3996
  %v4079 = vunpack.c.l.b16 %v3997
  %v4080 = vunpack.c.h.b16 %v3997
  %v4081 = vunpack.c.l.b16 %v3998
  %v4082 = vunpack.c.h.b16 %v3998
  %v4083 = vunpack.c.l.b16 %v3999
  %v4084 = vunpack.c.h.b16 %v3999
  %v4085 = vunpack.c.l.b16 %v4000
  %v4086 = vunpack.c.h.b16 %v4000
  %v4087 = vunpack.c.l.b16 %v4001
  %v4088 = vunpack.c.h.b16 %v4001
  %v4089 = vunpack.c.l.b16 %v4002
  %v4090 = vunpack.c.h.b16 %v4002
  %v4091 = vunpack.c.l.b16 %v4003
  %v4092 = vunpack.c.h.b16 %v4003
  %v4093 = vunpack.c.l.b16 %v4004
  %v4094 = vunpack.c.h.b16 %v4004
  %v4095 = vunpack.c.l.b16 %v4005
  %v4096 = vunpack.c.h.b16 %v4005
  %v4097 = vunpack.c.l.b16 %v4006
  %v4098 = vunpack.c.h.b16 %v4006
  %v4099 = vunpack.c.l.b16 %v4007
  %v4100 = vunpack.c.h.b16 %v4007
  %v4101 = vunpack.c.l.b16 %v4008
  %v4102 = vunpack.c.h.b16 %v4008
  %v4103 = vunpack.c.l.b16 %v4009
  %v4104 = vunpack.c.h.b16 %v4009
  %v4105 = vunpack.c.l.b16 %v4010
  %v4106 = vunpack.c.h.b16 %v4010
  %v4107 = vpack.c.b16 %v4047, %v4043
  %v4108 = vpack.c.b16 %v4048, %v4044
  %v4109 = vpack.c.b16 %v4049, %v4045
  %v4110 = vpack.c.b16 %v4050, %v4046
  %v4111 = vpack.c.b16 %v4055, %v4051
  %v4112 = vpack.c.b16 %v4056, %v4052
  %v4113 = vpack.c.b16 %v4057, %v4053
  %v4114 = vpack.c.b16 %v4058, %v4054
  %v4115 = vpack.c.b16 %v4063, %v4059
  %v4116 = vpack.c.b16 %v4064, %v4060
  %v4117 = vpack.c.b16 %v4065, %v4061
  %v4118 = vpack.c.b16 %v4066, %v4062
  %v4119 = vpack.c.b16 %v4071, %v4067
  %v4120 = vpack.c.b16 %v4072, %v4068
  %v4121 = vpack.c.b16 %v4073, %v4069
  %v4122 = vpack.c.b16 %v4074, %v4070
  %v4123 = vpack.c.b16 %v4079, %v4075
  %v4124 = vpack.c.b16 %v4080, %v4076
  %v4125 = vpack.c.b16 %v4081, %v4077
  %v4126 = vpack.c.b16 %v4082, %v4078
  %v4127 = vpack.c.b16 %v4087, %v4083
  %v4128 = vpack.c.b16 %v4088, %v4084
  %v4129 = vpack.c.b16 %v4089, %v4085
  %v4130 = vpack.c.b16 %v4090, %v4086
  %v4131 = vpack.c.b16 %v4095, %v4091
  %v4132 = vpack.c.b16 %v4096, %v4092
  %v4133 = vpack.c.b16 %v4097, %v4093
  %v4134 = vpack.c.b16 %v4098, %v4094
  %v4135 = vpack.c.b16 %v4103, %v4099
  %v4136 = vpack.c.b16 %v4104, %v4100
  %v4137 = vpack.c.b16 %v4105, %v4101
  %v4138 = vpack.c.b16 %v4106, %v4102
  %4171 = vmatpush.bf16.msra.mxu0 %v4135
  %4172 = vmatpush.bf16.msra.mxu0 %v4131
  %4173 = vmatpush.bf16.msra.mxu0 %v4127
  %4174 = vmatpush.bf16.msra.mxu0 %v4123
  %4175 = vmatpush.bf16.msra.mxu0 %v4119
  %4176 = vmatpush.bf16.msra.mxu0 %v4115
  %4177 = vmatpush.bf16.msra.mxu0 %v4111
  %4178 = vmatpush.bf16.msra.mxu0 %v4107
  %4179 = vmatmul.bf16.gmra.mxu0 %v3978
  %v4180 = vpop.f32.mrf.mxu0
  %v4181 = vadd.f32 0.0, %v4180
  %v4182 = vpop.f32.mrf.mxu0
  %4183 = vdwg.mxu0
  %4184 = vmatpush.bf16.msra.mxu0 %v4136
  %4185 = vmatpush.bf16.msra.mxu0 %v4132
  %4186 = vmatpush.bf16.msra.mxu0 %v4128
  %4187 = vmatpush.bf16.msra.mxu0 %v4124
  %4188 = vmatpush.bf16.msra.mxu0 %v4120
  %4189 = vmatpush.bf16.msra.mxu0 %v4116
  %4190 = vmatpush.bf16.msra.mxu0 %v4112
  %4191 = vmatpush.bf16.msra.mxu0 %v4108
  %4192 = vmatmul.bf16.gmra.mxu0 %v3978
  %v4193 = vpop.f32.mrf.mxu0
  %v4194 = vadd.f32 0.0, %v4193
  %v4195 = vpop.f32.mrf.mxu0
  %4196 = vdwg.mxu0
  %4197 = vmatpush.bf16.msra.mxu0 %v4137
  %4198 = vmatpush.bf16.msra.mxu0 %v4133
  %4199 = vmatpush.bf16.msra.mxu0 %v4129
  %4200 = vmatpush.bf16.msra.mxu0 %v4125
  %4201 = vmatpush.bf16.msra.mxu0 %v4121
  %4202 = vmatpush.bf16.msra.mxu0 %v4117
  %4203 = vmatpush.bf16.msra.mxu0 %v4113
  %4204 = vmatpush.bf16.msra.mxu0 %v4109
  %4205 = vmatmul.bf16.gmra.mxu0 %v3978
  %v4206 = vpop.f32.mrf.mxu0
  %v4207 = vadd.f32 0.0, %v4206
  %v4208 = vpop.f32.mrf.mxu0
  %4209 = vdwg.mxu0
  %4210 = vmatpush.bf16.msra.mxu0 %v4138
  %4211 = vmatpush.bf16.msra.mxu0 %v4134
  %4212 = vmatpush.bf16.msra.mxu0 %v4130
  %4213 = vmatpush.bf16.msra.mxu0 %v4126
  %4214 = vmatpush.bf16.msra.mxu0 %v4122
  %4215 = vmatpush.bf16.msra.mxu0 %v4118
  %4216 = vmatpush.bf16.msra.mxu0 %v4114
  %4217 = vmatpush.bf16.msra.mxu0 %v4110
  %4218 = vmatmul.bf16.gmra.mxu0 %v3978
  %v4219 = vpop.f32.mrf.mxu0
  %v4220 = vadd.f32 0.0, %v4219
  %v4221 = vpop.f32.mrf.mxu0
  %4222 = vdwg.mxu0
  %v4223 = vadd.f32 %v3973, %v4181
  %v4224 = vadd.f32 %v3974, %v4194
  %v4225 = vadd.f32 %v3975, %v4207
  %v4226 = vadd.f32 %v3976, %v4220
  %v4227 = vxor.u32 %v4223, 2147483648
  %v4228 = vxor.u32 %v4224, 2147483648
  %v4229 = vmul.f32 %v4227, 1.442695
  %v4230 = vpow.pop %v4229
  %v4231 = vmul.f32 %v4228, 1.442695
  %v4232 = vpow.pop %v4231
  %v4233 = vadd.f32 %v4230, 1.0
  %v4234 = vadd.f32 %v4232, 1.0
  %v4235 = vrcp.pop %v4233
  %v4236 = vmul.f32 %v4233, %v4235
  %v4237 = vsub.f32 1.0, %v4236
  %v4238 = vmul.f32 %v4235, %v4237
  %v4239 = vadd.f32 %v4235, %v4238
  %vm4240 = vweird.f32 %v4233
  %vm4241 = vweird.f32 %v4235
  %vm4242 = vmor %vm4240, %vm4241
  %v4243 = vsel %vm4242, %v4235, %v4239
  %v4244 = vand.u32 2147483647, %v4233
  %vm4245 = vcmp.eq.f32.partialorder %v4244, 8.507059e+37
  %v4246 = vand.u32 %v4233, 2147483648
  %v4247 = vor.u32 1.1754944e-38, %v4246
  %v4248 = vsel %vm4245, %v4247, %v4243
  %v4249 = vmul.f32 1.0, %v4248
  %v4250 = vrcp.pop %v4234
  %v4251 = vmul.f32 %v4234, %v4250
  %v4252 = vsub.f32 1.0, %v4251
  %v4253 = vmul.f32 %v4250, %v4252
  %v4254 = vadd.f32 %v4250, %v4253
  %vm4255 = vweird.f32 %v4234
  %vm4256 = vweird.f32 %v4250
  %vm4257 = vmor %vm4255, %vm4256
  %v4258 = vsel %vm4257, %v4250, %v4254
  %v4259 = vand.u32 2147483647, %v4234
  %vm4260 = vcmp.eq.f32.partialorder %v4259, 8.507059e+37
  %v4261 = vand.u32 %v4234, 2147483648
  %v4262 = vor.u32 1.1754944e-38, %v4261
  %v4263 = vsel %vm4260, %v4262, %v4258
  %v4264 = vmul.f32 1.0, %v4263
  %v4265 = vtanh.pop %v4225
  %v4266 = vxor.u32 %v4226, 2147483648
  %v4267 = vmul.f32 %v4266, 1.442695
  %v4268 = vpow.pop %v4267
  %v4269 = vadd.f32 %v4268, 1.0
  %v4270 = vrcp.pop %v4269
  %v4271 = vmul.f32 %v4269, %v4270
  %v4272 = vsub.f32 1.0, %v4271
  %v4273 = vmul.f32 %v4270, %v4272
  %v4274 = vadd.f32 %v4270, %v4273
  %vm4275 = vweird.f32 %v4269
  %vm4276 = vweird.f32 %v4270
  %vm4277 = vmor %vm4275, %vm4276
  %v4278 = vsel %vm4277, %v4270, %v4274
  %v4279 = vand.u32 2147483647, %v4269
  %vm4280 = vcmp.eq.f32.partialorder %v4279, 8.507059e+37
  %v4281 = vand.u32 %v4269, 2147483648
  %v4282 = vor.u32 1.1754944e-38, %v4281
  %v4283 = vsel %vm4280, %v4282, %v4278
  %v4284 = vmul.f32 1.0, %v4283
  %v4285 = vld [vmem:[#allocation3] sm:$0xff]
  %v4286 = vmul.f32 %v4264, %v4285
  %v4287 = vmul.f32 %v4249, %v4265
  %v4288 = vadd.f32 %v4286, %v4287
  %v4289 = vtanh.pop %v4288
  %v4290 = vmul.f32 %v4284, %v4289
  %4291 = vst [vmem:[#allocation3] sm:$0xff] %v4288
  %4292 = vst [vmem:[#allocation2] sm:$0xff] %v4290
  %v4294 = vrot.slane %v4290, 1
  %v4295 = vrot.slane %v4290, 2
  %v4296 = vrot.slane %v4290, 3
  %v4297 = vrot.slane %v4290, 4
  %v4298 = vrot.slane %v4290, 5
  %v4299 = vrot.slane %v4290, 6
  %v4300 = vrot.slane %v4290, 7
  %v4308 = vpack.c.bf16 %v4290, %v4290
  %v4309 = vpack.c.bf16 %v4294, %v4294
  %v4310 = vpack.c.bf16 %v4295, %v4295
  %v4311 = vpack.c.bf16 %v4296, %v4296
  %v4312 = vpack.c.bf16 %v4297, %v4297
  %v4313 = vpack.c.bf16 %v4298, %v4298
  %v4314 = vpack.c.bf16 %v4299, %v4299
  %v4315 = vpack.c.bf16 %v4300, %v4300
  %v4324 = vrot.slane %v4308, 7
  %v4325 = vrot.slane %v4309, 7
  %v4326 = vrot.slane %v4310, 7
  %v4327 = vrot.slane %v4311, 7
  %v4328 = vrot.slane %v4312, 7
  %v4329 = vrot.slane %v4313, 7
  %v4330 = vrot.slane %v4314, 7
  %v4331 = vrot.slane %v4315, 7
  %v4340 = vld [vmem:[%s2 + $0x4] sm:$0x2]
  %v4341 = vsel %vm1159, %v4324, %v4340
  %4342 = vst [vmem:[%s2 + $0x4] sm:$0x2] %v4341
  %v4343 = vld [vmem:[%s2 + $0xc] sm:$0x2]
  %v4344 = vsel %vm1159, %v4325, %v4343
  %4345 = vst [vmem:[%s2 + $0xc] sm:$0x2] %v4344
  %v4346 = vld [vmem:[%s2 + $0x14] sm:$0x2]
  %v4347 = vsel %vm1159, %v4326, %v4346
  %4348 = vst [vmem:[%s2 + $0x14] sm:$0x2] %v4347
  %v4349 = vld [vmem:[%s2 + $0x1c] sm:$0x2]
  %v4350 = vsel %vm1159, %v4327, %v4349
  %4351 = vst [vmem:[%s2 + $0x1c] sm:$0x2] %v4350
  %v4352 = vld [vmem:[%s2 + $0x24] sm:$0x2]
  %v4353 = vsel %vm1159, %v4328, %v4352
  %4354 = vst [vmem:[%s2 + $0x24] sm:$0x2] %v4353
  %v4355 = vld [vmem:[%s2 + $0x2c] sm:$0x2]
  %v4356 = vsel %vm1159, %v4329, %v4355
  %4357 = vst [vmem:[%s2 + $0x2c] sm:$0x2] %v4356
  %v4358 = vld [vmem:[%s2 + $0x34] sm:$0x2]
  %v4359 = vsel %vm1159, %v4330, %v4358
  %4360 = vst [vmem:[%s2 + $0x34] sm:$0x2] %v4359
  %v4361 = vld [vmem:[%s2 + $0x3c] sm:$0x2]
  %v4362 = vsel %vm1159, %v4331, %v4361
  %4363 = vst [vmem:[%s2 + $0x3c] sm:$0x2] %v4362
  %s4364 = scalar_lea.vmem %s0, 352
  %v4365 = vld [vmem:[%s4364] sm:$0xff]
  %v4366 = vld [vmem:[%s4364 + $0x8] sm:$0xff]
  %v4367 = vld [vmem:[%s4364 + $0x10] sm:$0xff]
  %v4368 = vld [vmem:[%s4364 + $0x18] sm:$0xff]
  %v4369 = vld [vmem:[#allocation2] sm:$0xff]
  %v4370 = vpack.c.bf16 %v4369, %v4369
  %v4371 = vld [vmem:[%s1] sm:$0xff]
  %v4372 = vld [vmem:[%s1 + $0x8] sm:$0xff]
  %v4373 = vld [vmem:[%s1 + $0x10] sm:$0xff]
  %v4374 = vld [vmem:[%s1 + $0x18] sm:$0xff]
  %v4375 = vld [vmem:[%s1 + $0x20] sm:$0xff]
  %v4376 = vld [vmem:[%s1 + $0x28] sm:$0xff]
  %v4377 = vld [vmem:[%s1 + $0x30] sm:$0xff]
  %v4378 = vld [vmem:[%s1 + $0x38] sm:$0xff]
  %v4379 = vld [vmem:[%s1 + $0x40] sm:$0xff]
  %v4380 = vld [vmem:[%s1 + $0x48] sm:$0xff]
  %v4381 = vld [vmem:[%s1 + $0x50] sm:$0xff]
  %v4382 = vld [vmem:[%s1 + $0x58] sm:$0xff]
  %v4383 = vld [vmem:[%s1 + $0x60] sm:$0xff]
  %v4384 = vld [vmem:[%s1 + $0x68] sm:$0xff]
  %v4385 = vld [vmem:[%s1 + $0x70] sm:$0xff]
  %v4386 = vld [vmem:[%s1 + $0x78] sm:$0xff]
  %v4387 = vld [vmem:[%s1 + $0x80] sm:$0xff]
  %v4388 = vld [vmem:[%s1 + $0x88] sm:$0xff]
  %v4389 = vld [vmem:[%s1 + $0x90] sm:$0xff]
  %v4390 = vld [vmem:[%s1 + $0x98] sm:$0xff]
  %v4391 = vld [vmem:[%s1 + $0xa0] sm:$0xff]
  %v4392 = vld [vmem:[%s1 + $0xa8] sm:$0xff]
  %v4393 = vld [vmem:[%s1 + $0xb0] sm:$0xff]
  %v4394 = vld [vmem:[%s1 + $0xb8] sm:$0xff]
  %v4395 = vld [vmem:[%s1 + $0xc0] sm:$0xff]
  %v4396 = vld [vmem:[%s1 + $0xc8] sm:$0xff]
  %v4397 = vld [vmem:[%s1 + $0xd0] sm:$0xff]
  %v4398 = vld [vmem:[%s1 + $0xd8] sm:$0xff]
  %v4399 = vld [vmem:[%s1 + $0xe0] sm:$0xff]
  %v4400 = vld [vmem:[%s1 + $0xe8] sm:$0xff]
  %v4401 = vld [vmem:[%s1 + $0xf0] sm:$0xff]
  %v4402 = vld [vmem:[%s1 + $0xf8] sm:$0xff]
  %v4435 = vunpack.c.l.b16 %v4371
  %v4436 = vunpack.c.h.b16 %v4371
  %v4437 = vunpack.c.l.b16 %v4372
  %v4438 = vunpack.c.h.b16 %v4372
  %v4439 = vunpack.c.l.b16 %v4373
  %v4440 = vunpack.c.h.b16 %v4373
  %v4441 = vunpack.c.l.b16 %v4374
  %v4442 = vunpack.c.h.b16 %v4374
  %v4443 = vunpack.c.l.b16 %v4375
  %v4444 = vunpack.c.h.b16 %v4375
  %v4445 = vunpack.c.l.b16 %v4376
  %v4446 = vunpack.c.h.b16 %v4376
  %v4447 = vunpack.c.l.b16 %v4377
  %v4448 = vunpack.c.h.b16 %v4377
  %v4449 = vunpack.c.l.b16 %v4378
  %v4450 = vunpack.c.h.b16 %v4378
  %v4451 = vunpack.c.l.b16 %v4379
  %v4452 = vunpack.c.h.b16 %v4379
  %v4453 = vunpack.c.l.b16 %v4380
  %v4454 = vunpack.c.h.b16 %v4380
  %v4455 = vunpack.c.l.b16 %v4381
  %v4456 = vunpack.c.h.b16 %v4381
  %v4457 = vunpack.c.l.b16 %v4382
  %v4458 = vunpack.c.h.b16 %v4382
  %v4459 = vunpack.c.l.b16 %v4383
  %v4460 = vunpack.c.h.b16 %v4383
  %v4461 = vunpack.c.l.b16 %v4384
  %v4462 = vunpack.c.h.b16 %v4384
  %v4463 = vunpack.c.l.b16 %v4385
  %v4464 = vunpack.c.h.b16 %v4385
  %v4465 = vunpack.c.l.b16 %v4386
  %v4466 = vunpack.c.h.b16 %v4386
  %v4467 = vunpack.c.l.b16 %v4387
  %v4468 = vunpack.c.h.b16 %v4387
  %v4469 = vunpack.c.l.b16 %v4388
  %v4470 = vunpack.c.h.b16 %v4388
  %v4471 = vunpack.c.l.b16 %v4389
  %v4472 = vunpack.c.h.b16 %v4389
  %v4473 = vunpack.c.l.b16 %v4390
  %v4474 = vunpack.c.h.b16 %v4390
  %v4475 = vunpack.c.l.b16 %v4391
  %v4476 = vunpack.c.h.b16 %v4391
  %v4477 = vunpack.c.l.b16 %v4392
  %v4478 = vunpack.c.h.b16 %v4392
  %v4479 = vunpack.c.l.b16 %v4393
  %v4480 = vunpack.c.h.b16 %v4393
  %v4481 = vunpack.c.l.b16 %v4394
  %v4482 = vunpack.c.h.b16 %v4394
  %v4483 = vunpack.c.l.b16 %v4395
  %v4484 = vunpack.c.h.b16 %v4395
  %v4485 = vunpack.c.l.b16 %v4396
  %v4486 = vunpack.c.h.b16 %v4396
  %v4487 = vunpack.c.l.b16 %v4397
  %v4488 = vunpack.c.h.b16 %v4397
  %v4489 = vunpack.c.l.b16 %v4398
  %v4490 = vunpack.c.h.b16 %v4398
  %v4491 = vunpack.c.l.b16 %v4399
  %v4492 = vunpack.c.h.b16 %v4399
  %v4493 = vunpack.c.l.b16 %v4400
  %v4494 = vunpack.c.h.b16 %v4400
  %v4495 = vunpack.c.l.b16 %v4401
  %v4496 = vunpack.c.h.b16 %v4401
  %v4497 = vunpack.c.l.b16 %v4402
  %v4498 = vunpack.c.h.b16 %v4402
  %v4499 = vpack.c.b16 %v4439, %v4435
  %v4500 = vpack.c.b16 %v4440, %v4436
  %v4501 = vpack.c.b16 %v4441, %v4437
  %v4502 = vpack.c.b16 %v4442, %v4438
  %v4503 = vpack.c.b16 %v4447, %v4443
  %v4504 = vpack.c.b16 %v4448, %v4444
  %v4505 = vpack.c.b16 %v4449, %v4445
  %v4506 = vpack.c.b16 %v4450, %v4446
  %v4507 = vpack.c.b16 %v4455, %v4451
  %v4508 = vpack.c.b16 %v4456, %v4452
  %v4509 = vpack.c.b16 %v4457, %v4453
  %v4510 = vpack.c.b16 %v4458, %v4454
  %v4511 = vpack.c.b16 %v4463, %v4459
  %v4512 = vpack.c.b16 %v4464, %v4460
  %v4513 = vpack.c.b16 %v4465, %v4461
  %v4514 = vpack.c.b16 %v4466, %v4462
  %v4515 = vpack.c.b16 %v4471, %v4467
  %v4516 = vpack.c.b16 %v4472, %v4468
  %v4517 = vpack.c.b16 %v4473, %v4469
  %v4518 = vpack.c.b16 %v4474, %v4470
  %v4519 = vpack.c.b16 %v4479, %v4475
  %v4520 = vpack.c.b16 %v4480, %v4476
  %v4521 = vpack.c.b16 %v4481, %v4477
  %v4522 = vpack.c.b16 %v4482, %v4478
  %v4523 = vpack.c.b16 %v4487, %v4483
  %v4524 = vpack.c.b16 %v4488, %v4484
  %v4525 = vpack.c.b16 %v4489, %v4485
  %v4526 = vpack.c.b16 %v4490, %v4486
  %v4527 = vpack.c.b16 %v4495, %v4491
  %v4528 = vpack.c.b16 %v4496, %v4492
  %v4529 = vpack.c.b16 %v4497, %v4493
  %v4530 = vpack.c.b16 %v4498, %v4494
  %4563 = vmatpush.bf16.msra.mxu0 %v4527
  %4564 = vmatpush.bf16.msra.mxu0 %v4523
  %4565 = vmatpush.bf16.msra.mxu0 %v4519
  %4566 = vmatpush.bf16.msra.mxu0 %v4515
  %4567 = vmatpush.bf16.msra.mxu0 %v4511
  %4568 = vmatpush.bf16.msra.mxu0 %v4507
  %4569 = vmatpush.bf16.msra.mxu0 %v4503
  %4570 = vmatpush.bf16.msra.mxu0 %v4499
  %4571 = vmatmul.bf16.gmra.mxu0 %v4370
  %v4572 = vpop.f32.mrf.mxu0
  %v4573 = vadd.f32 0.0, %v4572
  %v4574 = vpop.f32.mrf.mxu0
  %4575 = vdwg.mxu0
  %4576 = vmatpush.bf16.msra.mxu0 %v4528
  %4577 = vmatpush.bf16.msra.mxu0 %v4524
  %4578 = vmatpush.bf16.msra.mxu0 %v4520
  %4579 = vmatpush.bf16.msra.mxu0 %v4516
  %4580 = vmatpush.bf16.msra.mxu0 %v4512
  %4581 = vmatpush.bf16.msra.mxu0 %v4508
  %4582 = vmatpush.bf16.msra.mxu0 %v4504
  %4583 = vmatpush.bf16.msra.mxu0 %v4500
  %4584 = vmatmul.bf16.gmra.mxu0 %v4370
  %v4585 = vpop.f32.mrf.mxu0
  %v4586 = vadd.f32 0.0, %v4585
  %v4587 = vpop.f32.mrf.mxu0
  %4588 = vdwg.mxu0
  %4589 = vmatpush.bf16.msra.mxu0 %v4529
  %4590 = vmatpush.bf16.msra.mxu0 %v4525
  %4591 = vmatpush.bf16.msra.mxu0 %v4521
  %4592 = vmatpush.bf16.msra.mxu0 %v4517
  %4593 = vmatpush.bf16.msra.mxu0 %v4513
  %4594 = vmatpush.bf16.msra.mxu0 %v4509
  %4595 = vmatpush.bf16.msra.mxu0 %v4505
  %4596 = vmatpush.bf16.msra.mxu0 %v4501
  %4597 = vmatmul.bf16.gmra.mxu0 %v4370
  %v4598 = vpop.f32.mrf.mxu0
  %v4599 = vadd.f32 0.0, %v4598
  %v4600 = vpop.f32.mrf.mxu0
  %4601 = vdwg.mxu0
  %4602 = vmatpush.bf16.msra.mxu0 %v4530
  %4603 = vmatpush.bf16.msra.mxu0 %v4526
  %4604 = vmatpush.bf16.msra.mxu0 %v4522
  %4605 = vmatpush.bf16.msra.mxu0 %v4518
  %4606 = vmatpush.bf16.msra.mxu0 %v4514
  %4607 = vmatpush.bf16.msra.mxu0 %v4510
  %4608 = vmatpush.bf16.msra.mxu0 %v4506
  %4609 = vmatpush.bf16.msra.mxu0 %v4502
  %4610 = vmatmul.bf16.gmra.mxu0 %v4370
  %v4611 = vpop.f32.mrf.mxu0
  %v4612 = vadd.f32 0.0, %v4611
  %v4613 = vpop.f32.mrf.mxu0
  %4614 = vdwg.mxu0
  %v4615 = vadd.f32 %v4365, %v4573
  %v4616 = vadd.f32 %v4366, %v4586
  %v4617 = vadd.f32 %v4367, %v4599
  %v4618 = vadd.f32 %v4368, %v4612
  %v4619 = vxor.u32 %v4615, 2147483648
  %v4620 = vxor.u32 %v4616, 2147483648
  %v4621 = vmul.f32 %v4619, 1.442695
  %v4622 = vpow.pop %v4621
  %v4623 = vmul.f32 %v4620, 1.442695
  %v4624 = vpow.pop %v4623
  %v4625 = vadd.f32 %v4622, 1.0
  %v4626 = vadd.f32 %v4624, 1.0
  %v4627 = vrcp.pop %v4625
  %v4628 = vmul.f32 %v4625, %v4627
  %v4629 = vsub.f32 1.0, %v4628
  %v4630 = vmul.f32 %v4627, %v4629
  %v4631 = vadd.f32 %v4627, %v4630
  %vm4632 = vweird.f32 %v4625
  %vm4633 = vweird.f32 %v4627
  %vm4634 = vmor %vm4632, %vm4633
  %v4635 = vsel %vm4634, %v4627, %v4631
  %v4636 = vand.u32 2147483647, %v4625
  %vm4637 = vcmp.eq.f32.partialorder %v4636, 8.507059e+37
  %v4638 = vand.u32 %v4625, 2147483648
  %v4639 = vor.u32 1.1754944e-38, %v4638
  %v4640 = vsel %vm4637, %v4639, %v4635
  %v4641 = vmul.f32 1.0, %v4640
  %v4642 = vrcp.pop %v4626
  %v4643 = vmul.f32 %v4626, %v4642
  %v4644 = vsub.f32 1.0, %v4643
  %v4645 = vmul.f32 %v4642, %v4644
  %v4646 = vadd.f32 %v4642, %v4645
  %vm4647 = vweird.f32 %v4626
  %vm4648 = vweird.f32 %v4642
  %vm4649 = vmor %vm4647, %vm4648
  %v4650 = vsel %vm4649, %v4642, %v4646
  %v4651 = vand.u32 2147483647, %v4626
  %vm4652 = vcmp.eq.f32.partialorder %v4651, 8.507059e+37
  %v4653 = vand.u32 %v4626, 2147483648
  %v4654 = vor.u32 1.1754944e-38, %v4653
  %v4655 = vsel %vm4652, %v4654, %v4650
  %v4656 = vmul.f32 1.0, %v4655
  %v4657 = vtanh.pop %v4617
  %v4658 = vxor.u32 %v4618, 2147483648
  %v4659 = vmul.f32 %v4658, 1.442695
  %v4660 = vpow.pop %v4659
  %v4661 = vadd.f32 %v4660, 1.0
  %v4662 = vrcp.pop %v4661
  %v4663 = vmul.f32 %v4661, %v4662
  %v4664 = vsub.f32 1.0, %v4663
  %v4665 = vmul.f32 %v4662, %v4664
  %v4666 = vadd.f32 %v4662, %v4665
  %vm4667 = vweird.f32 %v4661
  %vm4668 = vweird.f32 %v4662
  %vm4669 = vmor %vm4667, %vm4668
  %v4670 = vsel %vm4669, %v4662, %v4666
  %v4671 = vand.u32 2147483647, %v4661
  %vm4672 = vcmp.eq.f32.partialorder %v4671, 8.507059e+37
  %v4673 = vand.u32 %v4661, 2147483648
  %v4674 = vor.u32 1.1754944e-38, %v4673
  %v4675 = vsel %vm4672, %v4674, %v4670
  %v4676 = vmul.f32 1.0, %v4675
  %v4677 = vld [vmem:[#allocation3] sm:$0xff]
  %v4678 = vmul.f32 %v4656, %v4677
  %v4679 = vmul.f32 %v4641, %v4657
  %v4680 = vadd.f32 %v4678, %v4679
  %v4681 = vtanh.pop %v4680
  %v4682 = vmul.f32 %v4676, %v4681
  %4683 = vst [vmem:[#allocation3] sm:$0xff] %v4680
  %4684 = vst [vmem:[#allocation2] sm:$0xff] %v4682
  %v4686 = vrot.slane %v4682, 1
  %v4687 = vrot.slane %v4682, 2
  %v4688 = vrot.slane %v4682, 3
  %v4689 = vrot.slane %v4682, 4
  %v4690 = vrot.slane %v4682, 5
  %v4691 = vrot.slane %v4682, 6
  %v4692 = vrot.slane %v4682, 7
  %v4700 = vpack.c.bf16 %v4682, %v4682
  %v4701 = vpack.c.bf16 %v4686, %v4686
  %v4702 = vpack.c.bf16 %v4687, %v4687
  %v4703 = vpack.c.bf16 %v4688, %v4688
  %v4704 = vpack.c.bf16 %v4689, %v4689
  %v4705 = vpack.c.bf16 %v4690, %v4690
  %v4706 = vpack.c.bf16 %v4691, %v4691
  %v4707 = vpack.c.bf16 %v4692, %v4692
  %v4709 = vshll.u32 %v4700, 16
  %v4711 = vrot.slane %v4709, 7
  %v4713 = vshll.u32 %v4701, 16
  %v4715 = vrot.slane %v4713, 7
  %v4717 = vshll.u32 %v4702, 16
  %v4719 = vrot.slane %v4717, 7
  %v4721 = vshll.u32 %v4703, 16
  %v4723 = vrot.slane %v4721, 7
  %v4725 = vshll.u32 %v4704, 16
  %v4727 = vrot.slane %v4725, 7
  %v4729 = vshll.u32 %v4705, 16
  %v4731 = vrot.slane %v4729, 7
  %v4733 = vshll.u32 %v4706, 16
  %v4735 = vrot.slane %v4733, 7
  %v4737 = vshll.u32 %v4707, 16
  %v4739 = vrot.slane %v4737, 7
  %v4748 = vld [vmem:[%s2 + $0x4] sm:$0x2]
  %v4749 = vsel %vm1569, %v4711, %v4748
  %4750 = vst [vmem:[%s2 + $0x4] sm:$0x2] %v4749
  %v4751 = vld [vmem:[%s2 + $0xc] sm:$0x2]
  %v4752 = vsel %vm1569, %v4715, %v4751
  %4753 = vst [vmem:[%s2 + $0xc] sm:$0x2] %v4752
  %v4754 = vld [vmem:[%s2 + $0x14] sm:$0x2]
  %v4755 = vsel %vm1569, %v4719, %v4754
  %4756 = vst [vmem:[%s2 + $0x14] sm:$0x2] %v4755
  %v4757 = vld [vmem:[%s2 + $0x1c] sm:$0x2]
  %v4758 = vsel %vm1569, %v4723, %v4757
  %4759 = vst [vmem:[%s2 + $0x1c] sm:$0x2] %v4758
  %v4760 = vld [vmem:[%s2 + $0x24] sm:$0x2]
  %v4761 = vsel %vm1569, %v4727, %v4760
  %4762 = vst [vmem:[%s2 + $0x24] sm:$0x2] %v4761
  %v4763 = vld [vmem:[%s2 + $0x2c] sm:$0x2]
  %v4764 = vsel %vm1569, %v4731, %v4763
  %4765 = vst [vmem:[%s2 + $0x2c] sm:$0x2] %v4764
  %v4766 = vld [vmem:[%s2 + $0x34] sm:$0x2]
  %v4767 = vsel %vm1569, %v4735, %v4766
  %4768 = vst [vmem:[%s2 + $0x34] sm:$0x2] %v4767
  %v4769 = vld [vmem:[%s2 + $0x3c] sm:$0x2]
  %v4770 = vsel %vm1569, %v4739, %v4769
  %4771 = vst [vmem:[%s2 + $0x3c] sm:$0x2] %v4770
  %s4772 = scalar_lea.vmem %s0, 384
  %v4773 = vld [vmem:[%s4772] sm:$0xff]
  %v4774 = vld [vmem:[%s4772 + $0x8] sm:$0xff]
  %v4775 = vld [vmem:[%s4772 + $0x10] sm:$0xff]
  %v4776 = vld [vmem:[%s4772 + $0x18] sm:$0xff]
  %v4777 = vld [vmem:[#allocation2] sm:$0xff]
  %v4778 = vpack.c.bf16 %v4777, %v4777
  %v4779 = vld [vmem:[%s1] sm:$0xff]
  %v4780 = vld [vmem:[%s1 + $0x8] sm:$0xff]
  %v4781 = vld [vmem:[%s1 + $0x10] sm:$0xff]
  %v4782 = vld [vmem:[%s1 + $0x18] sm:$0xff]
  %v4783 = vld [vmem:[%s1 + $0x20] sm:$0xff]
  %v4784 = vld [vmem:[%s1 + $0x28] sm:$0xff]
  %v4785 = vld [vmem:[%s1 + $0x30] sm:$0xff]
  %v4786 = vld [vmem:[%s1 + $0x38] sm:$0xff]
  %v4787 = vld [vmem:[%s1 + $0x40] sm:$0xff]
  %v4788 = vld [vmem:[%s1 + $0x48] sm:$0xff]
  %v4789 = vld [vmem:[%s1 + $0x50] sm:$0xff]
  %v4790 = vld [vmem:[%s1 + $0x58] sm:$0xff]
  %v4791 = vld [vmem:[%s1 + $0x60] sm:$0xff]
  %v4792 = vld [vmem:[%s1 + $0x68] sm:$0xff]
  %v4793 = vld [vmem:[%s1 + $0x70] sm:$0xff]
  %v4794 = vld [vmem:[%s1 + $0x78] sm:$0xff]
  %v4795 = vld [vmem:[%s1 + $0x80] sm:$0xff]
  %v4796 = vld [vmem:[%s1 + $0x88] sm:$0xff]
  %v4797 = vld [vmem:[%s1 + $0x90] sm:$0xff]
  %v4798 = vld [vmem:[%s1 + $0x98] sm:$0xff]
  %v4799 = vld [vmem:[%s1 + $0xa0] sm:$0xff]
  %v4800 = vld [vmem:[%s1 + $0xa8] sm:$0xff]
  %v4801 = vld [vmem:[%s1 + $0xb0] sm:$0xff]
  %v4802 = vld [vmem:[%s1 + $0xb8] sm:$0xff]
  %v4803 = vld [vmem:[%s1 + $0xc0] sm:$0xff]
  %v4804 = vld [vmem:[%s1 + $0xc8] sm:$0xff]
  %v4805 = vld [vmem:[%s1 + $0xd0] sm:$0xff]
  %v4806 = vld [vmem:[%s1 + $0xd8] sm:$0xff]
  %v4807 = vld [vmem:[%s1 + $0xe0] sm:$0xff]
  %v4808 = vld [vmem:[%s1 + $0xe8] sm:$0xff]
  %v4809 = vld [vmem:[%s1 + $0xf0] sm:$0xff]
  %v4810 = vld [vmem:[%s1 + $0xf8] sm:$0xff]
  %v4843 = vunpack.c.l.b16 %v4779
  %v4844 = vunpack.c.h.b16 %v4779
  %v4845 = vunpack.c.l.b16 %v4780
  %v4846 = vunpack.c.h.b16 %v4780
  %v4847 = vunpack.c.l.b16 %v4781
  %v4848 = vunpack.c.h.b16 %v4781
  %v4849 = vunpack.c.l.b16 %v4782
  %v4850 = vunpack.c.h.b16 %v4782
  %v4851 = vunpack.c.l.b16 %v4783
  %v4852 = vunpack.c.h.b16 %v4783
  %v4853 = vunpack.c.l.b16 %v4784
  %v4854 = vunpack.c.h.b16 %v4784
  %v4855 = vunpack.c.l.b16 %v4785
  %v4856 = vunpack.c.h.b16 %v4785
  %v4857 = vunpack.c.l.b16 %v4786
  %v4858 = vunpack.c.h.b16 %v4786
  %v4859 = vunpack.c.l.b16 %v4787
  %v4860 = vunpack.c.h.b16 %v4787
  %v4861 = vunpack.c.l.b16 %v4788
  %v4862 = vunpack.c.h.b16 %v4788
  %v4863 = vunpack.c.l.b16 %v4789
  %v4864 = vunpack.c.h.b16 %v4789
  %v4865 = vunpack.c.l.b16 %v4790
  %v4866 = vunpack.c.h.b16 %v4790
  %v4867 = vunpack.c.l.b16 %v4791
  %v4868 = vunpack.c.h.b16 %v4791
  %v4869 = vunpack.c.l.b16 %v4792
  %v4870 = vunpack.c.h.b16 %v4792
  %v4871 = vunpack.c.l.b16 %v4793
  %v4872 = vunpack.c.h.b16 %v4793
  %v4873 = vunpack.c.l.b16 %v4794
  %v4874 = vunpack.c.h.b16 %v4794
  %v4875 = vunpack.c.l.b16 %v4795
  %v4876 = vunpack.c.h.b16 %v4795
  %v4877 = vunpack.c.l.b16 %v4796
  %v4878 = vunpack.c.h.b16 %v4796
  %v4879 = vunpack.c.l.b16 %v4797
  %v4880 = vunpack.c.h.b16 %v4797
  %v4881 = vunpack.c.l.b16 %v4798
  %v4882 = vunpack.c.h.b16 %v4798
  %v4883 = vunpack.c.l.b16 %v4799
  %v4884 = vunpack.c.h.b16 %v4799
  %v4885 = vunpack.c.l.b16 %v4800
  %v4886 = vunpack.c.h.b16 %v4800
  %v4887 = vunpack.c.l.b16 %v4801
  %v4888 = vunpack.c.h.b16 %v4801
  %v4889 = vunpack.c.l.b16 %v4802
  %v4890 = vunpack.c.h.b16 %v4802
  %v4891 = vunpack.c.l.b16 %v4803
  %v4892 = vunpack.c.h.b16 %v4803
  %v4893 = vunpack.c.l.b16 %v4804
  %v4894 = vunpack.c.h.b16 %v4804
  %v4895 = vunpack.c.l.b16 %v4805
  %v4896 = vunpack.c.h.b16 %v4805
  %v4897 = vunpack.c.l.b16 %v4806
  %v4898 = vunpack.c.h.b16 %v4806
  %v4899 = vunpack.c.l.b16 %v4807
  %v4900 = vunpack.c.h.b16 %v4807
  %v4901 = vunpack.c.l.b16 %v4808
  %v4902 = vunpack.c.h.b16 %v4808
  %v4903 = vunpack.c.l.b16 %v4809
  %v4904 = vunpack.c.h.b16 %v4809
  %v4905 = vunpack.c.l.b16 %v4810
  %v4906 = vunpack.c.h.b16 %v4810
  %v4907 = vpack.c.b16 %v4847, %v4843
  %v4908 = vpack.c.b16 %v4848, %v4844
  %v4909 = vpack.c.b16 %v4849, %v4845
  %v4910 = vpack.c.b16 %v4850, %v4846
  %v4911 = vpack.c.b16 %v4855, %v4851
  %v4912 = vpack.c.b16 %v4856, %v4852
  %v4913 = vpack.c.b16 %v4857, %v4853
  %v4914 = vpack.c.b16 %v4858, %v4854
  %v4915 = vpack.c.b16 %v4863, %v4859
  %v4916 = vpack.c.b16 %v4864, %v4860
  %v4917 = vpack.c.b16 %v4865, %v4861
  %v4918 = vpack.c.b16 %v4866, %v4862
  %v4919 = vpack.c.b16 %v4871, %v4867
  %v4920 = vpack.c.b16 %v4872, %v4868
  %v4921 = vpack.c.b16 %v4873, %v4869
  %v4922 = vpack.c.b16 %v4874, %v4870
  %v4923 = vpack.c.b16 %v4879, %v4875
  %v4924 = vpack.c.b16 %v4880, %v4876
  %v4925 = vpack.c.b16 %v4881, %v4877
  %v4926 = vpack.c.b16 %v4882, %v4878
  %v4927 = vpack.c.b16 %v4887, %v4883
  %v4928 = vpack.c.b16 %v4888, %v4884
  %v4929 = vpack.c.b16 %v4889, %v4885
  %v4930 = vpack.c.b16 %v4890, %v4886
  %v4931 = vpack.c.b16 %v4895, %v4891
  %v4932 = vpack.c.b16 %v4896, %v4892
  %v4933 = vpack.c.b16 %v4897, %v4893
  %v4934 = vpack.c.b16 %v4898, %v4894
  %v4935 = vpack.c.b16 %v4903, %v4899
  %v4936 = vpack.c.b16 %v4904, %v4900
  %v4937 = vpack.c.b16 %v4905, %v4901
  %v4938 = vpack.c.b16 %v4906, %v4902
  %4971 = vmatpush.bf16.msra.mxu0 %v4935
  %4972 = vmatpush.bf16.msra.mxu0 %v4931
  %4973 = vmatpush.bf16.msra.mxu0 %v4927
  %4974 = vmatpush.bf16.msra.mxu0 %v4923
  %4975 = vmatpush.bf16.msra.mxu0 %v4919
  %4976 = vmatpush.bf16.msra.mxu0 %v4915
  %4977 = vmatpush.bf16.msra.mxu0 %v4911
  %4978 = vmatpush.bf16.msra.mxu0 %v4907
  %4979 = vmatmul.bf16.gmra.mxu0 %v4778
  %v4980 = vpop.f32.mrf.mxu0
  %v4981 = vadd.f32 0.0, %v4980
  %v4982 = vpop.f32.mrf.mxu0
  %4983 = vdwg.mxu0
  %4984 = vmatpush.bf16.msra.mxu0 %v4936
  %4985 = vmatpush.bf16.msra.mxu0 %v4932
  %4986 = vmatpush.bf16.msra.mxu0 %v4928
  %4987 = vmatpush.bf16.msra.mxu0 %v4924
  %4988 = vmatpush.bf16.msra.mxu0 %v4920
  %4989 = vmatpush.bf16.msra.mxu0 %v4916
  %4990 = vmatpush.bf16.msra.mxu0 %v4912
  %4991 = vmatpush.bf16.msra.mxu0 %v4908
  %4992 = vmatmul.bf16.gmra.mxu0 %v4778
  %v4993 = vpop.f32.mrf.mxu0
  %v4994 = vadd.f32 0.0, %v4993
  %v4995 = vpop.f32.mrf.mxu0
  %4996 = vdwg.mxu0
  %4997 = vmatpush.bf16.msra.mxu0 %v4937
  %4998 = vmatpush.bf16.msra.mxu0 %v4933
  %4999 = vmatpush.bf16.msra.mxu0 %v4929
  %5000 = vmatpush.bf16.msra.mxu0 %v4925
  %5001 = vmatpush.bf16.msra.mxu0 %v4921
  %5002 = vmatpush.bf16.msra.mxu0 %v4917
  %5003 = vmatpush.bf16.msra.mxu0 %v4913
  %5004 = vmatpush.bf16.msra.mxu0 %v4909
  %5005 = vmatmul.bf16.gmra.mxu0 %v4778
  %v5006 = vpop.f32.mrf.mxu0
  %v5007 = vadd.f32 0.0, %v5006
  %v5008 = vpop.f32.mrf.mxu0
  %5009 = vdwg.mxu0
  %5010 = vmatpush.bf16.msra.mxu0 %v4938
  %5011 = vmatpush.bf16.msra.mxu0 %v4934
  %5012 = vmatpush.bf16.msra.mxu0 %v4930
  %5013 = vmatpush.bf16.msra.mxu0 %v4926
  %5014 = vmatpush.bf16.msra.mxu0 %v4922
  %5015 = vmatpush.bf16.msra.mxu0 %v4918
  %5016 = vmatpush.bf16.msra.mxu0 %v4914
  %5017 = vmatpush.bf16.msra.mxu0 %v4910
  %5018 = vmatmul.bf16.gmra.mxu0 %v4778
  %v5019 = vpop.f32.mrf.mxu0
  %v5020 = vadd.f32 0.0, %v5019
  %v5021 = vpop.f32.mrf.mxu0
  %5022 = vdwg.mxu0
  %v5023 = vadd.f32 %v4773, %v4981
  %v5024 = vadd.f32 %v4774, %v4994
  %v5025 = vadd.f32 %v4775, %v5007
  %v5026 = vadd.f32 %v4776, %v5020
  %v5027 = vxor.u32 %v5023, 2147483648
  %v5028 = vxor.u32 %v5024, 2147483648
  %v5029 = vmul.f32 %v5027, 1.442695
  %v5030 = vpow.pop %v5029
  %v5031 = vmul.f32 %v5028, 1.442695
  %v5032 = vpow.pop %v5031
  %v5033 = vadd.f32 %v5030, 1.0
  %v5034 = vadd.f32 %v5032, 1.0
  %v5035 = vrcp.pop %v5033
  %v5036 = vmul.f32 %v5033, %v5035
  %v5037 = vsub.f32 1.0, %v5036
  %v5038 = vmul.f32 %v5035, %v5037
  %v5039 = vadd.f32 %v5035, %v5038
  %vm5040 = vweird.f32 %v5033
  %vm5041 = vweird.f32 %v5035
  %vm5042 = vmor %vm5040, %vm5041
  %v5043 = vsel %vm5042, %v5035, %v5039
  %v5044 = vand.u32 2147483647, %v5033
  %vm5045 = vcmp.eq.f32.partialorder %v5044, 8.507059e+37
  %v5046 = vand.u32 %v5033, 2147483648
  %v5047 = vor.u32 1.1754944e-38, %v5046
  %v5048 = vsel %vm5045, %v5047, %v5043
  %v5049 = vmul.f32 1.0, %v5048
  %v5050 = vrcp.pop %v5034
  %v5051 = vmul.f32 %v5034, %v5050
  %v5052 = vsub.f32 1.0, %v5051
  %v5053 = vmul.f32 %v5050, %v5052
  %v5054 = vadd.f32 %v5050, %v5053
  %vm5055 = vweird.f32 %v5034
  %vm5056 = vweird.f32 %v5050
  %vm5057 = vmor %vm5055, %vm5056
  %v5058 = vsel %vm5057, %v5050, %v5054
  %v5059 = vand.u32 2147483647, %v5034
  %vm5060 = vcmp.eq.f32.partialorder %v5059, 8.507059e+37
  %v5061 = vand.u32 %v5034, 2147483648
  %v5062 = vor.u32 1.1754944e-38, %v5061
  %v5063 = vsel %vm5060, %v5062, %v5058
  %v5064 = vmul.f32 1.0, %v5063
  %v5065 = vtanh.pop %v5025
  %v5066 = vxor.u32 %v5026, 2147483648
  %v5067 = vmul.f32 %v5066, 1.442695
  %v5068 = vpow.pop %v5067
  %v5069 = vadd.f32 %v5068, 1.0
  %v5070 = vrcp.pop %v5069
  %v5071 = vmul.f32 %v5069, %v5070
  %v5072 = vsub.f32 1.0, %v5071
  %v5073 = vmul.f32 %v5070, %v5072
  %v5074 = vadd.f32 %v5070, %v5073
  %vm5075 = vweird.f32 %v5069
  %vm5076 = vweird.f32 %v5070
  %vm5077 = vmor %vm5075, %vm5076
  %v5078 = vsel %vm5077, %v5070, %v5074
  %v5079 = vand.u32 2147483647, %v5069
  %vm5080 = vcmp.eq.f32.partialorder %v5079, 8.507059e+37
  %v5081 = vand.u32 %v5069, 2147483648
  %v5082 = vor.u32 1.1754944e-38, %v5081
  %v5083 = vsel %vm5080, %v5082, %v5078
  %v5084 = vmul.f32 1.0, %v5083
  %v5085 = vld [vmem:[#allocation3] sm:$0xff]
  %v5086 = vmul.f32 %v5064, %v5085
  %v5087 = vmul.f32 %v5049, %v5065
  %v5088 = vadd.f32 %v5086, %v5087
  %v5089 = vtanh.pop %v5088
  %v5090 = vmul.f32 %v5084, %v5089
  %5091 = vst [vmem:[#allocation3] sm:$0xff] %v5088
  %5092 = vst [vmem:[#allocation2] sm:$0xff] %v5090
  %v5094 = vrot.slane %v5090, 1
  %v5095 = vrot.slane %v5090, 2
  %v5096 = vrot.slane %v5090, 3
  %v5097 = vrot.slane %v5090, 4
  %v5098 = vrot.slane %v5090, 5
  %v5099 = vrot.slane %v5090, 6
  %v5100 = vrot.slane %v5090, 7
  %v5108 = vpack.c.bf16 %v5090, %v5090
  %v5109 = vpack.c.bf16 %v5094, %v5094
  %v5110 = vpack.c.bf16 %v5095, %v5095
  %v5111 = vpack.c.bf16 %v5096, %v5096
  %v5112 = vpack.c.bf16 %v5097, %v5097
  %v5113 = vpack.c.bf16 %v5098, %v5098
  %v5114 = vpack.c.bf16 %v5099, %v5099
  %v5115 = vpack.c.bf16 %v5100, %v5100
  %v5124 = vrot.slane %v5108, 6
  %v5125 = vrot.slane %v5109, 6
  %v5126 = vrot.slane %v5110, 6
  %v5127 = vrot.slane %v5111, 6
  %v5128 = vrot.slane %v5112, 6
  %v5129 = vrot.slane %v5113, 6
  %v5130 = vrot.slane %v5114, 6
  %v5131 = vrot.slane %v5115, 6
  %v5140 = vld [vmem:[%s2 + $0x4] sm:$0x4]
  %v5141 = vsel %vm1964, %v5124, %v5140
  %5142 = vst [vmem:[%s2 + $0x4] sm:$0x4] %v5141
  %v5143 = vld [vmem:[%s2 + $0xc] sm:$0x4]
  %v5144 = vsel %vm1964, %v5125, %v5143
  %5145 = vst [vmem:[%s2 + $0xc] sm:$0x4] %v5144
  %v5146 = vld [vmem:[%s2 + $0x14] sm:$0x4]
  %v5147 = vsel %vm1964, %v5126, %v5146
  %5148 = vst [vmem:[%s2 + $0x14] sm:$0x4] %v5147
  %v5149 = vld [vmem:[%s2 + $0x1c] sm:$0x4]
  %v5150 = vsel %vm1964, %v5127, %v5149
  %5151 = vst [vmem:[%s2 + $0x1c] sm:$0x4] %v5150
  %v5152 = vld [vmem:[%s2 + $0x24] sm:$0x4]
  %v5153 = vsel %vm1964, %v5128, %v5152
  %5154 = vst [vmem:[%s2 + $0x24] sm:$0x4] %v5153
  %v5155 = vld [vmem:[%s2 + $0x2c] sm:$0x4]
  %v5156 = vsel %vm1964, %v5129, %v5155
  %5157 = vst [vmem:[%s2 + $0x2c] sm:$0x4] %v5156
  %v5158 = vld [vmem:[%s2 + $0x34] sm:$0x4]
  %v5159 = vsel %vm1964, %v5130, %v5158
  %5160 = vst [vmem:[%s2 + $0x34] sm:$0x4] %v5159
  %v5161 = vld [vmem:[%s2 + $0x3c] sm:$0x4]
  %v5162 = vsel %vm1964, %v5131, %v5161
  %5163 = vst [vmem:[%s2 + $0x3c] sm:$0x4] %v5162
  %s5164 = scalar_lea.vmem %s0, 416
  %v5165 = vld [vmem:[%s5164] sm:$0xff]
  %v5166 = vld [vmem:[%s5164 + $0x8] sm:$0xff]
  %v5167 = vld [vmem:[%s5164 + $0x10] sm:$0xff]
  %v5168 = vld [vmem:[%s5164 + $0x18] sm:$0xff]
  %v5169 = vld [vmem:[#allocation2] sm:$0xff]
  %v5170 = vpack.c.bf16 %v5169, %v5169
  %v5171 = vld [vmem:[%s1] sm:$0xff]
  %v5172 = vld [vmem:[%s1 + $0x8] sm:$0xff]
  %v5173 = vld [vmem:[%s1 + $0x10] sm:$0xff]
  %v5174 = vld [vmem:[%s1 + $0x18] sm:$0xff]
  %v5175 = vld [vmem:[%s1 + $0x20] sm:$0xff]
  %v5176 = vld [vmem:[%s1 + $0x28] sm:$0xff]
  %v5177 = vld [vmem:[%s1 + $0x30] sm:$0xff]
  %v5178 = vld [vmem:[%s1 + $0x38] sm:$0xff]
  %v5179 = vld [vmem:[%s1 + $0x40] sm:$0xff]
  %v5180 = vld [vmem:[%s1 + $0x48] sm:$0xff]
  %v5181 = vld [vmem:[%s1 + $0x50] sm:$0xff]
  %v5182 = vld [vmem:[%s1 + $0x58] sm:$0xff]
  %v5183 = vld [vmem:[%s1 + $0x60] sm:$0xff]
  %v5184 = vld [vmem:[%s1 + $0x68] sm:$0xff]
  %v5185 = vld [vmem:[%s1 + $0x70] sm:$0xff]
  %v5186 = vld [vmem:[%s1 + $0x78] sm:$0xff]
  %v5187 = vld [vmem:[%s1 + $0x80] sm:$0xff]
  %v5188 = vld [vmem:[%s1 + $0x88] sm:$0xff]
  %v5189 = vld [vmem:[%s1 + $0x90] sm:$0xff]
  %v5190 = vld [vmem:[%s1 + $0x98] sm:$0xff]
  %v5191 = vld [vmem:[%s1 + $0xa0] sm:$0xff]
  %v5192 = vld [vmem:[%s1 + $0xa8] sm:$0xff]
  %v5193 = vld [vmem:[%s1 + $0xb0] sm:$0xff]
  %v5194 = vld [vmem:[%s1 + $0xb8] sm:$0xff]
  %v5195 = vld [vmem:[%s1 + $0xc0] sm:$0xff]
  %v5196 = vld [vmem:[%s1 + $0xc8] sm:$0xff]
  %v5197 = vld [vmem:[%s1 + $0xd0] sm:$0xff]
  %v5198 = vld [vmem:[%s1 + $0xd8] sm:$0xff]
  %v5199 = vld [vmem:[%s1 + $0xe0] sm:$0xff]
  %v5200 = vld [vmem:[%s1 + $0xe8] sm:$0xff]
  %v5201 = vld [vmem:[%s1 + $0xf0] sm:$0xff]
  %v5202 = vld [vmem:[%s1 + $0xf8] sm:$0xff]
  %v5235 = vunpack.c.l.b16 %v5171
  %v5236 = vunpack.c.h.b16 %v5171
  %v5237 = vunpack.c.l.b16 %v5172
  %v5238 = vunpack.c.h.b16 %v5172
  %v5239 = vunpack.c.l.b16 %v5173
  %v5240 = vunpack.c.h.b16 %v5173
  %v5241 = vunpack.c.l.b16 %v5174
  %v5242 = vunpack.c.h.b16 %v5174
  %v5243 = vunpack.c.l.b16 %v5175
  %v5244 = vunpack.c.h.b16 %v5175
  %v5245 = vunpack.c.l.b16 %v5176
  %v5246 = vunpack.c.h.b16 %v5176
  %v5247 = vunpack.c.l.b16 %v5177
  %v5248 = vunpack.c.h.b16 %v5177
  %v5249 = vunpack.c.l.b16 %v5178
  %v5250 = vunpack.c.h.b16 %v5178
  %v5251 = vunpack.c.l.b16 %v5179
  %v5252 = vunpack.c.h.b16 %v5179
  %v5253 = vunpack.c.l.b16 %v5180
  %v5254 = vunpack.c.h.b16 %v5180
  %v5255 = vunpack.c.l.b16 %v5181
  %v5256 = vunpack.c.h.b16 %v5181
  %v5257 = vunpack.c.l.b16 %v5182
  %v5258 = vunpack.c.h.b16 %v5182
  %v5259 = vunpack.c.l.b16 %v5183
  %v5260 = vunpack.c.h.b16 %v5183
  %v5261 = vunpack.c.l.b16 %v5184
  %v5262 = vunpack.c.h.b16 %v5184
  %v5263 = vunpack.c.l.b16 %v5185
  %v5264 = vunpack.c.h.b16 %v5185
  %v5265 = vunpack.c.l.b16 %v5186
  %v5266 = vunpack.c.h.b16 %v5186
  %v5267 = vunpack.c.l.b16 %v5187
  %v5268 = vunpack.c.h.b16 %v5187
  %v5269 = vunpack.c.l.b16 %v5188
  %v5270 = vunpack.c.h.b16 %v5188
  %v5271 = vunpack.c.l.b16 %v5189
  %v5272 = vunpack.c.h.b16 %v5189
  %v5273 = vunpack.c.l.b16 %v5190
  %v5274 = vunpack.c.h.b16 %v5190
  %v5275 = vunpack.c.l.b16 %v5191
  %v5276 = vunpack.c.h.b16 %v5191
  %v5277 = vunpack.c.l.b16 %v5192
  %v5278 = vunpack.c.h.b16 %v5192
  %v5279 = vunpack.c.l.b16 %v5193
  %v5280 = vunpack.c.h.b16 %v5193
  %v5281 = vunpack.c.l.b16 %v5194
  %v5282 = vunpack.c.h.b16 %v5194
  %v5283 = vunpack.c.l.b16 %v5195
  %v5284 = vunpack.c.h.b16 %v5195
  %v5285 = vunpack.c.l.b16 %v5196
  %v5286 = vunpack.c.h.b16 %v5196
  %v5287 = vunpack.c.l.b16 %v5197
  %v5288 = vunpack.c.h.b16 %v5197
  %v5289 = vunpack.c.l.b16 %v5198
  %v5290 = vunpack.c.h.b16 %v5198
  %v5291 = vunpack.c.l.b16 %v5199
  %v5292 = vunpack.c.h.b16 %v5199
  %v5293 = vunpack.c.l.b16 %v5200
  %v5294 = vunpack.c.h.b16 %v5200
  %v5295 = vunpack.c.l.b16 %v5201
  %v5296 = vunpack.c.h.b16 %v5201
  %v5297 = vunpack.c.l.b16 %v5202
  %v5298 = vunpack.c.h.b16 %v5202
  %v5299 = vpack.c.b16 %v5239, %v5235
  %v5300 = vpack.c.b16 %v5240, %v5236
  %v5301 = vpack.c.b16 %v5241, %v5237
  %v5302 = vpack.c.b16 %v5242, %v5238
  %v5303 = vpack.c.b16 %v5247, %v5243
  %v5304 = vpack.c.b16 %v5248, %v5244
  %v5305 = vpack.c.b16 %v5249, %v5245
  %v5306 = vpack.c.b16 %v5250, %v5246
  %v5307 = vpack.c.b16 %v5255, %v5251
  %v5308 = vpack.c.b16 %v5256, %v5252
  %v5309 = vpack.c.b16 %v5257, %v5253
  %v5310 = vpack.c.b16 %v5258, %v5254
  %v5311 = vpack.c.b16 %v5263, %v5259
  %v5312 = vpack.c.b16 %v5264, %v5260
  %v5313 = vpack.c.b16 %v5265, %v5261
  %v5314 = vpack.c.b16 %v5266, %v5262
  %v5315 = vpack.c.b16 %v5271, %v5267
  %v5316 = vpack.c.b16 %v5272, %v5268
  %v5317 = vpack.c.b16 %v5273, %v5269
  %v5318 = vpack.c.b16 %v5274, %v5270
  %v5319 = vpack.c.b16 %v5279, %v5275
  %v5320 = vpack.c.b16 %v5280, %v5276
  %v5321 = vpack.c.b16 %v5281, %v5277
  %v5322 = vpack.c.b16 %v5282, %v5278
  %v5323 = vpack.c.b16 %v5287, %v5283
  %v5324 = vpack.c.b16 %v5288, %v5284
  %v5325 = vpack.c.b16 %v5289, %v5285
  %v5326 = vpack.c.b16 %v5290, %v5286
  %v5327 = vpack.c.b16 %v5295, %v5291
  %v5328 = vpack.c.b16 %v5296, %v5292
  %v5329 = vpack.c.b16 %v5297, %v5293
  %v5330 = vpack.c.b16 %v5298, %v5294
  %5363 = vmatpush.bf16.msra.mxu0 %v5327
  %5364 = vmatpush.bf16.msra.mxu0 %v5323
  %5365 = vmatpush.bf16.msra.mxu0 %v5319
  %5366 = vmatpush.bf16.msra.mxu0 %v5315
  %5367 = vmatpush.bf16.msra.mxu0 %v5311
  %5368 = vmatpush.bf16.msra.mxu0 %v5307
  %5369 = vmatpush.bf16.msra.mxu0 %v5303
  %5370 = vmatpush.bf16.msra.mxu0 %v5299
  %5371 = vmatmul.bf16.gmra.mxu0 %v5170
  %v5372 = vpop.f32.mrf.mxu0
  %v5373 = vadd.f32 0.0, %v5372
  %v5374 = vpop.f32.mrf.mxu0
  %5375 = vdwg.mxu0
  %5376 = vmatpush.bf16.msra.mxu0 %v5328
  %5377 = vmatpush.bf16.msra.mxu0 %v5324
  %5378 = vmatpush.bf16.msra.mxu0 %v5320
  %5379 = vmatpush.bf16.msra.mxu0 %v5316
  %5380 = vmatpush.bf16.msra.mxu0 %v5312
  %5381 = vmatpush.bf16.msra.mxu0 %v5308
  %5382 = vmatpush.bf16.msra.mxu0 %v5304
  %5383 = vmatpush.bf16.msra.mxu0 %v5300
  %5384 = vmatmul.bf16.gmra.mxu0 %v5170
  %v5385 = vpop.f32.mrf.mxu0
  %v5386 = vadd.f32 0.0, %v5385
  %v5387 = vpop.f32.mrf.mxu0
  %5388 = vdwg.mxu0
  %5389 = vmatpush.bf16.msra.mxu0 %v5329
  %5390 = vmatpush.bf16.msra.mxu0 %v5325
  %5391 = vmatpush.bf16.msra.mxu0 %v5321
  %5392 = vmatpush.bf16.msra.mxu0 %v5317
  %5393 = vmatpush.bf16.msra.mxu0 %v5313
  %5394 = vmatpush.bf16.msra.mxu0 %v5309
  %5395 = vmatpush.bf16.msra.mxu0 %v5305
  %5396 = vmatpush.bf16.msra.mxu0 %v5301
  %5397 = vmatmul.bf16.gmra.mxu0 %v5170
  %v5398 = vpop.f32.mrf.mxu0
  %v5399 = vadd.f32 0.0, %v5398
  %v5400 = vpop.f32.mrf.mxu0
  %5401 = vdwg.mxu0
  %5402 = vmatpush.bf16.msra.mxu0 %v5330
  %5403 = vmatpush.bf16.msra.mxu0 %v5326
  %5404 = vmatpush.bf16.msra.mxu0 %v5322
  %5405 = vmatpush.bf16.msra.mxu0 %v5318
  %5406 = vmatpush.bf16.msra.mxu0 %v5314
  %5407 = vmatpush.bf16.msra.mxu0 %v5310
  %5408 = vmatpush.bf16.msra.mxu0 %v5306
  %5409 = vmatpush.bf16.msra.mxu0 %v5302
  %5410 = vmatmul.bf16.gmra.mxu0 %v5170
  %v5411 = vpop.f32.mrf.mxu0
  %v5412 = vadd.f32 0.0, %v5411
  %v5413 = vpop.f32.mrf.mxu0
  %5414 = vdwg.mxu0
  %v5415 = vadd.f32 %v5165, %v5373
  %v5416 = vadd.f32 %v5166, %v5386
  %v5417 = vadd.f32 %v5167, %v5399
  %v5418 = vadd.f32 %v5168, %v5412
  %v5419 = vxor.u32 %v5415, 2147483648
  %v5420 = vxor.u32 %v5416, 2147483648
  %v5421 = vmul.f32 %v5419, 1.442695
  %v5422 = vpow.pop %v5421
  %v5423 = vmul.f32 %v5420, 1.442695
  %v5424 = vpow.pop %v5423
  %v5425 = vadd.f32 %v5422, 1.0
  %v5426 = vadd.f32 %v5424, 1.0
  %v5427 = vrcp.pop %v5425
  %v5428 = vmul.f32 %v5425, %v5427
  %v5429 = vsub.f32 1.0, %v5428
  %v5430 = vmul.f32 %v5427, %v5429
  %v5431 = vadd.f32 %v5427, %v5430
  %vm5432 = vweird.f32 %v5425
  %vm5433 = vweird.f32 %v5427
  %vm5434 = vmor %vm5432, %vm5433
  %v5435 = vsel %vm5434, %v5427, %v5431
  %v5436 = vand.u32 2147483647, %v5425
  %vm5437 = vcmp.eq.f32.partialorder %v5436, 8.507059e+37
  %v5438 = vand.u32 %v5425, 2147483648
  %v5439 = vor.u32 1.1754944e-38, %v5438
  %v5440 = vsel %vm5437, %v5439, %v5435
  %v5441 = vmul.f32 1.0, %v5440
  %v5442 = vrcp.pop %v5426
  %v5443 = vmul.f32 %v5426, %v5442
  %v5444 = vsub.f32 1.0, %v5443
  %v5445 = vmul.f32 %v5442, %v5444
  %v5446 = vadd.f32 %v5442, %v5445
  %vm5447 = vweird.f32 %v5426
  %vm5448 = vweird.f32 %v5442
  %vm5449 = vmor %vm5447, %vm5448
  %v5450 = vsel %vm5449, %v5442, %v5446
  %v5451 = vand.u32 2147483647, %v5426
  %vm5452 = vcmp.eq.f32.partialorder %v5451, 8.507059e+37
  %v5453 = vand.u32 %v5426, 2147483648
  %v5454 = vor.u32 1.1754944e-38, %v5453
  %v5455 = vsel %vm5452, %v5454, %v5450
  %v5456 = vmul.f32 1.0, %v5455
  %v5457 = vtanh.pop %v5417
  %v5458 = vxor.u32 %v5418, 2147483648
  %v5459 = vmul.f32 %v5458, 1.442695
  %v5460 = vpow.pop %v5459
  %v5461 = vadd.f32 %v5460, 1.0
  %v5462 = vrcp.pop %v5461
  %v5463 = vmul.f32 %v5461, %v5462
  %v5464 = vsub.f32 1.0, %v5463
  %v5465 = vmul.f32 %v5462, %v5464
  %v5466 = vadd.f32 %v5462, %v5465
  %vm5467 = vweird.f32 %v5461
  %vm5468 = vweird.f32 %v5462
  %vm5469 = vmor %vm5467, %vm5468
  %v5470 = vsel %vm5469, %v5462, %v5466
  %v5471 = vand.u32 2147483647, %v5461
  %vm5472 = vcmp.eq.f32.partialorder %v5471, 8.507059e+37
  %v5473 = vand.u32 %v5461, 2147483648
  %v5474 = vor.u32 1.1754944e-38, %v5473
  %v5475 = vsel %vm5472, %v5474, %v5470
  %v5476 = vmul.f32 1.0, %v5475
  %v5477 = vld [vmem:[#allocation3] sm:$0xff]
  %v5478 = vmul.f32 %v5456, %v5477
  %v5479 = vmul.f32 %v5441, %v5457
  %v5480 = vadd.f32 %v5478, %v5479
  %v5481 = vtanh.pop %v5480
  %v5482 = vmul.f32 %v5476, %v5481
  %5483 = vst [vmem:[#allocation3] sm:$0xff] %v5480
  %5484 = vst [vmem:[#allocation2] sm:$0xff] %v5482
  %v5486 = vrot.slane %v5482, 1
  %v5487 = vrot.slane %v5482, 2
  %v5488 = vrot.slane %v5482, 3
  %v5489 = vrot.slane %v5482, 4
  %v5490 = vrot.slane %v5482, 5
  %v5491 = vrot.slane %v5482, 6
  %v5492 = vrot.slane %v5482, 7
  %v5500 = vpack.c.bf16 %v5482, %v5482
  %v5501 = vpack.c.bf16 %v5486, %v5486
  %v5502 = vpack.c.bf16 %v5487, %v5487
  %v5503 = vpack.c.bf16 %v5488, %v5488
  %v5504 = vpack.c.bf16 %v5489, %v5489
  %v5505 = vpack.c.bf16 %v5490, %v5490
  %v5506 = vpack.c.bf16 %v5491, %v5491
  %v5507 = vpack.c.bf16 %v5492, %v5492
  %v5509 = vshll.u32 %v5500, 16
  %v5511 = vrot.slane %v5509, 6
  %v5513 = vshll.u32 %v5501, 16
  %v5515 = vrot.slane %v5513, 6
  %v5517 = vshll.u32 %v5502, 16
  %v5519 = vrot.slane %v5517, 6
  %v5521 = vshll.u32 %v5503, 16
  %v5523 = vrot.slane %v5521, 6
  %v5525 = vshll.u32 %v5504, 16
  %v5527 = vrot.slane %v5525, 6
  %v5529 = vshll.u32 %v5505, 16
  %v5531 = vrot.slane %v5529, 6
  %v5533 = vshll.u32 %v5506, 16
  %v5535 = vrot.slane %v5533, 6
  %v5537 = vshll.u32 %v5507, 16
  %v5539 = vrot.slane %v5537, 6
  %v5548 = vld [vmem:[%s2 + $0x4] sm:$0x4]
  %v5549 = vsel %vm2374, %v5511, %v5548
  %5550 = vst [vmem:[%s2 + $0x4] sm:$0x4] %v5549
  %v5551 = vld [vmem:[%s2 + $0xc] sm:$0x4]
  %v5552 = vsel %vm2374, %v5515, %v5551
  %5553 = vst [vmem:[%s2 + $0xc] sm:$0x4] %v5552
  %v5554 = vld [vmem:[%s2 + $0x14] sm:$0x4]
  %v5555 = vsel %vm2374, %v5519, %v5554
  %5556 = vst [vmem:[%s2 + $0x14] sm:$0x4] %v5555
  %v5557 = vld [vmem:[%s2 + $0x1c] sm:$0x4]
  %v5558 = vsel %vm2374, %v5523, %v5557
  %5559 = vst [vmem:[%s2 + $0x1c] sm:$0x4] %v5558
  %v5560 = vld [vmem:[%s2 + $0x24] sm:$0x4]
  %v5561 = vsel %vm2374, %v5527, %v5560
  %5562 = vst [vmem:[%s2 + $0x24] sm:$0x4] %v5561
  %v5563 = vld [vmem:[%s2 + $0x2c] sm:$0x4]
  %v5564 = vsel %vm2374, %v5531, %v5563
  %5565 = vst [vmem:[%s2 + $0x2c] sm:$0x4] %v5564
  %v5566 = vld [vmem:[%s2 + $0x34] sm:$0x4]
  %v5567 = vsel %vm2374, %v5535, %v5566
  %5568 = vst [vmem:[%s2 + $0x34] sm:$0x4] %v5567
  %v5569 = vld [vmem:[%s2 + $0x3c] sm:$0x4]
  %v5570 = vsel %vm2374, %v5539, %v5569
  %5571 = vst [vmem:[%s2 + $0x3c] sm:$0x4] %v5570
  %s5572 = scalar_lea.vmem %s0, 448
  %v5573 = vld [vmem:[%s5572] sm:$0xff]
  %v5574 = vld [vmem:[%s5572 + $0x8] sm:$0xff]
  %v5575 = vld [vmem:[%s5572 + $0x10] sm:$0xff]
  %v5576 = vld [vmem:[%s5572 + $0x18] sm:$0xff]
  %v5577 = vld [vmem:[#allocation2] sm:$0xff]
  %v5578 = vpack.c.bf16 %v5577, %v5577
  %v5579 = vld [vmem:[%s1] sm:$0xff]
  %v5580 = vld [vmem:[%s1 + $0x8] sm:$0xff]
  %v5581 = vld [vmem:[%s1 + $0x10] sm:$0xff]
  %v5582 = vld [vmem:[%s1 + $0x18] sm:$0xff]
  %v5583 = vld [vmem:[%s1 + $0x20] sm:$0xff]
  %v5584 = vld [vmem:[%s1 + $0x28] sm:$0xff]
  %v5585 = vld [vmem:[%s1 + $0x30] sm:$0xff]
  %v5586 = vld [vmem:[%s1 + $0x38] sm:$0xff]
  %v5587 = vld [vmem:[%s1 + $0x40] sm:$0xff]
  %v5588 = vld [vmem:[%s1 + $0x48] sm:$0xff]
  %v5589 = vld [vmem:[%s1 + $0x50] sm:$0xff]
  %v5590 = vld [vmem:[%s1 + $0x58] sm:$0xff]
  %v5591 = vld [vmem:[%s1 + $0x60] sm:$0xff]
  %v5592 = vld [vmem:[%s1 + $0x68] sm:$0xff]
  %v5593 = vld [vmem:[%s1 + $0x70] sm:$0xff]
  %v5594 = vld [vmem:[%s1 + $0x78] sm:$0xff]
  %v5595 = vld [vmem:[%s1 + $0x80] sm:$0xff]
  %v5596 = vld [vmem:[%s1 + $0x88] sm:$0xff]
  %v5597 = vld [vmem:[%s1 + $0x90] sm:$0xff]
  %v5598 = vld [vmem:[%s1 + $0x98] sm:$0xff]
  %v5599 = vld [vmem:[%s1 + $0xa0] sm:$0xff]
  %v5600 = vld [vmem:[%s1 + $0xa8] sm:$0xff]
  %v5601 = vld [vmem:[%s1 + $0xb0] sm:$0xff]
  %v5602 = vld [vmem:[%s1 + $0xb8] sm:$0xff]
  %v5603 = vld [vmem:[%s1 + $0xc0] sm:$0xff]
  %v5604 = vld [vmem:[%s1 + $0xc8] sm:$0xff]
  %v5605 = vld [vmem:[%s1 + $0xd0] sm:$0xff]
  %v5606 = vld [vmem:[%s1 + $0xd8] sm:$0xff]
  %v5607 = vld [vmem:[%s1 + $0xe0] sm:$0xff]
  %v5608 = vld [vmem:[%s1 + $0xe8] sm:$0xff]
  %v5609 = vld [vmem:[%s1 + $0xf0] sm:$0xff]
  %v5610 = vld [vmem:[%s1 + $0xf8] sm:$0xff]
  %v5643 = vunpack.c.l.b16 %v5579
  %v5644 = vunpack.c.h.b16 %v5579
  %v5645 = vunpack.c.l.b16 %v5580
  %v5646 = vunpack.c.h.b16 %v5580
  %v5647 = vunpack.c.l.b16 %v5581
  %v5648 = vunpack.c.h.b16 %v5581
  %v5649 = vunpack.c.l.b16 %v5582
  %v5650 = vunpack.c.h.b16 %v5582
  %v5651 = vunpack.c.l.b16 %v5583
  %v5652 = vunpack.c.h.b16 %v5583
  %v5653 = vunpack.c.l.b16 %v5584
  %v5654 = vunpack.c.h.b16 %v5584
  %v5655 = vunpack.c.l.b16 %v5585
  %v5656 = vunpack.c.h.b16 %v5585
  %v5657 = vunpack.c.l.b16 %v5586
  %v5658 = vunpack.c.h.b16 %v5586
  %v5659 = vunpack.c.l.b16 %v5587
  %v5660 = vunpack.c.h.b16 %v5587
  %v5661 = vunpack.c.l.b16 %v5588
  %v5662 = vunpack.c.h.b16 %v5588
  %v5663 = vunpack.c.l.b16 %v5589
  %v5664 = vunpack.c.h.b16 %v5589
  %v5665 = vunpack.c.l.b16 %v5590
  %v5666 = vunpack.c.h.b16 %v5590
  %v5667 = vunpack.c.l.b16 %v5591
  %v5668 = vunpack.c.h.b16 %v5591
  %v5669 = vunpack.c.l.b16 %v5592
  %v5670 = vunpack.c.h.b16 %v5592
  %v5671 = vunpack.c.l.b16 %v5593
  %v5672 = vunpack.c.h.b16 %v5593
  %v5673 = vunpack.c.l.b16 %v5594
  %v5674 = vunpack.c.h.b16 %v5594
  %v5675 = vunpack.c.l.b16 %v5595
  %v5676 = vunpack.c.h.b16 %v5595
  %v5677 = vunpack.c.l.b16 %v5596
  %v5678 = vunpack.c.h.b16 %v5596
  %v5679 = vunpack.c.l.b16 %v5597
  %v5680 = vunpack.c.h.b16 %v5597
  %v5681 = vunpack.c.l.b16 %v5598
  %v5682 = vunpack.c.h.b16 %v5598
  %v5683 = vunpack.c.l.b16 %v5599
  %v5684 = vunpack.c.h.b16 %v5599
  %v5685 = vunpack.c.l.b16 %v5600
  %v5686 = vunpack.c.h.b16 %v5600
  %v5687 = vunpack.c.l.b16 %v5601
  %v5688 = vunpack.c.h.b16 %v5601
  %v5689 = vunpack.c.l.b16 %v5602
  %v5690 = vunpack.c.h.b16 %v5602
  %v5691 = vunpack.c.l.b16 %v5603
  %v5692 = vunpack.c.h.b16 %v5603
  %v5693 = vunpack.c.l.b16 %v5604
  %v5694 = vunpack.c.h.b16 %v5604
  %v5695 = vunpack.c.l.b16 %v5605
  %v5696 = vunpack.c.h.b16 %v5605
  %v5697 = vunpack.c.l.b16 %v5606
  %v5698 = vunpack.c.h.b16 %v5606
  %v5699 = vunpack.c.l.b16 %v5607
  %v5700 = vunpack.c.h.b16 %v5607
  %v5701 = vunpack.c.l.b16 %v5608
  %v5702 = vunpack.c.h.b16 %v5608
  %v5703 = vunpack.c.l.b16 %v5609
  %v5704 = vunpack.c.h.b16 %v5609
  %v5705 = vunpack.c.l.b16 %v5610
  %v5706 = vunpack.c.h.b16 %v5610
  %v5707 = vpack.c.b16 %v5647, %v5643
  %v5708 = vpack.c.b16 %v5648, %v5644
  %v5709 = vpack.c.b16 %v5649, %v5645
  %v5710 = vpack.c.b16 %v5650, %v5646
  %v5711 = vpack.c.b16 %v5655, %v5651
  %v5712 = vpack.c.b16 %v5656, %v5652
  %v5713 = vpack.c.b16 %v5657, %v5653
  %v5714 = vpack.c.b16 %v5658, %v5654
  %v5715 = vpack.c.b16 %v5663, %v5659
  %v5716 = vpack.c.b16 %v5664, %v5660
  %v5717 = vpack.c.b16 %v5665, %v5661
  %v5718 = vpack.c.b16 %v5666, %v5662
  %v5719 = vpack.c.b16 %v5671, %v5667
  %v5720 = vpack.c.b16 %v5672, %v5668
  %v5721 = vpack.c.b16 %v5673, %v5669
  %v5722 = vpack.c.b16 %v5674, %v5670
  %v5723 = vpack.c.b16 %v5679, %v5675
  %v5724 = vpack.c.b16 %v5680, %v5676
  %v5725 = vpack.c.b16 %v5681, %v5677
  %v5726 = vpack.c.b16 %v5682, %v5678
  %v5727 = vpack.c.b16 %v5687, %v5683
  %v5728 = vpack.c.b16 %v5688, %v5684
  %v5729 = vpack.c.b16 %v5689, %v5685
  %v5730 = vpack.c.b16 %v5690, %v5686
  %v5731 = vpack.c.b16 %v5695, %v5691
  %v5732 = vpack.c.b16 %v5696, %v5692
  %v5733 = vpack.c.b16 %v5697, %v5693
  %v5734 = vpack.c.b16 %v5698, %v5694
  %v5735 = vpack.c.b16 %v5703, %v5699
  %v5736 = vpack.c.b16 %v5704, %v5700
  %v5737 = vpack.c.b16 %v5705, %v5701
  %v5738 = vpack.c.b16 %v5706, %v5702
  %5771 = vmatpush.bf16.msra.mxu0 %v5735
  %5772 = vmatpush.bf16.msra.mxu0 %v5731
  %5773 = vmatpush.bf16.msra.mxu0 %v5727
  %5774 = vmatpush.bf16.msra.mxu0 %v5723
  %5775 = vmatpush.bf16.msra.mxu0 %v5719
  %5776 = vmatpush.bf16.msra.mxu0 %v5715
  %5777 = vmatpush.bf16.msra.mxu0 %v5711
  %5778 = vmatpush.bf16.msra.mxu0 %v5707
  %5779 = vmatmul.bf16.gmra.mxu0 %v5578
  %v5780 = vpop.f32.mrf.mxu0
  %v5781 = vadd.f32 0.0, %v5780
  %v5782 = vpop.f32.mrf.mxu0
  %5783 = vdwg.mxu0
  %5784 = vmatpush.bf16.msra.mxu0 %v5736
  %5785 = vmatpush.bf16.msra.mxu0 %v5732
  %5786 = vmatpush.bf16.msra.mxu0 %v5728
  %5787 = vmatpush.bf16.msra.mxu0 %v5724
  %5788 = vmatpush.bf16.msra.mxu0 %v5720
  %5789 = vmatpush.bf16.msra.mxu0 %v5716
  %5790 = vmatpush.bf16.msra.mxu0 %v5712
  %5791 = vmatpush.bf16.msra.mxu0 %v5708
  %5792 = vmatmul.bf16.gmra.mxu0 %v5578
  %v5793 = vpop.f32.mrf.mxu0
  %v5794 = vadd.f32 0.0, %v5793
  %v5795 = vpop.f32.mrf.mxu0
  %5796 = vdwg.mxu0
  %5797 = vmatpush.bf16.msra.mxu0 %v5737
  %5798 = vmatpush.bf16.msra.mxu0 %v5733
  %5799 = vmatpush.bf16.msra.mxu0 %v5729
  %5800 = vmatpush.bf16.msra.mxu0 %v5725
  %5801 = vmatpush.bf16.msra.mxu0 %v5721
  %5802 = vmatpush.bf16.msra.mxu0 %v5717
  %5803 = vmatpush.bf16.msra.mxu0 %v5713
  %5804 = vmatpush.bf16.msra.mxu0 %v5709
  %5805 = vmatmul.bf16.gmra.mxu0 %v5578
  %v5806 = vpop.f32.mrf.mxu0
  %v5807 = vadd.f32 0.0, %v5806
  %v5808 = vpop.f32.mrf.mxu0
  %5809 = vdwg.mxu0
  %5810 = vmatpush.bf16.msra.mxu0 %v5738
  %5811 = vmatpush.bf16.msra.mxu0 %v5734
  %5812 = vmatpush.bf16.msra.mxu0 %v5730
  %5813 = vmatpush.bf16.msra.mxu0 %v5726
  %5814 = vmatpush.bf16.msra.mxu0 %v5722
  %5815 = vmatpush.bf16.msra.mxu0 %v5718
  %5816 = vmatpush.bf16.msra.mxu0 %v5714
  %5817 = vmatpush.bf16.msra.mxu0 %v5710
  %5818 = vmatmul.bf16.gmra.mxu0 %v5578
  %v5819 = vpop.f32.mrf.mxu0
  %v5820 = vadd.f32 0.0, %v5819
  %v5821 = vpop.f32.mrf.mxu0
  %5822 = vdwg.mxu0
  %v5823 = vadd.f32 %v5573, %v5781
  %v5824 = vadd.f32 %v5574, %v5794
  %v5825 = vadd.f32 %v5575, %v5807
  %v5826 = vadd.f32 %v5576, %v5820
  %v5827 = vxor.u32 %v5823, 2147483648
  %v5828 = vxor.u32 %v5824, 2147483648
  %v5829 = vmul.f32 %v5827, 1.442695
  %v5830 = vpow.pop %v5829
  %v5831 = vmul.f32 %v5828, 1.442695
  %v5832 = vpow.pop %v5831
  %v5833 = vadd.f32 %v5830, 1.0
  %v5834 = vadd.f32 %v5832, 1.0
  %v5835 = vrcp.pop %v5833
  %v5836 = vmul.f32 %v5833, %v5835
  %v5837 = vsub.f32 1.0, %v5836
  %v5838 = vmul.f32 %v5835, %v5837
  %v5839 = vadd.f32 %v5835, %v5838
  %vm5840 = vweird.f32 %v5833
  %vm5841 = vweird.f32 %v5835
  %vm5842 = vmor %vm5840, %vm5841
  %v5843 = vsel %vm5842, %v5835, %v5839
  %v5844 = vand.u32 2147483647, %v5833
  %vm5845 = vcmp.eq.f32.partialorder %v5844, 8.507059e+37
  %v5846 = vand.u32 %v5833, 2147483648
  %v5847 = vor.u32 1.1754944e-38, %v5846
  %v5848 = vsel %vm5845, %v5847, %v5843
  %v5849 = vmul.f32 1.0, %v5848
  %v5850 = vrcp.pop %v5834
  %v5851 = vmul.f32 %v5834, %v5850
  %v5852 = vsub.f32 1.0, %v5851
  %v5853 = vmul.f32 %v5850, %v5852
  %v5854 = vadd.f32 %v5850, %v5853
  %vm5855 = vweird.f32 %v5834
  %vm5856 = vweird.f32 %v5850
  %vm5857 = vmor %vm5855, %vm5856
  %v5858 = vsel %vm5857, %v5850, %v5854
  %v5859 = vand.u32 2147483647, %v5834
  %vm5860 = vcmp.eq.f32.partialorder %v5859, 8.507059e+37
  %v5861 = vand.u32 %v5834, 2147483648
  %v5862 = vor.u32 1.1754944e-38, %v5861
  %v5863 = vsel %vm5860, %v5862, %v5858
  %v5864 = vmul.f32 1.0, %v5863
  %v5865 = vtanh.pop %v5825
  %v5866 = vxor.u32 %v5826, 2147483648
  %v5867 = vmul.f32 %v5866, 1.442695
  %v5868 = vpow.pop %v5867
  %v5869 = vadd.f32 %v5868, 1.0
  %v5870 = vrcp.pop %v5869
  %v5871 = vmul.f32 %v5869, %v5870
  %v5872 = vsub.f32 1.0, %v5871
  %v5873 = vmul.f32 %v5870, %v5872
  %v5874 = vadd.f32 %v5870, %v5873
  %vm5875 = vweird.f32 %v5869
  %vm5876 = vweird.f32 %v5870
  %vm5877 = vmor %vm5875, %vm5876
  %v5878 = vsel %vm5877, %v5870, %v5874
  %v5879 = vand.u32 2147483647, %v5869
  %vm5880 = vcmp.eq.f32.partialorder %v5879, 8.507059e+37
  %v5881 = vand.u32 %v5869, 2147483648
  %v5882 = vor.u32 1.1754944e-38, %v5881
  %v5883 = vsel %vm5880, %v5882, %v5878
  %v5884 = vmul.f32 1.0, %v5883
  %v5885 = vld [vmem:[#allocation3] sm:$0xff]
  %v5886 = vmul.f32 %v5864, %v5885
  %v5887 = vmul.f32 %v5849, %v5865
  %v5888 = vadd.f32 %v5886, %v5887
  %v5889 = vtanh.pop %v5888
  %v5890 = vmul.f32 %v5884, %v5889
  %5891 = vst [vmem:[#allocation3] sm:$0xff] %v5888
  %5892 = vst [vmem:[#allocation2] sm:$0xff] %v5890
  %v5894 = vrot.slane %v5890, 1
  %v5895 = vrot.slane %v5890, 2
  %v5896 = vrot.slane %v5890, 3
  %v5897 = vrot.slane %v5890, 4
  %v5898 = vrot.slane %v5890, 5
  %v5899 = vrot.slane %v5890, 6
  %v5900 = vrot.slane %v5890, 7
  %v5908 = vpack.c.bf16 %v5890, %v5890
  %v5909 = vpack.c.bf16 %v5894, %v5894
  %v5910 = vpack.c.bf16 %v5895, %v5895
  %v5911 = vpack.c.bf16 %v5896, %v5896
  %v5912 = vpack.c.bf16 %v5897, %v5897
  %v5913 = vpack.c.bf16 %v5898, %v5898
  %v5914 = vpack.c.bf16 %v5899, %v5899
  %v5915 = vpack.c.bf16 %v5900, %v5900
  %v5924 = vrot.slane %v5908, 5
  %v5925 = vrot.slane %v5909, 5
  %v5926 = vrot.slane %v5910, 5
  %v5927 = vrot.slane %v5911, 5
  %v5928 = vrot.slane %v5912, 5
  %v5929 = vrot.slane %v5913, 5
  %v5930 = vrot.slane %v5914, 5
  %v5931 = vrot.slane %v5915, 5
  %v5940 = vld [vmem:[%s2 + $0x4] sm:$0x8]
  %v5941 = vsel %vm2769, %v5924, %v5940
  %5942 = vst [vmem:[%s2 + $0x4] sm:$0x8] %v5941
  %v5943 = vld [vmem:[%s2 + $0xc] sm:$0x8]
  %v5944 = vsel %vm2769, %v5925, %v5943
  %5945 = vst [vmem:[%s2 + $0xc] sm:$0x8] %v5944
  %v5946 = vld [vmem:[%s2 + $0x14] sm:$0x8]
  %v5947 = vsel %vm2769, %v5926, %v5946
  %5948 = vst [vmem:[%s2 + $0x14] sm:$0x8] %v5947
  %v5949 = vld [vmem:[%s2 + $0x1c] sm:$0x8]
  %v5950 = vsel %vm2769, %v5927, %v5949
  %5951 = vst [vmem:[%s2 + $0x1c] sm:$0x8] %v5950
  %v5952 = vld [vmem:[%s2 + $0x24] sm:$0x8]
  %v5953 = vsel %vm2769, %v5928, %v5952
  %5954 = vst [vmem:[%s2 + $0x24] sm:$0x8] %v5953
  %v5955 = vld [vmem:[%s2 + $0x2c] sm:$0x8]
  %v5956 = vsel %vm2769, %v5929, %v5955
  %5957 = vst [vmem:[%s2 + $0x2c] sm:$0x8] %v5956
  %v5958 = vld [vmem:[%s2 + $0x34] sm:$0x8]
  %v5959 = vsel %vm2769, %v5930, %v5958
  %5960 = vst [vmem:[%s2 + $0x34] sm:$0x8] %v5959
  %v5961 = vld [vmem:[%s2 + $0x3c] sm:$0x8]
  %v5962 = vsel %vm2769, %v5931, %v5961
  %5963 = vst [vmem:[%s2 + $0x3c] sm:$0x8] %v5962
  %s5964 = scalar_lea.vmem %s0, 480
  %v5965 = vld [vmem:[%s5964] sm:$0xff]
  %v5966 = vld [vmem:[%s5964 + $0x8] sm:$0xff]
  %v5967 = vld [vmem:[%s5964 + $0x10] sm:$0xff]
  %v5968 = vld [vmem:[%s5964 + $0x18] sm:$0xff]
  %v5969 = vld [vmem:[#allocation2] sm:$0xff]
  %v5970 = vpack.c.bf16 %v5969, %v5969
  %v5971 = vld [vmem:[%s1] sm:$0xff]
  %v5972 = vld [vmem:[%s1 + $0x8] sm:$0xff]
  %v5973 = vld [vmem:[%s1 + $0x10] sm:$0xff]
  %v5974 = vld [vmem:[%s1 + $0x18] sm:$0xff]
  %v5975 = vld [vmem:[%s1 + $0x20] sm:$0xff]
  %v5976 = vld [vmem:[%s1 + $0x28] sm:$0xff]
  %v5977 = vld [vmem:[%s1 + $0x30] sm:$0xff]
  %v5978 = vld [vmem:[%s1 + $0x38] sm:$0xff]
  %v5979 = vld [vmem:[%s1 + $0x40] sm:$0xff]
  %v5980 = vld [vmem:[%s1 + $0x48] sm:$0xff]
  %v5981 = vld [vmem:[%s1 + $0x50] sm:$0xff]
  %v5982 = vld [vmem:[%s1 + $0x58] sm:$0xff]
  %v5983 = vld [vmem:[%s1 + $0x60] sm:$0xff]
  %v5984 = vld [vmem:[%s1 + $0x68] sm:$0xff]
  %v5985 = vld [vmem:[%s1 + $0x70] sm:$0xff]
  %v5986 = vld [vmem:[%s1 + $0x78] sm:$0xff]
  %v5987 = vld [vmem:[%s1 + $0x80] sm:$0xff]
  %v5988 = vld [vmem:[%s1 + $0x88] sm:$0xff]
  %v5989 = vld [vmem:[%s1 + $0x90] sm:$0xff]
  %v5990 = vld [vmem:[%s1 + $0x98] sm:$0xff]
  %v5991 = vld [vmem:[%s1 + $0xa0] sm:$0xff]
  %v5992 = vld [vmem:[%s1 + $0xa8] sm:$0xff]
  %v5993 = vld [vmem:[%s1 + $0xb0] sm:$0xff]
  %v5994 = vld [vmem:[%s1 + $0xb8] sm:$0xff]
  %v5995 = vld [vmem:[%s1 + $0xc0] sm:$0xff]
  %v5996 = vld [vmem:[%s1 + $0xc8] sm:$0xff]
  %v5997 = vld [vmem:[%s1 + $0xd0] sm:$0xff]
  %v5998 = vld [vmem:[%s1 + $0xd8] sm:$0xff]
  %v5999 = vld [vmem:[%s1 + $0xe0] sm:$0xff]
  %v6000 = vld [vmem:[%s1 + $0xe8] sm:$0xff]
  %v6001 = vld [vmem:[%s1 + $0xf0] sm:$0xff]
  %v6002 = vld [vmem:[%s1 + $0xf8] sm:$0xff]
  %v6035 = vunpack.c.l.b16 %v5971
  %v6036 = vunpack.c.h.b16 %v5971
  %v6037 = vunpack.c.l.b16 %v5972
  %v6038 = vunpack.c.h.b16 %v5972
  %v6039 = vunpack.c.l.b16 %v5973
  %v6040 = vunpack.c.h.b16 %v5973
  %v6041 = vunpack.c.l.b16 %v5974
  %v6042 = vunpack.c.h.b16 %v5974
  %v6043 = vunpack.c.l.b16 %v5975
  %v6044 = vunpack.c.h.b16 %v5975
  %v6045 = vunpack.c.l.b16 %v5976
  %v6046 = vunpack.c.h.b16 %v5976
  %v6047 = vunpack.c.l.b16 %v5977
  %v6048 = vunpack.c.h.b16 %v5977
  %v6049 = vunpack.c.l.b16 %v5978
  %v6050 = vunpack.c.h.b16 %v5978
  %v6051 = vunpack.c.l.b16 %v5979
  %v6052 = vunpack.c.h.b16 %v5979
  %v6053 = vunpack.c.l.b16 %v5980
  %v6054 = vunpack.c.h.b16 %v5980
  %v6055 = vunpack.c.l.b16 %v5981
  %v6056 = vunpack.c.h.b16 %v5981
  %v6057 = vunpack.c.l.b16 %v5982
  %v6058 = vunpack.c.h.b16 %v5982
  %v6059 = vunpack.c.l.b16 %v5983
  %v6060 = vunpack.c.h.b16 %v5983
  %v6061 = vunpack.c.l.b16 %v5984
  %v6062 = vunpack.c.h.b16 %v5984
  %v6063 = vunpack.c.l.b16 %v5985
  %v6064 = vunpack.c.h.b16 %v5985
  %v6065 = vunpack.c.l.b16 %v5986
  %v6066 = vunpack.c.h.b16 %v5986
  %v6067 = vunpack.c.l.b16 %v5987
  %v6068 = vunpack.c.h.b16 %v5987
  %v6069 = vunpack.c.l.b16 %v5988
  %v6070 = vunpack.c.h.b16 %v5988
  %v6071 = vunpack.c.l.b16 %v5989
  %v6072 = vunpack.c.h.b16 %v5989
  %v6073 = vunpack.c.l.b16 %v5990
  %v6074 = vunpack.c.h.b16 %v5990
  %v6075 = vunpack.c.l.b16 %v5991
  %v6076 = vunpack.c.h.b16 %v5991
  %v6077 = vunpack.c.l.b16 %v5992
  %v6078 = vunpack.c.h.b16 %v5992
  %v6079 = vunpack.c.l.b16 %v5993
  %v6080 = vunpack.c.h.b16 %v5993
  %v6081 = vunpack.c.l.b16 %v5994
  %v6082 = vunpack.c.h.b16 %v5994
  %v6083 = vunpack.c.l.b16 %v5995
  %v6084 = vunpack.c.h.b16 %v5995
  %v6085 = vunpack.c.l.b16 %v5996
  %v6086 = vunpack.c.h.b16 %v5996
  %v6087 = vunpack.c.l.b16 %v5997
  %v6088 = vunpack.c.h.b16 %v5997
  %v6089 = vunpack.c.l.b16 %v5998
  %v6090 = vunpack.c.h.b16 %v5998
  %v6091 = vunpack.c.l.b16 %v5999
  %v6092 = vunpack.c.h.b16 %v5999
  %v6093 = vunpack.c.l.b16 %v6000
  %v6094 = vunpack.c.h.b16 %v6000
  %v6095 = vunpack.c.l.b16 %v6001
  %v6096 = vunpack.c.h.b16 %v6001
  %v6097 = vunpack.c.l.b16 %v6002
  %v6098 = vunpack.c.h.b16 %v6002
  %v6099 = vpack.c.b16 %v6039, %v6035
  %v6100 = vpack.c.b16 %v6040, %v6036
  %v6101 = vpack.c.b16 %v6041, %v6037
  %v6102 = vpack.c.b16 %v6042, %v6038
  %v6103 = vpack.c.b16 %v6047, %v6043
  %v6104 = vpack.c.b16 %v6048, %v6044
  %v6105 = vpack.c.b16 %v6049, %v6045
  %v6106 = vpack.c.b16 %v6050, %v6046
  %v6107 = vpack.c.b16 %v6055, %v6051
  %v6108 = vpack.c.b16 %v6056, %v6052
  %v6109 = vpack.c.b16 %v6057, %v6053
  %v6110 = vpack.c.b16 %v6058, %v6054
  %v6111 = vpack.c.b16 %v6063, %v6059
  %v6112 = vpack.c.b16 %v6064, %v6060
  %v6113 = vpack.c.b16 %v6065, %v6061
  %v6114 = vpack.c.b16 %v6066, %v6062
  %v6115 = vpack.c.b16 %v6071, %v6067
  %v6116 = vpack.c.b16 %v6072, %v6068
  %v6117 = vpack.c.b16 %v6073, %v6069
  %v6118 = vpack.c.b16 %v6074, %v6070
  %v6119 = vpack.c.b16 %v6079, %v6075
  %v6120 = vpack.c.b16 %v6080, %v6076
  %v6121 = vpack.c.b16 %v6081, %v6077
  %v6122 = vpack.c.b16 %v6082, %v6078
  %v6123 = vpack.c.b16 %v6087, %v6083
  %v6124 = vpack.c.b16 %v6088, %v6084
  %v6125 = vpack.c.b16 %v6089, %v6085
  %v6126 = vpack.c.b16 %v6090, %v6086
  %v6127 = vpack.c.b16 %v6095, %v6091
  %v6128 = vpack.c.b16 %v6096, %v6092
  %v6129 = vpack.c.b16 %v6097, %v6093
  %v6130 = vpack.c.b16 %v6098, %v6094
  %6163 = vmatpush.bf16.msra.mxu0 %v6127
  %6164 = vmatpush.bf16.msra.mxu0 %v6123
  %6165 = vmatpush.bf16.msra.mxu0 %v6119
  %6166 = vmatpush.bf16.msra.mxu0 %v6115
  %6167 = vmatpush.bf16.msra.mxu0 %v6111
  %6168 = vmatpush.bf16.msra.mxu0 %v6107
  %6169 = vmatpush.bf16.msra.mxu0 %v6103
  %6170 = vmatpush.bf16.msra.mxu0 %v6099
  %6171 = vmatmul.bf16.gmra.mxu0 %v5970
  %v6172 = vpop.f32.mrf.mxu0
  %v6173 = vadd.f32 0.0, %v6172
  %v6174 = vpop.f32.mrf.mxu0
  %6175 = vdwg.mxu0
  %6176 = vmatpush.bf16.msra.mxu0 %v6128
  %6177 = vmatpush.bf16.msra.mxu0 %v6124
  %6178 = vmatpush.bf16.msra.mxu0 %v6120
  %6179 = vmatpush.bf16.msra.mxu0 %v6116
  %6180 = vmatpush.bf16.msra.mxu0 %v6112
  %6181 = vmatpush.bf16.msra.mxu0 %v6108
  %6182 = vmatpush.bf16.msra.mxu0 %v6104
  %6183 = vmatpush.bf16.msra.mxu0 %v6100
  %6184 = vmatmul.bf16.gmra.mxu0 %v5970
  %v6185 = vpop.f32.mrf.mxu0
  %v6186 = vadd.f32 0.0, %v6185
  %v6187 = vpop.f32.mrf.mxu0
  %6188 = vdwg.mxu0
  %6189 = vmatpush.bf16.msra.mxu0 %v6129
  %6190 = vmatpush.bf16.msra.mxu0 %v6125
  %6191 = vmatpush.bf16.msra.mxu0 %v6121
  %6192 = vmatpush.bf16.msra.mxu0 %v6117
  %6193 = vmatpush.bf16.msra.mxu0 %v6113
  %6194 = vmatpush.bf16.msra.mxu0 %v6109
  %6195 = vmatpush.bf16.msra.mxu0 %v6105
  %6196 = vmatpush.bf16.msra.mxu0 %v6101
  %6197 = vmatmul.bf16.gmra.mxu0 %v5970
  %v6198 = vpop.f32.mrf.mxu0
  %v6199 = vadd.f32 0.0, %v6198
  %v6200 = vpop.f32.mrf.mxu0
  %6201 = vdwg.mxu0
  %6202 = vmatpush.bf16.msra.mxu0 %v6130
  %6203 = vmatpush.bf16.msra.mxu0 %v6126
  %6204 = vmatpush.bf16.msra.mxu0 %v6122
  %6205 = vmatpush.bf16.msra.mxu0 %v6118
  %6206 = vmatpush.bf16.msra.mxu0 %v6114
  %6207 = vmatpush.bf16.msra.mxu0 %v6110
  %6208 = vmatpush.bf16.msra.mxu0 %v6106
  %6209 = vmatpush.bf16.msra.mxu0 %v6102
  %6210 = vmatmul.bf16.gmra.mxu0 %v5970
  %v6211 = vpop.f32.mrf.mxu0
  %v6212 = vadd.f32 0.0, %v6211
  %v6213 = vpop.f32.mrf.mxu0
  %6214 = vdwg.mxu0
  %v6215 = vadd.f32 %v5965, %v6173
  %v6216 = vadd.f32 %v5966, %v6186
  %v6217 = vadd.f32 %v5967, %v6199
  %v6218 = vadd.f32 %v5968, %v6212
  %v6219 = vxor.u32 %v6215, 2147483648
  %v6220 = vxor.u32 %v6216, 2147483648
  %v6221 = vmul.f32 %v6219, 1.442695
  %v6222 = vpow.pop %v6221
  %v6223 = vmul.f32 %v6220, 1.442695
  %v6224 = vpow.pop %v6223
  %v6225 = vadd.f32 %v6222, 1.0
  %v6226 = vadd.f32 %v6224, 1.0
  %v6227 = vrcp.pop %v6225
  %v6228 = vmul.f32 %v6225, %v6227
  %v6229 = vsub.f32 1.0, %v6228
  %v6230 = vmul.f32 %v6227, %v6229
  %v6231 = vadd.f32 %v6227, %v6230
  %vm6232 = vweird.f32 %v6225
  %vm6233 = vweird.f32 %v6227
  %vm6234 = vmor %vm6232, %vm6233
  %v6235 = vsel %vm6234, %v6227, %v6231
  %v6236 = vand.u32 2147483647, %v6225
  %vm6237 = vcmp.eq.f32.partialorder %v6236, 8.507059e+37
  %v6238 = vand.u32 %v6225, 2147483648
  %v6239 = vor.u32 1.1754944e-38, %v6238
  %v6240 = vsel %vm6237, %v6239, %v6235
  %v6241 = vmul.f32 1.0, %v6240
  %v6242 = vrcp.pop %v6226
  %v6243 = vmul.f32 %v6226, %v6242
  %v6244 = vsub.f32 1.0, %v6243
  %v6245 = vmul.f32 %v6242, %v6244
  %v6246 = vadd.f32 %v6242, %v6245
  %vm6247 = vweird.f32 %v6226
  %vm6248 = vweird.f32 %v6242
  %vm6249 = vmor %vm6247, %vm6248
  %v6250 = vsel %vm6249, %v6242, %v6246
  %v6251 = vand.u32 2147483647, %v6226
  %vm6252 = vcmp.eq.f32.partialorder %v6251, 8.507059e+37
  %v6253 = vand.u32 %v6226, 2147483648
  %v6254 = vor.u32 1.1754944e-38, %v6253
  %v6255 = vsel %vm6252, %v6254, %v6250
  %v6256 = vmul.f32 1.0, %v6255
  %v6257 = vtanh.pop %v6217
  %v6258 = vxor.u32 %v6218, 2147483648
  %v6259 = vmul.f32 %v6258, 1.442695
  %v6260 = vpow.pop %v6259
  %v6261 = vadd.f32 %v6260, 1.0
  %v6262 = vrcp.pop %v6261
  %v6263 = vmul.f32 %v6261, %v6262
  %v6264 = vsub.f32 1.0, %v6263
  %v6265 = vmul.f32 %v6262, %v6264
  %v6266 = vadd.f32 %v6262, %v6265
  %vm6267 = vweird.f32 %v6261
  %vm6268 = vweird.f32 %v6262
  %vm6269 = vmor %vm6267, %vm6268
  %v6270 = vsel %vm6269, %v6262, %v6266
  %v6271 = vand.u32 2147483647, %v6261
  %vm6272 = vcmp.eq.f32.partialorder %v6271, 8.507059e+37
  %v6273 = vand.u32 %v6261, 2147483648
  %v6274 = vor.u32 1.1754944e-38, %v6273
  %v6275 = vsel %vm6272, %v6274, %v6270
  %v6276 = vmul.f32 1.0, %v6275
  %v6277 = vld [vmem:[#allocation3] sm:$0xff]
  %v6278 = vmul.f32 %v6256, %v6277
  %v6279 = vmul.f32 %v6241, %v6257
  %v6280 = vadd.f32 %v6278, %v6279
  %v6281 = vtanh.pop %v6280
  %v6282 = vmul.f32 %v6276, %v6281
  %6283 = vst [vmem:[#allocation3] sm:$0xff] %v6280
  %6284 = vst [vmem:[#allocation2] sm:$0xff] %v6282
  %v6286 = vrot.slane %v6282, 1
  %v6287 = vrot.slane %v6282, 2
  %v6288 = vrot.slane %v6282, 3
  %v6289 = vrot.slane %v6282, 4
  %v6290 = vrot.slane %v6282, 5
  %v6291 = vrot.slane %v6282, 6
  %v6292 = vrot.slane %v6282, 7
  %v6300 = vpack.c.bf16 %v6282, %v6282
  %v6301 = vpack.c.bf16 %v6286, %v6286
  %v6302 = vpack.c.bf16 %v6287, %v6287
  %v6303 = vpack.c.bf16 %v6288, %v6288
  %v6304 = vpack.c.bf16 %v6289, %v6289
  %v6305 = vpack.c.bf16 %v6290, %v6290
  %v6306 = vpack.c.bf16 %v6291, %v6291
  %v6307 = vpack.c.bf16 %v6292, %v6292
  %v6309 = vshll.u32 %v6300, 16
  %v6311 = vrot.slane %v6309, 5
  %v6313 = vshll.u32 %v6301, 16
  %v6315 = vrot.slane %v6313, 5
  %v6317 = vshll.u32 %v6302, 16
  %v6319 = vrot.slane %v6317, 5
  %v6321 = vshll.u32 %v6303, 16
  %v6323 = vrot.slane %v6321, 5
  %v6325 = vshll.u32 %v6304, 16
  %v6327 = vrot.slane %v6325, 5
  %v6329 = vshll.u32 %v6305, 16
  %v6331 = vrot.slane %v6329, 5
  %v6333 = vshll.u32 %v6306, 16
  %v6335 = vrot.slane %v6333, 5
  %v6337 = vshll.u32 %v6307, 16
  %v6339 = vrot.slane %v6337, 5
  %v6348 = vld [vmem:[%s2 + $0x4] sm:$0x8]
  %v6349 = vsel %vm3179, %v6311, %v6348
  %6350 = vst [vmem:[%s2 + $0x4] sm:$0x8] %v6349
  %v6351 = vld [vmem:[%s2 + $0xc] sm:$0x8]
  %v6352 = vsel %vm3179, %v6315, %v6351
  %6353 = vst [vmem:[%s2 + $0xc] sm:$0x8] %v6352
  %v6354 = vld [vmem:[%s2 + $0x14] sm:$0x8]
  %v6355 = vsel %vm3179, %v6319, %v6354
  %6356 = vst [vmem:[%s2 + $0x14] sm:$0x8] %v6355
  %v6357 = vld [vmem:[%s2 + $0x1c] sm:$0x8]
  %v6358 = vsel %vm3179, %v6323, %v6357
  %6359 = vst [vmem:[%s2 + $0x1c] sm:$0x8] %v6358
  %v6360 = vld [vmem:[%s2 + $0x24] sm:$0x8]
  %v6361 = vsel %vm3179, %v6327, %v6360
  %6362 = vst [vmem:[%s2 + $0x24] sm:$0x8] %v6361
  %v6363 = vld [vmem:[%s2 + $0x2c] sm:$0x8]
  %v6364 = vsel %vm3179, %v6331, %v6363
  %6365 = vst [vmem:[%s2 + $0x2c] sm:$0x8] %v6364
  %v6366 = vld [vmem:[%s2 + $0x34] sm:$0x8]
  %v6367 = vsel %vm3179, %v6335, %v6366
  %6368 = vst [vmem:[%s2 + $0x34] sm:$0x8] %v6367
  %v6369 = vld [vmem:[%s2 + $0x3c] sm:$0x8]
  %v6370 = vsel %vm3179, %v6339, %v6369
  %6371 = vst [vmem:[%s2 + $0x3c] sm:$0x8] %v6370
  // Predicated region
  $region14: #{caption_decoder_forward.4} parent=0 // pred_check
    _
  $region15: #{caption_decoder_forward.4} parent=0 // pred_check_branch
    %6373 = sbr.rel (0) target = $region17
  $region16: #{caption_decoder_forward.4} parent=0 // pred_region
    _
  $region17: #{caption_decoder_forward.4} parent=0 // pred_fallthru
    _
  // Predicated region
  $region18: #{caption_decoder_forward.4} parent=0 // pred_check
    _
  $region19: #{caption_decoder_forward.4} parent=0 // pred_check_branch
    %6375 = sbr.rel (0) target = $region21
  $region20: #{caption_decoder_forward.4} parent=0 // pred_region
    _
  $region21: #{caption_decoder_forward.4} parent=0 // pred_fallthru
    _

</llo_original>
